<compile_context>
chip_gen: v5e
topology: v5e:2x2
jax: 0.10.0
libtpu: 0.0.40
codegen_flags: <defaults>
</compile_context>

<pallas_src>
import functools

import jax
import jax.numpy as jnp
from jax import lax
from jax.experimental import pallas as pl
from jax.experimental.pallas import tpu as pltpu

EPS = 1e-5
LANE = 128


def _pad_to(n, m):
    return ((n + m - 1) // m) * m


# ------------------------------ fused kernel --------------------------------

def _bottleneck_kernel(xp_ref, mask_ref, w1_ref, b1_ref, w2_ref, b2_ref,
                       w3_ref, b3_ref, o_ref, *, D, H, W, Wp):
    """One batch element per grid step.  All channel dims padded to 128."""
    Dp, Hp = D + 2, H + 2
    Mp = Dp * Hp * Wp          # rows of the spatially padded volume
    M = D * H * W              # rows of the output volume
    Cin = xp_ref.shape[-1]
    C1 = w1_ref.shape[-1]
    C2 = w2_ref.shape[-1]

    xp2d = xp_ref[0]                                        # (Mp, Cin) f32

    # ---- conv1 (1x1x1) + folded bn1 + relu over the padded volume ----
    y1 = jnp.dot(xp2d.astype(jnp.bfloat16), w1_ref[...],
                 preferred_element_type=jnp.float32)
    y1 = jnp.maximum(y1 + b1_ref[...], 0.0)
    # zero the spatial halo so conv2 sees true zero padding (relu(bias) != 0 there)
    y1 = y1 * mask_ref[...]
    y1 = y1.reshape(Dp, Hp, Wp, C1)

    # ---- conv2 (3x3x3, pad=1) as 27 shifted matmuls, f32 accumulation ----
    acc = jnp.zeros((M, C2), jnp.float32)
    for kd in range(3):
        for kh in range(3):
            for kw in range(3):
                tap = kd * 9 + kh * 3 + kw
                patch = lax.slice(y1, (kd, kh, kw, 0),
                                  (kd + D, kh + H, kw + W, C1))
                patch = patch.reshape(M, C1).astype(jnp.bfloat16)
                acc = acc + jnp.dot(patch, w2_ref[tap],
                                    preferred_element_type=jnp.float32)
    y2 = jnp.maximum(acc + b2_ref[...], 0.0)

    # ---- conv3 (1x1x1) + folded bn3 + residual + relu ----
    y3 = jnp.dot(y2.astype(jnp.bfloat16), w3_ref[...],
                 preferred_element_type=jnp.float32) + b3_ref[...]
    xp4d = xp2d.reshape(Dp, Hp, Wp, Cin)
    res = lax.slice(xp4d, (1, 1, 1, 0), (1 + D, 1 + H, 1 + W, Cin))
    res = res.reshape(M, Cin)                               # f32 residual
    o_ref[0] = jnp.maximum(y3 + res, 0.0).astype(o_ref.dtype)


# ------------------------------ glue (JAX) ----------------------------------

def fold_bn(bn_params):
    gamma, beta, mean, var = bn_params
    scale = gamma / jnp.sqrt(var + EPS)
    bias = beta - mean * scale
    return scale, bias


def bottleneck_forward(x_ncdhw, params):
    """Bottleneck forward (stride=1, downsample=None).  x_ncdhw: (N, C, D, H, W)."""
    N, Cin, D, H, W = x_ncdhw.shape
    w1 = params["conv1_w"]                      # (planes, Cin, 1, 1, 1)
    w2 = params["conv2_w"]                      # (planes, planes, 3, 3, 3)
    w3 = params["conv3_w"]                      # (planes*4, planes, 1, 1, 1)
    planes = w1.shape[0]
    cout = w3.shape[0]
    assert cout == Cin, "stride=1/downsample=None requires in_planes == planes*4"
    assert W % 8 == 0, "TODO(synk): general W needs sublane-padded output tiles"

    Cp_in = _pad_to(Cin, LANE)
    Cp1 = _pad_to(planes, LANE)
    Cp3 = _pad_to(cout, LANE)
    Dp, Hp = D + 2, H + 2
    Wp = _pad_to(W + 2, 8)                      # keep the sublane dim 8-aligned
    Mp = Dp * Hp * Wp
    M = D * H * W

    s1, b1 = fold_bn(params["bn1"])
    s2, b2 = fold_bn(params["bn2"])
    s3, b3 = fold_bn(params["bn3"])

    # BN scale folded into weight columns; weights bf16, biases f32, all 128-padded.
    w1m = jnp.transpose(w1[:, :, 0, 0, 0], (1, 0)) * s1[None, :]
    w1m = jnp.pad(w1m, ((0, Cp_in - Cin), (0, Cp1 - planes))).astype(jnp.bfloat16)
    b1p = jnp.pad(b1, (0, Cp1 - planes)).reshape(1, Cp1).astype(jnp.float32)

    w2m = jnp.transpose(w2, (2, 3, 4, 1, 0)) * s2[None, None, None, None, :]
    w2m = w2m.reshape(27, planes, planes)
    w2m = jnp.pad(w2m, ((0, 0), (0, Cp1 - planes), (0, Cp1 - planes)))
    w2m = w2m.astype(jnp.bfloat16)
    b2p = jnp.pad(b2, (0, Cp1 - planes)).reshape(1, Cp1).astype(jnp.float32)

    w3m = jnp.transpose(w3[:, :, 0, 0, 0], (1, 0)) * s3[None, :]
    w3m = jnp.pad(w3m, ((0, Cp1 - planes), (0, Cp3 - cout))).astype(jnp.bfloat16)
    b3p = jnp.pad(b3, (0, Cp3 - cout)).reshape(1, Cp3).astype(jnp.float32)

    # channels-last, channel-padded, spatially zero-padded by 1 (W padded to 8k)
    xcl = jnp.transpose(x_ncdhw, (0, 2, 3, 4, 1)).astype(jnp.float32)
    xp = jnp.pad(xcl, ((0, 0), (1, 1), (1, 1), (1, Wp - W - 1), (0, Cp_in - Cin)))
    xp = xp.reshape(N, Mp, Cp_in)

    # interior mask (1 at valid voxels of the padded volume, 0 on the halo)
    dd = jnp.arange(Dp).reshape(Dp, 1, 1)
    hh = jnp.arange(Hp).reshape(1, Hp, 1)
    ww = jnp.arange(Wp).reshape(1, 1, Wp)
    interior = ((dd >= 1) & (dd <= D) & (hh >= 1) & (hh <= H)
                & (ww >= 1) & (ww <= W))
    mask = interior.astype(jnp.float32).reshape(Mp, 1)

    kern = functools.partial(_bottleneck_kernel, D=D, H=H, W=W, Wp=Wp)
    out = pl.pallas_call(
        kern,
        out_shape=jax.ShapeDtypeStruct((N, M, Cp3), jnp.float32),
        grid=(N,),
        in_specs=[
            pl.BlockSpec((1, Mp, Cp_in), lambda n: (n, 0, 0)),   # padded x
            pl.BlockSpec((Mp, 1), lambda n: (0, 0)),             # interior mask
            pl.BlockSpec((Cp_in, Cp1), lambda n: (0, 0)),        # w1 (scale folded)
            pl.BlockSpec((1, Cp1), lambda n: (0, 0)),            # b1
            pl.BlockSpec((27, Cp1, Cp1), lambda n: (0, 0, 0)),   # w2 taps
            pl.BlockSpec((1, Cp1), lambda n: (0, 0)),            # b2
            pl.BlockSpec((Cp1, Cp3), lambda n: (0, 0)),          # w3
            pl.BlockSpec((1, Cp3), lambda n: (0, 0)),            # b3
        ],
        out_specs=pl.BlockSpec((1, M, Cp3), lambda n: (n, 0, 0)),
        compiler_params=pltpu.CompilerParams(
            dimension_semantics=("parallel",),
            vmem_limit_bytes=32 * 1024 * 1024),
    )(xp, mask, w1m, b1p, w2m, b2p, w3m, b3p)

    out = out.reshape(N, D, H, W, Cp3)[..., :cout]
    return jnp.transpose(out, (0, 4, 1, 2, 3))                   # back to NCDHW


# --------------------------- pure-JAX reference ------------------------------

def reference_forward(x, params):
    def conv(a, w, pad):
        return lax.conv_general_dilated(
            a, w, window_strides=(1, 1, 1), padding=[(pad, pad)] * 3,
            dimension_numbers=("NCDHW", "OIDHW", "NCDHW"))

    def bn(a, p):
        g, b, m, v = p
        scale = g / jnp.sqrt(v + EPS)
        shift = b - m * scale
        return a * scale[None, :, None, None, None] + shift[None, :, None, None, None]

    out = jax.nn.relu(bn(conv(x, params["conv1_w"], 0), params["bn1"]))
    out = jax.nn.relu(bn(conv(out, params["conv2_w"], 1), params["bn2"]))
    out = bn(conv(out, params["conv3_w"], 0), params["bn3"])
    return jax.nn.relu(out + x)


# --------------------------------- main --------------------------------------

def make_params(key, in_planes, planes):
    ks = jax.random.split(key, 16)

    def bn_init(k, c):
        k0, k1, k2, k3 = jax.random.split(k, 4)
        gamma = jax.random.uniform(k0, (c,), jnp.float32, 0.5, 1.5)
        beta = jax.random.normal(k1, (c,), jnp.float32) * 0.1
        mean = jax.random.normal(k2, (c,), jnp.float32) * 0.1
        var = jax.random.uniform(k3, (c,), jnp.float32, 0.5, 1.5)
        return (gamma, beta, mean, var)

    return {
        "conv1_w": jax.random.normal(ks[0], (planes, in_planes, 1, 1, 1), jnp.float32) * 0.1,
        "bn1": bn_init(ks[1], planes),
        "conv2_w": jax.random.normal(ks[2], (planes, planes, 3, 3, 3), jnp.float32) * 0.1,
        "bn2": bn_init(ks[3], planes),
        "conv3_w": jax.random.normal(ks[4], (planes * 4, planes, 1, 1, 1), jnp.float32) * 0.1,
        "bn3": bn_init(ks[5], planes * 4),
    }


if __name__ == "__main__":
    key = jax.random.PRNGKey(0)
    k_x, k_p = jax.random.split(key)

    # Small shapes consistent with the module: residual add requires in_planes == planes*4.
    N, in_planes, planes, D, H, W = 2, 16, 4, 8, 8, 8
    x = jax.random.normal(k_x, (N, in_planes, D, H, W), jnp.float32)
    params = make_params(k_p, in_planes, planes)

    fwd = jax.jit(bottleneck_forward)
    out = jax.block_until_ready(fwd(x, params))
    ref = jax.block_until_ready(reference_forward(x, params))

    assert out.shape == (N, planes * 4, D, H, W)
    max_err = jnp.max(jnp.abs(out - ref))
    # bf16 MXU inputs -> relaxed tolerance vs. the f32 reference
    assert jnp.allclose(out, ref, atol=2e-2, rtol=2e-2), f"max abs err {max_err}"

    print("KERNEL_OK")
</pallas_src>

<mosaic_0001>
module attributes {stable_mosaic.version = 11 : i64} {
  func.func @_bottleneck_kernel(%arg0: i32, %arg1: memref<1x1600x128xf32, #tpu.memory_space<vmem>>, %arg2: memref<1600x1xf32, #tpu.memory_space<vmem>>, %arg3: memref<128x128xbf16, #tpu.memory_space<vmem>>, %arg4: memref<1x128xf32, #tpu.memory_space<vmem>>, %arg5: memref<27x128x128xbf16, #tpu.memory_space<vmem>>, %arg6: memref<1x128xf32, #tpu.memory_space<vmem>>, %arg7: memref<128x128xbf16, #tpu.memory_space<vmem>>, %arg8: memref<1x128xf32, #tpu.memory_space<vmem>>, %arg9: memref<1x512x128xf32, #tpu.memory_space<vmem>>) attributes {dimension_semantics = [#tpu.dimension_semantics<parallel>], iteration_bounds = array<i64: 2>, scalar_prefetch = 0 : i64, scratch_operands = 0 : i64, tpu.core_type = #tpu.core_type<tc>, window_params = [{transform_indices = @transform_0, window_bounds = array<i64: 1, 1600, 128>}, {pipeline_mode = #tpu.pipeline_mode<synchronous>, transform_indices = @transform_1, window_bounds = array<i64: 1600, 1>}, {pipeline_mode = #tpu.pipeline_mode<synchronous>, transform_indices = @transform_2, window_bounds = array<i64: 128, 128>}, {pipeline_mode = #tpu.pipeline_mode<synchronous>, transform_indices = @transform_3, window_bounds = array<i64: 1, 128>}, {pipeline_mode = #tpu.pipeline_mode<synchronous>, transform_indices = @transform_4, window_bounds = array<i64: 27, 128, 128>}, {pipeline_mode = #tpu.pipeline_mode<synchronous>, transform_indices = @transform_5, window_bounds = array<i64: 1, 128>}, {pipeline_mode = #tpu.pipeline_mode<synchronous>, transform_indices = @transform_6, window_bounds = array<i64: 128, 128>}, {pipeline_mode = #tpu.pipeline_mode<synchronous>, transform_indices = @transform_7, window_bounds = array<i64: 1, 128>}, {transform_indices = @transform_8, window_bounds = array<i64: 1, 512, 128>}]} {
    %c0 = arith.constant 0 : index
    %c0_0 = arith.constant 0 : index
    %c0_1 = arith.constant 0 : index
    %0 = vector.load %arg1[%c0, %c0_0, %c0_1] : memref<1x1600x128xf32, #tpu.memory_space<vmem>>, vector<1x1600x128xf32>
    %1 = vector.shape_cast %0 : vector<1x1600x128xf32> to vector<1600x128xf32>
    %2 = arith.truncf %1 : vector<1600x128xf32> to vector<1600x128xbf16>
    %c0_2 = arith.constant 0 : index
    %c0_3 = arith.constant 0 : index
    %3 = vector.load %arg3[%c0_2, %c0_3] : memref<128x128xbf16, #tpu.memory_space<vmem>>, vector<128x128xbf16>
    %cst = arith.constant dense<0.000000e+00> : vector<1600x128xf32>
    %4 = tpu.matmul %2, %3, %cst {dimension_numbers = #tpu.dot_dimension_numbers<[1], [0], [0], [1], [0, 0, 1, 1], [], []>} : vector<1600x128xbf16>, vector<128x128xbf16>, vector<1600x128xf32> -> vector<1600x128xf32>
    %c0_4 = arith.constant 0 : index
    %c0_5 = arith.constant 0 : index
    %5 = vector.load %arg4[%c0_4, %c0_5] : memref<1x128xf32, #tpu.memory_space<vmem>>, vector<1x128xf32>
    %6 = vector.broadcast %5 : vector<1x128xf32> to vector<1600x128xf32>
    %7 = arith.addf %4, %6 : vector<1600x128xf32>
    %cst_6 = arith.constant 0.000000e+00 : f32
    %8 = vector.broadcast %cst_6 : f32 to vector<1600x128xf32>
    %9 = arith.maximumf %7, %8 : vector<1600x128xf32>
    %c0_7 = arith.constant 0 : index
    %c0_8 = arith.constant 0 : index
    %10 = vector.load %arg2[%c0_7, %c0_8] : memref<1600x1xf32, #tpu.memory_space<vmem>>, vector<1600x1xf32>
    %11 = vector.broadcast %10 : vector<1600x1xf32> to vector<1600x128xf32>
    %12 = arith.mulf %9, %11 : vector<1600x128xf32>
    %13 = vector.shape_cast %12 : vector<1600x128xf32> to vector<10x10x16x128xf32>
    %cst_9 = arith.constant 0.000000e+00 : f32
    %14 = vector.broadcast %cst_9 : f32 to vector<512x128xf32>
    %15 = vector.extract_strided_slice %13 {offsets = [0, 0, 0, 0], sizes = [8, 8, 8, 128], strides = [1, 1, 1, 1]} : vector<10x10x16x128xf32> to vector<8x8x8x128xf32>
    %16 = vector.shape_cast %15 : vector<8x8x8x128xf32> to vector<512x128xf32>
    %17 = arith.truncf %16 : vector<512x128xf32> to vector<512x128xbf16>
    %c0_10 = arith.constant 0 : index
    %c0_11 = arith.constant 0 : index
    %c0_12 = arith.constant 0 : index
    %18 = vector.load %arg5[%c0_10, %c0_11, %c0_12] : memref<27x128x128xbf16, #tpu.memory_space<vmem>>, vector<1x128x128xbf16>
    %19 = vector.shape_cast %18 : vector<1x128x128xbf16> to vector<128x128xbf16>
    %cst_13 = arith.constant dense<0.000000e+00> : vector<512x128xf32>
    %20 = tpu.matmul %17, %19, %cst_13 {dimension_numbers = #tpu.dot_dimension_numbers<[1], [0], [0], [1], [0, 0, 1, 1], [], []>} : vector<512x128xbf16>, vector<128x128xbf16>, vector<512x128xf32> -> vector<512x128xf32>
    %21 = arith.addf %14, %20 : vector<512x128xf32>
    %22 = vector.extract_strided_slice %13 {offsets = [0, 0, 1, 0], sizes = [8, 8, 8, 128], strides = [1, 1, 1, 1]} : vector<10x10x16x128xf32> to vector<8x8x8x128xf32>
    %23 = vector.shape_cast %22 : vector<8x8x8x128xf32> to vector<512x128xf32>
    %24 = arith.truncf %23 : vector<512x128xf32> to vector<512x128xbf16>
    %c1 = arith.constant 1 : index
    %c0_14 = arith.constant 0 : index
    %c0_15 = arith.constant 0 : index
    %25 = vector.load %arg5[%c1, %c0_14, %c0_15] : memref<27x128x128xbf16, #tpu.memory_space<vmem>>, vector<1x128x128xbf16>
    %26 = vector.shape_cast %25 : vector<1x128x128xbf16> to vector<128x128xbf16>
    %cst_16 = arith.constant dense<0.000000e+00> : vector<512x128xf32>
    %27 = tpu.matmul %24, %26, %cst_16 {dimension_numbers = #tpu.dot_dimension_numbers<[1], [0], [0], [1], [0, 0, 1, 1], [], []>} : vector<512x128xbf16>, vector<128x128xbf16>, vector<512x128xf32> -> vector<512x128xf32>
    %28 = arith.addf %21, %27 : vector<512x128xf32>
    %29 = vector.extract_strided_slice %13 {offsets = [0, 0, 2, 0], sizes = [8, 8, 8, 128], strides = [1, 1, 1, 1]} : vector<10x10x16x128xf32> to vector<8x8x8x128xf32>
    %30 = vector.shape_cast %29 : vector<8x8x8x128xf32> to vector<512x128xf32>
    %31 = arith.truncf %30 : vector<512x128xf32> to vector<512x128xbf16>
    %c2 = arith.constant 2 : index
    %c0_17 = arith.constant 0 : index
    %c0_18 = arith.constant 0 : index
    %32 = vector.load %arg5[%c2, %c0_17, %c0_18] : memref<27x128x128xbf16, #tpu.memory_space<vmem>>, vector<1x128x128xbf16>
    %33 = vector.shape_cast %32 : vector<1x128x128xbf16> to vector<128x128xbf16>
    %cst_19 = arith.constant dense<0.000000e+00> : vector<512x128xf32>
    %34 = tpu.matmul %31, %33, %cst_19 {dimension_numbers = #tpu.dot_dimension_numbers<[1], [0], [0], [1], [0, 0, 1, 1], [], []>} : vector<512x128xbf16>, vector<128x128xbf16>, vector<512x128xf32> -> vector<512x128xf32>
    %35 = arith.addf %28, %34 : vector<512x128xf32>
    %36 = vector.extract_strided_slice %13 {offsets = [0, 1, 0, 0], sizes = [8, 8, 8, 128], strides = [1, 1, 1, 1]} : vector<10x10x16x128xf32> to vector<8x8x8x128xf32>
    %37 = vector.shape_cast %36 : vector<8x8x8x128xf32> to vector<512x128xf32>
    %38 = arith.truncf %37 : vector<512x128xf32> to vector<512x128xbf16>
    %c3 = arith.constant 3 : index
    %c0_20 = arith.constant 0 : index
    %c0_21 = arith.constant 0 : index
    %39 = vector.load %arg5[%c3, %c0_20, %c0_21] : memref<27x128x128xbf16, #tpu.memory_space<vmem>>, vector<1x128x128xbf16>
    %40 = vector.shape_cast %39 : vector<1x128x128xbf16> to vector<128x128xbf16>
    %cst_22 = arith.constant dense<0.000000e+00> : vector<512x128xf32>
    %41 = tpu.matmul %38, %40, %cst_22 {dimension_numbers = #tpu.dot_dimension_numbers<[1], [0], [0], [1], [0, 0, 1, 1], [], []>} : vector<512x128xbf16>, vector<128x128xbf16>, vector<512x128xf32> -> vector<512x128xf32>
    %42 = arith.addf %35, %41 : vector<512x128xf32>
    %43 = vector.extract_strided_slice %13 {offsets = [0, 1, 1, 0], sizes = [8, 8, 8, 128], strides = [1, 1, 1, 1]} : vector<10x10x16x128xf32> to vector<8x8x8x128xf32>
    %44 = vector.shape_cast %43 : vector<8x8x8x128xf32> to vector<512x128xf32>
    %45 = arith.truncf %44 : vector<512x128xf32> to vector<512x128xbf16>
    %c4 = arith.constant 4 : index
    %c0_23 = arith.constant 0 : index
    %c0_24 = arith.constant 0 : index
    %46 = vector.load %arg5[%c4, %c0_23, %c0_24] : memref<27x128x128xbf16, #tpu.memory_space<vmem>>, vector<1x128x128xbf16>
    %47 = vector.shape_cast %46 : vector<1x128x128xbf16> to vector<128x128xbf16>
    %cst_25 = arith.constant dense<0.000000e+00> : vector<512x128xf32>
    %48 = tpu.matmul %45, %47, %cst_25 {dimension_numbers = #tpu.dot_dimension_numbers<[1], [0], [0], [1], [0, 0, 1, 1], [], []>} : vector<512x128xbf16>, vector<128x128xbf16>, vector<512x128xf32> -> vector<512x128xf32>
    %49 = arith.addf %42, %48 : vector<512x128xf32>
    %50 = vector.extract_strided_slice %13 {offsets = [0, 1, 2, 0], sizes = [8, 8, 8, 128], strides = [1, 1, 1, 1]} : vector<10x10x16x128xf32> to vector<8x8x8x128xf32>
    %51 = vector.shape_cast %50 : vector<8x8x8x128xf32> to vector<512x128xf32>
    %52 = arith.truncf %51 : vector<512x128xf32> to vector<512x128xbf16>
    %c5 = arith.constant 5 : index
    %c0_26 = arith.constant 0 : index
    %c0_27 = arith.constant 0 : index
    %53 = vector.load %arg5[%c5, %c0_26, %c0_27] : memref<27x128x128xbf16, #tpu.memory_space<vmem>>, vector<1x128x128xbf16>
    %54 = vector.shape_cast %53 : vector<1x128x128xbf16> to vector<128x128xbf16>
    %cst_28 = arith.constant dense<0.000000e+00> : vector<512x128xf32>
    %55 = tpu.matmul %52, %54, %cst_28 {dimension_numbers = #tpu.dot_dimension_numbers<[1], [0], [0], [1], [0, 0, 1, 1], [], []>} : vector<512x128xbf16>, vector<128x128xbf16>, vector<512x128xf32> -> vector<512x128xf32>
    %56 = arith.addf %49, %55 : vector<512x128xf32>
    %57 = vector.extract_strided_slice %13 {offsets = [0, 2, 0, 0], sizes = [8, 8, 8, 128], strides = [1, 1, 1, 1]} : vector<10x10x16x128xf32> to vector<8x8x8x128xf32>
    %58 = vector.shape_cast %57 : vector<8x8x8x128xf32> to vector<512x128xf32>
    %59 = arith.truncf %58 : vector<512x128xf32> to vector<512x128xbf16>
    %c6 = arith.constant 6 : index
    %c0_29 = arith.constant 0 : index
    %c0_30 = arith.constant 0 : index
    %60 = vector.load %arg5[%c6, %c0_29, %c0_30] : memref<27x128x128xbf16, #tpu.memory_space<vmem>>, vector<1x128x128xbf16>
    %61 = vector.shape_cast %60 : vector<1x128x128xbf16> to vector<128x128xbf16>
    %cst_31 = arith.constant dense<0.000000e+00> : vector<512x128xf32>
    %62 = tpu.matmul %59, %61, %cst_31 {dimension_numbers = #tpu.dot_dimension_numbers<[1], [0], [0], [1], [0, 0, 1, 1], [], []>} : vector<512x128xbf16>, vector<128x128xbf16>, vector<512x128xf32> -> vector<512x128xf32>
    %63 = arith.addf %56, %62 : vector<512x128xf32>
    %64 = vector.extract_strided_slice %13 {offsets = [0, 2, 1, 0], sizes = [8, 8, 8, 128], strides = [1, 1, 1, 1]} : vector<10x10x16x128xf32> to vector<8x8x8x128xf32>
    %65 = vector.shape_cast %64 : vector<8x8x8x128xf32> to vector<512x128xf32>
    %66 = arith.truncf %65 : vector<512x128xf32> to vector<512x128xbf16>
    %c7 = arith.constant 7 : index
    %c0_32 = arith.constant 0 : index
    %c0_33 = arith.constant 0 : index
    %67 = vector.load %arg5[%c7, %c0_32, %c0_33] : memref<27x128x128xbf16, #tpu.memory_space<vmem>>, vector<1x128x128xbf16>
    %68 = vector.shape_cast %67 : vector<1x128x128xbf16> to vector<128x128xbf16>
    %cst_34 = arith.constant dense<0.000000e+00> : vector<512x128xf32>
    %69 = tpu.matmul %66, %68, %cst_34 {dimension_numbers = #tpu.dot_dimension_numbers<[1], [0], [0], [1], [0, 0, 1, 1], [], []>} : vector<512x128xbf16>, vector<128x128xbf16>, vector<512x128xf32> -> vector<512x128xf32>
    %70 = arith.addf %63, %69 : vector<512x128xf32>
    %71 = vector.extract_strided_slice %13 {offsets = [0, 2, 2, 0], sizes = [8, 8, 8, 128], strides = [1, 1, 1, 1]} : vector<10x10x16x128xf32> to vector<8x8x8x128xf32>
    %72 = vector.shape_cast %71 : vector<8x8x8x128xf32> to vector<512x128xf32>
    %73 = arith.truncf %72 : vector<512x128xf32> to vector<512x128xbf16>
    %c8 = arith.constant 8 : index
    %c0_35 = arith.constant 0 : index
    %c0_36 = arith.constant 0 : index
    %74 = vector.load %arg5[%c8, %c0_35, %c0_36] : memref<27x128x128xbf16, #tpu.memory_space<vmem>>, vector<1x128x128xbf16>
    %75 = vector.shape_cast %74 : vector<1x128x128xbf16> to vector<128x128xbf16>
    %cst_37 = arith.constant dense<0.000000e+00> : vector<512x128xf32>
    %76 = tpu.matmul %73, %75, %cst_37 {dimension_numbers = #tpu.dot_dimension_numbers<[1], [0], [0], [1], [0, 0, 1, 1], [], []>} : vector<512x128xbf16>, vector<128x128xbf16>, vector<512x128xf32> -> vector<512x128xf32>
    %77 = arith.addf %70, %76 : vector<512x128xf32>
    %78 = vector.extract_strided_slice %13 {offsets = [1, 0, 0, 0], sizes = [8, 8, 8, 128], strides = [1, 1, 1, 1]} : vector<10x10x16x128xf32> to vector<8x8x8x128xf32>
    %79 = vector.shape_cast %78 : vector<8x8x8x128xf32> to vector<512x128xf32>
    %80 = arith.truncf %79 : vector<512x128xf32> to vector<512x128xbf16>
    %c9 = arith.constant 9 : index
    %c0_38 = arith.constant 0 : index
    %c0_39 = arith.constant 0 : index
    %81 = vector.load %arg5[%c9, %c0_38, %c0_39] : memref<27x128x128xbf16, #tpu.memory_space<vmem>>, vector<1x128x128xbf16>
    %82 = vector.shape_cast %81 : vector<1x128x128xbf16> to vector<128x128xbf16>
    %cst_40 = arith.constant dense<0.000000e+00> : vector<512x128xf32>
    %83 = tpu.matmul %80, %82, %cst_40 {dimension_numbers = #tpu.dot_dimension_numbers<[1], [0], [0], [1], [0, 0, 1, 1], [], []>} : vector<512x128xbf16>, vector<128x128xbf16>, vector<512x128xf32> -> vector<512x128xf32>
    %84 = arith.addf %77, %83 : vector<512x128xf32>
    %85 = vector.extract_strided_slice %13 {offsets = [1, 0, 1, 0], sizes = [8, 8, 8, 128], strides = [1, 1, 1, 1]} : vector<10x10x16x128xf32> to vector<8x8x8x128xf32>
    %86 = vector.shape_cast %85 : vector<8x8x8x128xf32> to vector<512x128xf32>
    %87 = arith.truncf %86 : vector<512x128xf32> to vector<512x128xbf16>
    %c10 = arith.constant 10 : index
    %c0_41 = arith.constant 0 : index
    %c0_42 = arith.constant 0 : index
    %88 = vector.load %arg5[%c10, %c0_41, %c0_42] : memref<27x128x128xbf16, #tpu.memory_space<vmem>>, vector<1x128x128xbf16>
    %89 = vector.shape_cast %88 : vector<1x128x128xbf16> to vector<128x128xbf16>
    %cst_43 = arith.constant dense<0.000000e+00> : vector<512x128xf32>
    %90 = tpu.matmul %87, %89, %cst_43 {dimension_numbers = #tpu.dot_dimension_numbers<[1], [0], [0], [1], [0, 0, 1, 1], [], []>} : vector<512x128xbf16>, vector<128x128xbf16>, vector<512x128xf32> -> vector<512x128xf32>
    %91 = arith.addf %84, %90 : vector<512x128xf32>
    %92 = vector.extract_strided_slice %13 {offsets = [1, 0, 2, 0], sizes = [8, 8, 8, 128], strides = [1, 1, 1, 1]} : vector<10x10x16x128xf32> to vector<8x8x8x128xf32>
    %93 = vector.shape_cast %92 : vector<8x8x8x128xf32> to vector<512x128xf32>
    %94 = arith.truncf %93 : vector<512x128xf32> to vector<512x128xbf16>
    %c11 = arith.constant 11 : index
    %c0_44 = arith.constant 0 : index
    %c0_45 = arith.constant 0 : index
    %95 = vector.load %arg5[%c11, %c0_44, %c0_45] : memref<27x128x128xbf16, #tpu.memory_space<vmem>>, vector<1x128x128xbf16>
    %96 = vector.shape_cast %95 : vector<1x128x128xbf16> to vector<128x128xbf16>
    %cst_46 = arith.constant dense<0.000000e+00> : vector<512x128xf32>
    %97 = tpu.matmul %94, %96, %cst_46 {dimension_numbers = #tpu.dot_dimension_numbers<[1], [0], [0], [1], [0, 0, 1, 1], [], []>} : vector<512x128xbf16>, vector<128x128xbf16>, vector<512x128xf32> -> vector<512x128xf32>
    %98 = arith.addf %91, %97 : vector<512x128xf32>
    %99 = vector.extract_strided_slice %13 {offsets = [1, 1, 0, 0], sizes = [8, 8, 8, 128], strides = [1, 1, 1, 1]} : vector<10x10x16x128xf32> to vector<8x8x8x128xf32>
    %100 = vector.shape_cast %99 : vector<8x8x8x128xf32> to vector<512x128xf32>
    %101 = arith.truncf %100 : vector<512x128xf32> to vector<512x128xbf16>
    %c12 = arith.constant 12 : index
    %c0_47 = arith.constant 0 : index
    %c0_48 = arith.constant 0 : index
    %102 = vector.load %arg5[%c12, %c0_47, %c0_48] : memref<27x128x128xbf16, #tpu.memory_space<vmem>>, vector<1x128x128xbf16>
    %103 = vector.shape_cast %102 : vector<1x128x128xbf16> to vector<128x128xbf16>
    %cst_49 = arith.constant dense<0.000000e+00> : vector<512x128xf32>
    %104 = tpu.matmul %101, %103, %cst_49 {dimension_numbers = #tpu.dot_dimension_numbers<[1], [0], [0], [1], [0, 0, 1, 1], [], []>} : vector<512x128xbf16>, vector<128x128xbf16>, vector<512x128xf32> -> vector<512x128xf32>
    %105 = arith.addf %98, %104 : vector<512x128xf32>
    %106 = vector.extract_strided_slice %13 {offsets = [1, 1, 1, 0], sizes = [8, 8, 8, 128], strides = [1, 1, 1, 1]} : vector<10x10x16x128xf32> to vector<8x8x8x128xf32>
    %107 = vector.shape_cast %106 : vector<8x8x8x128xf32> to vector<512x128xf32>
    %108 = arith.truncf %107 : vector<512x128xf32> to vector<512x128xbf16>
    %c13 = arith.constant 13 : index
    %c0_50 = arith.constant 0 : index
    %c0_51 = arith.constant 0 : index
    %109 = vector.load %arg5[%c13, %c0_50, %c0_51] : memref<27x128x128xbf16, #tpu.memory_space<vmem>>, vector<1x128x128xbf16>
    %110 = vector.shape_cast %109 : vector<1x128x128xbf16> to vector<128x128xbf16>
    %cst_52 = arith.constant dense<0.000000e+00> : vector<512x128xf32>
    %111 = tpu.matmul %108, %110, %cst_52 {dimension_numbers = #tpu.dot_dimension_numbers<[1], [0], [0], [1], [0, 0, 1, 1], [], []>} : vector<512x128xbf16>, vector<128x128xbf16>, vector<512x128xf32> -> vector<512x128xf32>
    %112 = arith.addf %105, %111 : vector<512x128xf32>
    %113 = vector.extract_strided_slice %13 {offsets = [1, 1, 2, 0], sizes = [8, 8, 8, 128], strides = [1, 1, 1, 1]} : vector<10x10x16x128xf32> to vector<8x8x8x128xf32>
    %114 = vector.shape_cast %113 : vector<8x8x8x128xf32> to vector<512x128xf32>
    %115 = arith.truncf %114 : vector<512x128xf32> to vector<512x128xbf16>
    %c14 = arith.constant 14 : index
    %c0_53 = arith.constant 0 : index
    %c0_54 = arith.constant 0 : index
    %116 = vector.load %arg5[%c14, %c0_53, %c0_54] : memref<27x128x128xbf16, #tpu.memory_space<vmem>>, vector<1x128x128xbf16>
    %117 = vector.shape_cast %116 : vector<1x128x128xbf16> to vector<128x128xbf16>
    %cst_55 = arith.constant dense<0.000000e+00> : vector<512x128xf32>
    %118 = tpu.matmul %115, %117, %cst_55 {dimension_numbers = #tpu.dot_dimension_numbers<[1], [0], [0], [1], [0, 0, 1, 1], [], []>} : vector<512x128xbf16>, vector<128x128xbf16>, vector<512x128xf32> -> vector<512x128xf32>
    %119 = arith.addf %112, %118 : vector<512x128xf32>
    %120 = vector.extract_strided_slice %13 {offsets = [1, 2, 0, 0], sizes = [8, 8, 8, 128], strides = [1, 1, 1, 1]} : vector<10x10x16x128xf32> to vector<8x8x8x128xf32>
    %121 = vector.shape_cast %120 : vector<8x8x8x128xf32> to vector<512x128xf32>
    %122 = arith.truncf %121 : vector<512x128xf32> to vector<512x128xbf16>
    %c15 = arith.constant 15 : index
    %c0_56 = arith.constant 0 : index
    %c0_57 = arith.constant 0 : index
    %123 = vector.load %arg5[%c15, %c0_56, %c0_57] : memref<27x128x128xbf16, #tpu.memory_space<vmem>>, vector<1x128x128xbf16>
    %124 = vector.shape_cast %123 : vector<1x128x128xbf16> to vector<128x128xbf16>
    %cst_58 = arith.constant dense<0.000000e+00> : vector<512x128xf32>
    %125 = tpu.matmul %122, %124, %cst_58 {dimension_numbers = #tpu.dot_dimension_numbers<[1], [0], [0], [1], [0, 0, 1, 1], [], []>} : vector<512x128xbf16>, vector<128x128xbf16>, vector<512x128xf32> -> vector<512x128xf32>
    %126 = arith.addf %119, %125 : vector<512x128xf32>
    %127 = vector.extract_strided_slice %13 {offsets = [1, 2, 1, 0], sizes = [8, 8, 8, 128], strides = [1, 1, 1, 1]} : vector<10x10x16x128xf32> to vector<8x8x8x128xf32>
    %128 = vector.shape_cast %127 : vector<8x8x8x128xf32> to vector<512x128xf32>
    %129 = arith.truncf %128 : vector<512x128xf32> to vector<512x128xbf16>
    %c16 = arith.constant 16 : index
    %c0_59 = arith.constant 0 : index
    %c0_60 = arith.constant 0 : index
    %130 = vector.load %arg5[%c16, %c0_59, %c0_60] : memref<27x128x128xbf16, #tpu.memory_space<vmem>>, vector<1x128x128xbf16>
    %131 = vector.shape_cast %130 : vector<1x128x128xbf16> to vector<128x128xbf16>
    %cst_61 = arith.constant dense<0.000000e+00> : vector<512x128xf32>
    %132 = tpu.matmul %129, %131, %cst_61 {dimension_numbers = #tpu.dot_dimension_numbers<[1], [0], [0], [1], [0, 0, 1, 1], [], []>} : vector<512x128xbf16>, vector<128x128xbf16>, vector<512x128xf32> -> vector<512x128xf32>
    %133 = arith.addf %126, %132 : vector<512x128xf32>
    %134 = vector.extract_strided_slice %13 {offsets = [1, 2, 2, 0], sizes = [8, 8, 8, 128], strides = [1, 1, 1, 1]} : vector<10x10x16x128xf32> to vector<8x8x8x128xf32>
    %135 = vector.shape_cast %134 : vector<8x8x8x128xf32> to vector<512x128xf32>
    %136 = arith.truncf %135 : vector<512x128xf32> to vector<512x128xbf16>
    %c17 = arith.constant 17 : index
    %c0_62 = arith.constant 0 : index
    %c0_63 = arith.constant 0 : index
    %137 = vector.load %arg5[%c17, %c0_62, %c0_63] : memref<27x128x128xbf16, #tpu.memory_space<vmem>>, vector<1x128x128xbf16>
    %138 = vector.shape_cast %137 : vector<1x128x128xbf16> to vector<128x128xbf16>
    %cst_64 = arith.constant dense<0.000000e+00> : vector<512x128xf32>
    %139 = tpu.matmul %136, %138, %cst_64 {dimension_numbers = #tpu.dot_dimension_numbers<[1], [0], [0], [1], [0, 0, 1, 1], [], []>} : vector<512x128xbf16>, vector<128x128xbf16>, vector<512x128xf32> -> vector<512x128xf32>
    %140 = arith.addf %133, %139 : vector<512x128xf32>
    %141 = vector.extract_strided_slice %13 {offsets = [2, 0, 0, 0], sizes = [8, 8, 8, 128], strides = [1, 1, 1, 1]} : vector<10x10x16x128xf32> to vector<8x8x8x128xf32>
    %142 = vector.shape_cast %141 : vector<8x8x8x128xf32> to vector<512x128xf32>
    %143 = arith.truncf %142 : vector<512x128xf32> to vector<512x128xbf16>
    %c18 = arith.constant 18 : index
    %c0_65 = arith.constant 0 : index
    %c0_66 = arith.constant 0 : index
    %144 = vector.load %arg5[%c18, %c0_65, %c0_66] : memref<27x128x128xbf16, #tpu.memory_space<vmem>>, vector<1x128x128xbf16>
    %145 = vector.shape_cast %144 : vector<1x128x128xbf16> to vector<128x128xbf16>
    %cst_67 = arith.constant dense<0.000000e+00> : vector<512x128xf32>
    %146 = tpu.matmul %143, %145, %cst_67 {dimension_numbers = #tpu.dot_dimension_numbers<[1], [0], [0], [1], [0, 0, 1, 1], [], []>} : vector<512x128xbf16>, vector<128x128xbf16>, vector<512x128xf32> -> vector<512x128xf32>
    %147 = arith.addf %140, %146 : vector<512x128xf32>
    %148 = vector.extract_strided_slice %13 {offsets = [2, 0, 1, 0], sizes = [8, 8, 8, 128], strides = [1, 1, 1, 1]} : vector<10x10x16x128xf32> to vector<8x8x8x128xf32>
    %149 = vector.shape_cast %148 : vector<8x8x8x128xf32> to vector<512x128xf32>
    %150 = arith.truncf %149 : vector<512x128xf32> to vector<512x128xbf16>
    %c19 = arith.constant 19 : index
    %c0_68 = arith.constant 0 : index
    %c0_69 = arith.constant 0 : index
    %151 = vector.load %arg5[%c19, %c0_68, %c0_69] : memref<27x128x128xbf16, #tpu.memory_space<vmem>>, vector<1x128x128xbf16>
    %152 = vector.shape_cast %151 : vector<1x128x128xbf16> to vector<128x128xbf16>
    %cst_70 = arith.constant dense<0.000000e+00> : vector<512x128xf32>
    %153 = tpu.matmul %150, %152, %cst_70 {dimension_numbers = #tpu.dot_dimension_numbers<[1], [0], [0], [1], [0, 0, 1, 1], [], []>} : vector<512x128xbf16>, vector<128x128xbf16>, vector<512x128xf32> -> vector<512x128xf32>
    %154 = arith.addf %147, %153 : vector<512x128xf32>
    %155 = vector.extract_strided_slice %13 {offsets = [2, 0, 2, 0], sizes = [8, 8, 8, 128], strides = [1, 1, 1, 1]} : vector<10x10x16x128xf32> to vector<8x8x8x128xf32>
    %156 = vector.shape_cast %155 : vector<8x8x8x128xf32> to vector<512x128xf32>
    %157 = arith.truncf %156 : vector<512x128xf32> to vector<512x128xbf16>
    %c20 = arith.constant 20 : index
    %c0_71 = arith.constant 0 : index
    %c0_72 = arith.constant 0 : index
    %158 = vector.load %arg5[%c20, %c0_71, %c0_72] : memref<27x128x128xbf16, #tpu.memory_space<vmem>>, vector<1x128x128xbf16>
    %159 = vector.shape_cast %158 : vector<1x128x128xbf16> to vector<128x128xbf16>
    %cst_73 = arith.constant dense<0.000000e+00> : vector<512x128xf32>
    %160 = tpu.matmul %157, %159, %cst_73 {dimension_numbers = #tpu.dot_dimension_numbers<[1], [0], [0], [1], [0, 0, 1, 1], [], []>} : vector<512x128xbf16>, vector<128x128xbf16>, vector<512x128xf32> -> vector<512x128xf32>
    %161 = arith.addf %154, %160 : vector<512x128xf32>
    %162 = vector.extract_strided_slice %13 {offsets = [2, 1, 0, 0], sizes = [8, 8, 8, 128], strides = [1, 1, 1, 1]} : vector<10x10x16x128xf32> to vector<8x8x8x128xf32>
    %163 = vector.shape_cast %162 : vector<8x8x8x128xf32> to vector<512x128xf32>
    %164 = arith.truncf %163 : vector<512x128xf32> to vector<512x128xbf16>
    %c21 = arith.constant 21 : index
    %c0_74 = arith.constant 0 : index
    %c0_75 = arith.constant 0 : index
    %165 = vector.load %arg5[%c21, %c0_74, %c0_75] : memref<27x128x128xbf16, #tpu.memory_space<vmem>>, vector<1x128x128xbf16>
    %166 = vector.shape_cast %165 : vector<1x128x128xbf16> to vector<128x128xbf16>
    %cst_76 = arith.constant dense<0.000000e+00> : vector<512x128xf32>
    %167 = tpu.matmul %164, %166, %cst_76 {dimension_numbers = #tpu.dot_dimension_numbers<[1], [0], [0], [1], [0, 0, 1, 1], [], []>} : vector<512x128xbf16>, vector<128x128xbf16>, vector<512x128xf32> -> vector<512x128xf32>
    %168 = arith.addf %161, %167 : vector<512x128xf32>
    %169 = vector.extract_strided_slice %13 {offsets = [2, 1, 1, 0], sizes = [8, 8, 8, 128], strides = [1, 1, 1, 1]} : vector<10x10x16x128xf32> to vector<8x8x8x128xf32>
    %170 = vector.shape_cast %169 : vector<8x8x8x128xf32> to vector<512x128xf32>
    %171 = arith.truncf %170 : vector<512x128xf32> to vector<512x128xbf16>
    %c22 = arith.constant 22 : index
    %c0_77 = arith.constant 0 : index
    %c0_78 = arith.constant 0 : index
    %172 = vector.load %arg5[%c22, %c0_77, %c0_78] : memref<27x128x128xbf16, #tpu.memory_space<vmem>>, vector<1x128x128xbf16>
    %173 = vector.shape_cast %172 : vector<1x128x128xbf16> to vector<128x128xbf16>
    %cst_79 = arith.constant dense<0.000000e+00> : vector<512x128xf32>
    %174 = tpu.matmul %171, %173, %cst_79 {dimension_numbers = #tpu.dot_dimension_numbers<[1], [0], [0], [1], [0, 0, 1, 1], [], []>} : vector<512x128xbf16>, vector<128x128xbf16>, vector<512x128xf32> -> vector<512x128xf32>
    %175 = arith.addf %168, %174 : vector<512x128xf32>
    %176 = vector.extract_strided_slice %13 {offsets = [2, 1, 2, 0], sizes = [8, 8, 8, 128], strides = [1, 1, 1, 1]} : vector<10x10x16x128xf32> to vector<8x8x8x128xf32>
    %177 = vector.shape_cast %176 : vector<8x8x8x128xf32> to vector<512x128xf32>
    %178 = arith.truncf %177 : vector<512x128xf32> to vector<512x128xbf16>
    %c23 = arith.constant 23 : index
    %c0_80 = arith.constant 0 : index
    %c0_81 = arith.constant 0 : index
    %179 = vector.load %arg5[%c23, %c0_80, %c0_81] : memref<27x128x128xbf16, #tpu.memory_space<vmem>>, vector<1x128x128xbf16>
    %180 = vector.shape_cast %179 : vector<1x128x128xbf16> to vector<128x128xbf16>
    %cst_82 = arith.constant dense<0.000000e+00> : vector<512x128xf32>
    %181 = tpu.matmul %178, %180, %cst_82 {dimension_numbers = #tpu.dot_dimension_numbers<[1], [0], [0], [1], [0, 0, 1, 1], [], []>} : vector<512x128xbf16>, vector<128x128xbf16>, vector<512x128xf32> -> vector<512x128xf32>
    %182 = arith.addf %175, %181 : vector<512x128xf32>
    %183 = vector.extract_strided_slice %13 {offsets = [2, 2, 0, 0], sizes = [8, 8, 8, 128], strides = [1, 1, 1, 1]} : vector<10x10x16x128xf32> to vector<8x8x8x128xf32>
    %184 = vector.shape_cast %183 : vector<8x8x8x128xf32> to vector<512x128xf32>
    %185 = arith.truncf %184 : vector<512x128xf32> to vector<512x128xbf16>
    %c24 = arith.constant 24 : index
    %c0_83 = arith.constant 0 : index
    %c0_84 = arith.constant 0 : index
    %186 = vector.load %arg5[%c24, %c0_83, %c0_84] : memref<27x128x128xbf16, #tpu.memory_space<vmem>>, vector<1x128x128xbf16>
    %187 = vector.shape_cast %186 : vector<1x128x128xbf16> to vector<128x128xbf16>
    %cst_85 = arith.constant dense<0.000000e+00> : vector<512x128xf32>
    %188 = tpu.matmul %185, %187, %cst_85 {dimension_numbers = #tpu.dot_dimension_numbers<[1], [0], [0], [1], [0, 0, 1, 1], [], []>} : vector<512x128xbf16>, vector<128x128xbf16>, vector<512x128xf32> -> vector<512x128xf32>
    %189 = arith.addf %182, %188 : vector<512x128xf32>
    %190 = vector.extract_strided_slice %13 {offsets = [2, 2, 1, 0], sizes = [8, 8, 8, 128], strides = [1, 1, 1, 1]} : vector<10x10x16x128xf32> to vector<8x8x8x128xf32>
    %191 = vector.shape_cast %190 : vector<8x8x8x128xf32> to vector<512x128xf32>
    %192 = arith.truncf %191 : vector<512x128xf32> to vector<512x128xbf16>
    %c25 = arith.constant 25 : index
    %c0_86 = arith.constant 0 : index
    %c0_87 = arith.constant 0 : index
    %193 = vector.load %arg5[%c25, %c0_86, %c0_87] : memref<27x128x128xbf16, #tpu.memory_space<vmem>>, vector<1x128x128xbf16>
    %194 = vector.shape_cast %193 : vector<1x128x128xbf16> to vector<128x128xbf16>
    %cst_88 = arith.constant dense<0.000000e+00> : vector<512x128xf32>
    %195 = tpu.matmul %192, %194, %cst_88 {dimension_numbers = #tpu.dot_dimension_numbers<[1], [0], [0], [1], [0, 0, 1, 1], [], []>} : vector<512x128xbf16>, vector<128x128xbf16>, vector<512x128xf32> -> vector<512x128xf32>
    %196 = arith.addf %189, %195 : vector<512x128xf32>
    %197 = vector.extract_strided_slice %13 {offsets = [2, 2, 2, 0], sizes = [8, 8, 8, 128], strides = [1, 1, 1, 1]} : vector<10x10x16x128xf32> to vector<8x8x8x128xf32>
    %198 = vector.shape_cast %197 : vector<8x8x8x128xf32> to vector<512x128xf32>
    %199 = arith.truncf %198 : vector<512x128xf32> to vector<512x128xbf16>
    %c26 = arith.constant 26 : index
    %c0_89 = arith.constant 0 : index
    %c0_90 = arith.constant 0 : index
    %200 = vector.load %arg5[%c26, %c0_89, %c0_90] : memref<27x128x128xbf16, #tpu.memory_space<vmem>>, vector<1x128x128xbf16>
    %201 = vector.shape_cast %200 : vector<1x128x128xbf16> to vector<128x128xbf16>
    %cst_91 = arith.constant dense<0.000000e+00> : vector<512x128xf32>
    %202 = tpu.matmul %199, %201, %cst_91 {dimension_numbers = #tpu.dot_dimension_numbers<[1], [0], [0], [1], [0, 0, 1, 1], [], []>} : vector<512x128xbf16>, vector<128x128xbf16>, vector<512x128xf32> -> vector<512x128xf32>
    %203 = arith.addf %196, %202 : vector<512x128xf32>
    %c0_92 = arith.constant 0 : index
    %c0_93 = arith.constant 0 : index
    %204 = vector.load %arg6[%c0_92, %c0_93] : memref<1x128xf32, #tpu.memory_space<vmem>>, vector<1x128xf32>
    %205 = vector.broadcast %204 : vector<1x128xf32> to vector<512x128xf32>
    %206 = arith.addf %203, %205 : vector<512x128xf32>
    %cst_94 = arith.constant 0.000000e+00 : f32
    %207 = vector.broadcast %cst_94 : f32 to vector<512x128xf32>
    %208 = arith.maximumf %206, %207 : vector<512x128xf32>
    %209 = arith.truncf %208 : vector<512x128xf32> to vector<512x128xbf16>
    %c0_95 = arith.constant 0 : index
    %c0_96 = arith.constant 0 : index
    %210 = vector.load %arg7[%c0_95, %c0_96] : memref<128x128xbf16, #tpu.memory_space<vmem>>, vector<128x128xbf16>
    %cst_97 = arith.constant dense<0.000000e+00> : vector<512x128xf32>
    %211 = tpu.matmul %209, %210, %cst_97 {dimension_numbers = #tpu.dot_dimension_numbers<[1], [0], [0], [1], [0, 0, 1, 1], [], []>} : vector<512x128xbf16>, vector<128x128xbf16>, vector<512x128xf32> -> vector<512x128xf32>
    %c0_98 = arith.constant 0 : index
    %c0_99 = arith.constant 0 : index
    %212 = vector.load %arg8[%c0_98, %c0_99] : memref<1x128xf32, #tpu.memory_space<vmem>>, vector<1x128xf32>
    %213 = vector.broadcast %212 : vector<1x128xf32> to vector<512x128xf32>
    %214 = arith.addf %211, %213 : vector<512x128xf32>
    %215 = vector.shape_cast %1 : vector<1600x128xf32> to vector<10x10x16x128xf32>
    %216 = vector.extract_strided_slice %215 {offsets = [1, 1, 1, 0], sizes = [8, 8, 8, 128], strides = [1, 1, 1, 1]} : vector<10x10x16x128xf32> to vector<8x8x8x128xf32>
    %217 = vector.shape_cast %216 : vector<8x8x8x128xf32> to vector<512x128xf32>
    %218 = arith.addf %214, %217 : vector<512x128xf32>
    %cst_100 = arith.constant 0.000000e+00 : f32
    %219 = vector.broadcast %cst_100 : f32 to vector<512x128xf32>
    %220 = arith.maximumf %218, %219 : vector<512x128xf32>
    %c0_101 = arith.constant 0 : index
    %c0_102 = arith.constant 0 : index
    %c0_103 = arith.constant 0 : index
    %221 = vector.load %arg9[%c0_101, %c0_102, %c0_103] : memref<1x512x128xf32, #tpu.memory_space<vmem>>, vector<1x512x128xf32>
    %222 = vector.shape_cast %221 : vector<1x512x128xf32> to vector<512x128xf32>
    %223 = vector.shape_cast %220 : vector<512x128xf32> to vector<1x512x128xf32>
    tpu.vector_store %arg9[%c0_101, %c0_102, %c0_103], %223 {strides = array<i32>} : memref<1x512x128xf32, #tpu.memory_space<vmem>>, vector<1x512x128xf32>,
    return
  }
  func.func @transform_0(%arg0: i32) -> (i32, i32, i32) {
    %c0_i32 = arith.constant 0 : i32
    %c0_i32_0 = arith.constant 0 : i32
    %c0_i32_1 = arith.constant 0 : i32
    return %arg0, %c0_i32, %c0_i32_0 : i32, i32, i32
  }
  func.func @transform_1(%arg0: i32) -> (i32, i32) {
    %c0_i32 = arith.constant 0 : i32
    %c0_i32_0 = arith.constant 0 : i32
    %c0_i32_1 = arith.constant 0 : i32
    return %c0_i32, %c0_i32_0 : i32, i32
  }
  func.func @transform_2(%arg0: i32) -> (i32, i32) {
    %c0_i32 = arith.constant 0 : i32
    %c0_i32_0 = arith.constant 0 : i32
    %c0_i32_1 = arith.constant 0 : i32
    return %c0_i32, %c0_i32_0 : i32, i32
  }
  func.func @transform_3(%arg0: i32) -> (i32, i32) {
    %c0_i32 = arith.constant 0 : i32
    %c0_i32_0 = arith.constant 0 : i32
    %c0_i32_1 = arith.constant 0 : i32
    return %c0_i32, %c0_i32_0 : i32, i32
  }
  func.func @transform_4(%arg0: i32) -> (i32, i32, i32) {
    %c0_i32 = arith.constant 0 : i32
    %c0_i32_0 = arith.constant 0 : i32
    %c0_i32_1 = arith.constant 0 : i32
    %c0_i32_2 = arith.constant 0 : i32
    return %c0_i32, %c0_i32_0, %c0_i32_1 : i32, i32, i32
  }
  func.func @transform_5(%arg0: i32) -> (i32, i32) {
    %c0_i32 = arith.constant 0 : i32
    %c0_i32_0 = arith.constant 0 : i32
    %c0_i32_1 = arith.constant 0 : i32
    return %c0_i32, %c0_i32_0 : i32, i32
  }
  func.func @transform_6(%arg0: i32) -> (i32, i32) {
    %c0_i32 = arith.constant 0 : i32
    %c0_i32_0 = arith.constant 0 : i32
    %c0_i32_1 = arith.constant 0 : i32
    return %c0_i32, %c0_i32_0 : i32, i32
  }
  func.func @transform_7(%arg0: i32) -> (i32, i32) {
    %c0_i32 = arith.constant 0 : i32
    %c0_i32_0 = arith.constant 0 : i32
    %c0_i32_1 = arith.constant 0 : i32
    return %c0_i32, %c0_i32_0 : i32, i32
  }
  func.func @transform_8(%arg0: i32) -> (i32, i32, i32) {
    %c0_i32 = arith.constant 0 : i32
    %c0_i32_0 = arith.constant 0 : i32
    %c0_i32_1 = arith.constant 0 : i32
    return %arg0, %c0_i32, %c0_i32_0 : i32, i32, i32
  }
}

</mosaic_0001>

<llo_original>
// kernel: bottleneck_forward.1
$region0: #{bottleneck_forward.1}
  #allocation0 [shape = 'u32[]', space=smem, size = 0x4, offset = 0x4, fixed_abs, tag = 'smem constant byte address 0x4 - core index']
  #allocation1 [shape = 'u32[72,128]{1,0:T(1,128)}', space=vmem, size = 0x9000, scoped, tag = 'internal scratch']
  %s0 = inlined_call_operand.vmem [shape: f32[2,1600,128], index: 0, kind: input, shape index: {}]
  %s1 = inlined_call_operand.vmem [shape: f32[1600,1], index: 1, kind: input, shape index: {}]
  %s2 = inlined_call_operand.vmem [shape: bf16[128,128], index: 2, kind: input, shape index: {}]
  %s3 = inlined_call_operand.vmem [shape: f32[1,128], index: 3, kind: input, shape index: {}]
  %s4 = inlined_call_operand.vmem [shape: bf16[27,128,128], index: 4, kind: input, shape index: {}]
  %s5 = inlined_call_operand.vmem [shape: f32[1,128], index: 5, kind: input, shape index: {}]
  %s6 = inlined_call_operand.vmem [shape: bf16[128,128], index: 6, kind: input, shape index: {}]
  %s7 = inlined_call_operand.vmem [shape: f32[1,128], index: 7, kind: input, shape index: {}]
  %s8 = inlined_call_operand.vmem [shape: f32[2,512,128], index: 8, kind: output, shape index: {}]
  %s9 = sld [smem:[#allocation0]]
  $region65: #{bottleneck_forward.1} parent=0
    _
  %s11 = ssub.s32 1, %s9
  %s12 = scalar_select 0, %s11, %s9
  loop: start=0, step=1, limit=4
  $region2: #{bottleneck_forward.1} parent=0 // loop_pre_header
    _
  $region3: #{bottleneck_forward.1} parent=0 // loop_header
    %s14 = sphi 0, %s18
    %p15 = scmp.ge.s32.totalorder %s14, 4
    %s24 = sphi 0, %s26
    %s27 = sphi 0, %s24
    %s28 = sphi 0, %s27
    %s44 = sphi 0, %s28
    %s48 = sphi 0, %s48
    %s50 = sphi 0, %s48
    %s51 = sphi 0, %s50
    %s65 = sphi 0, %s51
    %s69 = sphi 0, %s69
    %s71 = sphi 0, %s69
    %s72 = sphi 0, %s71
    %s86 = sphi 0, %s72
    %s90 = sphi 0, %s90
    %s92 = sphi 0, %s90
    %s93 = sphi 0, %s92
    %s107 = sphi 0, %s93
    %s111 = sphi 0, %s111
    %s113 = sphi 0, %s111
    %s114 = sphi 0, %s113
    %s128 = sphi 0, %s114
    %s132 = sphi 0, %s132
    %s134 = sphi 0, %s132
    %s135 = sphi 0, %s134
    %s149 = sphi 0, %s135
    %s153 = sphi 0, %s153
    %s155 = sphi 0, %s153
    %s156 = sphi 0, %s155
    %s170 = sphi 0, %s156
    %s174 = sphi 0, %s174
    %s176 = sphi 0, %s174
    %s177 = sphi 0, %s176
    %s191 = sphi 0, %s177
    %s197 = sphi 0, %s199
    %s200 = sphi 0, %s197
    %s201 = sphi 0, %s200
    %s217 = sphi 0, %s201
  $region4: #{bottleneck_forward.1} parent=0 // loop_header_branch
    %17 = sbr.rel (%p15) target = $region8
  $region5: #{bottleneck_forward.1} parent=0 // loop_body
    %s19 = ssub.s32 %s14, 1
    %s20 = ssub.s32 %s14, 2
    %s21 = sadd.s32 %s14, 1
    %s22 = ssub.s32 %s14, %s21
    %p23 = scmp.eq.s32.totalorder %s22, 0
    %s25 = sadd.s32 %s24, 1
    %s26 = scalar_select %p23, %s24, %s25
    %p29 = pneg %p23
    %p30 = scmp.eq.s32.totalorder %s14, 1
    %p31 = por %p29, %p30
    %p32 = scmp.ne.s32.totalorder %s24, %s27
    %p33 = scmp.eq.s32.totalorder %s14, 0
    %p34 = por %p32, %p33
    %p35 = scmp.ne.s32.totalorder %s24, %s27
    %p36 = scmp.eq.s32.totalorder %s19, 1
    %p37 = por %p35, %p36
    %p38 = scmp.ne.s32.totalorder %s27, %s28
    %p39 = scmp.eq.s32.totalorder %s19, 0
    %p40 = por %p38, %p39
    %p41 = scmp.ne.s32.totalorder %s27, %s28
    %p42 = scmp.eq.s32.totalorder %s20, 1
    %p43 = por %p41, %p42
    %p45 = scmp.ne.s32.totalorder %s28, %s44
    %p46 = scmp.eq.s32.totalorder %s20, 0
    %p47 = por %p45, %p46
    %s49 = sadd.s32 %s48, 1
    %p52 = scmp.eq.s32.totalorder %s14, 1
    %p53 = scmp.ne.s32.totalorder %s48, %s50
    %p54 = scmp.eq.s32.totalorder %s14, 0
    %p55 = por %p53, %p54
    %p56 = scmp.ne.s32.totalorder %s48, %s50
    %p57 = scmp.eq.s32.totalorder %s19, 1
    %p58 = por %p56, %p57
    %p59 = scmp.ne.s32.totalorder %s50, %s51
    %p60 = scmp.eq.s32.totalorder %s19, 0
    %p61 = por %p59, %p60
    %p62 = scmp.ne.s32.totalorder %s50, %s51
    %p63 = scmp.eq.s32.totalorder %s20, 1
    %p64 = por %p62, %p63
    %p66 = scmp.ne.s32.totalorder %s51, %s65
    %p67 = scmp.eq.s32.totalorder %s20, 0
    %p68 = por %p66, %p67
    %s70 = sadd.s32 %s69, 1
    %p73 = scmp.eq.s32.totalorder %s14, 1
    %p74 = scmp.ne.s32.totalorder %s69, %s71
    %p75 = scmp.eq.s32.totalorder %s14, 0
    %p76 = por %p74, %p75
    %p77 = scmp.ne.s32.totalorder %s69, %s71
    %p78 = scmp.eq.s32.totalorder %s19, 1
    %p79 = por %p77, %p78
    %p80 = scmp.ne.s32.totalorder %s71, %s72
    %p81 = scmp.eq.s32.totalorder %s19, 0
    %p82 = por %p80, %p81
    %p83 = scmp.ne.s32.totalorder %s71, %s72
    %p84 = scmp.eq.s32.totalorder %s20, 1
    %p85 = por %p83, %p84
    %p87 = scmp.ne.s32.totalorder %s72, %s86
    %p88 = scmp.eq.s32.totalorder %s20, 0
    %p89 = por %p87, %p88
    %s91 = sadd.s32 %s90, 1
    %p94 = scmp.eq.s32.totalorder %s14, 1
    %p95 = scmp.ne.s32.totalorder %s90, %s92
    %p96 = scmp.eq.s32.totalorder %s14, 0
    %p97 = por %p95, %p96
    %p98 = scmp.ne.s32.totalorder %s90, %s92
    %p99 = scmp.eq.s32.totalorder %s19, 1
    %p100 = por %p98, %p99
    %p101 = scmp.ne.s32.totalorder %s92, %s93
    %p102 = scmp.eq.s32.totalorder %s19, 0
    %p103 = por %p101, %p102
    %p104 = scmp.ne.s32.totalorder %s92, %s93
    %p105 = scmp.eq.s32.totalorder %s20, 1
    %p106 = por %p104, %p105
    %p108 = scmp.ne.s32.totalorder %s93, %s107
    %p109 = scmp.eq.s32.totalorder %s20, 0
    %p110 = por %p108, %p109
    %s112 = sadd.s32 %s111, 1
    %p115 = scmp.eq.s32.totalorder %s14, 1
    %p116 = scmp.ne.s32.totalorder %s111, %s113
    %p117 = scmp.eq.s32.totalorder %s14, 0
    %p118 = por %p116, %p117
    %p119 = scmp.ne.s32.totalorder %s111, %s113
    %p120 = scmp.eq.s32.totalorder %s19, 1
    %p121 = por %p119, %p120
    %p122 = scmp.ne.s32.totalorder %s113, %s114
    %p123 = scmp.eq.s32.totalorder %s19, 0
    %p124 = por %p122, %p123
    %p125 = scmp.ne.s32.totalorder %s113, %s114
    %p126 = scmp.eq.s32.totalorder %s20, 1
    %p127 = por %p125, %p126
    %p129 = scmp.ne.s32.totalorder %s114, %s128
    %p130 = scmp.eq.s32.totalorder %s20, 0
    %p131 = por %p129, %p130
    %s133 = sadd.s32 %s132, 1
    %p136 = scmp.eq.s32.totalorder %s14, 1
    %p137 = scmp.ne.s32.totalorder %s132, %s134
    %p138 = scmp.eq.s32.totalorder %s14, 0
    %p139 = por %p137, %p138
    %p140 = scmp.ne.s32.totalorder %s132, %s134
    %p141 = scmp.eq.s32.totalorder %s19, 1
    %p142 = por %p140, %p141
    %p143 = scmp.ne.s32.totalorder %s134, %s135
    %p144 = scmp.eq.s32.totalorder %s19, 0
    %p145 = por %p143, %p144
    %p146 = scmp.ne.s32.totalorder %s134, %s135
    %p147 = scmp.eq.s32.totalorder %s20, 1
    %p148 = por %p146, %p147
    %p150 = scmp.ne.s32.totalorder %s135, %s149
    %p151 = scmp.eq.s32.totalorder %s20, 0
    %p152 = por %p150, %p151
    %s154 = sadd.s32 %s153, 1
    %p157 = scmp.eq.s32.totalorder %s14, 1
    %p158 = scmp.ne.s32.totalorder %s153, %s155
    %p159 = scmp.eq.s32.totalorder %s14, 0
    %p160 = por %p158, %p159
    %p161 = scmp.ne.s32.totalorder %s153, %s155
    %p162 = scmp.eq.s32.totalorder %s19, 1
    %p163 = por %p161, %p162
    %p164 = scmp.ne.s32.totalorder %s155, %s156
    %p165 = scmp.eq.s32.totalorder %s19, 0
    %p166 = por %p164, %p165
    %p167 = scmp.ne.s32.totalorder %s155, %s156
    %p168 = scmp.eq.s32.totalorder %s20, 1
    %p169 = por %p167, %p168
    %p171 = scmp.ne.s32.totalorder %s156, %s170
    %p172 = scmp.eq.s32.totalorder %s20, 0
    %p173 = por %p171, %p172
    %s175 = sadd.s32 %s174, 1
    %p178 = scmp.eq.s32.totalorder %s14, 1
    %p179 = scmp.ne.s32.totalorder %s174, %s176
    %p180 = scmp.eq.s32.totalorder %s14, 0
    %p181 = por %p179, %p180
    %p182 = scmp.ne.s32.totalorder %s174, %s176
    %p183 = scmp.eq.s32.totalorder %s19, 1
    %p184 = por %p182, %p183
    %p185 = scmp.ne.s32.totalorder %s176, %s177
    %p186 = scmp.eq.s32.totalorder %s19, 0
    %p187 = por %p185, %p186
    %p188 = scmp.ne.s32.totalorder %s176, %s177
    %p189 = scmp.eq.s32.totalorder %s20, 1
    %p190 = por %p188, %p189
    %p192 = scmp.ne.s32.totalorder %s177, %s191
    %p193 = scmp.eq.s32.totalorder %s20, 0
    %p194 = por %p192, %p193
    %s195 = ssub.s32 %s14, %s21
    %p196 = scmp.eq.s32.totalorder %s195, 0
    %s198 = sadd.s32 %s197, 1
    %s199 = scalar_select %p196, %s197, %s198
    %p202 = pneg %p196
    %p203 = scmp.eq.s32.totalorder %s14, 1
    %p204 = por %p202, %p203
    %p205 = scmp.ne.s32.totalorder %s197, %s200
    %p206 = scmp.eq.s32.totalorder %s14, 0
    %p207 = por %p205, %p206
    %p208 = scmp.ne.s32.totalorder %s197, %s200
    %p209 = scmp.eq.s32.totalorder %s19, 1
    %p210 = por %p208, %p209
    %p211 = scmp.ne.s32.totalorder %s200, %s201
    %p212 = scmp.eq.s32.totalorder %s19, 0
    %p213 = por %p211, %p212
    %p214 = scmp.ne.s32.totalorder %s200, %s201
    %p215 = scmp.eq.s32.totalorder %s20, 1
    %p216 = por %p214, %p215
    %p218 = scmp.ne.s32.totalorder %s201, %s217
    %p219 = scmp.eq.s32.totalorder %s20, 0
    %p220 = por %p218, %p219
    %p221 = scmp.le.s32.totalorder 1, %s14
    %p222 = scmp.lt.s32.totalorder %s14, 3
    %p223 = pnand %p221, %p222
    %p224 = pneg %p223
    // Predicated region
    $region9: #{bottleneck_forward.1} parent=5 // pred_check
      _
    $region10: #{bottleneck_forward.1} parent=5 // pred_check_branch
      %226 = sbr.rel (%p223) target = $region12
    $region11: #{bottleneck_forward.1} parent=5 // pred_region
      %s227 = ssub.s32 %s14, 1
      // Predicated region
      $region13: #{bottleneck_forward.1} parent=11 // pred_check
        %p228 = pneg %p61
      $region14: #{bottleneck_forward.1} parent=11 // pred_check_branch
        %230 = sbr.rel (%p228) target = $region16
      $region15: #{bottleneck_forward.1} parent=11 // pred_region
        _
      $region16: #{bottleneck_forward.1} parent=11 // pred_fallthru
        _
      // Predicated region
      $region17: #{bottleneck_forward.1} parent=11 // pred_check
        %p231 = pneg %p82
      $region18: #{bottleneck_forward.1} parent=11 // pred_check_branch
        %233 = sbr.rel (%p231) target = $region20
      $region19: #{bottleneck_forward.1} parent=11 // pred_region
        _
      $region20: #{bottleneck_forward.1} parent=11 // pred_fallthru
        _
      // Predicated region
      $region21: #{bottleneck_forward.1} parent=11 // pred_check
        %p234 = pneg %p103
      $region22: #{bottleneck_forward.1} parent=11 // pred_check_branch
        %236 = sbr.rel (%p234) target = $region24
      $region23: #{bottleneck_forward.1} parent=11 // pred_region
        _
      $region24: #{bottleneck_forward.1} parent=11 // pred_fallthru
        _
      // Predicated region
      $region25: #{bottleneck_forward.1} parent=11 // pred_check
        %p237 = pneg %p124
      $region26: #{bottleneck_forward.1} parent=11 // pred_check_branch
        %239 = sbr.rel (%p237) target = $region28
      $region27: #{bottleneck_forward.1} parent=11 // pred_region
        _
      $region28: #{bottleneck_forward.1} parent=11 // pred_fallthru
        _
      // Predicated region
      $region29: #{bottleneck_forward.1} parent=11 // pred_check
        %p240 = pneg %p145
      $region30: #{bottleneck_forward.1} parent=11 // pred_check_branch
        %242 = sbr.rel (%p240) target = $region32
      $region31: #{bottleneck_forward.1} parent=11 // pred_region
        _
      $region32: #{bottleneck_forward.1} parent=11 // pred_fallthru
        _
      // Predicated region
      $region33: #{bottleneck_forward.1} parent=11 // pred_check
        %p243 = pneg %p166
      $region34: #{bottleneck_forward.1} parent=11 // pred_check_branch
        %245 = sbr.rel (%p243) target = $region36
      $region35: #{bottleneck_forward.1} parent=11 // pred_region
        _
      $region36: #{bottleneck_forward.1} parent=11 // pred_fallthru
        _
      // Predicated region
      $region37: #{bottleneck_forward.1} parent=11 // pred_check
        %p246 = pneg %p187
      $region38: #{bottleneck_forward.1} parent=11 // pred_check_branch
        %248 = sbr.rel (%p246) target = $region40
      $region39: #{bottleneck_forward.1} parent=11 // pred_region
        _
      $region40: #{bottleneck_forward.1} parent=11 // pred_fallthru
        _
    $region12: #{bottleneck_forward.1} parent=5 // pred_fallthru
      _
    %p249 = scmp.lt.s32.totalorder %s14, 2
    // Predicated region
    $region41: #{bottleneck_forward.1} parent=5 // pred_check
      %p250 = pneg %p249
    $region42: #{bottleneck_forward.1} parent=5 // pred_check_branch
      %252 = sbr.rel (%p250) target = $region44
    $region43: #{bottleneck_forward.1} parent=5 // pred_region
      // Predicated region
      $region45: #{bottleneck_forward.1} parent=43 // pred_check
        %p253 = pneg %p34
      $region46: #{bottleneck_forward.1} parent=43 // pred_check_branch
        %255 = sbr.rel (%p253) target = $region48
      $region47: #{bottleneck_forward.1} parent=43 // pred_region
        %p256 = scmp.lt.s32.totalorder %s14, 1
        %s257 = scalar_select %p256, %s14, 1
        %s258 = smul.addr %s257, 200
        %s259 = smul.addr %s258, 8
        %s260 = scalar_lea.vmem %s0, %s259
      $region48: #{bottleneck_forward.1} parent=43 // pred_fallthru
        _
    $region44: #{bottleneck_forward.1} parent=5 // pred_fallthru
      _
    %p261 = scmp.le.s32.totalorder 1, %s14
    %p262 = scmp.lt.s32.totalorder %s14, 3
    %p263 = pnand %p261, %p262
    %p264 = pneg %p263
    // Predicated region
    $region49: #{bottleneck_forward.1} parent=5 // pred_check
      _
    $region50: #{bottleneck_forward.1} parent=5 // pred_check_branch
      %266 = sbr.rel (%p263) target = $region52
    $region51: #{bottleneck_forward.1} parent=5 // pred_region
      %s267 = ssub.s32 %s14, 1
      %p268 = scmp.lt.s32.totalorder %s19, 1
      %s269 = scalar_select %p268, %s19, 1
      %s270 = smul.addr %s269, 200
      %s271 = smul.addr %s270, 8
      %s272 = scalar_lea.vmem %s0, %s271
      %p273 = pneg %p40
      %p274 = pneg %p37
      %p275 = pneg %p61
      %p276 = pneg %p58
      %p277 = pneg %p82
      %p278 = pneg %p79
      %p279 = pneg %p103
      %p280 = pneg %p100
      %p281 = pneg %p124
      %p282 = pneg %p121
      %p283 = pneg %p145
      %p284 = pneg %p142
      %p285 = pneg %p166
      %p286 = pneg %p163
      %p287 = pneg %p187
      %p288 = pneg %p184
      %p289 = pneg %p213
      %p290 = pneg %p210
      %p291 = scmp.lt.s32.totalorder %s19, 1
      %s292 = scalar_select %p291, %s19, 1
      %s293 = smul.addr %s292, 64
      %s294 = smul.addr %s293, 8
      %s295 = scalar_lea.vmem %s8, %s294
      %p296 = scmp.lt.s32.totalorder %s19, 1
      %s297 = scalar_select %p296, %s19, 1
      %s298 = smul.addr %s297, 200
      %s299 = smul.addr %s298, 8
      %s300 = scalar_lea.vmem %s0, %s299
      %p301 = scmp.lt.s32.totalorder %s19, 1
      %s302 = scalar_select %p301, %s19, 1
      %s303 = smul.addr %s302, 64
      %s304 = smul.addr %s303, 8
      %s305 = scalar_lea.vmem %s8, %s304
      %v306 = vld [vmem:[%s300] sm:$0xff]
      %v307 = vld [vmem:[%s300 + $0x8] sm:$0xff]
      %v308 = vld [vmem:[%s300 + $0x10] sm:$0xff]
      %v309 = vld [vmem:[%s300 + $0x18] sm:$0xff]
      %v310 = vld [vmem:[%s300 + $0x20] sm:$0xff]
      %v311 = vld [vmem:[%s300 + $0x28] sm:$0xff]
      %v312 = vld [vmem:[%s300 + $0x30] sm:$0xff]
      %v313 = vld [vmem:[%s300 + $0x38] sm:$0xff]
      %v314 = vld [vmem:[%s300 + $0x40] sm:$0xff]
      %v315 = vld [vmem:[%s300 + $0x48] sm:$0xff]
      %v316 = vld [vmem:[%s300 + $0x50] sm:$0xff]
      %v317 = vld [vmem:[%s300 + $0x58] sm:$0xff]
      %v318 = vld [vmem:[%s300 + $0x60] sm:$0xff]
      %v319 = vld [vmem:[%s300 + $0x68] sm:$0xff]
      %v320 = vld [vmem:[%s300 + $0x70] sm:$0xff]
      %v321 = vld [vmem:[%s300 + $0x78] sm:$0xff]
      %v322 = vld [vmem:[%s300 + $0x80] sm:$0xff]
      %v323 = vld [vmem:[%s300 + $0x88] sm:$0xff]
      %v324 = vld [vmem:[%s300 + $0x90] sm:$0xff]
      %v325 = vld [vmem:[%s300 + $0x98] sm:$0xff]
      %v326 = vld [vmem:[%s300 + $0xa0] sm:$0xff]
      %v327 = vld [vmem:[%s300 + $0xa8] sm:$0xff]
      %v328 = vld [vmem:[%s300 + $0xb0] sm:$0xff]
      %v329 = vld [vmem:[%s300 + $0xb8] sm:$0xff]
      %v330 = vld [vmem:[%s300 + $0xc0] sm:$0xff]
      %v331 = vld [vmem:[%s300 + $0xc8] sm:$0xff]
      %v332 = vld [vmem:[%s300 + $0xd0] sm:$0xff]
      %v333 = vld [vmem:[%s300 + $0xd8] sm:$0xff]
      %v334 = vld [vmem:[%s300 + $0xe0] sm:$0xff]
      %v335 = vld [vmem:[%s300 + $0xe8] sm:$0xff]
      %v336 = vld [vmem:[%s300 + $0xf0] sm:$0xff]
      %v337 = vld [vmem:[%s300 + $0xf8] sm:$0xff]
      %v338 = vld [vmem:[%s300 + $0x100] sm:$0xff]
      %v339 = vld [vmem:[%s300 + $0x108] sm:$0xff]
      %v340 = vld [vmem:[%s300 + $0x110] sm:$0xff]
      %v341 = vld [vmem:[%s300 + $0x118] sm:$0xff]
      %v342 = vld [vmem:[%s300 + $0x120] sm:$0xff]
      %v343 = vld [vmem:[%s300 + $0x128] sm:$0xff]
      %v344 = vld [vmem:[%s300 + $0x130] sm:$0xff]
      %v345 = vld [vmem:[%s300 + $0x138] sm:$0xff]
      %v346 = vld [vmem:[%s300 + $0x140] sm:$0xff]
      %v347 = vld [vmem:[%s300 + $0x148] sm:$0xff]
      %v348 = vld [vmem:[%s300 + $0x150] sm:$0xff]
      %v349 = vld [vmem:[%s300 + $0x158] sm:$0xff]
      %v350 = vld [vmem:[%s300 + $0x160] sm:$0xff]
      %v351 = vld [vmem:[%s300 + $0x168] sm:$0xff]
      %v352 = vld [vmem:[%s300 + $0x170] sm:$0xff]
      %v353 = vld [vmem:[%s300 + $0x178] sm:$0xff]
      %v354 = vld [vmem:[%s300 + $0x180] sm:$0xff]
      %v355 = vld [vmem:[%s300 + $0x188] sm:$0xff]
      %v356 = vld [vmem:[%s300 + $0x190] sm:$0xff]
      %v357 = vld [vmem:[%s300 + $0x198] sm:$0xff]
      %v358 = vld [vmem:[%s300 + $0x1a0] sm:$0xff]
      %v359 = vld [vmem:[%s300 + $0x1a8] sm:$0xff]
      %v360 = vld [vmem:[%s300 + $0x1b0] sm:$0xff]
      %v361 = vld [vmem:[%s300 + $0x1b8] sm:$0xff]
      %v362 = vld [vmem:[%s300 + $0x1c0] sm:$0xff]
      %v363 = vld [vmem:[%s300 + $0x1c8] sm:$0xff]
      %v364 = vld [vmem:[%s300 + $0x1d0] sm:$0xff]
      %v365 = vld [vmem:[%s300 + $0x1d8] sm:$0xff]
      %v366 = vld [vmem:[%s300 + $0x1e0] sm:$0xff]
      %v367 = vld [vmem:[%s300 + $0x1e8] sm:$0xff]
      %v368 = vld [vmem:[%s300 + $0x1f0] sm:$0xff]
      %v369 = vld [vmem:[%s300 + $0x1f8] sm:$0xff]
      %v370 = vld [vmem:[%s300 + $0x200] sm:$0xff]
      %v371 = vld [vmem:[%s300 + $0x208] sm:$0xff]
      %v372 = vld [vmem:[%s300 + $0x210] sm:$0xff]
      %v373 = vld [vmem:[%s300 + $0x218] sm:$0xff]
      %v374 = vld [vmem:[%s300 + $0x220] sm:$0xff]
      %v375 = vld [vmem:[%s300 + $0x228] sm:$0xff]
      %v376 = vld [vmem:[%s300 + $0x230] sm:$0xff]
      %v377 = vld [vmem:[%s300 + $0x238] sm:$0xff]
      %v378 = vld [vmem:[%s300 + $0x240] sm:$0xff]
      %v379 = vld [vmem:[%s300 + $0x248] sm:$0xff]
      %v380 = vld [vmem:[%s300 + $0x250] sm:$0xff]
      %v381 = vld [vmem:[%s300 + $0x258] sm:$0xff]
      %v382 = vld [vmem:[%s300 + $0x260] sm:$0xff]
      %v383 = vld [vmem:[%s300 + $0x268] sm:$0xff]
      %v384 = vld [vmem:[%s300 + $0x270] sm:$0xff]
      %v385 = vld [vmem:[%s300 + $0x278] sm:$0xff]
      %v386 = vld [vmem:[%s300 + $0x280] sm:$0xff]
      %v387 = vld [vmem:[%s300 + $0x288] sm:$0xff]
      %v388 = vld [vmem:[%s300 + $0x290] sm:$0xff]
      %v389 = vld [vmem:[%s300 + $0x298] sm:$0xff]
      %v390 = vld [vmem:[%s300 + $0x2a0] sm:$0xff]
      %v391 = vld [vmem:[%s300 + $0x2a8] sm:$0xff]
      %v392 = vld [vmem:[%s300 + $0x2b0] sm:$0xff]
      %v393 = vld [vmem:[%s300 + $0x2b8] sm:$0xff]
      %v394 = vld [vmem:[%s300 + $0x2c0] sm:$0xff]
      %v395 = vld [vmem:[%s300 + $0x2c8] sm:$0xff]
      %v396 = vld [vmem:[%s300 + $0x2d0] sm:$0xff]
      %v397 = vld [vmem:[%s300 + $0x2d8] sm:$0xff]
      %v398 = vld [vmem:[%s300 + $0x2e0] sm:$0xff]
      %v399 = vld [vmem:[%s300 + $0x2e8] sm:$0xff]
      %v400 = vld [vmem:[%s300 + $0x2f0] sm:$0xff]
      %v401 = vld [vmem:[%s300 + $0x2f8] sm:$0xff]
      %v402 = vld [vmem:[%s300 + $0x300] sm:$0xff]
      %v403 = vld [vmem:[%s300 + $0x308] sm:$0xff]
      %v404 = vld [vmem:[%s300 + $0x310] sm:$0xff]
      %v405 = vld [vmem:[%s300 + $0x318] sm:$0xff]
      %v406 = vld [vmem:[%s300 + $0x320] sm:$0xff]
      %v407 = vld [vmem:[%s300 + $0x328] sm:$0xff]
      %v408 = vld [vmem:[%s300 + $0x330] sm:$0xff]
      %v409 = vld [vmem:[%s300 + $0x338] sm:$0xff]
      %v410 = vld [vmem:[%s300 + $0x340] sm:$0xff]
      %v411 = vld [vmem:[%s300 + $0x348] sm:$0xff]
      %v412 = vld [vmem:[%s300 + $0x350] sm:$0xff]
      %v413 = vld [vmem:[%s300 + $0x358] sm:$0xff]
      %v414 = vld [vmem:[%s300 + $0x360] sm:$0xff]
      %v415 = vld [vmem:[%s300 + $0x368] sm:$0xff]
      %v416 = vld [vmem:[%s300 + $0x370] sm:$0xff]
      %v417 = vld [vmem:[%s300 + $0x378] sm:$0xff]
      %v418 = vld [vmem:[%s300 + $0x380] sm:$0xff]
      %v419 = vld [vmem:[%s300 + $0x388] sm:$0xff]
      %v420 = vld [vmem:[%s300 + $0x390] sm:$0xff]
      %v421 = vld [vmem:[%s300 + $0x398] sm:$0xff]
      %v422 = vld [vmem:[%s300 + $0x3a0] sm:$0xff]
      %v423 = vld [vmem:[%s300 + $0x3a8] sm:$0xff]
      %v424 = vld [vmem:[%s300 + $0x3b0] sm:$0xff]
      %v425 = vld [vmem:[%s300 + $0x3b8] sm:$0xff]
      %v426 = vld [vmem:[%s300 + $0x3c0] sm:$0xff]
      %v427 = vld [vmem:[%s300 + $0x3c8] sm:$0xff]
      %v428 = vld [vmem:[%s300 + $0x3d0] sm:$0xff]
      %v429 = vld [vmem:[%s300 + $0x3d8] sm:$0xff]
      %v430 = vld [vmem:[%s300 + $0x3e0] sm:$0xff]
      %v431 = vld [vmem:[%s300 + $0x3e8] sm:$0xff]
      %v432 = vld [vmem:[%s300 + $0x3f0] sm:$0xff]
      %v433 = vld [vmem:[%s300 + $0x3f8] sm:$0xff]
      %v434 = vld [vmem:[%s300 + $0x400] sm:$0xff]
      %v435 = vld [vmem:[%s300 + $0x408] sm:$0xff]
      %v436 = vld [vmem:[%s300 + $0x410] sm:$0xff]
      %v437 = vld [vmem:[%s300 + $0x418] sm:$0xff]
      %v438 = vld [vmem:[%s300 + $0x420] sm:$0xff]
      %v439 = vld [vmem:[%s300 + $0x428] sm:$0xff]
      %v440 = vld [vmem:[%s300 + $0x430] sm:$0xff]
      %v441 = vld [vmem:[%s300 + $0x438] sm:$0xff]
      %v442 = vld [vmem:[%s300 + $0x440] sm:$0xff]
      %v443 = vld [vmem:[%s300 + $0x448] sm:$0xff]
      %v444 = vld [vmem:[%s300 + $0x450] sm:$0xff]
      %v445 = vld [vmem:[%s300 + $0x458] sm:$0xff]
      %v446 = vld [vmem:[%s300 + $0x460] sm:$0xff]
      %v447 = vld [vmem:[%s300 + $0x468] sm:$0xff]
      %v448 = vld [vmem:[%s300 + $0x470] sm:$0xff]
      %v449 = vld [vmem:[%s300 + $0x478] sm:$0xff]
      %v450 = vld [vmem:[%s300 + $0x480] sm:$0xff]
      %v451 = vld [vmem:[%s300 + $0x488] sm:$0xff]
      %v452 = vld [vmem:[%s300 + $0x490] sm:$0xff]
      %v453 = vld [vmem:[%s300 + $0x498] sm:$0xff]
      %v454 = vld [vmem:[%s300 + $0x4a0] sm:$0xff]
      %v455 = vld [vmem:[%s300 + $0x4a8] sm:$0xff]
      %v456 = vld [vmem:[%s300 + $0x4b0] sm:$0xff]
      %v457 = vld [vmem:[%s300 + $0x4b8] sm:$0xff]
      %v458 = vld [vmem:[%s300 + $0x4c0] sm:$0xff]
      %v459 = vld [vmem:[%s300 + $0x4c8] sm:$0xff]
      %v460 = vld [vmem:[%s300 + $0x4d0] sm:$0xff]
      %v461 = vld [vmem:[%s300 + $0x4d8] sm:$0xff]
      %v462 = vld [vmem:[%s300 + $0x4e0] sm:$0xff]
      %v463 = vld [vmem:[%s300 + $0x4e8] sm:$0xff]
      %v464 = vld [vmem:[%s300 + $0x4f0] sm:$0xff]
      %v465 = vld [vmem:[%s300 + $0x4f8] sm:$0xff]
      %v466 = vld [vmem:[%s300 + $0x500] sm:$0xff]
      %v467 = vld [vmem:[%s300 + $0x508] sm:$0xff]
      %v468 = vld [vmem:[%s300 + $0x510] sm:$0xff]
      %v469 = vld [vmem:[%s300 + $0x518] sm:$0xff]
      %v470 = vld [vmem:[%s300 + $0x520] sm:$0xff]
      %v471 = vld [vmem:[%s300 + $0x528] sm:$0xff]
      %v472 = vld [vmem:[%s300 + $0x530] sm:$0xff]
      %v473 = vld [vmem:[%s300 + $0x538] sm:$0xff]
      %v474 = vld [vmem:[%s300 + $0x540] sm:$0xff]
      %v475 = vld [vmem:[%s300 + $0x548] sm:$0xff]
      %v476 = vld [vmem:[%s300 + $0x550] sm:$0xff]
      %v477 = vld [vmem:[%s300 + $0x558] sm:$0xff]
      %v478 = vld [vmem:[%s300 + $0x560] sm:$0xff]
      %v479 = vld [vmem:[%s300 + $0x568] sm:$0xff]
      %v480 = vld [vmem:[%s300 + $0x570] sm:$0xff]
      %v481 = vld [vmem:[%s300 + $0x578] sm:$0xff]
      %v482 = vld [vmem:[%s300 + $0x580] sm:$0xff]
      %v483 = vld [vmem:[%s300 + $0x588] sm:$0xff]
      %v484 = vld [vmem:[%s300 + $0x590] sm:$0xff]
      %v485 = vld [vmem:[%s300 + $0x598] sm:$0xff]
      %v486 = vld [vmem:[%s300 + $0x5a0] sm:$0xff]
      %v487 = vld [vmem:[%s300 + $0x5a8] sm:$0xff]
      %v488 = vld [vmem:[%s300 + $0x5b0] sm:$0xff]
      %v489 = vld [vmem:[%s300 + $0x5b8] sm:$0xff]
      %v490 = vld [vmem:[%s300 + $0x5c0] sm:$0xff]
      %v491 = vld [vmem:[%s300 + $0x5c8] sm:$0xff]
      %v492 = vld [vmem:[%s300 + $0x5d0] sm:$0xff]
      %v493 = vld [vmem:[%s300 + $0x5d8] sm:$0xff]
      %v494 = vld [vmem:[%s300 + $0x5e0] sm:$0xff]
      %v495 = vld [vmem:[%s300 + $0x5e8] sm:$0xff]
      %v496 = vld [vmem:[%s300 + $0x5f0] sm:$0xff]
      %v497 = vld [vmem:[%s300 + $0x5f8] sm:$0xff]
      %v498 = vld [vmem:[%s300 + $0x600] sm:$0xff]
      %v499 = vld [vmem:[%s300 + $0x608] sm:$0xff]
      %v500 = vld [vmem:[%s300 + $0x610] sm:$0xff]
      %v501 = vld [vmem:[%s300 + $0x618] sm:$0xff]
      %v502 = vld [vmem:[%s300 + $0x620] sm:$0xff]
      %v503 = vld [vmem:[%s300 + $0x628] sm:$0xff]
      %v504 = vld [vmem:[%s300 + $0x630] sm:$0xff]
      %v505 = vld [vmem:[%s300 + $0x638] sm:$0xff]
      %v506 = vpack.c.bf16 %v307, %v306
      %v507 = vpack.c.bf16 %v309, %v308
      %v508 = vpack.c.bf16 %v311, %v310
      %v509 = vpack.c.bf16 %v313, %v312
      %v510 = vpack.c.bf16 %v315, %v314
      %v511 = vpack.c.bf16 %v317, %v316
      %v512 = vpack.c.bf16 %v319, %v318
      %v513 = vpack.c.bf16 %v321, %v320
      %v514 = vpack.c.bf16 %v323, %v322
      %v515 = vpack.c.bf16 %v325, %v324
      %v516 = vpack.c.bf16 %v327, %v326
      %v517 = vpack.c.bf16 %v329, %v328
      %v518 = vpack.c.bf16 %v331, %v330
      %v519 = vpack.c.bf16 %v333, %v332
      %v520 = vpack.c.bf16 %v335, %v334
      %v521 = vpack.c.bf16 %v337, %v336
      %v522 = vpack.c.bf16 %v339, %v338
      %v523 = vpack.c.bf16 %v341, %v340
      %v524 = vpack.c.bf16 %v343, %v342
      %v525 = vpack.c.bf16 %v345, %v344
      %v526 = vpack.c.bf16 %v347, %v346
      %v527 = vpack.c.bf16 %v349, %v348
      %v528 = vpack.c.bf16 %v351, %v350
      %v529 = vpack.c.bf16 %v353, %v352
      %v530 = vpack.c.bf16 %v355, %v354
      %v531 = vpack.c.bf16 %v357, %v356
      %v532 = vpack.c.bf16 %v359, %v358
      %v533 = vpack.c.bf16 %v361, %v360
      %v534 = vpack.c.bf16 %v363, %v362
      %v535 = vpack.c.bf16 %v365, %v364
      %v536 = vpack.c.bf16 %v367, %v366
      %v537 = vpack.c.bf16 %v369, %v368
      %v538 = vpack.c.bf16 %v371, %v370
      %v539 = vpack.c.bf16 %v373, %v372
      %v540 = vpack.c.bf16 %v375, %v374
      %v541 = vpack.c.bf16 %v377, %v376
      %v542 = vpack.c.bf16 %v379, %v378
      %v543 = vpack.c.bf16 %v381, %v380
      %v544 = vpack.c.bf16 %v383, %v382
      %v545 = vpack.c.bf16 %v385, %v384
      %v546 = vpack.c.bf16 %v387, %v386
      %v547 = vpack.c.bf16 %v389, %v388
      %v548 = vpack.c.bf16 %v391, %v390
      %v549 = vpack.c.bf16 %v393, %v392
      %v550 = vpack.c.bf16 %v395, %v394
      %v551 = vpack.c.bf16 %v397, %v396
      %v552 = vpack.c.bf16 %v399, %v398
      %v553 = vpack.c.bf16 %v401, %v400
      %v554 = vpack.c.bf16 %v403, %v402
      %v555 = vpack.c.bf16 %v405, %v404
      %v556 = vpack.c.bf16 %v407, %v406
      %v557 = vpack.c.bf16 %v409, %v408
      %v558 = vpack.c.bf16 %v411, %v410
      %v559 = vpack.c.bf16 %v413, %v412
      %v560 = vpack.c.bf16 %v415, %v414
      %v561 = vpack.c.bf16 %v417, %v416
      %v562 = vpack.c.bf16 %v419, %v418
      %v563 = vpack.c.bf16 %v421, %v420
      %v564 = vpack.c.bf16 %v423, %v422
      %v565 = vpack.c.bf16 %v425, %v424
      %v566 = vpack.c.bf16 %v427, %v426
      %v567 = vpack.c.bf16 %v429, %v428
      %v568 = vpack.c.bf16 %v431, %v430
      %v569 = vpack.c.bf16 %v433, %v432
      %v570 = vpack.c.bf16 %v435, %v434
      %v571 = vpack.c.bf16 %v437, %v436
      %v572 = vpack.c.bf16 %v439, %v438
      %v573 = vpack.c.bf16 %v441, %v440
      %v574 = vpack.c.bf16 %v443, %v442
      %v575 = vpack.c.bf16 %v445, %v444
      %v576 = vpack.c.bf16 %v447, %v446
      %v577 = vpack.c.bf16 %v449, %v448
      %v578 = vpack.c.bf16 %v451, %v450
      %v579 = vpack.c.bf16 %v453, %v452
      %v580 = vpack.c.bf16 %v455, %v454
      %v581 = vpack.c.bf16 %v457, %v456
      %v582 = vpack.c.bf16 %v459, %v458
      %v583 = vpack.c.bf16 %v461, %v460
      %v584 = vpack.c.bf16 %v463, %v462
      %v585 = vpack.c.bf16 %v465, %v464
      %v586 = vpack.c.bf16 %v467, %v466
      %v587 = vpack.c.bf16 %v469, %v468
      %v588 = vpack.c.bf16 %v471, %v470
      %v589 = vpack.c.bf16 %v473, %v472
      %v590 = vpack.c.bf16 %v475, %v474
      %v591 = vpack.c.bf16 %v477, %v476
      %v592 = vpack.c.bf16 %v479, %v478
      %v593 = vpack.c.bf16 %v481, %v480
      %v594 = vpack.c.bf16 %v483, %v482
      %v595 = vpack.c.bf16 %v485, %v484
      %v596 = vpack.c.bf16 %v487, %v486
      %v597 = vpack.c.bf16 %v489, %v488
      %v598 = vpack.c.bf16 %v491, %v490
      %v599 = vpack.c.bf16 %v493, %v492
      %v600 = vpack.c.bf16 %v495, %v494
      %v601 = vpack.c.bf16 %v497, %v496
      %v602 = vpack.c.bf16 %v499, %v498
      %v603 = vpack.c.bf16 %v501, %v500
      %v604 = vpack.c.bf16 %v503, %v502
      %v605 = vpack.c.bf16 %v505, %v504
      %v606 = vld [vmem:[%s2] sm:$0xf]
      %v607 = vld [vmem:[%s2 + $0x4] sm:$0xf]
      %v608 = vld [vmem:[%s2 + $0x8] sm:$0xf]
      %v609 = vld [vmem:[%s2 + $0xc] sm:$0xf]
      %v610 = vld [vmem:[%s2 + $0x10] sm:$0xf]
      %v611 = vld [vmem:[%s2 + $0x14] sm:$0xf]
      %v612 = vld [vmem:[%s2 + $0x18] sm:$0xf]
      %v613 = vld [vmem:[%s2 + $0x1c] sm:$0xf]
      %v614 = vld [vmem:[%s2 + $0x20] sm:$0xf]
      %v615 = vld [vmem:[%s2 + $0x24] sm:$0xf]
      %v616 = vld [vmem:[%s2 + $0x28] sm:$0xf]
      %v617 = vld [vmem:[%s2 + $0x2c] sm:$0xf]
      %v618 = vld [vmem:[%s2 + $0x30] sm:$0xf]
      %v619 = vld [vmem:[%s2 + $0x34] sm:$0xf]
      %v620 = vld [vmem:[%s2 + $0x38] sm:$0xf]
      %v621 = vld [vmem:[%s2 + $0x3c] sm:$0xf]
      %v622 = vld [vmem:[%s3] sm:$0x1]
      %v624 = vperm.slane %v622, 0
      %v642 = vunpack.c.l.b16 %v606
      %v643 = vunpack.c.l.b16 %v607
      %v644 = vunpack.c.l.b16 %v608
      %v645 = vunpack.c.l.b16 %v609
      %v646 = vunpack.c.l.b16 %v610
      %v647 = vunpack.c.l.b16 %v611
      %v648 = vunpack.c.l.b16 %v612
      %v649 = vunpack.c.l.b16 %v613
      %v650 = vunpack.c.l.b16 %v614
      %v651 = vunpack.c.l.b16 %v615
      %v652 = vunpack.c.l.b16 %v616
      %v653 = vunpack.c.l.b16 %v617
      %v654 = vunpack.c.l.b16 %v618
      %v655 = vunpack.c.l.b16 %v619
      %v656 = vunpack.c.l.b16 %v620
      %v657 = vunpack.c.l.b16 %v621
      %v658 = vpack.c.b16 %v643, %v642
      %v659 = vpack.c.b16 %v645, %v644
      %v660 = vpack.c.b16 %v647, %v646
      %v661 = vpack.c.b16 %v649, %v648
      %v662 = vpack.c.b16 %v651, %v650
      %v663 = vpack.c.b16 %v653, %v652
      %v664 = vpack.c.b16 %v655, %v654
      %v665 = vpack.c.b16 %v657, %v656
      %674 = vmatpush.bf16.msra.mxu0 %v665
      %675 = vmatpush.bf16.msra.mxu0 %v664
      %676 = vmatpush.bf16.msra.mxu0 %v663
      %677 = vmatpush.bf16.msra.mxu0 %v662
      %678 = vmatpush.bf16.msra.mxu0 %v661
      %679 = vmatpush.bf16.msra.mxu0 %v660
      %680 = vmatpush.bf16.msra.mxu0 %v659
      %681 = vmatpush.bf16.msra.mxu0 %v658
      %682 = vmatmul.bf16.gmra.mxu0 %v506
      %v683 = vpop.f32.mrf.mxu0
      %v684 = vadd.f32 %v624, %v683
      %v685 = vpop.f32.mrf.mxu0
      %v686 = vadd.f32 %v624, %v685
      %687 = vmatmul.bf16.gmra.mxu0 %v507
      %v688 = vpop.f32.mrf.mxu0
      %v689 = vadd.f32 %v624, %v688
      %v690 = vpop.f32.mrf.mxu0
      %v691 = vadd.f32 %v624, %v690
      %692 = vmatmul.bf16.gmra.mxu0 %v508
      %v693 = vpop.f32.mrf.mxu0
      %v694 = vadd.f32 %v624, %v693
      %v695 = vpop.f32.mrf.mxu0
      %v696 = vadd.f32 %v624, %v695
      %697 = vmatmul.bf16.gmra.mxu0 %v509
      %v698 = vpop.f32.mrf.mxu0
      %v699 = vadd.f32 %v624, %v698
      %v700 = vpop.f32.mrf.mxu0
      %v701 = vadd.f32 %v624, %v700
      %702 = vmatmul.bf16.gmra.mxu0 %v510
      %v703 = vpop.f32.mrf.mxu0
      %v704 = vadd.f32 %v624, %v703
      %v705 = vpop.f32.mrf.mxu0
      %v706 = vadd.f32 %v624, %v705
      %707 = vmatmul.bf16.gmra.mxu0 %v511
      %v708 = vpop.f32.mrf.mxu0
      %v709 = vadd.f32 %v624, %v708
      %v710 = vpop.f32.mrf.mxu0
      %v711 = vadd.f32 %v624, %v710
      %712 = vmatmul.bf16.gmra.mxu0 %v512
      %v713 = vpop.f32.mrf.mxu0
      %v714 = vadd.f32 %v624, %v713
      %v715 = vpop.f32.mrf.mxu0
      %v716 = vadd.f32 %v624, %v715
      %717 = vmatmul.bf16.gmra.mxu0 %v513
      %v718 = vpop.f32.mrf.mxu0
      %v719 = vadd.f32 %v624, %v718
      %v720 = vpop.f32.mrf.mxu0
      %v721 = vadd.f32 %v624, %v720
      %722 = vmatmul.bf16.gmra.mxu0 %v514
      %v723 = vpop.f32.mrf.mxu0
      %v724 = vadd.f32 %v624, %v723
      %v725 = vpop.f32.mrf.mxu0
      %v726 = vadd.f32 %v624, %v725
      %727 = vmatmul.bf16.gmra.mxu0 %v515
      %v728 = vpop.f32.mrf.mxu0
      %v729 = vadd.f32 %v624, %v728
      %v730 = vpop.f32.mrf.mxu0
      %v731 = vadd.f32 %v624, %v730
      %732 = vmatmul.bf16.gmra.mxu0 %v516
      %v733 = vpop.f32.mrf.mxu0
      %v734 = vadd.f32 %v624, %v733
      %v735 = vpop.f32.mrf.mxu0
      %v736 = vadd.f32 %v624, %v735
      %737 = vmatmul.bf16.gmra.mxu0 %v517
      %v738 = vpop.f32.mrf.mxu0
      %v739 = vadd.f32 %v624, %v738
      %v740 = vpop.f32.mrf.mxu0
      %v741 = vadd.f32 %v624, %v740
      %742 = vmatmul.bf16.gmra.mxu0 %v518
      %v743 = vpop.f32.mrf.mxu0
      %v744 = vadd.f32 %v624, %v743
      %v745 = vpop.f32.mrf.mxu0
      %v746 = vadd.f32 %v624, %v745
      %747 = vmatmul.bf16.gmra.mxu0 %v519
      %v748 = vpop.f32.mrf.mxu0
      %v749 = vadd.f32 %v624, %v748
      %v750 = vpop.f32.mrf.mxu0
      %v751 = vadd.f32 %v624, %v750
      %752 = vmatmul.bf16.gmra.mxu0 %v520
      %v753 = vpop.f32.mrf.mxu0
      %v754 = vadd.f32 %v624, %v753
      %v755 = vpop.f32.mrf.mxu0
      %v756 = vadd.f32 %v624, %v755
      %757 = vmatmul.bf16.gmra.mxu0 %v521
      %v758 = vpop.f32.mrf.mxu0
      %v759 = vadd.f32 %v624, %v758
      %v760 = vpop.f32.mrf.mxu0
      %v761 = vadd.f32 %v624, %v760
      %762 = vmatmul.bf16.gmra.mxu0 %v522
      %v763 = vpop.f32.mrf.mxu0
      %v764 = vadd.f32 %v624, %v763
      %v765 = vpop.f32.mrf.mxu0
      %v766 = vadd.f32 %v624, %v765
      %767 = vmatmul.bf16.gmra.mxu0 %v523
      %v768 = vpop.f32.mrf.mxu0
      %v769 = vadd.f32 %v624, %v768
      %v770 = vpop.f32.mrf.mxu0
      %v771 = vadd.f32 %v624, %v770
      %772 = vmatmul.bf16.gmra.mxu0 %v524
      %v773 = vpop.f32.mrf.mxu0
      %v774 = vadd.f32 %v624, %v773
      %v775 = vpop.f32.mrf.mxu0
      %v776 = vadd.f32 %v624, %v775
      %777 = vmatmul.bf16.gmra.mxu0 %v525
      %v778 = vpop.f32.mrf.mxu0
      %v779 = vadd.f32 %v624, %v778
      %v780 = vpop.f32.mrf.mxu0
      %v781 = vadd.f32 %v624, %v780
      %782 = vmatmul.bf16.gmra.mxu0 %v526
      %v783 = vpop.f32.mrf.mxu0
      %v784 = vadd.f32 %v624, %v783
      %v785 = vpop.f32.mrf.mxu0
      %v786 = vadd.f32 %v624, %v785
      %787 = vmatmul.bf16.gmra.mxu0 %v527
      %v788 = vpop.f32.mrf.mxu0
      %v789 = vadd.f32 %v624, %v788
      %v790 = vpop.f32.mrf.mxu0
      %v791 = vadd.f32 %v624, %v790
      %792 = vmatmul.bf16.gmra.mxu0 %v528
      %v793 = vpop.f32.mrf.mxu0
      %v794 = vadd.f32 %v624, %v793
      %v795 = vpop.f32.mrf.mxu0
      %v796 = vadd.f32 %v624, %v795
      %797 = vmatmul.bf16.gmra.mxu0 %v529
      %v798 = vpop.f32.mrf.mxu0
      %v799 = vadd.f32 %v624, %v798
      %v800 = vpop.f32.mrf.mxu0
      %v801 = vadd.f32 %v624, %v800
      %802 = vmatmul.bf16.gmra.mxu0 %v530
      %v803 = vpop.f32.mrf.mxu0
      %v804 = vadd.f32 %v624, %v803
      %v805 = vpop.f32.mrf.mxu0
      %v806 = vadd.f32 %v624, %v805
      %807 = vmatmul.bf16.gmra.mxu0 %v531
      %v808 = vpop.f32.mrf.mxu0
      %v809 = vadd.f32 %v624, %v808
      %v810 = vpop.f32.mrf.mxu0
      %v811 = vadd.f32 %v624, %v810
      %812 = vmatmul.bf16.gmra.mxu0 %v532
      %v813 = vpop.f32.mrf.mxu0
      %v814 = vadd.f32 %v624, %v813
      %v815 = vpop.f32.mrf.mxu0
      %v816 = vadd.f32 %v624, %v815
      %817 = vmatmul.bf16.gmra.mxu0 %v533
      %v818 = vpop.f32.mrf.mxu0
      %v819 = vadd.f32 %v624, %v818
      %v820 = vpop.f32.mrf.mxu0
      %v821 = vadd.f32 %v624, %v820
      %822 = vmatmul.bf16.gmra.mxu0 %v534
      %v823 = vpop.f32.mrf.mxu0
      %v824 = vadd.f32 %v624, %v823
      %v825 = vpop.f32.mrf.mxu0
      %v826 = vadd.f32 %v624, %v825
      %827 = vmatmul.bf16.gmra.mxu0 %v535
      %v828 = vpop.f32.mrf.mxu0
      %v829 = vadd.f32 %v624, %v828
      %v830 = vpop.f32.mrf.mxu0
      %v831 = vadd.f32 %v624, %v830
      %832 = vmatmul.bf16.gmra.mxu0 %v536
      %v833 = vpop.f32.mrf.mxu0
      %v834 = vadd.f32 %v624, %v833
      %v835 = vpop.f32.mrf.mxu0
      %v836 = vadd.f32 %v624, %v835
      %837 = vmatmul.bf16.gmra.mxu0 %v537
      %v838 = vpop.f32.mrf.mxu0
      %v839 = vadd.f32 %v624, %v838
      %v840 = vpop.f32.mrf.mxu0
      %v841 = vadd.f32 %v624, %v840
      %842 = vmatmul.bf16.gmra.mxu0 %v538
      %v843 = vpop.f32.mrf.mxu0
      %v844 = vadd.f32 %v624, %v843
      %v845 = vpop.f32.mrf.mxu0
      %v846 = vadd.f32 %v624, %v845
      %847 = vmatmul.bf16.gmra.mxu0 %v539
      %v848 = vpop.f32.mrf.mxu0
      %v849 = vadd.f32 %v624, %v848
      %v850 = vpop.f32.mrf.mxu0
      %v851 = vadd.f32 %v624, %v850
      %852 = vmatmul.bf16.gmra.mxu0 %v540
      %v853 = vpop.f32.mrf.mxu0
      %v854 = vadd.f32 %v624, %v853
      %v855 = vpop.f32.mrf.mxu0
      %v856 = vadd.f32 %v624, %v855
      %857 = vmatmul.bf16.gmra.mxu0 %v541
      %v858 = vpop.f32.mrf.mxu0
      %v859 = vadd.f32 %v624, %v858
      %v860 = vpop.f32.mrf.mxu0
      %v861 = vadd.f32 %v624, %v860
      %862 = vmatmul.bf16.gmra.mxu0 %v542
      %v863 = vpop.f32.mrf.mxu0
      %v864 = vadd.f32 %v624, %v863
      %v865 = vpop.f32.mrf.mxu0
      %v866 = vadd.f32 %v624, %v865
      %867 = vmatmul.bf16.gmra.mxu0 %v543
      %v868 = vpop.f32.mrf.mxu0
      %v869 = vadd.f32 %v624, %v868
      %v870 = vpop.f32.mrf.mxu0
      %v871 = vadd.f32 %v624, %v870
      %872 = vmatmul.bf16.gmra.mxu0 %v544
      %v873 = vpop.f32.mrf.mxu0
      %v874 = vadd.f32 %v624, %v873
      %v875 = vpop.f32.mrf.mxu0
      %v876 = vadd.f32 %v624, %v875
      %877 = vmatmul.bf16.gmra.mxu0 %v545
      %v878 = vpop.f32.mrf.mxu0
      %v879 = vadd.f32 %v624, %v878
      %v880 = vpop.f32.mrf.mxu0
      %v881 = vadd.f32 %v624, %v880
      %882 = vmatmul.bf16.gmra.mxu0 %v546
      %v883 = vpop.f32.mrf.mxu0
      %v884 = vadd.f32 %v624, %v883
      %v885 = vpop.f32.mrf.mxu0
      %v886 = vadd.f32 %v624, %v885
      %887 = vmatmul.bf16.gmra.mxu0 %v547
      %v888 = vpop.f32.mrf.mxu0
      %v889 = vadd.f32 %v624, %v888
      %v890 = vpop.f32.mrf.mxu0
      %v891 = vadd.f32 %v624, %v890
      %892 = vmatmul.bf16.gmra.mxu0 %v548
      %v893 = vpop.f32.mrf.mxu0
      %v894 = vadd.f32 %v624, %v893
      %v895 = vpop.f32.mrf.mxu0
      %v896 = vadd.f32 %v624, %v895
      %897 = vmatmul.bf16.gmra.mxu0 %v549
      %v898 = vpop.f32.mrf.mxu0
      %v899 = vadd.f32 %v624, %v898
      %v900 = vpop.f32.mrf.mxu0
      %v901 = vadd.f32 %v624, %v900
      %902 = vmatmul.bf16.gmra.mxu0 %v550
      %v903 = vpop.f32.mrf.mxu0
      %v904 = vadd.f32 %v624, %v903
      %v905 = vpop.f32.mrf.mxu0
      %v906 = vadd.f32 %v624, %v905
      %907 = vmatmul.bf16.gmra.mxu0 %v551
      %v908 = vpop.f32.mrf.mxu0
      %v909 = vadd.f32 %v624, %v908
      %v910 = vpop.f32.mrf.mxu0
      %v911 = vadd.f32 %v624, %v910
      %912 = vmatmul.bf16.gmra.mxu0 %v552
      %v913 = vpop.f32.mrf.mxu0
      %v914 = vadd.f32 %v624, %v913
      %v915 = vpop.f32.mrf.mxu0
      %v916 = vadd.f32 %v624, %v915
      %917 = vmatmul.bf16.gmra.mxu0 %v553
      %v918 = vpop.f32.mrf.mxu0
      %v919 = vadd.f32 %v624, %v918
      %v920 = vpop.f32.mrf.mxu0
      %v921 = vadd.f32 %v624, %v920
      %922 = vmatmul.bf16.gmra.mxu0 %v554
      %v923 = vpop.f32.mrf.mxu0
      %v924 = vadd.f32 %v624, %v923
      %v925 = vpop.f32.mrf.mxu0
      %v926 = vadd.f32 %v624, %v925
      %927 = vmatmul.bf16.gmra.mxu0 %v555
      %v928 = vpop.f32.mrf.mxu0
      %v929 = vadd.f32 %v624, %v928
      %v930 = vpop.f32.mrf.mxu0
      %v931 = vadd.f32 %v624, %v930
      %932 = vmatmul.bf16.gmra.mxu0 %v556
      %v933 = vpop.f32.mrf.mxu0
      %v934 = vadd.f32 %v624, %v933
      %v935 = vpop.f32.mrf.mxu0
      %v936 = vadd.f32 %v624, %v935
      %937 = vmatmul.bf16.gmra.mxu0 %v557
      %v938 = vpop.f32.mrf.mxu0
      %v939 = vadd.f32 %v624, %v938
      %v940 = vpop.f32.mrf.mxu0
      %v941 = vadd.f32 %v624, %v940
      %942 = vmatmul.bf16.gmra.mxu0 %v558
      %v943 = vpop.f32.mrf.mxu0
      %v944 = vadd.f32 %v624, %v943
      %v945 = vpop.f32.mrf.mxu0
      %v946 = vadd.f32 %v624, %v945
      %947 = vmatmul.bf16.gmra.mxu0 %v559
      %v948 = vpop.f32.mrf.mxu0
      %v949 = vadd.f32 %v624, %v948
      %v950 = vpop.f32.mrf.mxu0
      %v951 = vadd.f32 %v624, %v950
      %952 = vmatmul.bf16.gmra.mxu0 %v560
      %v953 = vpop.f32.mrf.mxu0
      %v954 = vadd.f32 %v624, %v953
      %v955 = vpop.f32.mrf.mxu0
      %v956 = vadd.f32 %v624, %v955
      %957 = vmatmul.bf16.gmra.mxu0 %v561
      %v958 = vpop.f32.mrf.mxu0
      %v959 = vadd.f32 %v624, %v958
      %v960 = vpop.f32.mrf.mxu0
      %v961 = vadd.f32 %v624, %v960
      %962 = vmatmul.bf16.gmra.mxu0 %v562
      %v963 = vpop.f32.mrf.mxu0
      %v964 = vadd.f32 %v624, %v963
      %v965 = vpop.f32.mrf.mxu0
      %v966 = vadd.f32 %v624, %v965
      %967 = vmatmul.bf16.gmra.mxu0 %v563
      %v968 = vpop.f32.mrf.mxu0
      %v969 = vadd.f32 %v624, %v968
      %v970 = vpop.f32.mrf.mxu0
      %v971 = vadd.f32 %v624, %v970
      %972 = vmatmul.bf16.gmra.mxu0 %v564
      %v973 = vpop.f32.mrf.mxu0
      %v974 = vadd.f32 %v624, %v973
      %v975 = vpop.f32.mrf.mxu0
      %v976 = vadd.f32 %v624, %v975
      %977 = vmatmul.bf16.gmra.mxu0 %v565
      %v978 = vpop.f32.mrf.mxu0
      %v979 = vadd.f32 %v624, %v978
      %v980 = vpop.f32.mrf.mxu0
      %v981 = vadd.f32 %v624, %v980
      %982 = vmatmul.bf16.gmra.mxu0 %v566
      %v983 = vpop.f32.mrf.mxu0
      %v984 = vadd.f32 %v624, %v983
      %v985 = vpop.f32.mrf.mxu0
      %v986 = vadd.f32 %v624, %v985
      %987 = vmatmul.bf16.gmra.mxu0 %v567
      %v988 = vpop.f32.mrf.mxu0
      %v989 = vadd.f32 %v624, %v988
      %v990 = vpop.f32.mrf.mxu0
      %v991 = vadd.f32 %v624, %v990
      %992 = vmatmul.bf16.gmra.mxu0 %v568
      %v993 = vpop.f32.mrf.mxu0
      %v994 = vadd.f32 %v624, %v993
      %v995 = vpop.f32.mrf.mxu0
      %v996 = vadd.f32 %v624, %v995
      %997 = vmatmul.bf16.gmra.mxu0 %v569
      %v998 = vpop.f32.mrf.mxu0
      %v999 = vadd.f32 %v624, %v998
      %v1000 = vpop.f32.mrf.mxu0
      %v1001 = vadd.f32 %v624, %v1000
      %1002 = vmatmul.bf16.gmra.mxu0 %v570
      %v1003 = vpop.f32.mrf.mxu0
      %v1004 = vadd.f32 %v624, %v1003
      %v1005 = vpop.f32.mrf.mxu0
      %v1006 = vadd.f32 %v624, %v1005
      %1007 = vmatmul.bf16.gmra.mxu0 %v571
      %v1008 = vpop.f32.mrf.mxu0
      %v1009 = vadd.f32 %v624, %v1008
      %v1010 = vpop.f32.mrf.mxu0
      %v1011 = vadd.f32 %v624, %v1010
      %1012 = vmatmul.bf16.gmra.mxu0 %v572
      %v1013 = vpop.f32.mrf.mxu0
      %v1014 = vadd.f32 %v624, %v1013
      %v1015 = vpop.f32.mrf.mxu0
      %v1016 = vadd.f32 %v624, %v1015
      %1017 = vmatmul.bf16.gmra.mxu0 %v573
      %v1018 = vpop.f32.mrf.mxu0
      %v1019 = vadd.f32 %v624, %v1018
      %v1020 = vpop.f32.mrf.mxu0
      %v1021 = vadd.f32 %v624, %v1020
      %1022 = vmatmul.bf16.gmra.mxu0 %v574
      %v1023 = vpop.f32.mrf.mxu0
      %v1024 = vadd.f32 %v624, %v1023
      %v1025 = vpop.f32.mrf.mxu0
      %v1026 = vadd.f32 %v624, %v1025
      %1027 = vmatmul.bf16.gmra.mxu0 %v575
      %v1028 = vpop.f32.mrf.mxu0
      %v1029 = vadd.f32 %v624, %v1028
      %v1030 = vpop.f32.mrf.mxu0
      %v1031 = vadd.f32 %v624, %v1030
      %1032 = vmatmul.bf16.gmra.mxu0 %v576
      %v1033 = vpop.f32.mrf.mxu0
      %v1034 = vadd.f32 %v624, %v1033
      %v1035 = vpop.f32.mrf.mxu0
      %v1036 = vadd.f32 %v624, %v1035
      %1037 = vmatmul.bf16.gmra.mxu0 %v577
      %v1038 = vpop.f32.mrf.mxu0
      %v1039 = vadd.f32 %v624, %v1038
      %v1040 = vpop.f32.mrf.mxu0
      %v1041 = vadd.f32 %v624, %v1040
      %1042 = vmatmul.bf16.gmra.mxu0 %v578
      %v1043 = vpop.f32.mrf.mxu0
      %v1044 = vadd.f32 %v624, %v1043
      %v1045 = vpop.f32.mrf.mxu0
      %v1046 = vadd.f32 %v624, %v1045
      %1047 = vmatmul.bf16.gmra.mxu0 %v579
      %v1048 = vpop.f32.mrf.mxu0
      %v1049 = vadd.f32 %v624, %v1048
      %v1050 = vpop.f32.mrf.mxu0
      %v1051 = vadd.f32 %v624, %v1050
      %1052 = vmatmul.bf16.gmra.mxu0 %v580
      %v1053 = vpop.f32.mrf.mxu0
      %v1054 = vadd.f32 %v624, %v1053
      %v1055 = vpop.f32.mrf.mxu0
      %v1056 = vadd.f32 %v624, %v1055
      %1057 = vmatmul.bf16.gmra.mxu0 %v581
      %v1058 = vpop.f32.mrf.mxu0
      %v1059 = vadd.f32 %v624, %v1058
      %v1060 = vpop.f32.mrf.mxu0
      %v1061 = vadd.f32 %v624, %v1060
      %1062 = vmatmul.bf16.gmra.mxu0 %v582
      %v1063 = vpop.f32.mrf.mxu0
      %v1064 = vadd.f32 %v624, %v1063
      %v1065 = vpop.f32.mrf.mxu0
      %v1066 = vadd.f32 %v624, %v1065
      %1067 = vmatmul.bf16.gmra.mxu0 %v583
      %v1068 = vpop.f32.mrf.mxu0
      %v1069 = vadd.f32 %v624, %v1068
      %v1070 = vpop.f32.mrf.mxu0
      %v1071 = vadd.f32 %v624, %v1070
      %1072 = vmatmul.bf16.gmra.mxu0 %v584
      %v1073 = vpop.f32.mrf.mxu0
      %v1074 = vadd.f32 %v624, %v1073
      %v1075 = vpop.f32.mrf.mxu0
      %v1076 = vadd.f32 %v624, %v1075
      %1077 = vmatmul.bf16.gmra.mxu0 %v585
      %v1078 = vpop.f32.mrf.mxu0
      %v1079 = vadd.f32 %v624, %v1078
      %v1080 = vpop.f32.mrf.mxu0
      %v1081 = vadd.f32 %v624, %v1080
      %1082 = vmatmul.bf16.gmra.mxu0 %v586
      %v1083 = vpop.f32.mrf.mxu0
      %v1084 = vadd.f32 %v624, %v1083
      %v1085 = vpop.f32.mrf.mxu0
      %v1086 = vadd.f32 %v624, %v1085
      %1087 = vmatmul.bf16.gmra.mxu0 %v587
      %v1088 = vpop.f32.mrf.mxu0
      %v1089 = vadd.f32 %v624, %v1088
      %v1090 = vpop.f32.mrf.mxu0
      %v1091 = vadd.f32 %v624, %v1090
      %1092 = vmatmul.bf16.gmra.mxu0 %v588
      %v1093 = vpop.f32.mrf.mxu0
      %v1094 = vadd.f32 %v624, %v1093
      %v1095 = vpop.f32.mrf.mxu0
      %v1096 = vadd.f32 %v624, %v1095
      %1097 = vmatmul.bf16.gmra.mxu0 %v589
      %v1098 = vpop.f32.mrf.mxu0
      %v1099 = vadd.f32 %v624, %v1098
      %v1100 = vpop.f32.mrf.mxu0
      %v1101 = vadd.f32 %v624, %v1100
      %1102 = vmatmul.bf16.gmra.mxu0 %v590
      %v1103 = vpop.f32.mrf.mxu0
      %v1104 = vadd.f32 %v624, %v1103
      %v1105 = vpop.f32.mrf.mxu0
      %v1106 = vadd.f32 %v624, %v1105
      %1107 = vmatmul.bf16.gmra.mxu0 %v591
      %v1108 = vpop.f32.mrf.mxu0
      %v1109 = vadd.f32 %v624, %v1108
      %v1110 = vpop.f32.mrf.mxu0
      %v1111 = vadd.f32 %v624, %v1110
      %1112 = vmatmul.bf16.gmra.mxu0 %v592
      %v1113 = vpop.f32.mrf.mxu0
      %v1114 = vadd.f32 %v624, %v1113
      %v1115 = vpop.f32.mrf.mxu0
      %v1116 = vadd.f32 %v624, %v1115
      %1117 = vmatmul.bf16.gmra.mxu0 %v593
      %v1118 = vpop.f32.mrf.mxu0
      %v1119 = vadd.f32 %v624, %v1118
      %v1120 = vpop.f32.mrf.mxu0
      %v1121 = vadd.f32 %v624, %v1120
      %1122 = vmatmul.bf16.gmra.mxu0 %v594
      %v1123 = vpop.f32.mrf.mxu0
      %v1124 = vadd.f32 %v624, %v1123
      %v1125 = vpop.f32.mrf.mxu0
      %v1126 = vadd.f32 %v624, %v1125
      %1127 = vmatmul.bf16.gmra.mxu0 %v595
      %v1128 = vpop.f32.mrf.mxu0
      %v1129 = vadd.f32 %v624, %v1128
      %v1130 = vpop.f32.mrf.mxu0
      %v1131 = vadd.f32 %v624, %v1130
      %1132 = vmatmul.bf16.gmra.mxu0 %v596
      %v1133 = vpop.f32.mrf.mxu0
      %v1134 = vadd.f32 %v624, %v1133
      %v1135 = vpop.f32.mrf.mxu0
      %v1136 = vadd.f32 %v624, %v1135
      %1137 = vmatmul.bf16.gmra.mxu0 %v597
      %v1138 = vpop.f32.mrf.mxu0
      %v1139 = vadd.f32 %v624, %v1138
      %v1140 = vpop.f32.mrf.mxu0
      %v1141 = vadd.f32 %v624, %v1140
      %1142 = vmatmul.bf16.gmra.mxu0 %v598
      %v1143 = vpop.f32.mrf.mxu0
      %v1144 = vadd.f32 %v624, %v1143
      %v1145 = vpop.f32.mrf.mxu0
      %v1146 = vadd.f32 %v624, %v1145
      %1147 = vmatmul.bf16.gmra.mxu0 %v599
      %v1148 = vpop.f32.mrf.mxu0
      %v1149 = vadd.f32 %v624, %v1148
      %v1150 = vpop.f32.mrf.mxu0
      %v1151 = vadd.f32 %v624, %v1150
      %1152 = vmatmul.bf16.gmra.mxu0 %v600
      %v1153 = vpop.f32.mrf.mxu0
      %v1154 = vadd.f32 %v624, %v1153
      %v1155 = vpop.f32.mrf.mxu0
      %v1156 = vadd.f32 %v624, %v1155
      %1157 = vmatmul.bf16.gmra.mxu0 %v601
      %v1158 = vpop.f32.mrf.mxu0
      %v1159 = vadd.f32 %v624, %v1158
      %v1160 = vpop.f32.mrf.mxu0
      %v1161 = vadd.f32 %v624, %v1160
      %1162 = vmatmul.bf16.gmra.mxu0 %v602
      %v1163 = vpop.f32.mrf.mxu0
      %v1164 = vadd.f32 %v624, %v1163
      %v1165 = vpop.f32.mrf.mxu0
      %v1166 = vadd.f32 %v624, %v1165
      %1167 = vmatmul.bf16.gmra.mxu0 %v603
      %v1168 = vpop.f32.mrf.mxu0
      %v1169 = vadd.f32 %v624, %v1168
      %v1170 = vpop.f32.mrf.mxu0
      %v1171 = vadd.f32 %v624, %v1170
      %1172 = vmatmul.bf16.gmra.mxu0 %v604
      %v1173 = vpop.f32.mrf.mxu0
      %v1174 = vadd.f32 %v624, %v1173
      %v1175 = vpop.f32.mrf.mxu0
      %v1176 = vadd.f32 %v624, %v1175
      %1177 = vmatmul.bf16.gmra.mxu0 %v605
      %v1178 = vpop.f32.mrf.mxu0
      %v1179 = vadd.f32 %v624, %v1178
      %v1180 = vpop.f32.mrf.mxu0
      %v1181 = vadd.f32 %v624, %v1180
      %1182 = vdwg.mxu0
      %v1183 = vmax.f32 %v684, 0.0
      %v1184 = vmax.f32 %v686, 0.0
      %v1185 = vmax.f32 %v689, 0.0
      %v1186 = vmax.f32 %v691, 0.0
      %v1187 = vmax.f32 %v694, 0.0
      %v1188 = vmax.f32 %v696, 0.0
      %v1189 = vmax.f32 %v699, 0.0
      %v1190 = vmax.f32 %v701, 0.0
      %v1191 = vmax.f32 %v704, 0.0
      %v1192 = vmax.f32 %v706, 0.0
      %v1193 = vmax.f32 %v709, 0.0
      %v1194 = vmax.f32 %v711, 0.0
      %v1195 = vmax.f32 %v714, 0.0
      %v1196 = vmax.f32 %v716, 0.0
      %v1197 = vmax.f32 %v719, 0.0
      %v1198 = vmax.f32 %v721, 0.0
      %v1199 = vmax.f32 %v724, 0.0
      %v1200 = vmax.f32 %v726, 0.0
      %v1201 = vmax.f32 %v729, 0.0
      %v1202 = vmax.f32 %v731, 0.0
      %v1203 = vmax.f32 %v734, 0.0
      %v1204 = vmax.f32 %v736, 0.0
      %v1205 = vmax.f32 %v739, 0.0
      %v1206 = vmax.f32 %v741, 0.0
      %v1207 = vmax.f32 %v744, 0.0
      %v1208 = vmax.f32 %v746, 0.0
      %v1209 = vmax.f32 %v749, 0.0
      %v1210 = vmax.f32 %v751, 0.0
      %v1211 = vmax.f32 %v754, 0.0
      %v1212 = vmax.f32 %v756, 0.0
      %v1213 = vmax.f32 %v759, 0.0
      %v1214 = vmax.f32 %v761, 0.0
      %v1215 = vmax.f32 %v764, 0.0
      %v1216 = vmax.f32 %v766, 0.0
      %v1217 = vmax.f32 %v769, 0.0
      %v1218 = vmax.f32 %v771, 0.0
      %v1219 = vmax.f32 %v774, 0.0
      %v1220 = vmax.f32 %v776, 0.0
      %v1221 = vmax.f32 %v779, 0.0
      %v1222 = vmax.f32 %v781, 0.0
      %v1223 = vmax.f32 %v784, 0.0
      %v1224 = vmax.f32 %v786, 0.0
      %v1225 = vmax.f32 %v789, 0.0
      %v1226 = vmax.f32 %v791, 0.0
      %v1227 = vmax.f32 %v794, 0.0
      %v1228 = vmax.f32 %v796, 0.0
      %v1229 = vmax.f32 %v799, 0.0
      %v1230 = vmax.f32 %v801, 0.0
      %v1231 = vmax.f32 %v804, 0.0
      %v1232 = vmax.f32 %v806, 0.0
      %v1233 = vmax.f32 %v809, 0.0
      %v1234 = vmax.f32 %v811, 0.0
      %v1235 = vmax.f32 %v814, 0.0
      %v1236 = vmax.f32 %v816, 0.0
      %v1237 = vmax.f32 %v819, 0.0
      %v1238 = vmax.f32 %v821, 0.0
      %v1239 = vmax.f32 %v824, 0.0
      %v1240 = vmax.f32 %v826, 0.0
      %v1241 = vmax.f32 %v829, 0.0
      %v1242 = vmax.f32 %v831, 0.0
      %v1243 = vmax.f32 %v834, 0.0
      %v1244 = vmax.f32 %v836, 0.0
      %v1245 = vmax.f32 %v839, 0.0
      %v1246 = vmax.f32 %v841, 0.0
      %v1247 = vmax.f32 %v844, 0.0
      %v1248 = vmax.f32 %v846, 0.0
      %v1249 = vmax.f32 %v849, 0.0
      %v1250 = vmax.f32 %v851, 0.0
      %v1251 = vmax.f32 %v854, 0.0
      %v1252 = vmax.f32 %v856, 0.0
      %v1253 = vmax.f32 %v859, 0.0
      %v1254 = vmax.f32 %v861, 0.0
      %v1255 = vmax.f32 %v864, 0.0
      %v1256 = vmax.f32 %v866, 0.0
      %v1257 = vmax.f32 %v869, 0.0
      %v1258 = vmax.f32 %v871, 0.0
      %v1259 = vmax.f32 %v874, 0.0
      %v1260 = vmax.f32 %v876, 0.0
      %v1261 = vmax.f32 %v879, 0.0
      %v1262 = vmax.f32 %v881, 0.0
      %v1263 = vmax.f32 %v884, 0.0
      %v1264 = vmax.f32 %v886, 0.0
      %v1265 = vmax.f32 %v889, 0.0
      %v1266 = vmax.f32 %v891, 0.0
      %v1267 = vmax.f32 %v894, 0.0
      %v1268 = vmax.f32 %v896, 0.0
      %v1269 = vmax.f32 %v899, 0.0
      %v1270 = vmax.f32 %v901, 0.0
      %v1271 = vmax.f32 %v904, 0.0
      %v1272 = vmax.f32 %v906, 0.0
      %v1273 = vmax.f32 %v909, 0.0
      %v1274 = vmax.f32 %v911, 0.0
      %v1275 = vmax.f32 %v914, 0.0
      %v1276 = vmax.f32 %v916, 0.0
      %v1277 = vmax.f32 %v919, 0.0
      %v1278 = vmax.f32 %v921, 0.0
      %v1279 = vmax.f32 %v924, 0.0
      %v1280 = vmax.f32 %v926, 0.0
      %v1281 = vmax.f32 %v929, 0.0
      %v1282 = vmax.f32 %v931, 0.0
      %v1283 = vmax.f32 %v934, 0.0
      %v1284 = vmax.f32 %v936, 0.0
      %v1285 = vmax.f32 %v939, 0.0
      %v1286 = vmax.f32 %v941, 0.0
      %v1287 = vmax.f32 %v944, 0.0
      %v1288 = vmax.f32 %v946, 0.0
      %v1289 = vmax.f32 %v949, 0.0
      %v1290 = vmax.f32 %v951, 0.0
      %v1291 = vmax.f32 %v954, 0.0
      %v1292 = vmax.f32 %v956, 0.0
      %v1293 = vmax.f32 %v959, 0.0
      %v1294 = vmax.f32 %v961, 0.0
      %v1295 = vmax.f32 %v964, 0.0
      %v1296 = vmax.f32 %v966, 0.0
      %v1297 = vmax.f32 %v969, 0.0
      %v1298 = vmax.f32 %v971, 0.0
      %v1299 = vmax.f32 %v974, 0.0
      %v1300 = vmax.f32 %v976, 0.0
      %v1301 = vmax.f32 %v979, 0.0
      %v1302 = vmax.f32 %v981, 0.0
      %v1303 = vmax.f32 %v984, 0.0
      %v1304 = vmax.f32 %v986, 0.0
      %v1305 = vmax.f32 %v989, 0.0
      %v1306 = vmax.f32 %v991, 0.0
      %v1307 = vmax.f32 %v994, 0.0
      %v1308 = vmax.f32 %v996, 0.0
      %v1309 = vmax.f32 %v999, 0.0
      %v1310 = vmax.f32 %v1001, 0.0
      %v1311 = vmax.f32 %v1004, 0.0
      %v1312 = vmax.f32 %v1006, 0.0
      %v1313 = vmax.f32 %v1009, 0.0
      %v1314 = vmax.f32 %v1011, 0.0
      %v1315 = vmax.f32 %v1014, 0.0
      %v1316 = vmax.f32 %v1016, 0.0
      %v1317 = vmax.f32 %v1019, 0.0
      %v1318 = vmax.f32 %v1021, 0.0
      %v1319 = vmax.f32 %v1024, 0.0
      %v1320 = vmax.f32 %v1026, 0.0
      %v1321 = vmax.f32 %v1029, 0.0
      %v1322 = vmax.f32 %v1031, 0.0
      %v1323 = vmax.f32 %v1034, 0.0
      %v1324 = vmax.f32 %v1036, 0.0
      %v1325 = vmax.f32 %v1039, 0.0
      %v1326 = vmax.f32 %v1041, 0.0
      %v1327 = vmax.f32 %v1044, 0.0
      %v1328 = vmax.f32 %v1046, 0.0
      %v1329 = vmax.f32 %v1049, 0.0
      %v1330 = vmax.f32 %v1051, 0.0
      %v1331 = vmax.f32 %v1054, 0.0
      %v1332 = vmax.f32 %v1056, 0.0
      %v1333 = vmax.f32 %v1059, 0.0
      %v1334 = vmax.f32 %v1061, 0.0
      %v1335 = vmax.f32 %v1064, 0.0
      %v1336 = vmax.f32 %v1066, 0.0
      %v1337 = vmax.f32 %v1069, 0.0
      %v1338 = vmax.f32 %v1071, 0.0
      %v1339 = vmax.f32 %v1074, 0.0
      %v1340 = vmax.f32 %v1076, 0.0
      %v1341 = vmax.f32 %v1079, 0.0
      %v1342 = vmax.f32 %v1081, 0.0
      %v1343 = vmax.f32 %v1084, 0.0
      %v1344 = vmax.f32 %v1086, 0.0
      %v1345 = vmax.f32 %v1089, 0.0
      %v1346 = vmax.f32 %v1091, 0.0
      %v1347 = vmax.f32 %v1094, 0.0
      %v1348 = vmax.f32 %v1096, 0.0
      %v1349 = vmax.f32 %v1099, 0.0
      %v1350 = vmax.f32 %v1101, 0.0
      %v1351 = vmax.f32 %v1104, 0.0
      %v1352 = vmax.f32 %v1106, 0.0
      %v1353 = vmax.f32 %v1109, 0.0
      %v1354 = vmax.f32 %v1111, 0.0
      %v1355 = vmax.f32 %v1114, 0.0
      %v1356 = vmax.f32 %v1116, 0.0
      %v1357 = vmax.f32 %v1119, 0.0
      %v1358 = vmax.f32 %v1121, 0.0
      %v1359 = vmax.f32 %v1124, 0.0
      %v1360 = vmax.f32 %v1126, 0.0
      %v1361 = vmax.f32 %v1129, 0.0
      %v1362 = vmax.f32 %v1131, 0.0
      %v1363 = vmax.f32 %v1134, 0.0
      %v1364 = vmax.f32 %v1136, 0.0
      %v1365 = vmax.f32 %v1139, 0.0
      %v1366 = vmax.f32 %v1141, 0.0
      %v1367 = vmax.f32 %v1144, 0.0
      %v1368 = vmax.f32 %v1146, 0.0
      %v1369 = vmax.f32 %v1149, 0.0
      %v1370 = vmax.f32 %v1151, 0.0
      %v1371 = vmax.f32 %v1154, 0.0
      %v1372 = vmax.f32 %v1156, 0.0
      %v1373 = vmax.f32 %v1159, 0.0
      %v1374 = vmax.f32 %v1161, 0.0
      %v1375 = vmax.f32 %v1164, 0.0
      %v1376 = vmax.f32 %v1166, 0.0
      %v1377 = vmax.f32 %v1169, 0.0
      %v1378 = vmax.f32 %v1171, 0.0
      %v1379 = vmax.f32 %v1174, 0.0
      %v1380 = vmax.f32 %v1176, 0.0
      %v1381 = vmax.f32 %v1179, 0.0
      %v1382 = vmax.f32 %v1181, 0.0
      %v1383 = vld [vmem:[%s1] sm:$0xff]
      %v1384 = vld [vmem:[%s1 + $0x8] sm:$0xff]
      %v1385 = vld [vmem:[%s1 + $0x10] sm:$0xff]
      %v1386 = vld [vmem:[%s1 + $0x18] sm:$0xff]
      %v1387 = vld [vmem:[%s1 + $0x20] sm:$0xff]
      %v1388 = vld [vmem:[%s1 + $0x28] sm:$0xff]
      %v1389 = vld [vmem:[%s1 + $0x30] sm:$0xff]
      %v1390 = vld [vmem:[%s1 + $0x38] sm:$0xff]
      %v1391 = vld [vmem:[%s1 + $0x40] sm:$0xff]
      %v1392 = vld [vmem:[%s1 + $0x48] sm:$0xff]
      %v1393 = vld [vmem:[%s1 + $0x50] sm:$0xff]
      %v1394 = vld [vmem:[%s1 + $0x58] sm:$0xff]
      %v1395 = vld [vmem:[%s1 + $0x60] sm:$0xff]
      %v1396 = vld [vmem:[%s1 + $0x68] sm:$0xff]
      %v1397 = vld [vmem:[%s1 + $0x70] sm:$0xff]
      %v1398 = vld [vmem:[%s1 + $0x78] sm:$0xff]
      %v1399 = vld [vmem:[%s1 + $0x80] sm:$0xff]
      %v1400 = vld [vmem:[%s1 + $0x88] sm:$0xff]
      %v1401 = vld [vmem:[%s1 + $0x90] sm:$0xff]
      %v1402 = vld [vmem:[%s1 + $0x98] sm:$0xff]
      %v1403 = vld [vmem:[%s1 + $0xa0] sm:$0xff]
      %v1404 = vld [vmem:[%s1 + $0xa8] sm:$0xff]
      %v1405 = vld [vmem:[%s1 + $0xb0] sm:$0xff]
      %v1406 = vld [vmem:[%s1 + $0xb8] sm:$0xff]
      %v1407 = vld [vmem:[%s1 + $0xc0] sm:$0xff]
      %v1408 = vld [vmem:[%s1 + $0xc8] sm:$0xff]
      %v1409 = vld [vmem:[%s1 + $0xd0] sm:$0xff]
      %v1410 = vld [vmem:[%s1 + $0xd8] sm:$0xff]
      %v1411 = vld [vmem:[%s1 + $0xe0] sm:$0xff]
      %v1412 = vld [vmem:[%s1 + $0xe8] sm:$0xff]
      %v1413 = vld [vmem:[%s1 + $0xf0] sm:$0xff]
      %v1414 = vld [vmem:[%s1 + $0xf8] sm:$0xff]
      %v1415 = vld [vmem:[%s1 + $0x100] sm:$0xff]
      %v1416 = vld [vmem:[%s1 + $0x108] sm:$0xff]
      %v1417 = vld [vmem:[%s1 + $0x110] sm:$0xff]
      %v1418 = vld [vmem:[%s1 + $0x118] sm:$0xff]
      %v1419 = vld [vmem:[%s1 + $0x120] sm:$0xff]
      %v1420 = vld [vmem:[%s1 + $0x128] sm:$0xff]
      %v1421 = vld [vmem:[%s1 + $0x130] sm:$0xff]
      %v1422 = vld [vmem:[%s1 + $0x138] sm:$0xff]
      %v1423 = vld [vmem:[%s1 + $0x140] sm:$0xff]
      %v1424 = vld [vmem:[%s1 + $0x148] sm:$0xff]
      %v1425 = vld [vmem:[%s1 + $0x150] sm:$0xff]
      %v1426 = vld [vmem:[%s1 + $0x158] sm:$0xff]
      %v1427 = vld [vmem:[%s1 + $0x160] sm:$0xff]
      %v1428 = vld [vmem:[%s1 + $0x168] sm:$0xff]
      %v1429 = vld [vmem:[%s1 + $0x170] sm:$0xff]
      %v1430 = vld [vmem:[%s1 + $0x178] sm:$0xff]
      %v1431 = vld [vmem:[%s1 + $0x180] sm:$0xff]
      %v1432 = vld [vmem:[%s1 + $0x188] sm:$0xff]
      %v1433 = vld [vmem:[%s1 + $0x190] sm:$0xff]
      %v1434 = vld [vmem:[%s1 + $0x198] sm:$0xff]
      %v1435 = vld [vmem:[%s1 + $0x1a0] sm:$0xff]
      %v1436 = vld [vmem:[%s1 + $0x1a8] sm:$0xff]
      %v1437 = vld [vmem:[%s1 + $0x1b0] sm:$0xff]
      %v1438 = vld [vmem:[%s1 + $0x1b8] sm:$0xff]
      %v1439 = vld [vmem:[%s1 + $0x1c0] sm:$0xff]
      %v1440 = vld [vmem:[%s1 + $0x1c8] sm:$0xff]
      %v1441 = vld [vmem:[%s1 + $0x1d0] sm:$0xff]
      %v1442 = vld [vmem:[%s1 + $0x1d8] sm:$0xff]
      %v1443 = vld [vmem:[%s1 + $0x1e0] sm:$0xff]
      %v1444 = vld [vmem:[%s1 + $0x1e8] sm:$0xff]
      %v1445 = vld [vmem:[%s1 + $0x1f0] sm:$0xff]
      %v1446 = vld [vmem:[%s1 + $0x1f8] sm:$0xff]
      %v1447 = vld [vmem:[%s1 + $0x200] sm:$0xff]
      %v1448 = vld [vmem:[%s1 + $0x208] sm:$0xff]
      %v1449 = vld [vmem:[%s1 + $0x210] sm:$0xff]
      %v1450 = vld [vmem:[%s1 + $0x218] sm:$0xff]
      %v1451 = vld [vmem:[%s1 + $0x220] sm:$0xff]
      %v1452 = vld [vmem:[%s1 + $0x228] sm:$0xff]
      %v1453 = vld [vmem:[%s1 + $0x230] sm:$0xff]
      %v1454 = vld [vmem:[%s1 + $0x238] sm:$0xff]
      %v1455 = vld [vmem:[%s1 + $0x240] sm:$0xff]
      %v1456 = vld [vmem:[%s1 + $0x248] sm:$0xff]
      %v1457 = vld [vmem:[%s1 + $0x250] sm:$0xff]
      %v1458 = vld [vmem:[%s1 + $0x258] sm:$0xff]
      %v1459 = vld [vmem:[%s1 + $0x260] sm:$0xff]
      %v1460 = vld [vmem:[%s1 + $0x268] sm:$0xff]
      %v1461 = vld [vmem:[%s1 + $0x270] sm:$0xff]
      %v1462 = vld [vmem:[%s1 + $0x278] sm:$0xff]
      %v1463 = vld [vmem:[%s1 + $0x280] sm:$0xff]
      %v1464 = vld [vmem:[%s1 + $0x288] sm:$0xff]
      %v1465 = vld [vmem:[%s1 + $0x290] sm:$0xff]
      %v1466 = vld [vmem:[%s1 + $0x298] sm:$0xff]
      %v1467 = vld [vmem:[%s1 + $0x2a0] sm:$0xff]
      %v1468 = vld [vmem:[%s1 + $0x2a8] sm:$0xff]
      %v1469 = vld [vmem:[%s1 + $0x2b0] sm:$0xff]
      %v1470 = vld [vmem:[%s1 + $0x2b8] sm:$0xff]
      %v1471 = vld [vmem:[%s1 + $0x2c0] sm:$0xff]
      %v1472 = vld [vmem:[%s1 + $0x2c8] sm:$0xff]
      %v1473 = vld [vmem:[%s1 + $0x2d0] sm:$0xff]
      %v1474 = vld [vmem:[%s1 + $0x2d8] sm:$0xff]
      %v1475 = vld [vmem:[%s1 + $0x2e0] sm:$0xff]
      %v1476 = vld [vmem:[%s1 + $0x2e8] sm:$0xff]
      %v1477 = vld [vmem:[%s1 + $0x2f0] sm:$0xff]
      %v1478 = vld [vmem:[%s1 + $0x2f8] sm:$0xff]
      %v1479 = vld [vmem:[%s1 + $0x300] sm:$0xff]
      %v1480 = vld [vmem:[%s1 + $0x308] sm:$0xff]
      %v1481 = vld [vmem:[%s1 + $0x310] sm:$0xff]
      %v1482 = vld [vmem:[%s1 + $0x318] sm:$0xff]
      %v1483 = vld [vmem:[%s1 + $0x320] sm:$0xff]
      %v1484 = vld [vmem:[%s1 + $0x328] sm:$0xff]
      %v1485 = vld [vmem:[%s1 + $0x330] sm:$0xff]
      %v1486 = vld [vmem:[%s1 + $0x338] sm:$0xff]
      %v1487 = vld [vmem:[%s1 + $0x340] sm:$0xff]
      %v1488 = vld [vmem:[%s1 + $0x348] sm:$0xff]
      %v1489 = vld [vmem:[%s1 + $0x350] sm:$0xff]
      %v1490 = vld [vmem:[%s1 + $0x358] sm:$0xff]
      %v1491 = vld [vmem:[%s1 + $0x360] sm:$0xff]
      %v1492 = vld [vmem:[%s1 + $0x368] sm:$0xff]
      %v1493 = vld [vmem:[%s1 + $0x370] sm:$0xff]
      %v1494 = vld [vmem:[%s1 + $0x378] sm:$0xff]
      %v1495 = vld [vmem:[%s1 + $0x380] sm:$0xff]
      %v1496 = vld [vmem:[%s1 + $0x388] sm:$0xff]
      %v1497 = vld [vmem:[%s1 + $0x390] sm:$0xff]
      %v1498 = vld [vmem:[%s1 + $0x398] sm:$0xff]
      %v1499 = vld [vmem:[%s1 + $0x3a0] sm:$0xff]
      %v1500 = vld [vmem:[%s1 + $0x3a8] sm:$0xff]
      %v1501 = vld [vmem:[%s1 + $0x3b0] sm:$0xff]
      %v1502 = vld [vmem:[%s1 + $0x3b8] sm:$0xff]
      %v1503 = vld [vmem:[%s1 + $0x3c0] sm:$0xff]
      %v1504 = vld [vmem:[%s1 + $0x3c8] sm:$0xff]
      %v1505 = vld [vmem:[%s1 + $0x3d0] sm:$0xff]
      %v1506 = vld [vmem:[%s1 + $0x3d8] sm:$0xff]
      %v1507 = vld [vmem:[%s1 + $0x3e0] sm:$0xff]
      %v1508 = vld [vmem:[%s1 + $0x3e8] sm:$0xff]
      %v1509 = vld [vmem:[%s1 + $0x3f0] sm:$0xff]
      %v1510 = vld [vmem:[%s1 + $0x3f8] sm:$0xff]
      %v1511 = vld [vmem:[%s1 + $0x400] sm:$0xff]
      %v1512 = vld [vmem:[%s1 + $0x408] sm:$0xff]
      %v1513 = vld [vmem:[%s1 + $0x410] sm:$0xff]
      %v1514 = vld [vmem:[%s1 + $0x418] sm:$0xff]
      %v1515 = vld [vmem:[%s1 + $0x420] sm:$0xff]
      %v1516 = vld [vmem:[%s1 + $0x428] sm:$0xff]
      %v1517 = vld [vmem:[%s1 + $0x430] sm:$0xff]
      %v1518 = vld [vmem:[%s1 + $0x438] sm:$0xff]
      %v1519 = vld [vmem:[%s1 + $0x440] sm:$0xff]
      %v1520 = vld [vmem:[%s1 + $0x448] sm:$0xff]
      %v1521 = vld [vmem:[%s1 + $0x450] sm:$0xff]
      %v1522 = vld [vmem:[%s1 + $0x458] sm:$0xff]
      %v1523 = vld [vmem:[%s1 + $0x460] sm:$0xff]
      %v1524 = vld [vmem:[%s1 + $0x468] sm:$0xff]
      %v1525 = vld [vmem:[%s1 + $0x470] sm:$0xff]
      %v1526 = vld [vmem:[%s1 + $0x478] sm:$0xff]
      %v1527 = vld [vmem:[%s1 + $0x480] sm:$0xff]
      %v1528 = vld [vmem:[%s1 + $0x488] sm:$0xff]
      %v1529 = vld [vmem:[%s1 + $0x490] sm:$0xff]
      %v1530 = vld [vmem:[%s1 + $0x498] sm:$0xff]
      %v1531 = vld [vmem:[%s1 + $0x4a0] sm:$0xff]
      %v1532 = vld [vmem:[%s1 + $0x4a8] sm:$0xff]
      %v1533 = vld [vmem:[%s1 + $0x4b0] sm:$0xff]
      %v1534 = vld [vmem:[%s1 + $0x4b8] sm:$0xff]
      %v1535 = vld [vmem:[%s1 + $0x4c0] sm:$0xff]
      %v1536 = vld [vmem:[%s1 + $0x4c8] sm:$0xff]
      %v1537 = vld [vmem:[%s1 + $0x4d0] sm:$0xff]
      %v1538 = vld [vmem:[%s1 + $0x4d8] sm:$0xff]
      %v1539 = vld [vmem:[%s1 + $0x4e0] sm:$0xff]
      %v1540 = vld [vmem:[%s1 + $0x4e8] sm:$0xff]
      %v1541 = vld [vmem:[%s1 + $0x4f0] sm:$0xff]
      %v1542 = vld [vmem:[%s1 + $0x4f8] sm:$0xff]
      %v1543 = vld [vmem:[%s1 + $0x500] sm:$0xff]
      %v1544 = vld [vmem:[%s1 + $0x508] sm:$0xff]
      %v1545 = vld [vmem:[%s1 + $0x510] sm:$0xff]
      %v1546 = vld [vmem:[%s1 + $0x518] sm:$0xff]
      %v1547 = vld [vmem:[%s1 + $0x520] sm:$0xff]
      %v1548 = vld [vmem:[%s1 + $0x528] sm:$0xff]
      %v1549 = vld [vmem:[%s1 + $0x530] sm:$0xff]
      %v1550 = vld [vmem:[%s1 + $0x538] sm:$0xff]
      %v1551 = vld [vmem:[%s1 + $0x540] sm:$0xff]
      %v1552 = vld [vmem:[%s1 + $0x548] sm:$0xff]
      %v1553 = vld [vmem:[%s1 + $0x550] sm:$0xff]
      %v1554 = vld [vmem:[%s1 + $0x558] sm:$0xff]
      %v1555 = vld [vmem:[%s1 + $0x560] sm:$0xff]
      %v1556 = vld [vmem:[%s1 + $0x568] sm:$0xff]
      %v1557 = vld [vmem:[%s1 + $0x570] sm:$0xff]
      %v1558 = vld [vmem:[%s1 + $0x578] sm:$0xff]
      %v1559 = vld [vmem:[%s1 + $0x580] sm:$0xff]
      %v1560 = vld [vmem:[%s1 + $0x588] sm:$0xff]
      %v1561 = vld [vmem:[%s1 + $0x590] sm:$0xff]
      %v1562 = vld [vmem:[%s1 + $0x598] sm:$0xff]
      %v1563 = vld [vmem:[%s1 + $0x5a0] sm:$0xff]
      %v1564 = vld [vmem:[%s1 + $0x5a8] sm:$0xff]
      %v1565 = vld [vmem:[%s1 + $0x5b0] sm:$0xff]
      %v1566 = vld [vmem:[%s1 + $0x5b8] sm:$0xff]
      %v1567 = vld [vmem:[%s1 + $0x5c0] sm:$0xff]
      %v1568 = vld [vmem:[%s1 + $0x5c8] sm:$0xff]
      %v1569 = vld [vmem:[%s1 + $0x5d0] sm:$0xff]
      %v1570 = vld [vmem:[%s1 + $0x5d8] sm:$0xff]
      %v1571 = vld [vmem:[%s1 + $0x5e0] sm:$0xff]
      %v1572 = vld [vmem:[%s1 + $0x5e8] sm:$0xff]
      %v1573 = vld [vmem:[%s1 + $0x5f0] sm:$0xff]
      %v1574 = vld [vmem:[%s1 + $0x5f8] sm:$0xff]
      %v1575 = vld [vmem:[%s1 + $0x600] sm:$0xff]
      %v1576 = vld [vmem:[%s1 + $0x608] sm:$0xff]
      %v1577 = vld [vmem:[%s1 + $0x610] sm:$0xff]
      %v1578 = vld [vmem:[%s1 + $0x618] sm:$0xff]
      %v1579 = vld [vmem:[%s1 + $0x620] sm:$0xff]
      %v1580 = vld [vmem:[%s1 + $0x628] sm:$0xff]
      %v1581 = vld [vmem:[%s1 + $0x630] sm:$0xff]
      %v1582 = vld [vmem:[%s1 + $0x638] sm:$0xff]
      %1584 = vset.pattern.permute.xlu0 0
      %1585 = vperm.xlu0 %1584, %v1383
      %v1586 = vpop.permute.xlu0 %1585
      %1589 = vset.pattern.permute.xlu0 0
      %1590 = vperm.xlu0 %1589, %v1384
      %v1591 = vpop.permute.xlu0 %1590
      %1594 = vset.pattern.permute.xlu0 0
      %1595 = vperm.xlu0 %1594, %v1385
      %v1596 = vpop.permute.xlu0 %1595
      %1599 = vset.pattern.permute.xlu0 0
      %1600 = vperm.xlu0 %1599, %v1386
      %v1601 = vpop.permute.xlu0 %1600
      %1604 = vset.pattern.permute.xlu0 0
      %1605 = vperm.xlu0 %1604, %v1387
      %v1606 = vpop.permute.xlu0 %1605
      %1609 = vset.pattern.permute.xlu0 0
      %1610 = vperm.xlu0 %1609, %v1388
      %v1611 = vpop.permute.xlu0 %1610
      %1614 = vset.pattern.permute.xlu0 0
      %1615 = vperm.xlu0 %1614, %v1389
      %v1616 = vpop.permute.xlu0 %1615
      %1619 = vset.pattern.permute.xlu0 0
      %1620 = vperm.xlu0 %1619, %v1390
      %v1621 = vpop.permute.xlu0 %1620
      %1624 = vset.pattern.permute.xlu0 0
      %1625 = vperm.xlu0 %1624, %v1391
      %v1626 = vpop.permute.xlu0 %1625
      %1629 = vset.pattern.permute.xlu0 0
      %1630 = vperm.xlu0 %1629, %v1392
      %v1631 = vpop.permute.xlu0 %1630
      %1634 = vset.pattern.permute.xlu0 0
      %1635 = vperm.xlu0 %1634, %v1393
      %v1636 = vpop.permute.xlu0 %1635
      %1639 = vset.pattern.permute.xlu0 0
      %1640 = vperm.xlu0 %1639, %v1394
      %v1641 = vpop.permute.xlu0 %1640
      %1644 = vset.pattern.permute.xlu0 0
      %1645 = vperm.xlu0 %1644, %v1395
      %v1646 = vpop.permute.xlu0 %1645
      %1649 = vset.pattern.permute.xlu0 0
      %1650 = vperm.xlu0 %1649, %v1396
      %v1651 = vpop.permute.xlu0 %1650
      %1654 = vset.pattern.permute.xlu0 0
      %1655 = vperm.xlu0 %1654, %v1397
      %v1656 = vpop.permute.xlu0 %1655
      %1659 = vset.pattern.permute.xlu0 0
      %1660 = vperm.xlu0 %1659, %v1398
      %v1661 = vpop.permute.xlu0 %1660
      %1664 = vset.pattern.permute.xlu0 0
      %1665 = vperm.xlu0 %1664, %v1399
      %v1666 = vpop.permute.xlu0 %1665
      %1669 = vset.pattern.permute.xlu0 0
      %1670 = vperm.xlu0 %1669, %v1400
      %v1671 = vpop.permute.xlu0 %1670
      %1674 = vset.pattern.permute.xlu0 0
      %1675 = vperm.xlu0 %1674, %v1401
      %v1676 = vpop.permute.xlu0 %1675
      %1679 = vset.pattern.permute.xlu0 0
      %1680 = vperm.xlu0 %1679, %v1402
      %v1681 = vpop.permute.xlu0 %1680
      %1684 = vset.pattern.permute.xlu0 0
      %1685 = vperm.xlu0 %1684, %v1403
      %v1686 = vpop.permute.xlu0 %1685
      %1689 = vset.pattern.permute.xlu0 0
      %1690 = vperm.xlu0 %1689, %v1404
      %v1691 = vpop.permute.xlu0 %1690
      %1694 = vset.pattern.permute.xlu0 0
      %1695 = vperm.xlu0 %1694, %v1405
      %v1696 = vpop.permute.xlu0 %1695
      %1699 = vset.pattern.permute.xlu0 0
      %1700 = vperm.xlu0 %1699, %v1406
      %v1701 = vpop.permute.xlu0 %1700
      %1704 = vset.pattern.permute.xlu0 0
      %1705 = vperm.xlu0 %1704, %v1407
      %v1706 = vpop.permute.xlu0 %1705
      %1709 = vset.pattern.permute.xlu0 0
      %1710 = vperm.xlu0 %1709, %v1408
      %v1711 = vpop.permute.xlu0 %1710
      %1714 = vset.pattern.permute.xlu0 0
      %1715 = vperm.xlu0 %1714, %v1409
      %v1716 = vpop.permute.xlu0 %1715
      %1719 = vset.pattern.permute.xlu0 0
      %1720 = vperm.xlu0 %1719, %v1410
      %v1721 = vpop.permute.xlu0 %1720
      %1724 = vset.pattern.permute.xlu0 0
      %1725 = vperm.xlu0 %1724, %v1411
      %v1726 = vpop.permute.xlu0 %1725
      %1729 = vset.pattern.permute.xlu0 0
      %1730 = vperm.xlu0 %1729, %v1412
      %v1731 = vpop.permute.xlu0 %1730
      %1734 = vset.pattern.permute.xlu0 0
      %1735 = vperm.xlu0 %1734, %v1413
      %v1736 = vpop.permute.xlu0 %1735
      %1739 = vset.pattern.permute.xlu0 0
      %1740 = vperm.xlu0 %1739, %v1414
      %v1741 = vpop.permute.xlu0 %1740
      %1744 = vset.pattern.permute.xlu0 0
      %1745 = vperm.xlu0 %1744, %v1415
      %v1746 = vpop.permute.xlu0 %1745
      %1749 = vset.pattern.permute.xlu0 0
      %1750 = vperm.xlu0 %1749, %v1416
      %v1751 = vpop.permute.xlu0 %1750
      %1754 = vset.pattern.permute.xlu0 0
      %1755 = vperm.xlu0 %1754, %v1417
      %v1756 = vpop.permute.xlu0 %1755
      %1759 = vset.pattern.permute.xlu0 0
      %1760 = vperm.xlu0 %1759, %v1418
      %v1761 = vpop.permute.xlu0 %1760
      %1764 = vset.pattern.permute.xlu0 0
      %1765 = vperm.xlu0 %1764, %v1419
      %v1766 = vpop.permute.xlu0 %1765
      %1769 = vset.pattern.permute.xlu0 0
      %1770 = vperm.xlu0 %1769, %v1420
      %v1771 = vpop.permute.xlu0 %1770
      %1774 = vset.pattern.permute.xlu0 0
      %1775 = vperm.xlu0 %1774, %v1421
      %v1776 = vpop.permute.xlu0 %1775
      %1779 = vset.pattern.permute.xlu0 0
      %1780 = vperm.xlu0 %1779, %v1422
      %v1781 = vpop.permute.xlu0 %1780
      %1784 = vset.pattern.permute.xlu0 0
      %1785 = vperm.xlu0 %1784, %v1423
      %v1786 = vpop.permute.xlu0 %1785
      %1789 = vset.pattern.permute.xlu0 0
      %1790 = vperm.xlu0 %1789, %v1424
      %v1791 = vpop.permute.xlu0 %1790
      %1794 = vset.pattern.permute.xlu0 0
      %1795 = vperm.xlu0 %1794, %v1425
      %v1796 = vpop.permute.xlu0 %1795
      %1799 = vset.pattern.permute.xlu0 0
      %1800 = vperm.xlu0 %1799, %v1426
      %v1801 = vpop.permute.xlu0 %1800
      %1804 = vset.pattern.permute.xlu0 0
      %1805 = vperm.xlu0 %1804, %v1427
      %v1806 = vpop.permute.xlu0 %1805
      %1809 = vset.pattern.permute.xlu0 0
      %1810 = vperm.xlu0 %1809, %v1428
      %v1811 = vpop.permute.xlu0 %1810
      %1814 = vset.pattern.permute.xlu0 0
      %1815 = vperm.xlu0 %1814, %v1429
      %v1816 = vpop.permute.xlu0 %1815
      %1819 = vset.pattern.permute.xlu0 0
      %1820 = vperm.xlu0 %1819, %v1430
      %v1821 = vpop.permute.xlu0 %1820
      %1824 = vset.pattern.permute.xlu0 0
      %1825 = vperm.xlu0 %1824, %v1431
      %v1826 = vpop.permute.xlu0 %1825
      %1829 = vset.pattern.permute.xlu0 0
      %1830 = vperm.xlu0 %1829, %v1432
      %v1831 = vpop.permute.xlu0 %1830
      %1834 = vset.pattern.permute.xlu0 0
      %1835 = vperm.xlu0 %1834, %v1433
      %v1836 = vpop.permute.xlu0 %1835
      %1839 = vset.pattern.permute.xlu0 0
      %1840 = vperm.xlu0 %1839, %v1434
      %v1841 = vpop.permute.xlu0 %1840
      %1844 = vset.pattern.permute.xlu0 0
      %1845 = vperm.xlu0 %1844, %v1435
      %v1846 = vpop.permute.xlu0 %1845
      %1849 = vset.pattern.permute.xlu0 0
      %1850 = vperm.xlu0 %1849, %v1436
      %v1851 = vpop.permute.xlu0 %1850
      %1854 = vset.pattern.permute.xlu0 0
      %1855 = vperm.xlu0 %1854, %v1437
      %v1856 = vpop.permute.xlu0 %1855
      %1859 = vset.pattern.permute.xlu0 0
      %1860 = vperm.xlu0 %1859, %v1438
      %v1861 = vpop.permute.xlu0 %1860
      %1864 = vset.pattern.permute.xlu0 0
      %1865 = vperm.xlu0 %1864, %v1439
      %v1866 = vpop.permute.xlu0 %1865
      %1869 = vset.pattern.permute.xlu0 0
      %1870 = vperm.xlu0 %1869, %v1440
      %v1871 = vpop.permute.xlu0 %1870
      %1874 = vset.pattern.permute.xlu0 0
      %1875 = vperm.xlu0 %1874, %v1441
      %v1876 = vpop.permute.xlu0 %1875
      %1879 = vset.pattern.permute.xlu0 0
      %1880 = vperm.xlu0 %1879, %v1442
      %v1881 = vpop.permute.xlu0 %1880
      %1884 = vset.pattern.permute.xlu0 0
      %1885 = vperm.xlu0 %1884, %v1443
      %v1886 = vpop.permute.xlu0 %1885
      %1889 = vset.pattern.permute.xlu0 0
      %1890 = vperm.xlu0 %1889, %v1444
      %v1891 = vpop.permute.xlu0 %1890
      %1894 = vset.pattern.permute.xlu0 0
      %1895 = vperm.xlu0 %1894, %v1445
      %v1896 = vpop.permute.xlu0 %1895
      %1899 = vset.pattern.permute.xlu0 0
      %1900 = vperm.xlu0 %1899, %v1446
      %v1901 = vpop.permute.xlu0 %1900
      %1904 = vset.pattern.permute.xlu0 0
      %1905 = vperm.xlu0 %1904, %v1447
      %v1906 = vpop.permute.xlu0 %1905
      %1909 = vset.pattern.permute.xlu0 0
      %1910 = vperm.xlu0 %1909, %v1448
      %v1911 = vpop.permute.xlu0 %1910
      %1914 = vset.pattern.permute.xlu0 0
      %1915 = vperm.xlu0 %1914, %v1449
      %v1916 = vpop.permute.xlu0 %1915
      %1919 = vset.pattern.permute.xlu0 0
      %1920 = vperm.xlu0 %1919, %v1450
      %v1921 = vpop.permute.xlu0 %1920
      %1924 = vset.pattern.permute.xlu0 0
      %1925 = vperm.xlu0 %1924, %v1451
      %v1926 = vpop.permute.xlu0 %1925
      %1929 = vset.pattern.permute.xlu0 0
      %1930 = vperm.xlu0 %1929, %v1452
      %v1931 = vpop.permute.xlu0 %1930
      %1934 = vset.pattern.permute.xlu0 0
      %1935 = vperm.xlu0 %1934, %v1453
      %v1936 = vpop.permute.xlu0 %1935
      %1939 = vset.pattern.permute.xlu0 0
      %1940 = vperm.xlu0 %1939, %v1454
      %v1941 = vpop.permute.xlu0 %1940
      %1944 = vset.pattern.permute.xlu0 0
      %1945 = vperm.xlu0 %1944, %v1455
      %v1946 = vpop.permute.xlu0 %1945
      %1949 = vset.pattern.permute.xlu0 0
      %1950 = vperm.xlu0 %1949, %v1456
      %v1951 = vpop.permute.xlu0 %1950
      %1954 = vset.pattern.permute.xlu0 0
      %1955 = vperm.xlu0 %1954, %v1457
      %v1956 = vpop.permute.xlu0 %1955
      %1959 = vset.pattern.permute.xlu0 0
      %1960 = vperm.xlu0 %1959, %v1458
      %v1961 = vpop.permute.xlu0 %1960
      %1964 = vset.pattern.permute.xlu0 0
      %1965 = vperm.xlu0 %1964, %v1459
      %v1966 = vpop.permute.xlu0 %1965
      %1969 = vset.pattern.permute.xlu0 0
      %1970 = vperm.xlu0 %1969, %v1460
      %v1971 = vpop.permute.xlu0 %1970
      %1974 = vset.pattern.permute.xlu0 0
      %1975 = vperm.xlu0 %1974, %v1461
      %v1976 = vpop.permute.xlu0 %1975
      %1979 = vset.pattern.permute.xlu0 0
      %1980 = vperm.xlu0 %1979, %v1462
      %v1981 = vpop.permute.xlu0 %1980
      %1984 = vset.pattern.permute.xlu0 0
      %1985 = vperm.xlu0 %1984, %v1463
      %v1986 = vpop.permute.xlu0 %1985
      %1989 = vset.pattern.permute.xlu0 0
      %1990 = vperm.xlu0 %1989, %v1464
      %v1991 = vpop.permute.xlu0 %1990
      %1994 = vset.pattern.permute.xlu0 0
      %1995 = vperm.xlu0 %1994, %v1465
      %v1996 = vpop.permute.xlu0 %1995
      %1999 = vset.pattern.permute.xlu0 0
      %2000 = vperm.xlu0 %1999, %v1466
      %v2001 = vpop.permute.xlu0 %2000
      %2004 = vset.pattern.permute.xlu0 0
      %2005 = vperm.xlu0 %2004, %v1467
      %v2006 = vpop.permute.xlu0 %2005
      %2009 = vset.pattern.permute.xlu0 0
      %2010 = vperm.xlu0 %2009, %v1468
      %v2011 = vpop.permute.xlu0 %2010
      %2014 = vset.pattern.permute.xlu0 0
      %2015 = vperm.xlu0 %2014, %v1469
      %v2016 = vpop.permute.xlu0 %2015
      %2019 = vset.pattern.permute.xlu0 0
      %2020 = vperm.xlu0 %2019, %v1470
      %v2021 = vpop.permute.xlu0 %2020
      %2024 = vset.pattern.permute.xlu0 0
      %2025 = vperm.xlu0 %2024, %v1471
      %v2026 = vpop.permute.xlu0 %2025
      %2029 = vset.pattern.permute.xlu0 0
      %2030 = vperm.xlu0 %2029, %v1472
      %v2031 = vpop.permute.xlu0 %2030
      %2034 = vset.pattern.permute.xlu0 0
      %2035 = vperm.xlu0 %2034, %v1473
      %v2036 = vpop.permute.xlu0 %2035
      %2039 = vset.pattern.permute.xlu0 0
      %2040 = vperm.xlu0 %2039, %v1474
      %v2041 = vpop.permute.xlu0 %2040
      %2044 = vset.pattern.permute.xlu0 0
      %2045 = vperm.xlu0 %2044, %v1475
      %v2046 = vpop.permute.xlu0 %2045
      %2049 = vset.pattern.permute.xlu0 0
      %2050 = vperm.xlu0 %2049, %v1476
      %v2051 = vpop.permute.xlu0 %2050
      %2054 = vset.pattern.permute.xlu0 0
      %2055 = vperm.xlu0 %2054, %v1477
      %v2056 = vpop.permute.xlu0 %2055
      %2059 = vset.pattern.permute.xlu0 0
      %2060 = vperm.xlu0 %2059, %v1478
      %v2061 = vpop.permute.xlu0 %2060
      %2064 = vset.pattern.permute.xlu0 0
      %2065 = vperm.xlu0 %2064, %v1479
      %v2066 = vpop.permute.xlu0 %2065
      %2069 = vset.pattern.permute.xlu0 0
      %2070 = vperm.xlu0 %2069, %v1480
      %v2071 = vpop.permute.xlu0 %2070
      %2074 = vset.pattern.permute.xlu0 0
      %2075 = vperm.xlu0 %2074, %v1481
      %v2076 = vpop.permute.xlu0 %2075
      %2079 = vset.pattern.permute.xlu0 0
      %2080 = vperm.xlu0 %2079, %v1482
      %v2081 = vpop.permute.xlu0 %2080
      %2084 = vset.pattern.permute.xlu0 0
      %2085 = vperm.xlu0 %2084, %v1483
      %v2086 = vpop.permute.xlu0 %2085
      %2089 = vset.pattern.permute.xlu0 0
      %2090 = vperm.xlu0 %2089, %v1484
      %v2091 = vpop.permute.xlu0 %2090
      %2094 = vset.pattern.permute.xlu0 0
      %2095 = vperm.xlu0 %2094, %v1485
      %v2096 = vpop.permute.xlu0 %2095
      %2099 = vset.pattern.permute.xlu0 0
      %2100 = vperm.xlu0 %2099, %v1486
      %v2101 = vpop.permute.xlu0 %2100
      %2104 = vset.pattern.permute.xlu0 0
      %2105 = vperm.xlu0 %2104, %v1487
      %v2106 = vpop.permute.xlu0 %2105
      %2109 = vset.pattern.permute.xlu0 0
      %2110 = vperm.xlu0 %2109, %v1488
      %v2111 = vpop.permute.xlu0 %2110
      %2114 = vset.pattern.permute.xlu0 0
      %2115 = vperm.xlu0 %2114, %v1489
      %v2116 = vpop.permute.xlu0 %2115
      %2119 = vset.pattern.permute.xlu0 0
      %2120 = vperm.xlu0 %2119, %v1490
      %v2121 = vpop.permute.xlu0 %2120
      %2124 = vset.pattern.permute.xlu0 0
      %2125 = vperm.xlu0 %2124, %v1491
      %v2126 = vpop.permute.xlu0 %2125
      %2129 = vset.pattern.permute.xlu0 0
      %2130 = vperm.xlu0 %2129, %v1492
      %v2131 = vpop.permute.xlu0 %2130
      %2134 = vset.pattern.permute.xlu0 0
      %2135 = vperm.xlu0 %2134, %v1493
      %v2136 = vpop.permute.xlu0 %2135
      %2139 = vset.pattern.permute.xlu0 0
      %2140 = vperm.xlu0 %2139, %v1494
      %v2141 = vpop.permute.xlu0 %2140
      %2144 = vset.pattern.permute.xlu0 0
      %2145 = vperm.xlu0 %2144, %v1495
      %v2146 = vpop.permute.xlu0 %2145
      %2149 = vset.pattern.permute.xlu0 0
      %2150 = vperm.xlu0 %2149, %v1496
      %v2151 = vpop.permute.xlu0 %2150
      %2154 = vset.pattern.permute.xlu0 0
      %2155 = vperm.xlu0 %2154, %v1497
      %v2156 = vpop.permute.xlu0 %2155
      %2159 = vset.pattern.permute.xlu0 0
      %2160 = vperm.xlu0 %2159, %v1498
      %v2161 = vpop.permute.xlu0 %2160
      %2164 = vset.pattern.permute.xlu0 0
      %2165 = vperm.xlu0 %2164, %v1499
      %v2166 = vpop.permute.xlu0 %2165
      %2169 = vset.pattern.permute.xlu0 0
      %2170 = vperm.xlu0 %2169, %v1500
      %v2171 = vpop.permute.xlu0 %2170
      %2174 = vset.pattern.permute.xlu0 0
      %2175 = vperm.xlu0 %2174, %v1501
      %v2176 = vpop.permute.xlu0 %2175
      %2179 = vset.pattern.permute.xlu0 0
      %2180 = vperm.xlu0 %2179, %v1502
      %v2181 = vpop.permute.xlu0 %2180
      %2184 = vset.pattern.permute.xlu0 0
      %2185 = vperm.xlu0 %2184, %v1503
      %v2186 = vpop.permute.xlu0 %2185
      %2189 = vset.pattern.permute.xlu0 0
      %2190 = vperm.xlu0 %2189, %v1504
      %v2191 = vpop.permute.xlu0 %2190
      %2194 = vset.pattern.permute.xlu0 0
      %2195 = vperm.xlu0 %2194, %v1505
      %v2196 = vpop.permute.xlu0 %2195
      %2199 = vset.pattern.permute.xlu0 0
      %2200 = vperm.xlu0 %2199, %v1506
      %v2201 = vpop.permute.xlu0 %2200
      %2204 = vset.pattern.permute.xlu0 0
      %2205 = vperm.xlu0 %2204, %v1507
      %v2206 = vpop.permute.xlu0 %2205
      %2209 = vset.pattern.permute.xlu0 0
      %2210 = vperm.xlu0 %2209, %v1508
      %v2211 = vpop.permute.xlu0 %2210
      %2214 = vset.pattern.permute.xlu0 0
      %2215 = vperm.xlu0 %2214, %v1509
      %v2216 = vpop.permute.xlu0 %2215
      %2219 = vset.pattern.permute.xlu0 0
      %2220 = vperm.xlu0 %2219, %v1510
      %v2221 = vpop.permute.xlu0 %2220
      %2224 = vset.pattern.permute.xlu0 0
      %2225 = vperm.xlu0 %2224, %v1511
      %v2226 = vpop.permute.xlu0 %2225
      %2229 = vset.pattern.permute.xlu0 0
      %2230 = vperm.xlu0 %2229, %v1512
      %v2231 = vpop.permute.xlu0 %2230
      %2234 = vset.pattern.permute.xlu0 0
      %2235 = vperm.xlu0 %2234, %v1513
      %v2236 = vpop.permute.xlu0 %2235
      %2239 = vset.pattern.permute.xlu0 0
      %2240 = vperm.xlu0 %2239, %v1514
      %v2241 = vpop.permute.xlu0 %2240
      %2244 = vset.pattern.permute.xlu0 0
      %2245 = vperm.xlu0 %2244, %v1515
      %v2246 = vpop.permute.xlu0 %2245
      %2249 = vset.pattern.permute.xlu0 0
      %2250 = vperm.xlu0 %2249, %v1516
      %v2251 = vpop.permute.xlu0 %2250
      %2254 = vset.pattern.permute.xlu0 0
      %2255 = vperm.xlu0 %2254, %v1517
      %v2256 = vpop.permute.xlu0 %2255
      %2259 = vset.pattern.permute.xlu0 0
      %2260 = vperm.xlu0 %2259, %v1518
      %v2261 = vpop.permute.xlu0 %2260
      %2264 = vset.pattern.permute.xlu0 0
      %2265 = vperm.xlu0 %2264, %v1519
      %v2266 = vpop.permute.xlu0 %2265
      %2269 = vset.pattern.permute.xlu0 0
      %2270 = vperm.xlu0 %2269, %v1520
      %v2271 = vpop.permute.xlu0 %2270
      %2274 = vset.pattern.permute.xlu0 0
      %2275 = vperm.xlu0 %2274, %v1521
      %v2276 = vpop.permute.xlu0 %2275
      %2279 = vset.pattern.permute.xlu0 0
      %2280 = vperm.xlu0 %2279, %v1522
      %v2281 = vpop.permute.xlu0 %2280
      %2284 = vset.pattern.permute.xlu0 0
      %2285 = vperm.xlu0 %2284, %v1523
      %v2286 = vpop.permute.xlu0 %2285
      %2289 = vset.pattern.permute.xlu0 0
      %2290 = vperm.xlu0 %2289, %v1524
      %v2291 = vpop.permute.xlu0 %2290
      %2294 = vset.pattern.permute.xlu0 0
      %2295 = vperm.xlu0 %2294, %v1525
      %v2296 = vpop.permute.xlu0 %2295
      %2299 = vset.pattern.permute.xlu0 0
      %2300 = vperm.xlu0 %2299, %v1526
      %v2301 = vpop.permute.xlu0 %2300
      %2304 = vset.pattern.permute.xlu0 0
      %2305 = vperm.xlu0 %2304, %v1527
      %v2306 = vpop.permute.xlu0 %2305
      %2309 = vset.pattern.permute.xlu0 0
      %2310 = vperm.xlu0 %2309, %v1528
      %v2311 = vpop.permute.xlu0 %2310
      %2314 = vset.pattern.permute.xlu0 0
      %2315 = vperm.xlu0 %2314, %v1529
      %v2316 = vpop.permute.xlu0 %2315
      %2319 = vset.pattern.permute.xlu0 0
      %2320 = vperm.xlu0 %2319, %v1530
      %v2321 = vpop.permute.xlu0 %2320
      %2324 = vset.pattern.permute.xlu0 0
      %2325 = vperm.xlu0 %2324, %v1531
      %v2326 = vpop.permute.xlu0 %2325
      %2329 = vset.pattern.permute.xlu0 0
      %2330 = vperm.xlu0 %2329, %v1532
      %v2331 = vpop.permute.xlu0 %2330
      %2334 = vset.pattern.permute.xlu0 0
      %2335 = vperm.xlu0 %2334, %v1533
      %v2336 = vpop.permute.xlu0 %2335
      %2339 = vset.pattern.permute.xlu0 0
      %2340 = vperm.xlu0 %2339, %v1534
      %v2341 = vpop.permute.xlu0 %2340
      %2344 = vset.pattern.permute.xlu0 0
      %2345 = vperm.xlu0 %2344, %v1535
      %v2346 = vpop.permute.xlu0 %2345
      %2349 = vset.pattern.permute.xlu0 0
      %2350 = vperm.xlu0 %2349, %v1536
      %v2351 = vpop.permute.xlu0 %2350
      %2354 = vset.pattern.permute.xlu0 0
      %2355 = vperm.xlu0 %2354, %v1537
      %v2356 = vpop.permute.xlu0 %2355
      %2359 = vset.pattern.permute.xlu0 0
      %2360 = vperm.xlu0 %2359, %v1538
      %v2361 = vpop.permute.xlu0 %2360
      %2364 = vset.pattern.permute.xlu0 0
      %2365 = vperm.xlu0 %2364, %v1539
      %v2366 = vpop.permute.xlu0 %2365
      %2369 = vset.pattern.permute.xlu0 0
      %2370 = vperm.xlu0 %2369, %v1540
      %v2371 = vpop.permute.xlu0 %2370
      %2374 = vset.pattern.permute.xlu0 0
      %2375 = vperm.xlu0 %2374, %v1541
      %v2376 = vpop.permute.xlu0 %2375
      %2379 = vset.pattern.permute.xlu0 0
      %2380 = vperm.xlu0 %2379, %v1542
      %v2381 = vpop.permute.xlu0 %2380
      %2384 = vset.pattern.permute.xlu0 0
      %2385 = vperm.xlu0 %2384, %v1543
      %v2386 = vpop.permute.xlu0 %2385
      %2389 = vset.pattern.permute.xlu0 0
      %2390 = vperm.xlu0 %2389, %v1544
      %v2391 = vpop.permute.xlu0 %2390
      %2394 = vset.pattern.permute.xlu0 0
      %2395 = vperm.xlu0 %2394, %v1545
      %v2396 = vpop.permute.xlu0 %2395
      %2399 = vset.pattern.permute.xlu0 0
      %2400 = vperm.xlu0 %2399, %v1546
      %v2401 = vpop.permute.xlu0 %2400
      %2404 = vset.pattern.permute.xlu0 0
      %2405 = vperm.xlu0 %2404, %v1547
      %v2406 = vpop.permute.xlu0 %2405
      %2409 = vset.pattern.permute.xlu0 0
      %2410 = vperm.xlu0 %2409, %v1548
      %v2411 = vpop.permute.xlu0 %2410
      %2414 = vset.pattern.permute.xlu0 0
      %2415 = vperm.xlu0 %2414, %v1549
      %v2416 = vpop.permute.xlu0 %2415
      %2419 = vset.pattern.permute.xlu0 0
      %2420 = vperm.xlu0 %2419, %v1550
      %v2421 = vpop.permute.xlu0 %2420
      %2424 = vset.pattern.permute.xlu0 0
      %2425 = vperm.xlu0 %2424, %v1551
      %v2426 = vpop.permute.xlu0 %2425
      %2429 = vset.pattern.permute.xlu0 0
      %2430 = vperm.xlu0 %2429, %v1552
      %v2431 = vpop.permute.xlu0 %2430
      %2434 = vset.pattern.permute.xlu0 0
      %2435 = vperm.xlu0 %2434, %v1553
      %v2436 = vpop.permute.xlu0 %2435
      %2439 = vset.pattern.permute.xlu0 0
      %2440 = vperm.xlu0 %2439, %v1554
      %v2441 = vpop.permute.xlu0 %2440
      %2444 = vset.pattern.permute.xlu0 0
      %2445 = vperm.xlu0 %2444, %v1555
      %v2446 = vpop.permute.xlu0 %2445
      %2449 = vset.pattern.permute.xlu0 0
      %2450 = vperm.xlu0 %2449, %v1556
      %v2451 = vpop.permute.xlu0 %2450
      %2454 = vset.pattern.permute.xlu0 0
      %2455 = vperm.xlu0 %2454, %v1557
      %v2456 = vpop.permute.xlu0 %2455
      %2459 = vset.pattern.permute.xlu0 0
      %2460 = vperm.xlu0 %2459, %v1558
      %v2461 = vpop.permute.xlu0 %2460
      %2464 = vset.pattern.permute.xlu0 0
      %2465 = vperm.xlu0 %2464, %v1559
      %v2466 = vpop.permute.xlu0 %2465
      %2469 = vset.pattern.permute.xlu0 0
      %2470 = vperm.xlu0 %2469, %v1560
      %v2471 = vpop.permute.xlu0 %2470
      %2474 = vset.pattern.permute.xlu0 0
      %2475 = vperm.xlu0 %2474, %v1561
      %v2476 = vpop.permute.xlu0 %2475
      %2479 = vset.pattern.permute.xlu0 0
      %2480 = vperm.xlu0 %2479, %v1562
      %v2481 = vpop.permute.xlu0 %2480
      %2484 = vset.pattern.permute.xlu0 0
      %2485 = vperm.xlu0 %2484, %v1563
      %v2486 = vpop.permute.xlu0 %2485
      %2489 = vset.pattern.permute.xlu0 0
      %2490 = vperm.xlu0 %2489, %v1564
      %v2491 = vpop.permute.xlu0 %2490
      %2494 = vset.pattern.permute.xlu0 0
      %2495 = vperm.xlu0 %2494, %v1565
      %v2496 = vpop.permute.xlu0 %2495
      %2499 = vset.pattern.permute.xlu0 0
      %2500 = vperm.xlu0 %2499, %v1566
      %v2501 = vpop.permute.xlu0 %2500
      %2504 = vset.pattern.permute.xlu0 0
      %2505 = vperm.xlu0 %2504, %v1567
      %v2506 = vpop.permute.xlu0 %2505
      %2509 = vset.pattern.permute.xlu0 0
      %2510 = vperm.xlu0 %2509, %v1568
      %v2511 = vpop.permute.xlu0 %2510
      %2514 = vset.pattern.permute.xlu0 0
      %2515 = vperm.xlu0 %2514, %v1569
      %v2516 = vpop.permute.xlu0 %2515
      %2519 = vset.pattern.permute.xlu0 0
      %2520 = vperm.xlu0 %2519, %v1570
      %v2521 = vpop.permute.xlu0 %2520
      %2524 = vset.pattern.permute.xlu0 0
      %2525 = vperm.xlu0 %2524, %v1571
      %v2526 = vpop.permute.xlu0 %2525
      %2529 = vset.pattern.permute.xlu0 0
      %2530 = vperm.xlu0 %2529, %v1572
      %v2531 = vpop.permute.xlu0 %2530
      %2534 = vset.pattern.permute.xlu0 0
      %2535 = vperm.xlu0 %2534, %v1573
      %v2536 = vpop.permute.xlu0 %2535
      %2539 = vset.pattern.permute.xlu0 0
      %2540 = vperm.xlu0 %2539, %v1574
      %v2541 = vpop.permute.xlu0 %2540
      %2544 = vset.pattern.permute.xlu0 0
      %2545 = vperm.xlu0 %2544, %v1575
      %v2546 = vpop.permute.xlu0 %2545
      %2549 = vset.pattern.permute.xlu0 0
      %2550 = vperm.xlu0 %2549, %v1576
      %v2551 = vpop.permute.xlu0 %2550
      %2554 = vset.pattern.permute.xlu0 0
      %2555 = vperm.xlu0 %2554, %v1577
      %v2556 = vpop.permute.xlu0 %2555
      %2559 = vset.pattern.permute.xlu0 0
      %2560 = vperm.xlu0 %2559, %v1578
      %v2561 = vpop.permute.xlu0 %2560
      %2564 = vset.pattern.permute.xlu0 0
      %2565 = vperm.xlu0 %2564, %v1579
      %v2566 = vpop.permute.xlu0 %2565
      %2569 = vset.pattern.permute.xlu0 0
      %2570 = vperm.xlu0 %2569, %v1580
      %v2571 = vpop.permute.xlu0 %2570
      %2574 = vset.pattern.permute.xlu0 0
      %2575 = vperm.xlu0 %2574, %v1581
      %v2576 = vpop.permute.xlu0 %2575
      %2579 = vset.pattern.permute.xlu0 0
      %2580 = vperm.xlu0 %2579, %v1582
      %v2581 = vpop.permute.xlu0 %2580
      %v2583 = vmul.f32 %v1183, %v1586
      %v2584 = vmul.f32 %v1184, %v1591
      %v2585 = vmul.f32 %v1185, %v1596
      %v2586 = vmul.f32 %v1186, %v1601
      %v2587 = vmul.f32 %v1187, %v1606
      %v2588 = vmul.f32 %v1188, %v1611
      %v2589 = vmul.f32 %v1189, %v1616
      %v2590 = vmul.f32 %v1190, %v1621
      %v2591 = vmul.f32 %v1191, %v1626
      %v2592 = vmul.f32 %v1192, %v1631
      %v2593 = vmul.f32 %v1193, %v1636
      %v2594 = vmul.f32 %v1194, %v1641
      %v2595 = vmul.f32 %v1195, %v1646
      %v2596 = vmul.f32 %v1196, %v1651
      %v2597 = vmul.f32 %v1197, %v1656
      %v2598 = vmul.f32 %v1198, %v1661
      %v2599 = vmul.f32 %v1199, %v1666
      %v2600 = vmul.f32 %v1200, %v1671
      %v2601 = vmul.f32 %v1201, %v1676
      %v2602 = vmul.f32 %v1202, %v1681
      %v2603 = vmul.f32 %v1203, %v1686
      %v2604 = vmul.f32 %v1204, %v1691
      %v2605 = vmul.f32 %v1205, %v1696
      %v2606 = vmul.f32 %v1206, %v1701
      %v2607 = vmul.f32 %v1207, %v1706
      %v2608 = vmul.f32 %v1208, %v1711
      %v2609 = vmul.f32 %v1209, %v1716
      %v2610 = vmul.f32 %v1210, %v1721
      %v2611 = vmul.f32 %v1211, %v1726
      %v2612 = vmul.f32 %v1212, %v1731
      %v2613 = vmul.f32 %v1213, %v1736
      %v2614 = vmul.f32 %v1214, %v1741
      %v2615 = vmul.f32 %v1215, %v1746
      %v2616 = vmul.f32 %v1216, %v1751
      %v2617 = vmul.f32 %v1217, %v1756
      %v2618 = vmul.f32 %v1218, %v1761
      %v2619 = vmul.f32 %v1219, %v1766
      %v2620 = vmul.f32 %v1220, %v1771
      %v2621 = vmul.f32 %v1221, %v1776
      %v2622 = vmul.f32 %v1222, %v1781
      %v2623 = vmul.f32 %v1223, %v1786
      %v2624 = vmul.f32 %v1224, %v1791
      %v2625 = vmul.f32 %v1225, %v1796
      %v2626 = vmul.f32 %v1226, %v1801
      %v2627 = vmul.f32 %v1227, %v1806
      %v2628 = vmul.f32 %v1228, %v1811
      %v2629 = vmul.f32 %v1229, %v1816
      %v2630 = vmul.f32 %v1230, %v1821
      %v2631 = vmul.f32 %v1231, %v1826
      %v2632 = vmul.f32 %v1232, %v1831
      %v2633 = vmul.f32 %v1233, %v1836
      %v2634 = vmul.f32 %v1234, %v1841
      %v2635 = vmul.f32 %v1235, %v1846
      %v2636 = vmul.f32 %v1236, %v1851
      %v2637 = vmul.f32 %v1237, %v1856
      %v2638 = vmul.f32 %v1238, %v1861
      %v2639 = vmul.f32 %v1239, %v1866
      %v2640 = vmul.f32 %v1240, %v1871
      %v2641 = vmul.f32 %v1241, %v1876
      %v2642 = vmul.f32 %v1242, %v1881
      %v2643 = vmul.f32 %v1243, %v1886
      %v2644 = vmul.f32 %v1244, %v1891
      %v2645 = vmul.f32 %v1245, %v1896
      %v2646 = vmul.f32 %v1246, %v1901
      %v2647 = vmul.f32 %v1247, %v1906
      %v2648 = vmul.f32 %v1248, %v1911
      %v2649 = vmul.f32 %v1249, %v1916
      %v2650 = vmul.f32 %v1250, %v1921
      %v2651 = vmul.f32 %v1251, %v1926
      %v2652 = vmul.f32 %v1252, %v1931
      %v2653 = vmul.f32 %v1253, %v1936
      %v2654 = vmul.f32 %v1254, %v1941
      %v2655 = vmul.f32 %v1255, %v1946
      %v2656 = vmul.f32 %v1256, %v1951
      %v2657 = vmul.f32 %v1257, %v1956
      %v2658 = vmul.f32 %v1258, %v1961
      %v2659 = vmul.f32 %v1259, %v1966
      %v2660 = vmul.f32 %v1260, %v1971
      %v2661 = vmul.f32 %v1261, %v1976
      %v2662 = vmul.f32 %v1262, %v1981
      %v2663 = vmul.f32 %v1263, %v1986
      %v2664 = vmul.f32 %v1264, %v1991
      %v2665 = vmul.f32 %v1265, %v1996
      %v2666 = vmul.f32 %v1266, %v2001
      %v2667 = vmul.f32 %v1267, %v2006
      %v2668 = vmul.f32 %v1268, %v2011
      %v2669 = vmul.f32 %v1269, %v2016
      %v2670 = vmul.f32 %v1270, %v2021
      %v2671 = vmul.f32 %v1271, %v2026
      %v2672 = vmul.f32 %v1272, %v2031
      %v2673 = vmul.f32 %v1273, %v2036
      %v2674 = vmul.f32 %v1274, %v2041
      %v2675 = vmul.f32 %v1275, %v2046
      %v2676 = vmul.f32 %v1276, %v2051
      %v2677 = vmul.f32 %v1277, %v2056
      %v2678 = vmul.f32 %v1278, %v2061
      %v2679 = vmul.f32 %v1279, %v2066
      %v2680 = vmul.f32 %v1280, %v2071
      %v2681 = vmul.f32 %v1281, %v2076
      %v2682 = vmul.f32 %v1282, %v2081
      %v2683 = vmul.f32 %v1283, %v2086
      %v2684 = vmul.f32 %v1284, %v2091
      %v2685 = vmul.f32 %v1285, %v2096
      %v2686 = vmul.f32 %v1286, %v2101
      %v2687 = vmul.f32 %v1287, %v2106
      %v2688 = vmul.f32 %v1288, %v2111
      %v2689 = vmul.f32 %v1289, %v2116
      %v2690 = vmul.f32 %v1290, %v2121
      %v2691 = vmul.f32 %v1291, %v2126
      %v2692 = vmul.f32 %v1292, %v2131
      %v2693 = vmul.f32 %v1293, %v2136
      %v2694 = vmul.f32 %v1294, %v2141
      %v2695 = vmul.f32 %v1295, %v2146
      %v2696 = vmul.f32 %v1296, %v2151
      %v2697 = vmul.f32 %v1297, %v2156
      %v2698 = vmul.f32 %v1298, %v2161
      %v2699 = vmul.f32 %v1299, %v2166
      %v2700 = vmul.f32 %v1300, %v2171
      %v2701 = vmul.f32 %v1301, %v2176
      %v2702 = vmul.f32 %v1302, %v2181
      %v2703 = vmul.f32 %v1303, %v2186
      %v2704 = vmul.f32 %v1304, %v2191
      %v2705 = vmul.f32 %v1305, %v2196
      %v2706 = vmul.f32 %v1306, %v2201
      %v2707 = vmul.f32 %v1307, %v2206
      %v2708 = vmul.f32 %v1308, %v2211
      %v2709 = vmul.f32 %v1309, %v2216
      %v2710 = vmul.f32 %v1310, %v2221
      %v2711 = vmul.f32 %v1311, %v2226
      %v2712 = vmul.f32 %v1312, %v2231
      %v2713 = vmul.f32 %v1313, %v2236
      %v2714 = vmul.f32 %v1314, %v2241
      %v2715 = vmul.f32 %v1315, %v2246
      %v2716 = vmul.f32 %v1316, %v2251
      %v2717 = vmul.f32 %v1317, %v2256
      %v2718 = vmul.f32 %v1318, %v2261
      %v2719 = vmul.f32 %v1319, %v2266
      %v2720 = vmul.f32 %v1320, %v2271
      %v2721 = vmul.f32 %v1321, %v2276
      %v2722 = vmul.f32 %v1322, %v2281
      %v2723 = vmul.f32 %v1323, %v2286
      %v2724 = vmul.f32 %v1324, %v2291
      %v2725 = vmul.f32 %v1325, %v2296
      %v2726 = vmul.f32 %v1326, %v2301
      %v2727 = vmul.f32 %v1327, %v2306
      %v2728 = vmul.f32 %v1328, %v2311
      %v2729 = vmul.f32 %v1329, %v2316
      %v2730 = vmul.f32 %v1330, %v2321
      %v2731 = vmul.f32 %v1331, %v2326
      %v2732 = vmul.f32 %v1332, %v2331
      %v2733 = vmul.f32 %v1333, %v2336
      %v2734 = vmul.f32 %v1334, %v2341
      %v2735 = vmul.f32 %v1335, %v2346
      %v2736 = vmul.f32 %v1336, %v2351
      %v2737 = vmul.f32 %v1337, %v2356
      %v2738 = vmul.f32 %v1338, %v2361
      %v2739 = vmul.f32 %v1339, %v2366
      %v2740 = vmul.f32 %v1340, %v2371
      %v2741 = vmul.f32 %v1341, %v2376
      %v2742 = vmul.f32 %v1342, %v2381
      %v2743 = vmul.f32 %v1343, %v2386
      %v2744 = vmul.f32 %v1344, %v2391
      %v2745 = vmul.f32 %v1345, %v2396
      %v2746 = vmul.f32 %v1346, %v2401
      %v2747 = vmul.f32 %v1347, %v2406
      %v2748 = vmul.f32 %v1348, %v2411
      %v2749 = vmul.f32 %v1349, %v2416
      %v2750 = vmul.f32 %v1350, %v2421
      %v2751 = vmul.f32 %v1351, %v2426
      %v2752 = vmul.f32 %v1352, %v2431
      %v2753 = vmul.f32 %v1353, %v2436
      %v2754 = vmul.f32 %v1354, %v2441
      %v2755 = vmul.f32 %v1355, %v2446
      %v2756 = vmul.f32 %v1356, %v2451
      %v2757 = vmul.f32 %v1357, %v2456
      %v2758 = vmul.f32 %v1358, %v2461
      %v2759 = vmul.f32 %v1359, %v2466
      %v2760 = vmul.f32 %v1360, %v2471
      %v2761 = vmul.f32 %v1361, %v2476
      %v2762 = vmul.f32 %v1362, %v2481
      %v2763 = vmul.f32 %v1363, %v2486
      %v2764 = vmul.f32 %v1364, %v2491
      %v2765 = vmul.f32 %v1365, %v2496
      %v2766 = vmul.f32 %v1366, %v2501
      %v2767 = vmul.f32 %v1367, %v2506
      %v2768 = vmul.f32 %v1368, %v2511
      %v2769 = vmul.f32 %v1369, %v2516
      %v2770 = vmul.f32 %v1370, %v2521
      %v2771 = vmul.f32 %v1371, %v2526
      %v2772 = vmul.f32 %v1372, %v2531
      %v2773 = vmul.f32 %v1373, %v2536
      %v2774 = vmul.f32 %v1374, %v2541
      %v2775 = vmul.f32 %v1375, %v2546
      %v2776 = vmul.f32 %v1376, %v2551
      %v2777 = vmul.f32 %v1377, %v2556
      %v2778 = vmul.f32 %v1378, %v2561
      %v2779 = vmul.f32 %v1379, %v2566
      %v2780 = vmul.f32 %v1380, %v2571
      %v2781 = vmul.f32 %v1381, %v2576
      %v2782 = vmul.f32 %v1382, %v2581
      %v2783 = vpack.c.bf16 %v2585, %v2583
      %v2784 = vpack.c.bf16 %v2589, %v2587
      %v2785 = vpack.c.bf16 %v2593, %v2591
      %v2786 = vpack.c.bf16 %v2597, %v2595
      %v2787 = vpack.c.bf16 %v2605, %v2603
      %v2788 = vpack.c.bf16 %v2609, %v2607
      %v2789 = vpack.c.bf16 %v2613, %v2611
      %v2790 = vpack.c.bf16 %v2617, %v2615
      %v2791 = vpack.c.bf16 %v2625, %v2623
      %v2792 = vpack.c.bf16 %v2629, %v2627
      %v2793 = vpack.c.bf16 %v2633, %v2631
      %v2794 = vpack.c.bf16 %v2637, %v2635
      %v2795 = vpack.c.bf16 %v2645, %v2643
      %v2796 = vpack.c.bf16 %v2649, %v2647
      %v2797 = vpack.c.bf16 %v2653, %v2651
      %v2798 = vpack.c.bf16 %v2657, %v2655
      %v2799 = vpack.c.bf16 %v2665, %v2663
      %v2800 = vpack.c.bf16 %v2669, %v2667
      %v2801 = vpack.c.bf16 %v2673, %v2671
      %v2802 = vpack.c.bf16 %v2677, %v2675
      %v2803 = vpack.c.bf16 %v2685, %v2683
      %v2804 = vpack.c.bf16 %v2689, %v2687
      %v2805 = vpack.c.bf16 %v2693, %v2691
      %v2806 = vpack.c.bf16 %v2697, %v2695
      %v2807 = vpack.c.bf16 %v2705, %v2703
      %v2808 = vpack.c.bf16 %v2709, %v2707
      %v2809 = vpack.c.bf16 %v2713, %v2711
      %v2810 = vpack.c.bf16 %v2717, %v2715
      %v2811 = vpack.c.bf16 %v2725, %v2723
      %v2812 = vpack.c.bf16 %v2729, %v2727
      %v2813 = vpack.c.bf16 %v2733, %v2731
      %v2814 = vpack.c.bf16 %v2737, %v2735
      %v2815 = vld [vmem:[%s4] sm:$0xf]
      %v2816 = vld [vmem:[%s4 + $0x4] sm:$0xf]
      %v2817 = vld [vmem:[%s4 + $0x8] sm:$0xf]
      %v2818 = vld [vmem:[%s4 + $0xc] sm:$0xf]
      %v2819 = vld [vmem:[%s4 + $0x10] sm:$0xf]
      %v2820 = vld [vmem:[%s4 + $0x14] sm:$0xf]
      %v2821 = vld [vmem:[%s4 + $0x18] sm:$0xf]
      %v2822 = vld [vmem:[%s4 + $0x1c] sm:$0xf]
      %v2823 = vld [vmem:[%s4 + $0x20] sm:$0xf]
      %v2824 = vld [vmem:[%s4 + $0x24] sm:$0xf]
      %v2825 = vld [vmem:[%s4 + $0x28] sm:$0xf]
      %v2826 = vld [vmem:[%s4 + $0x2c] sm:$0xf]
      %v2827 = vld [vmem:[%s4 + $0x30] sm:$0xf]
      %v2828 = vld [vmem:[%s4 + $0x34] sm:$0xf]
      %v2829 = vld [vmem:[%s4 + $0x38] sm:$0xf]
      %v2830 = vld [vmem:[%s4 + $0x3c] sm:$0xf]
      %vm2959 = vcmask 1046528
      %v2960 = vrot.slane %v2583, 1
      %v2961 = vrot.slane %v2584, 1
      %v2962 = vsel %vm2959, %v2960, %v2961
      %v2963 = vrot.slane %v2585, 1
      %v2964 = vrot.slane %v2586, 1
      %v2965 = vsel %vm2959, %v2963, %v2964
      %v2966 = vrot.slane %v2587, 1
      %v2967 = vrot.slane %v2588, 1
      %v2968 = vsel %vm2959, %v2966, %v2967
      %v2969 = vrot.slane %v2589, 1
      %v2970 = vrot.slane %v2590, 1
      %v2971 = vsel %vm2959, %v2969, %v2970
      %v2972 = vrot.slane %v2591, 1
      %v2973 = vrot.slane %v2592, 1
      %v2974 = vsel %vm2959, %v2972, %v2973
      %v2975 = vrot.slane %v2593, 1
      %v2976 = vrot.slane %v2594, 1
      %v2977 = vsel %vm2959, %v2975, %v2976
      %v2978 = vrot.slane %v2595, 1
      %v2979 = vrot.slane %v2596, 1
      %v2980 = vsel %vm2959, %v2978, %v2979
      %v2981 = vrot.slane %v2597, 1
      %v2982 = vrot.slane %v2598, 1
      %v2983 = vsel %vm2959, %v2981, %v2982
      %v2984 = vrot.slane %v2603, 1
      %v2985 = vrot.slane %v2604, 1
      %v2986 = vsel %vm2959, %v2984, %v2985
      %v2987 = vrot.slane %v2605, 1
      %v2988 = vrot.slane %v2606, 1
      %v2989 = vsel %vm2959, %v2987, %v2988
      %v2990 = vrot.slane %v2607, 1
      %v2991 = vrot.slane %v2608, 1
      %v2992 = vsel %vm2959, %v2990, %v2991
      %v2993 = vrot.slane %v2609, 1
      %v2994 = vrot.slane %v2610, 1
      %v2995 = vsel %vm2959, %v2993, %v2994
      %v2996 = vrot.slane %v2611, 1
      %v2997 = vrot.slane %v2612, 1
      %v2998 = vsel %vm2959, %v2996, %v2997
      %v2999 = vrot.slane %v2613, 1
      %v3000 = vrot.slane %v2614, 1
      %v3001 = vsel %vm2959, %v2999, %v3000
      %v3002 = vrot.slane %v2615, 1
      %v3003 = vrot.slane %v2616, 1
      %v3004 = vsel %vm2959, %v3002, %v3003
      %v3005 = vrot.slane %v2617, 1
      %v3006 = vrot.slane %v2618, 1
      %v3007 = vsel %vm2959, %v3005, %v3006
      %v3008 = vrot.slane %v2623, 1
      %v3009 = vrot.slane %v2624, 1
      %v3010 = vsel %vm2959, %v3008, %v3009
      %v3011 = vrot.slane %v2625, 1
      %v3012 = vrot.slane %v2626, 1
      %v3013 = vsel %vm2959, %v3011, %v3012
      %v3014 = vrot.slane %v2627, 1
      %v3015 = vrot.slane %v2628, 1
      %v3016 = vsel %vm2959, %v3014, %v3015
      %v3017 = vrot.slane %v2629, 1
      %v3018 = vrot.slane %v2630, 1
      %v3019 = vsel %vm2959, %v3017, %v3018
      %v3020 = vrot.slane %v2631, 1
      %v3021 = vrot.slane %v2632, 1
      %v3022 = vsel %vm2959, %v3020, %v3021
      %v3023 = vrot.slane %v2633, 1
      %v3024 = vrot.slane %v2634, 1
      %v3025 = vsel %vm2959, %v3023, %v3024
      %v3026 = vrot.slane %v2635, 1
      %v3027 = vrot.slane %v2636, 1
      %v3028 = vsel %vm2959, %v3026, %v3027
      %v3029 = vrot.slane %v2637, 1
      %v3030 = vrot.slane %v2638, 1
      %v3031 = vsel %vm2959, %v3029, %v3030
      %v3032 = vrot.slane %v2643, 1
      %v3033 = vrot.slane %v2644, 1
      %v3034 = vsel %vm2959, %v3032, %v3033
      %v3035 = vrot.slane %v2645, 1
      %v3036 = vrot.slane %v2646, 1
      %v3037 = vsel %vm2959, %v3035, %v3036
      %v3038 = vrot.slane %v2647, 1
      %v3039 = vrot.slane %v2648, 1
      %v3040 = vsel %vm2959, %v3038, %v3039
      %v3041 = vrot.slane %v2649, 1
      %v3042 = vrot.slane %v2650, 1
      %v3043 = vsel %vm2959, %v3041, %v3042
      %v3044 = vrot.slane %v2651, 1
      %v3045 = vrot.slane %v2652, 1
      %v3046 = vsel %vm2959, %v3044, %v3045
      %v3047 = vrot.slane %v2653, 1
      %v3048 = vrot.slane %v2654, 1
      %v3049 = vsel %vm2959, %v3047, %v3048
      %v3050 = vrot.slane %v2655, 1
      %v3051 = vrot.slane %v2656, 1
      %v3052 = vsel %vm2959, %v3050, %v3051
      %v3053 = vrot.slane %v2657, 1
      %v3054 = vrot.slane %v2658, 1
      %v3055 = vsel %vm2959, %v3053, %v3054
      %v3056 = vrot.slane %v2663, 1
      %v3057 = vrot.slane %v2664, 1
      %v3058 = vsel %vm2959, %v3056, %v3057
      %v3059 = vrot.slane %v2665, 1
      %v3060 = vrot.slane %v2666, 1
      %v3061 = vsel %vm2959, %v3059, %v3060
      %v3062 = vrot.slane %v2667, 1
      %v3063 = vrot.slane %v2668, 1
      %v3064 = vsel %vm2959, %v3062, %v3063
      %v3065 = vrot.slane %v2669, 1
      %v3066 = vrot.slane %v2670, 1
      %v3067 = vsel %vm2959, %v3065, %v3066
      %v3068 = vrot.slane %v2671, 1
      %v3069 = vrot.slane %v2672, 1
      %v3070 = vsel %vm2959, %v3068, %v3069
      %v3071 = vrot.slane %v2673, 1
      %v3072 = vrot.slane %v2674, 1
      %v3073 = vsel %vm2959, %v3071, %v3072
      %v3074 = vrot.slane %v2675, 1
      %v3075 = vrot.slane %v2676, 1
      %v3076 = vsel %vm2959, %v3074, %v3075
      %v3077 = vrot.slane %v2677, 1
      %v3078 = vrot.slane %v2678, 1
      %v3079 = vsel %vm2959, %v3077, %v3078
      %v3080 = vrot.slane %v2683, 1
      %v3081 = vrot.slane %v2684, 1
      %v3082 = vsel %vm2959, %v3080, %v3081
      %v3083 = vrot.slane %v2685, 1
      %v3084 = vrot.slane %v2686, 1
      %v3085 = vsel %vm2959, %v3083, %v3084
      %v3086 = vrot.slane %v2687, 1
      %v3087 = vrot.slane %v2688, 1
      %v3088 = vsel %vm2959, %v3086, %v3087
      %v3089 = vrot.slane %v2689, 1
      %v3090 = vrot.slane %v2690, 1
      %v3091 = vsel %vm2959, %v3089, %v3090
      %v3092 = vrot.slane %v2691, 1
      %v3093 = vrot.slane %v2692, 1
      %v3094 = vsel %vm2959, %v3092, %v3093
      %v3095 = vrot.slane %v2693, 1
      %v3096 = vrot.slane %v2694, 1
      %v3097 = vsel %vm2959, %v3095, %v3096
      %v3098 = vrot.slane %v2695, 1
      %v3099 = vrot.slane %v2696, 1
      %v3100 = vsel %vm2959, %v3098, %v3099
      %v3101 = vrot.slane %v2697, 1
      %v3102 = vrot.slane %v2698, 1
      %v3103 = vsel %vm2959, %v3101, %v3102
      %v3104 = vrot.slane %v2703, 1
      %v3105 = vrot.slane %v2704, 1
      %v3106 = vsel %vm2959, %v3104, %v3105
      %v3107 = vrot.slane %v2705, 1
      %v3108 = vrot.slane %v2706, 1
      %v3109 = vsel %vm2959, %v3107, %v3108
      %v3110 = vrot.slane %v2707, 1
      %v3111 = vrot.slane %v2708, 1
      %v3112 = vsel %vm2959, %v3110, %v3111
      %v3113 = vrot.slane %v2709, 1
      %v3114 = vrot.slane %v2710, 1
      %v3115 = vsel %vm2959, %v3113, %v3114
      %v3116 = vrot.slane %v2711, 1
      %v3117 = vrot.slane %v2712, 1
      %v3118 = vsel %vm2959, %v3116, %v3117
      %v3119 = vrot.slane %v2713, 1
      %v3120 = vrot.slane %v2714, 1
      %v3121 = vsel %vm2959, %v3119, %v3120
      %v3122 = vrot.slane %v2715, 1
      %v3123 = vrot.slane %v2716, 1
      %v3124 = vsel %vm2959, %v3122, %v3123
      %v3125 = vrot.slane %v2717, 1
      %v3126 = vrot.slane %v2718, 1
      %v3127 = vsel %vm2959, %v3125, %v3126
      %v3128 = vrot.slane %v2723, 1
      %v3129 = vrot.slane %v2724, 1
      %v3130 = vsel %vm2959, %v3128, %v3129
      %v3131 = vrot.slane %v2725, 1
      %v3132 = vrot.slane %v2726, 1
      %v3133 = vsel %vm2959, %v3131, %v3132
      %v3134 = vrot.slane %v2727, 1
      %v3135 = vrot.slane %v2728, 1
      %v3136 = vsel %vm2959, %v3134, %v3135
      %v3137 = vrot.slane %v2729, 1
      %v3138 = vrot.slane %v2730, 1
      %v3139 = vsel %vm2959, %v3137, %v3138
      %v3140 = vrot.slane %v2731, 1
      %v3141 = vrot.slane %v2732, 1
      %v3142 = vsel %vm2959, %v3140, %v3141
      %v3143 = vrot.slane %v2733, 1
      %v3144 = vrot.slane %v2734, 1
      %v3145 = vsel %vm2959, %v3143, %v3144
      %v3146 = vrot.slane %v2735, 1
      %v3147 = vrot.slane %v2736, 1
      %v3148 = vsel %vm2959, %v3146, %v3147
      %v3149 = vrot.slane %v2737, 1
      %v3150 = vrot.slane %v2738, 1
      %v3151 = vsel %vm2959, %v3149, %v3150
      %v3216 = vpack.c.bf16 %v2965, %v2962
      %v3217 = vpack.c.bf16 %v2971, %v2968
      %v3218 = vpack.c.bf16 %v2977, %v2974
      %v3219 = vpack.c.bf16 %v2983, %v2980
      %v3220 = vpack.c.bf16 %v2989, %v2986
      %v3221 = vpack.c.bf16 %v2995, %v2992
      %v3222 = vpack.c.bf16 %v3001, %v2998
      %v3223 = vpack.c.bf16 %v3007, %v3004
      %v3224 = vpack.c.bf16 %v3013, %v3010
      %v3225 = vpack.c.bf16 %v3019, %v3016
      %v3226 = vpack.c.bf16 %v3025, %v3022
      %v3227 = vpack.c.bf16 %v3031, %v3028
      %v3228 = vpack.c.bf16 %v3037, %v3034
      %v3229 = vpack.c.bf16 %v3043, %v3040
      %v3230 = vpack.c.bf16 %v3049, %v3046
      %v3231 = vpack.c.bf16 %v3055, %v3052
      %v3232 = vpack.c.bf16 %v3061, %v3058
      %v3233 = vpack.c.bf16 %v3067, %v3064
      %v3234 = vpack.c.bf16 %v3073, %v3070
      %v3235 = vpack.c.bf16 %v3079, %v3076
      %v3236 = vpack.c.bf16 %v3085, %v3082
      %v3237 = vpack.c.bf16 %v3091, %v3088
      %v3238 = vpack.c.bf16 %v3097, %v3094
      %v3239 = vpack.c.bf16 %v3103, %v3100
      %v3240 = vpack.c.bf16 %v3109, %v3106
      %v3241 = vpack.c.bf16 %v3115, %v3112
      %v3242 = vpack.c.bf16 %v3121, %v3118
      %v3243 = vpack.c.bf16 %v3127, %v3124
      %v3244 = vpack.c.bf16 %v3133, %v3130
      %v3245 = vpack.c.bf16 %v3139, %v3136
      %v3246 = vpack.c.bf16 %v3145, %v3142
      %v3247 = vpack.c.bf16 %v3151, %v3148
      %s3248 = scalar_lea.vmem %s4, 64
      %v3249 = vld [vmem:[%s3248] sm:$0xf]
      %v3250 = vld [vmem:[%s3248 + $0x4] sm:$0xf]
      %v3251 = vld [vmem:[%s3248 + $0x8] sm:$0xf]
      %v3252 = vld [vmem:[%s3248 + $0xc] sm:$0xf]
      %v3253 = vld [vmem:[%s3248 + $0x10] sm:$0xf]
      %v3254 = vld [vmem:[%s3248 + $0x14] sm:$0xf]
      %v3255 = vld [vmem:[%s3248 + $0x18] sm:$0xf]
      %v3256 = vld [vmem:[%s3248 + $0x1c] sm:$0xf]
      %v3257 = vld [vmem:[%s3248 + $0x20] sm:$0xf]
      %v3258 = vld [vmem:[%s3248 + $0x24] sm:$0xf]
      %v3259 = vld [vmem:[%s3248 + $0x28] sm:$0xf]
      %v3260 = vld [vmem:[%s3248 + $0x2c] sm:$0xf]
      %v3261 = vld [vmem:[%s3248 + $0x30] sm:$0xf]
      %v3262 = vld [vmem:[%s3248 + $0x34] sm:$0xf]
      %v3263 = vld [vmem:[%s3248 + $0x38] sm:$0xf]
      %v3264 = vld [vmem:[%s3248 + $0x3c] sm:$0xf]
      %v3281 = vunpack.c.l.b16 %v3249
      %v3282 = vunpack.c.l.b16 %v3250
      %v3283 = vunpack.c.l.b16 %v3251
      %v3284 = vunpack.c.l.b16 %v3252
      %v3285 = vunpack.c.l.b16 %v3253
      %v3286 = vunpack.c.l.b16 %v3254
      %v3287 = vunpack.c.l.b16 %v3255
      %v3288 = vunpack.c.l.b16 %v3256
      %v3289 = vunpack.c.l.b16 %v3257
      %v3290 = vunpack.c.l.b16 %v3258
      %v3291 = vunpack.c.l.b16 %v3259
      %v3292 = vunpack.c.l.b16 %v3260
      %v3293 = vunpack.c.l.b16 %v3261
      %v3294 = vunpack.c.l.b16 %v3262
      %v3295 = vunpack.c.l.b16 %v3263
      %v3296 = vunpack.c.l.b16 %v3264
      %v3297 = vpack.c.b16 %v3282, %v3281
      %v3298 = vpack.c.b16 %v3284, %v3283
      %v3299 = vpack.c.b16 %v3286, %v3285
      %v3300 = vpack.c.b16 %v3288, %v3287
      %v3301 = vpack.c.b16 %v3290, %v3289
      %v3302 = vpack.c.b16 %v3292, %v3291
      %v3303 = vpack.c.b16 %v3294, %v3293
      %v3304 = vpack.c.b16 %v3296, %v3295
      %3313 = vmatpush.bf16.msra.mxu0 %v3304
      %3314 = vmatpush.bf16.msra.mxu0 %v3303
      %3315 = vmatpush.bf16.msra.mxu0 %v3302
      %3316 = vmatpush.bf16.msra.mxu0 %v3301
      %3317 = vmatpush.bf16.msra.mxu0 %v3300
      %3318 = vmatpush.bf16.msra.mxu0 %v3299
      %3319 = vmatpush.bf16.msra.mxu0 %v3298
      %3320 = vmatpush.bf16.msra.mxu0 %v3297
      %3321 = vmatmul.bf16.gmra.mxu0 %v3216
      %v3322 = vpop.f32.mrf.mxu0
      %v3323 = vadd.f32 0.0, %v3322
      %v3324 = vpop.f32.mrf.mxu0
      %v3325 = vadd.f32 0.0, %v3324
      %3326 = vmatmul.bf16.gmra.mxu0 %v3217
      %v3327 = vpop.f32.mrf.mxu0
      %v3328 = vadd.f32 0.0, %v3327
      %v3329 = vpop.f32.mrf.mxu0
      %v3330 = vadd.f32 0.0, %v3329
      %3331 = vmatmul.bf16.gmra.mxu0 %v3218
      %v3332 = vpop.f32.mrf.mxu0
      %v3333 = vadd.f32 0.0, %v3332
      %v3334 = vpop.f32.mrf.mxu0
      %v3335 = vadd.f32 0.0, %v3334
      %3336 = vmatmul.bf16.gmra.mxu0 %v3219
      %v3337 = vpop.f32.mrf.mxu0
      %v3338 = vadd.f32 0.0, %v3337
      %v3339 = vpop.f32.mrf.mxu0
      %v3340 = vadd.f32 0.0, %v3339
      %3341 = vmatmul.bf16.gmra.mxu0 %v3220
      %v3342 = vpop.f32.mrf.mxu0
      %v3343 = vadd.f32 0.0, %v3342
      %v3344 = vpop.f32.mrf.mxu0
      %v3345 = vadd.f32 0.0, %v3344
      %3346 = vmatmul.bf16.gmra.mxu0 %v3221
      %v3347 = vpop.f32.mrf.mxu0
      %v3348 = vadd.f32 0.0, %v3347
      %v3349 = vpop.f32.mrf.mxu0
      %v3350 = vadd.f32 0.0, %v3349
      %3351 = vmatmul.bf16.gmra.mxu0 %v3222
      %v3352 = vpop.f32.mrf.mxu0
      %v3353 = vadd.f32 0.0, %v3352
      %v3354 = vpop.f32.mrf.mxu0
      %v3355 = vadd.f32 0.0, %v3354
      %3356 = vmatmul.bf16.gmra.mxu0 %v3223
      %v3357 = vpop.f32.mrf.mxu0
      %v3358 = vadd.f32 0.0, %v3357
      %v3359 = vpop.f32.mrf.mxu0
      %v3360 = vadd.f32 0.0, %v3359
      %3361 = vmatmul.bf16.gmra.mxu0 %v3224
      %v3362 = vpop.f32.mrf.mxu0
      %v3363 = vadd.f32 0.0, %v3362
      %v3364 = vpop.f32.mrf.mxu0
      %v3365 = vadd.f32 0.0, %v3364
      %3366 = vmatmul.bf16.gmra.mxu0 %v3225
      %v3367 = vpop.f32.mrf.mxu0
      %v3368 = vadd.f32 0.0, %v3367
      %v3369 = vpop.f32.mrf.mxu0
      %v3370 = vadd.f32 0.0, %v3369
      %3371 = vmatmul.bf16.gmra.mxu0 %v3226
      %v3372 = vpop.f32.mrf.mxu0
      %v3373 = vadd.f32 0.0, %v3372
      %v3374 = vpop.f32.mrf.mxu0
      %v3375 = vadd.f32 0.0, %v3374
      %3376 = vmatmul.bf16.gmra.mxu0 %v3227
      %v3377 = vpop.f32.mrf.mxu0
      %v3378 = vadd.f32 0.0, %v3377
      %v3379 = vpop.f32.mrf.mxu0
      %v3380 = vadd.f32 0.0, %v3379
      %3381 = vmatmul.bf16.gmra.mxu0 %v3228
      %v3382 = vpop.f32.mrf.mxu0
      %v3383 = vadd.f32 0.0, %v3382
      %v3384 = vpop.f32.mrf.mxu0
      %v3385 = vadd.f32 0.0, %v3384
      %3386 = vmatmul.bf16.gmra.mxu0 %v3229
      %v3387 = vpop.f32.mrf.mxu0
      %v3388 = vadd.f32 0.0, %v3387
      %v3389 = vpop.f32.mrf.mxu0
      %v3390 = vadd.f32 0.0, %v3389
      %3391 = vmatmul.bf16.gmra.mxu0 %v3230
      %v3392 = vpop.f32.mrf.mxu0
      %v3393 = vadd.f32 0.0, %v3392
      %v3394 = vpop.f32.mrf.mxu0
      %v3395 = vadd.f32 0.0, %v3394
      %3396 = vmatmul.bf16.gmra.mxu0 %v3231
      %v3397 = vpop.f32.mrf.mxu0
      %v3398 = vadd.f32 0.0, %v3397
      %v3399 = vpop.f32.mrf.mxu0
      %v3400 = vadd.f32 0.0, %v3399
      %3401 = vmatmul.bf16.gmra.mxu0 %v3232
      %v3402 = vpop.f32.mrf.mxu0
      %v3403 = vadd.f32 0.0, %v3402
      %v3404 = vpop.f32.mrf.mxu0
      %v3405 = vadd.f32 0.0, %v3404
      %3406 = vmatmul.bf16.gmra.mxu0 %v3233
      %v3407 = vpop.f32.mrf.mxu0
      %v3408 = vadd.f32 0.0, %v3407
      %v3409 = vpop.f32.mrf.mxu0
      %v3410 = vadd.f32 0.0, %v3409
      %3411 = vmatmul.bf16.gmra.mxu0 %v3234
      %v3412 = vpop.f32.mrf.mxu0
      %v3413 = vadd.f32 0.0, %v3412
      %v3414 = vpop.f32.mrf.mxu0
      %v3415 = vadd.f32 0.0, %v3414
      %3416 = vmatmul.bf16.gmra.mxu0 %v3235
      %v3417 = vpop.f32.mrf.mxu0
      %v3418 = vadd.f32 0.0, %v3417
      %v3419 = vpop.f32.mrf.mxu0
      %v3420 = vadd.f32 0.0, %v3419
      %3421 = vmatmul.bf16.gmra.mxu0 %v3236
      %v3422 = vpop.f32.mrf.mxu0
      %v3423 = vadd.f32 0.0, %v3422
      %v3424 = vpop.f32.mrf.mxu0
      %v3425 = vadd.f32 0.0, %v3424
      %3426 = vmatmul.bf16.gmra.mxu0 %v3237
      %v3427 = vpop.f32.mrf.mxu0
      %v3428 = vadd.f32 0.0, %v3427
      %v3429 = vpop.f32.mrf.mxu0
      %v3430 = vadd.f32 0.0, %v3429
      %3431 = vmatmul.bf16.gmra.mxu0 %v3238
      %v3432 = vpop.f32.mrf.mxu0
      %v3433 = vadd.f32 0.0, %v3432
      %v3434 = vpop.f32.mrf.mxu0
      %v3435 = vadd.f32 0.0, %v3434
      %3436 = vmatmul.bf16.gmra.mxu0 %v3239
      %v3437 = vpop.f32.mrf.mxu0
      %v3438 = vadd.f32 0.0, %v3437
      %v3439 = vpop.f32.mrf.mxu0
      %v3440 = vadd.f32 0.0, %v3439
      %3441 = vmatmul.bf16.gmra.mxu0 %v3240
      %v3442 = vpop.f32.mrf.mxu0
      %v3443 = vadd.f32 0.0, %v3442
      %v3444 = vpop.f32.mrf.mxu0
      %v3445 = vadd.f32 0.0, %v3444
      %3446 = vmatmul.bf16.gmra.mxu0 %v3241
      %v3447 = vpop.f32.mrf.mxu0
      %v3448 = vadd.f32 0.0, %v3447
      %v3449 = vpop.f32.mrf.mxu0
      %v3450 = vadd.f32 0.0, %v3449
      %3451 = vmatmul.bf16.gmra.mxu0 %v3242
      %v3452 = vpop.f32.mrf.mxu0
      %v3453 = vadd.f32 0.0, %v3452
      %v3454 = vpop.f32.mrf.mxu0
      %v3455 = vadd.f32 0.0, %v3454
      %3456 = vmatmul.bf16.gmra.mxu0 %v3243
      %v3457 = vpop.f32.mrf.mxu0
      %v3458 = vadd.f32 0.0, %v3457
      %v3459 = vpop.f32.mrf.mxu0
      %v3460 = vadd.f32 0.0, %v3459
      %3461 = vmatmul.bf16.gmra.mxu0 %v3244
      %v3462 = vpop.f32.mrf.mxu0
      %v3463 = vadd.f32 0.0, %v3462
      %v3464 = vpop.f32.mrf.mxu0
      %v3465 = vadd.f32 0.0, %v3464
      %3466 = vmatmul.bf16.gmra.mxu0 %v3245
      %v3467 = vpop.f32.mrf.mxu0
      %v3468 = vadd.f32 0.0, %v3467
      %v3469 = vpop.f32.mrf.mxu0
      %v3470 = vadd.f32 0.0, %v3469
      %3471 = vmatmul.bf16.gmra.mxu0 %v3246
      %v3472 = vpop.f32.mrf.mxu0
      %v3473 = vadd.f32 0.0, %v3472
      %v3474 = vpop.f32.mrf.mxu0
      %v3475 = vadd.f32 0.0, %v3474
      %3476 = vmatmul.bf16.gmra.mxu0 %v3247
      %v3477 = vpop.f32.mrf.mxu0
      %v3478 = vadd.f32 0.0, %v3477
      %v3479 = vpop.f32.mrf.mxu0
      %v3480 = vadd.f32 0.0, %v3479
      %3481 = vdwg.mxu0
      %v3498 = vunpack.c.l.b16 %v2815
      %v3499 = vunpack.c.l.b16 %v2816
      %v3500 = vunpack.c.l.b16 %v2817
      %v3501 = vunpack.c.l.b16 %v2818
      %v3502 = vunpack.c.l.b16 %v2819
      %v3503 = vunpack.c.l.b16 %v2820
      %v3504 = vunpack.c.l.b16 %v2821
      %v3505 = vunpack.c.l.b16 %v2822
      %v3506 = vunpack.c.l.b16 %v2823
      %v3507 = vunpack.c.l.b16 %v2824
      %v3508 = vunpack.c.l.b16 %v2825
      %v3509 = vunpack.c.l.b16 %v2826
      %v3510 = vunpack.c.l.b16 %v2827
      %v3511 = vunpack.c.l.b16 %v2828
      %v3512 = vunpack.c.l.b16 %v2829
      %v3513 = vunpack.c.l.b16 %v2830
      %v3514 = vpack.c.b16 %v3499, %v3498
      %v3515 = vpack.c.b16 %v3501, %v3500
      %v3516 = vpack.c.b16 %v3503, %v3502
      %v3517 = vpack.c.b16 %v3505, %v3504
      %v3518 = vpack.c.b16 %v3507, %v3506
      %v3519 = vpack.c.b16 %v3509, %v3508
      %v3520 = vpack.c.b16 %v3511, %v3510
      %v3521 = vpack.c.b16 %v3513, %v3512
      %3530 = vmatpush.bf16.msra.mxu0 %v3521
      %3531 = vmatpush.bf16.msra.mxu0 %v3520
      %3532 = vmatpush.bf16.msra.mxu0 %v3519
      %3533 = vmatpush.bf16.msra.mxu0 %v3518
      %3534 = vmatpush.bf16.msra.mxu0 %v3517
      %3535 = vmatpush.bf16.msra.mxu0 %v3516
      %3536 = vmatpush.bf16.msra.mxu0 %v3515
      %3537 = vmatpush.bf16.msra.mxu0 %v3514
      %3538 = vmatmul.bf16.gmra.mxu0 %v2783
      %v3539 = vpop.f32.mrf.mxu0
      %v3540 = vadd.f32 %v3323, %v3539
      %v3541 = vpop.f32.mrf.mxu0
      %v3542 = vadd.f32 %v3325, %v3541
      %3543 = vmatmul.bf16.gmra.mxu0 %v2784
      %v3544 = vpop.f32.mrf.mxu0
      %v3545 = vadd.f32 %v3328, %v3544
      %v3546 = vpop.f32.mrf.mxu0
      %v3547 = vadd.f32 %v3330, %v3546
      %3548 = vmatmul.bf16.gmra.mxu0 %v2785
      %v3549 = vpop.f32.mrf.mxu0
      %v3550 = vadd.f32 %v3333, %v3549
      %v3551 = vpop.f32.mrf.mxu0
      %v3552 = vadd.f32 %v3335, %v3551
      %3553 = vmatmul.bf16.gmra.mxu0 %v2786
      %v3554 = vpop.f32.mrf.mxu0
      %v3555 = vadd.f32 %v3338, %v3554
      %v3556 = vpop.f32.mrf.mxu0
      %v3557 = vadd.f32 %v3340, %v3556
      %3558 = vmatmul.bf16.gmra.mxu0 %v2787
      %v3559 = vpop.f32.mrf.mxu0
      %v3560 = vadd.f32 %v3343, %v3559
      %v3561 = vpop.f32.mrf.mxu0
      %v3562 = vadd.f32 %v3345, %v3561
      %3563 = vmatmul.bf16.gmra.mxu0 %v2788
      %v3564 = vpop.f32.mrf.mxu0
      %v3565 = vadd.f32 %v3348, %v3564
      %v3566 = vpop.f32.mrf.mxu0
      %v3567 = vadd.f32 %v3350, %v3566
      %3568 = vmatmul.bf16.gmra.mxu0 %v2789
      %v3569 = vpop.f32.mrf.mxu0
      %v3570 = vadd.f32 %v3353, %v3569
      %v3571 = vpop.f32.mrf.mxu0
      %v3572 = vadd.f32 %v3355, %v3571
      %3573 = vmatmul.bf16.gmra.mxu0 %v2790
      %v3574 = vpop.f32.mrf.mxu0
      %v3575 = vadd.f32 %v3358, %v3574
      %v3576 = vpop.f32.mrf.mxu0
      %v3577 = vadd.f32 %v3360, %v3576
      %3578 = vmatmul.bf16.gmra.mxu0 %v2791
      %v3579 = vpop.f32.mrf.mxu0
      %v3580 = vadd.f32 %v3363, %v3579
      %v3581 = vpop.f32.mrf.mxu0
      %v3582 = vadd.f32 %v3365, %v3581
      %3583 = vmatmul.bf16.gmra.mxu0 %v2792
      %v3584 = vpop.f32.mrf.mxu0
      %v3585 = vadd.f32 %v3368, %v3584
      %v3586 = vpop.f32.mrf.mxu0
      %v3587 = vadd.f32 %v3370, %v3586
      %3588 = vmatmul.bf16.gmra.mxu0 %v2793
      %v3589 = vpop.f32.mrf.mxu0
      %v3590 = vadd.f32 %v3373, %v3589
      %v3591 = vpop.f32.mrf.mxu0
      %v3592 = vadd.f32 %v3375, %v3591
      %3593 = vmatmul.bf16.gmra.mxu0 %v2794
      %v3594 = vpop.f32.mrf.mxu0
      %v3595 = vadd.f32 %v3378, %v3594
      %v3596 = vpop.f32.mrf.mxu0
      %v3597 = vadd.f32 %v3380, %v3596
      %3598 = vmatmul.bf16.gmra.mxu0 %v2795
      %v3599 = vpop.f32.mrf.mxu0
      %v3600 = vadd.f32 %v3383, %v3599
      %v3601 = vpop.f32.mrf.mxu0
      %v3602 = vadd.f32 %v3385, %v3601
      %3603 = vmatmul.bf16.gmra.mxu0 %v2796
      %v3604 = vpop.f32.mrf.mxu0
      %v3605 = vadd.f32 %v3388, %v3604
      %v3606 = vpop.f32.mrf.mxu0
      %v3607 = vadd.f32 %v3390, %v3606
      %3608 = vmatmul.bf16.gmra.mxu0 %v2797
      %v3609 = vpop.f32.mrf.mxu0
      %v3610 = vadd.f32 %v3393, %v3609
      %v3611 = vpop.f32.mrf.mxu0
      %v3612 = vadd.f32 %v3395, %v3611
      %3613 = vmatmul.bf16.gmra.mxu0 %v2798
      %v3614 = vpop.f32.mrf.mxu0
      %v3615 = vadd.f32 %v3398, %v3614
      %v3616 = vpop.f32.mrf.mxu0
      %v3617 = vadd.f32 %v3400, %v3616
      %3618 = vmatmul.bf16.gmra.mxu0 %v2799
      %v3619 = vpop.f32.mrf.mxu0
      %v3620 = vadd.f32 %v3403, %v3619
      %v3621 = vpop.f32.mrf.mxu0
      %v3622 = vadd.f32 %v3405, %v3621
      %3623 = vmatmul.bf16.gmra.mxu0 %v2800
      %v3624 = vpop.f32.mrf.mxu0
      %v3625 = vadd.f32 %v3408, %v3624
      %v3626 = vpop.f32.mrf.mxu0
      %v3627 = vadd.f32 %v3410, %v3626
      %3628 = vmatmul.bf16.gmra.mxu0 %v2801
      %v3629 = vpop.f32.mrf.mxu0
      %v3630 = vadd.f32 %v3413, %v3629
      %v3631 = vpop.f32.mrf.mxu0
      %v3632 = vadd.f32 %v3415, %v3631
      %3633 = vmatmul.bf16.gmra.mxu0 %v2802
      %v3634 = vpop.f32.mrf.mxu0
      %v3635 = vadd.f32 %v3418, %v3634
      %v3636 = vpop.f32.mrf.mxu0
      %v3637 = vadd.f32 %v3420, %v3636
      %3638 = vmatmul.bf16.gmra.mxu0 %v2803
      %v3639 = vpop.f32.mrf.mxu0
      %v3640 = vadd.f32 %v3423, %v3639
      %v3641 = vpop.f32.mrf.mxu0
      %v3642 = vadd.f32 %v3425, %v3641
      %3643 = vmatmul.bf16.gmra.mxu0 %v2804
      %v3644 = vpop.f32.mrf.mxu0
      %v3645 = vadd.f32 %v3428, %v3644
      %v3646 = vpop.f32.mrf.mxu0
      %v3647 = vadd.f32 %v3430, %v3646
      %3648 = vmatmul.bf16.gmra.mxu0 %v2805
      %v3649 = vpop.f32.mrf.mxu0
      %v3650 = vadd.f32 %v3433, %v3649
      %v3651 = vpop.f32.mrf.mxu0
      %v3652 = vadd.f32 %v3435, %v3651
      %3653 = vmatmul.bf16.gmra.mxu0 %v2806
      %v3654 = vpop.f32.mrf.mxu0
      %v3655 = vadd.f32 %v3438, %v3654
      %v3656 = vpop.f32.mrf.mxu0
      %v3657 = vadd.f32 %v3440, %v3656
      %3658 = vmatmul.bf16.gmra.mxu0 %v2807
      %v3659 = vpop.f32.mrf.mxu0
      %v3660 = vadd.f32 %v3443, %v3659
      %v3661 = vpop.f32.mrf.mxu0
      %v3662 = vadd.f32 %v3445, %v3661
      %3663 = vmatmul.bf16.gmra.mxu0 %v2808
      %v3664 = vpop.f32.mrf.mxu0
      %v3665 = vadd.f32 %v3448, %v3664
      %v3666 = vpop.f32.mrf.mxu0
      %v3667 = vadd.f32 %v3450, %v3666
      %3668 = vmatmul.bf16.gmra.mxu0 %v2809
      %v3669 = vpop.f32.mrf.mxu0
      %v3670 = vadd.f32 %v3453, %v3669
      %v3671 = vpop.f32.mrf.mxu0
      %v3672 = vadd.f32 %v3455, %v3671
      %3673 = vmatmul.bf16.gmra.mxu0 %v2810
      %v3674 = vpop.f32.mrf.mxu0
      %v3675 = vadd.f32 %v3458, %v3674
      %v3676 = vpop.f32.mrf.mxu0
      %v3677 = vadd.f32 %v3460, %v3676
      %3678 = vmatmul.bf16.gmra.mxu0 %v2811
      %v3679 = vpop.f32.mrf.mxu0
      %v3680 = vadd.f32 %v3463, %v3679
      %v3681 = vpop.f32.mrf.mxu0
      %v3682 = vadd.f32 %v3465, %v3681
      %3683 = vmatmul.bf16.gmra.mxu0 %v2812
      %v3684 = vpop.f32.mrf.mxu0
      %v3685 = vadd.f32 %v3468, %v3684
      %v3686 = vpop.f32.mrf.mxu0
      %v3687 = vadd.f32 %v3470, %v3686
      %3688 = vmatmul.bf16.gmra.mxu0 %v2813
      %v3689 = vpop.f32.mrf.mxu0
      %v3690 = vadd.f32 %v3473, %v3689
      %v3691 = vpop.f32.mrf.mxu0
      %v3692 = vadd.f32 %v3475, %v3691
      %3693 = vmatmul.bf16.gmra.mxu0 %v2814
      %v3694 = vpop.f32.mrf.mxu0
      %v3695 = vadd.f32 %v3478, %v3694
      %v3696 = vpop.f32.mrf.mxu0
      %v3697 = vadd.f32 %v3480, %v3696
      %3698 = vdwg.mxu0
      %vm3699 = vcmask 1045504
      %v3700 = vrot.slane %v2583, 2
      %v3701 = vrot.slane %v2584, 2
      %v3702 = vsel %vm3699, %v3700, %v3701
      %v3703 = vrot.slane %v2585, 2
      %v3704 = vrot.slane %v2586, 2
      %v3705 = vsel %vm3699, %v3703, %v3704
      %v3706 = vrot.slane %v2587, 2
      %v3707 = vrot.slane %v2588, 2
      %v3708 = vsel %vm3699, %v3706, %v3707
      %v3709 = vrot.slane %v2589, 2
      %v3710 = vrot.slane %v2590, 2
      %v3711 = vsel %vm3699, %v3709, %v3710
      %v3712 = vrot.slane %v2591, 2
      %v3713 = vrot.slane %v2592, 2
      %v3714 = vsel %vm3699, %v3712, %v3713
      %v3715 = vrot.slane %v2593, 2
      %v3716 = vrot.slane %v2594, 2
      %v3717 = vsel %vm3699, %v3715, %v3716
      %v3718 = vrot.slane %v2595, 2
      %v3719 = vrot.slane %v2596, 2
      %v3720 = vsel %vm3699, %v3718, %v3719
      %v3721 = vrot.slane %v2597, 2
      %v3722 = vrot.slane %v2598, 2
      %v3723 = vsel %vm3699, %v3721, %v3722
      %v3724 = vrot.slane %v2603, 2
      %v3725 = vrot.slane %v2604, 2
      %v3726 = vsel %vm3699, %v3724, %v3725
      %v3727 = vrot.slane %v2605, 2
      %v3728 = vrot.slane %v2606, 2
      %v3729 = vsel %vm3699, %v3727, %v3728
      %v3730 = vrot.slane %v2607, 2
      %v3731 = vrot.slane %v2608, 2
      %v3732 = vsel %vm3699, %v3730, %v3731
      %v3733 = vrot.slane %v2609, 2
      %v3734 = vrot.slane %v2610, 2
      %v3735 = vsel %vm3699, %v3733, %v3734
      %v3736 = vrot.slane %v2611, 2
      %v3737 = vrot.slane %v2612, 2
      %v3738 = vsel %vm3699, %v3736, %v3737
      %v3739 = vrot.slane %v2613, 2
      %v3740 = vrot.slane %v2614, 2
      %v3741 = vsel %vm3699, %v3739, %v3740
      %v3742 = vrot.slane %v2615, 2
      %v3743 = vrot.slane %v2616, 2
      %v3744 = vsel %vm3699, %v3742, %v3743
      %v3745 = vrot.slane %v2617, 2
      %v3746 = vrot.slane %v2618, 2
      %v3747 = vsel %vm3699, %v3745, %v3746
      %v3748 = vrot.slane %v2623, 2
      %v3749 = vrot.slane %v2624, 2
      %v3750 = vsel %vm3699, %v3748, %v3749
      %v3751 = vrot.slane %v2625, 2
      %v3752 = vrot.slane %v2626, 2
      %v3753 = vsel %vm3699, %v3751, %v3752
      %v3754 = vrot.slane %v2627, 2
      %v3755 = vrot.slane %v2628, 2
      %v3756 = vsel %vm3699, %v3754, %v3755
      %v3757 = vrot.slane %v2629, 2
      %v3758 = vrot.slane %v2630, 2
      %v3759 = vsel %vm3699, %v3757, %v3758
      %v3760 = vrot.slane %v2631, 2
      %v3761 = vrot.slane %v2632, 2
      %v3762 = vsel %vm3699, %v3760, %v3761
      %v3763 = vrot.slane %v2633, 2
      %v3764 = vrot.slane %v2634, 2
      %v3765 = vsel %vm3699, %v3763, %v3764
      %v3766 = vrot.slane %v2635, 2
      %v3767 = vrot.slane %v2636, 2
      %v3768 = vsel %vm3699, %v3766, %v3767
      %v3769 = vrot.slane %v2637, 2
      %v3770 = vrot.slane %v2638, 2
      %v3771 = vsel %vm3699, %v3769, %v3770
      %v3772 = vrot.slane %v2643, 2
      %v3773 = vrot.slane %v2644, 2
      %v3774 = vsel %vm3699, %v3772, %v3773
      %v3775 = vrot.slane %v2645, 2
      %v3776 = vrot.slane %v2646, 2
      %v3777 = vsel %vm3699, %v3775, %v3776
      %v3778 = vrot.slane %v2647, 2
      %v3779 = vrot.slane %v2648, 2
      %v3780 = vsel %vm3699, %v3778, %v3779
      %v3781 = vrot.slane %v2649, 2
      %v3782 = vrot.slane %v2650, 2
      %v3783 = vsel %vm3699, %v3781, %v3782
      %v3784 = vrot.slane %v2651, 2
      %v3785 = vrot.slane %v2652, 2
      %v3786 = vsel %vm3699, %v3784, %v3785
      %v3787 = vrot.slane %v2653, 2
      %v3788 = vrot.slane %v2654, 2
      %v3789 = vsel %vm3699, %v3787, %v3788
      %v3790 = vrot.slane %v2655, 2
      %v3791 = vrot.slane %v2656, 2
      %v3792 = vsel %vm3699, %v3790, %v3791
      %v3793 = vrot.slane %v2657, 2
      %v3794 = vrot.slane %v2658, 2
      %v3795 = vsel %vm3699, %v3793, %v3794
      %v3796 = vrot.slane %v2663, 2
      %v3797 = vrot.slane %v2664, 2
      %v3798 = vsel %vm3699, %v3796, %v3797
      %v3799 = vrot.slane %v2665, 2
      %v3800 = vrot.slane %v2666, 2
      %v3801 = vsel %vm3699, %v3799, %v3800
      %v3802 = vrot.slane %v2667, 2
      %v3803 = vrot.slane %v2668, 2
      %v3804 = vsel %vm3699, %v3802, %v3803
      %v3805 = vrot.slane %v2669, 2
      %v3806 = vrot.slane %v2670, 2
      %v3807 = vsel %vm3699, %v3805, %v3806
      %v3808 = vrot.slane %v2671, 2
      %v3809 = vrot.slane %v2672, 2
      %v3810 = vsel %vm3699, %v3808, %v3809
      %v3811 = vrot.slane %v2673, 2
      %v3812 = vrot.slane %v2674, 2
      %v3813 = vsel %vm3699, %v3811, %v3812
      %v3814 = vrot.slane %v2675, 2
      %v3815 = vrot.slane %v2676, 2
      %v3816 = vsel %vm3699, %v3814, %v3815
      %v3817 = vrot.slane %v2677, 2
      %v3818 = vrot.slane %v2678, 2
      %v3819 = vsel %vm3699, %v3817, %v3818
      %v3820 = vrot.slane %v2683, 2
      %v3821 = vrot.slane %v2684, 2
      %v3822 = vsel %vm3699, %v3820, %v3821
      %v3823 = vrot.slane %v2685, 2
      %v3824 = vrot.slane %v2686, 2
      %v3825 = vsel %vm3699, %v3823, %v3824
      %v3826 = vrot.slane %v2687, 2
      %v3827 = vrot.slane %v2688, 2
      %v3828 = vsel %vm3699, %v3826, %v3827
      %v3829 = vrot.slane %v2689, 2
      %v3830 = vrot.slane %v2690, 2
      %v3831 = vsel %vm3699, %v3829, %v3830
      %v3832 = vrot.slane %v2691, 2
      %v3833 = vrot.slane %v2692, 2
      %v3834 = vsel %vm3699, %v3832, %v3833
      %v3835 = vrot.slane %v2693, 2
      %v3836 = vrot.slane %v2694, 2
      %v3837 = vsel %vm3699, %v3835, %v3836
      %v3838 = vrot.slane %v2695, 2
      %v3839 = vrot.slane %v2696, 2
      %v3840 = vsel %vm3699, %v3838, %v3839
      %v3841 = vrot.slane %v2697, 2
      %v3842 = vrot.slane %v2698, 2
      %v3843 = vsel %vm3699, %v3841, %v3842
      %v3844 = vrot.slane %v2703, 2
      %v3845 = vrot.slane %v2704, 2
      %v3846 = vsel %vm3699, %v3844, %v3845
      %v3847 = vrot.slane %v2705, 2
      %v3848 = vrot.slane %v2706, 2
      %v3849 = vsel %vm3699, %v3847, %v3848
      %v3850 = vrot.slane %v2707, 2
      %v3851 = vrot.slane %v2708, 2
      %v3852 = vsel %vm3699, %v3850, %v3851
      %v3853 = vrot.slane %v2709, 2
      %v3854 = vrot.slane %v2710, 2
      %v3855 = vsel %vm3699, %v3853, %v3854
      %v3856 = vrot.slane %v2711, 2
      %v3857 = vrot.slane %v2712, 2
      %v3858 = vsel %vm3699, %v3856, %v3857
      %v3859 = vrot.slane %v2713, 2
      %v3860 = vrot.slane %v2714, 2
      %v3861 = vsel %vm3699, %v3859, %v3860
      %v3862 = vrot.slane %v2715, 2
      %v3863 = vrot.slane %v2716, 2
      %v3864 = vsel %vm3699, %v3862, %v3863
      %v3865 = vrot.slane %v2717, 2
      %v3866 = vrot.slane %v2718, 2
      %v3867 = vsel %vm3699, %v3865, %v3866
      %v3868 = vrot.slane %v2723, 2
      %v3869 = vrot.slane %v2724, 2
      %v3870 = vsel %vm3699, %v3868, %v3869
      %v3871 = vrot.slane %v2725, 2
      %v3872 = vrot.slane %v2726, 2
      %v3873 = vsel %vm3699, %v3871, %v3872
      %v3874 = vrot.slane %v2727, 2
      %v3875 = vrot.slane %v2728, 2
      %v3876 = vsel %vm3699, %v3874, %v3875
      %v3877 = vrot.slane %v2729, 2
      %v3878 = vrot.slane %v2730, 2
      %v3879 = vsel %vm3699, %v3877, %v3878
      %v3880 = vrot.slane %v2731, 2
      %v3881 = vrot.slane %v2732, 2
      %v3882 = vsel %vm3699, %v3880, %v3881
      %v3883 = vrot.slane %v2733, 2
      %v3884 = vrot.slane %v2734, 2
      %v3885 = vsel %vm3699, %v3883, %v3884
      %v3886 = vrot.slane %v2735, 2
      %v3887 = vrot.slane %v2736, 2
      %v3888 = vsel %vm3699, %v3886, %v3887
      %v3889 = vrot.slane %v2737, 2
      %v3890 = vrot.slane %v2738, 2
      %v3891 = vsel %vm3699, %v3889, %v3890
      %v3956 = vpack.c.bf16 %v3705, %v3702
      %v3957 = vpack.c.bf16 %v3711, %v3708
      %v3958 = vpack.c.bf16 %v3717, %v3714
      %v3959 = vpack.c.bf16 %v3723, %v3720
      %v3960 = vpack.c.bf16 %v3729, %v3726
      %v3961 = vpack.c.bf16 %v3735, %v3732
      %v3962 = vpack.c.bf16 %v3741, %v3738
      %v3963 = vpack.c.bf16 %v3747, %v3744
      %v3964 = vpack.c.bf16 %v3753, %v3750
      %v3965 = vpack.c.bf16 %v3759, %v3756
      %v3966 = vpack.c.bf16 %v3765, %v3762
      %v3967 = vpack.c.bf16 %v3771, %v3768
      %v3968 = vpack.c.bf16 %v3777, %v3774
      %v3969 = vpack.c.bf16 %v3783, %v3780
      %v3970 = vpack.c.bf16 %v3789, %v3786
      %v3971 = vpack.c.bf16 %v3795, %v3792
      %v3972 = vpack.c.bf16 %v3801, %v3798
      %v3973 = vpack.c.bf16 %v3807, %v3804
      %v3974 = vpack.c.bf16 %v3813, %v3810
      %v3975 = vpack.c.bf16 %v3819, %v3816
      %v3976 = vpack.c.bf16 %v3825, %v3822
      %v3977 = vpack.c.bf16 %v3831, %v3828
      %v3978 = vpack.c.bf16 %v3837, %v3834
      %v3979 = vpack.c.bf16 %v3843, %v3840
      %v3980 = vpack.c.bf16 %v3849, %v3846
      %v3981 = vpack.c.bf16 %v3855, %v3852
      %v3982 = vpack.c.bf16 %v3861, %v3858
      %v3983 = vpack.c.bf16 %v3867, %v3864
      %v3984 = vpack.c.bf16 %v3873, %v3870
      %v3985 = vpack.c.bf16 %v3879, %v3876
      %v3986 = vpack.c.bf16 %v3885, %v3882
      %v3987 = vpack.c.bf16 %v3891, %v3888
      %s3988 = scalar_lea.vmem %s4, 128
      %v3989 = vld [vmem:[%s3988] sm:$0xf]
      %v3990 = vld [vmem:[%s3988 + $0x4] sm:$0xf]
      %v3991 = vld [vmem:[%s3988 + $0x8] sm:$0xf]
      %v3992 = vld [vmem:[%s3988 + $0xc] sm:$0xf]
      %v3993 = vld [vmem:[%s3988 + $0x10] sm:$0xf]
      %v3994 = vld [vmem:[%s3988 + $0x14] sm:$0xf]
      %v3995 = vld [vmem:[%s3988 + $0x18] sm:$0xf]
      %v3996 = vld [vmem:[%s3988 + $0x1c] sm:$0xf]
      %v3997 = vld [vmem:[%s3988 + $0x20] sm:$0xf]
      %v3998 = vld [vmem:[%s3988 + $0x24] sm:$0xf]
      %v3999 = vld [vmem:[%s3988 + $0x28] sm:$0xf]
      %v4000 = vld [vmem:[%s3988 + $0x2c] sm:$0xf]
      %v4001 = vld [vmem:[%s3988 + $0x30] sm:$0xf]
      %v4002 = vld [vmem:[%s3988 + $0x34] sm:$0xf]
      %v4003 = vld [vmem:[%s3988 + $0x38] sm:$0xf]
      %v4004 = vld [vmem:[%s3988 + $0x3c] sm:$0xf]
      %v4021 = vunpack.c.l.b16 %v3989
      %v4022 = vunpack.c.l.b16 %v3990
      %v4023 = vunpack.c.l.b16 %v3991
      %v4024 = vunpack.c.l.b16 %v3992
      %v4025 = vunpack.c.l.b16 %v3993
      %v4026 = vunpack.c.l.b16 %v3994
      %v4027 = vunpack.c.l.b16 %v3995
      %v4028 = vunpack.c.l.b16 %v3996
      %v4029 = vunpack.c.l.b16 %v3997
      %v4030 = vunpack.c.l.b16 %v3998
      %v4031 = vunpack.c.l.b16 %v3999
      %v4032 = vunpack.c.l.b16 %v4000
      %v4033 = vunpack.c.l.b16 %v4001
      %v4034 = vunpack.c.l.b16 %v4002
      %v4035 = vunpack.c.l.b16 %v4003
      %v4036 = vunpack.c.l.b16 %v4004
      %v4037 = vpack.c.b16 %v4022, %v4021
      %v4038 = vpack.c.b16 %v4024, %v4023
      %v4039 = vpack.c.b16 %v4026, %v4025
      %v4040 = vpack.c.b16 %v4028, %v4027
      %v4041 = vpack.c.b16 %v4030, %v4029
      %v4042 = vpack.c.b16 %v4032, %v4031
      %v4043 = vpack.c.b16 %v4034, %v4033
      %v4044 = vpack.c.b16 %v4036, %v4035
      %4053 = vmatpush.bf16.msra.mxu0 %v4044
      %4054 = vmatpush.bf16.msra.mxu0 %v4043
      %4055 = vmatpush.bf16.msra.mxu0 %v4042
      %4056 = vmatpush.bf16.msra.mxu0 %v4041
      %4057 = vmatpush.bf16.msra.mxu0 %v4040
      %4058 = vmatpush.bf16.msra.mxu0 %v4039
      %4059 = vmatpush.bf16.msra.mxu0 %v4038
      %4060 = vmatpush.bf16.msra.mxu0 %v4037
      %4061 = vmatmul.bf16.gmra.mxu0 %v3956
      %v4062 = vpop.f32.mrf.mxu0
      %v4063 = vadd.f32 0.0, %v4062
      %v4064 = vpop.f32.mrf.mxu0
      %v4065 = vadd.f32 0.0, %v4064
      %4066 = vmatmul.bf16.gmra.mxu0 %v3957
      %v4067 = vpop.f32.mrf.mxu0
      %v4068 = vadd.f32 0.0, %v4067
      %v4069 = vpop.f32.mrf.mxu0
      %v4070 = vadd.f32 0.0, %v4069
      %4071 = vmatmul.bf16.gmra.mxu0 %v3958
      %v4072 = vpop.f32.mrf.mxu0
      %v4073 = vadd.f32 0.0, %v4072
      %v4074 = vpop.f32.mrf.mxu0
      %v4075 = vadd.f32 0.0, %v4074
      %4076 = vmatmul.bf16.gmra.mxu0 %v3959
      %v4077 = vpop.f32.mrf.mxu0
      %v4078 = vadd.f32 0.0, %v4077
      %v4079 = vpop.f32.mrf.mxu0
      %v4080 = vadd.f32 0.0, %v4079
      %4081 = vmatmul.bf16.gmra.mxu0 %v3960
      %v4082 = vpop.f32.mrf.mxu0
      %v4083 = vadd.f32 0.0, %v4082
      %v4084 = vpop.f32.mrf.mxu0
      %v4085 = vadd.f32 0.0, %v4084
      %4086 = vmatmul.bf16.gmra.mxu0 %v3961
      %v4087 = vpop.f32.mrf.mxu0
      %v4088 = vadd.f32 0.0, %v4087
      %v4089 = vpop.f32.mrf.mxu0
      %v4090 = vadd.f32 0.0, %v4089
      %4091 = vmatmul.bf16.gmra.mxu0 %v3962
      %v4092 = vpop.f32.mrf.mxu0
      %v4093 = vadd.f32 0.0, %v4092
      %v4094 = vpop.f32.mrf.mxu0
      %v4095 = vadd.f32 0.0, %v4094
      %4096 = vmatmul.bf16.gmra.mxu0 %v3963
      %v4097 = vpop.f32.mrf.mxu0
      %v4098 = vadd.f32 0.0, %v4097
      %v4099 = vpop.f32.mrf.mxu0
      %v4100 = vadd.f32 0.0, %v4099
      %4101 = vmatmul.bf16.gmra.mxu0 %v3964
      %v4102 = vpop.f32.mrf.mxu0
      %v4103 = vadd.f32 0.0, %v4102
      %v4104 = vpop.f32.mrf.mxu0
      %v4105 = vadd.f32 0.0, %v4104
      %4106 = vmatmul.bf16.gmra.mxu0 %v3965
      %v4107 = vpop.f32.mrf.mxu0
      %v4108 = vadd.f32 0.0, %v4107
      %v4109 = vpop.f32.mrf.mxu0
      %v4110 = vadd.f32 0.0, %v4109
      %4111 = vmatmul.bf16.gmra.mxu0 %v3966
      %v4112 = vpop.f32.mrf.mxu0
      %v4113 = vadd.f32 0.0, %v4112
      %v4114 = vpop.f32.mrf.mxu0
      %v4115 = vadd.f32 0.0, %v4114
      %4116 = vmatmul.bf16.gmra.mxu0 %v3967
      %v4117 = vpop.f32.mrf.mxu0
      %v4118 = vadd.f32 0.0, %v4117
      %v4119 = vpop.f32.mrf.mxu0
      %v4120 = vadd.f32 0.0, %v4119
      %4121 = vmatmul.bf16.gmra.mxu0 %v3968
      %v4122 = vpop.f32.mrf.mxu0
      %v4123 = vadd.f32 0.0, %v4122
      %v4124 = vpop.f32.mrf.mxu0
      %v4125 = vadd.f32 0.0, %v4124
      %4126 = vmatmul.bf16.gmra.mxu0 %v3969
      %v4127 = vpop.f32.mrf.mxu0
      %v4128 = vadd.f32 0.0, %v4127
      %v4129 = vpop.f32.mrf.mxu0
      %v4130 = vadd.f32 0.0, %v4129
      %4131 = vmatmul.bf16.gmra.mxu0 %v3970
      %v4132 = vpop.f32.mrf.mxu0
      %v4133 = vadd.f32 0.0, %v4132
      %v4134 = vpop.f32.mrf.mxu0
      %v4135 = vadd.f32 0.0, %v4134
      %4136 = vmatmul.bf16.gmra.mxu0 %v3971
      %v4137 = vpop.f32.mrf.mxu0
      %v4138 = vadd.f32 0.0, %v4137
      %v4139 = vpop.f32.mrf.mxu0
      %v4140 = vadd.f32 0.0, %v4139
      %4141 = vmatmul.bf16.gmra.mxu0 %v3972
      %v4142 = vpop.f32.mrf.mxu0
      %v4143 = vadd.f32 0.0, %v4142
      %v4144 = vpop.f32.mrf.mxu0
      %v4145 = vadd.f32 0.0, %v4144
      %4146 = vmatmul.bf16.gmra.mxu0 %v3973
      %v4147 = vpop.f32.mrf.mxu0
      %v4148 = vadd.f32 0.0, %v4147
      %v4149 = vpop.f32.mrf.mxu0
      %v4150 = vadd.f32 0.0, %v4149
      %4151 = vmatmul.bf16.gmra.mxu0 %v3974
      %v4152 = vpop.f32.mrf.mxu0
      %v4153 = vadd.f32 0.0, %v4152
      %v4154 = vpop.f32.mrf.mxu0
      %v4155 = vadd.f32 0.0, %v4154
      %4156 = vmatmul.bf16.gmra.mxu0 %v3975
      %v4157 = vpop.f32.mrf.mxu0
      %v4158 = vadd.f32 0.0, %v4157
      %v4159 = vpop.f32.mrf.mxu0
      %v4160 = vadd.f32 0.0, %v4159
      %4161 = vmatmul.bf16.gmra.mxu0 %v3976
      %v4162 = vpop.f32.mrf.mxu0
      %v4163 = vadd.f32 0.0, %v4162
      %v4164 = vpop.f32.mrf.mxu0
      %v4165 = vadd.f32 0.0, %v4164
      %4166 = vmatmul.bf16.gmra.mxu0 %v3977
      %v4167 = vpop.f32.mrf.mxu0
      %v4168 = vadd.f32 0.0, %v4167
      %v4169 = vpop.f32.mrf.mxu0
      %v4170 = vadd.f32 0.0, %v4169
      %4171 = vmatmul.bf16.gmra.mxu0 %v3978
      %v4172 = vpop.f32.mrf.mxu0
      %v4173 = vadd.f32 0.0, %v4172
      %v4174 = vpop.f32.mrf.mxu0
      %v4175 = vadd.f32 0.0, %v4174
      %4176 = vmatmul.bf16.gmra.mxu0 %v3979
      %v4177 = vpop.f32.mrf.mxu0
      %v4178 = vadd.f32 0.0, %v4177
      %v4179 = vpop.f32.mrf.mxu0
      %v4180 = vadd.f32 0.0, %v4179
      %4181 = vmatmul.bf16.gmra.mxu0 %v3980
      %v4182 = vpop.f32.mrf.mxu0
      %v4183 = vadd.f32 0.0, %v4182
      %v4184 = vpop.f32.mrf.mxu0
      %v4185 = vadd.f32 0.0, %v4184
      %4186 = vmatmul.bf16.gmra.mxu0 %v3981
      %v4187 = vpop.f32.mrf.mxu0
      %v4188 = vadd.f32 0.0, %v4187
      %v4189 = vpop.f32.mrf.mxu0
      %v4190 = vadd.f32 0.0, %v4189
      %4191 = vmatmul.bf16.gmra.mxu0 %v3982
      %v4192 = vpop.f32.mrf.mxu0
      %v4193 = vadd.f32 0.0, %v4192
      %v4194 = vpop.f32.mrf.mxu0
      %v4195 = vadd.f32 0.0, %v4194
      %4196 = vmatmul.bf16.gmra.mxu0 %v3983
      %v4197 = vpop.f32.mrf.mxu0
      %v4198 = vadd.f32 0.0, %v4197
      %v4199 = vpop.f32.mrf.mxu0
      %v4200 = vadd.f32 0.0, %v4199
      %4201 = vmatmul.bf16.gmra.mxu0 %v3984
      %v4202 = vpop.f32.mrf.mxu0
      %v4203 = vadd.f32 0.0, %v4202
      %v4204 = vpop.f32.mrf.mxu0
      %v4205 = vadd.f32 0.0, %v4204
      %4206 = vmatmul.bf16.gmra.mxu0 %v3985
      %v4207 = vpop.f32.mrf.mxu0
      %v4208 = vadd.f32 0.0, %v4207
      %v4209 = vpop.f32.mrf.mxu0
      %v4210 = vadd.f32 0.0, %v4209
      %4211 = vmatmul.bf16.gmra.mxu0 %v3986
      %v4212 = vpop.f32.mrf.mxu0
      %v4213 = vadd.f32 0.0, %v4212
      %v4214 = vpop.f32.mrf.mxu0
      %v4215 = vadd.f32 0.0, %v4214
      %4216 = vmatmul.bf16.gmra.mxu0 %v3987
      %v4217 = vpop.f32.mrf.mxu0
      %v4218 = vadd.f32 0.0, %v4217
      %v4219 = vpop.f32.mrf.mxu0
      %v4220 = vadd.f32 0.0, %v4219
      %4221 = vdwg.mxu0
      %v4222 = vadd.f32 %v3540, %v4063
      %v4223 = vadd.f32 %v3542, %v4065
      %v4224 = vadd.f32 %v3545, %v4068
      %v4225 = vadd.f32 %v3547, %v4070
      %v4226 = vadd.f32 %v3550, %v4073
      %v4227 = vadd.f32 %v3552, %v4075
      %v4228 = vadd.f32 %v3555, %v4078
      %v4229 = vadd.f32 %v3557, %v4080
      %v4230 = vadd.f32 %v3560, %v4083
      %v4231 = vadd.f32 %v3562, %v4085
      %v4232 = vadd.f32 %v3565, %v4088
      %v4233 = vadd.f32 %v3567, %v4090
      %v4234 = vadd.f32 %v3570, %v4093
      %v4235 = vadd.f32 %v3572, %v4095
      %v4236 = vadd.f32 %v3575, %v4098
      %v4237 = vadd.f32 %v3577, %v4100
      %v4238 = vadd.f32 %v3580, %v4103
      %v4239 = vadd.f32 %v3582, %v4105
      %v4240 = vadd.f32 %v3585, %v4108
      %v4241 = vadd.f32 %v3587, %v4110
      %v4242 = vadd.f32 %v3590, %v4113
      %v4243 = vadd.f32 %v3592, %v4115
      %v4244 = vadd.f32 %v3595, %v4118
      %v4245 = vadd.f32 %v3597, %v4120
      %v4246 = vadd.f32 %v3600, %v4123
      %v4247 = vadd.f32 %v3602, %v4125
      %v4248 = vadd.f32 %v3605, %v4128
      %v4249 = vadd.f32 %v3607, %v4130
      %v4250 = vadd.f32 %v3610, %v4133
      %v4251 = vadd.f32 %v3612, %v4135
      %v4252 = vadd.f32 %v3615, %v4138
      %v4253 = vadd.f32 %v3617, %v4140
      %v4254 = vadd.f32 %v3620, %v4143
      %v4255 = vadd.f32 %v3622, %v4145
      %v4256 = vadd.f32 %v3625, %v4148
      %v4257 = vadd.f32 %v3627, %v4150
      %v4258 = vadd.f32 %v3630, %v4153
      %v4259 = vadd.f32 %v3632, %v4155
      %v4260 = vadd.f32 %v3635, %v4158
      %v4261 = vadd.f32 %v3637, %v4160
      %v4262 = vadd.f32 %v3640, %v4163
      %v4263 = vadd.f32 %v3642, %v4165
      %v4264 = vadd.f32 %v3645, %v4168
      %v4265 = vadd.f32 %v3647, %v4170
      %v4266 = vadd.f32 %v3650, %v4173
      %v4267 = vadd.f32 %v3652, %v4175
      %v4268 = vadd.f32 %v3655, %v4178
      %v4269 = vadd.f32 %v3657, %v4180
      %v4270 = vadd.f32 %v3660, %v4183
      %v4271 = vadd.f32 %v3662, %v4185
      %v4272 = vadd.f32 %v3665, %v4188
      %v4273 = vadd.f32 %v3667, %v4190
      %v4274 = vadd.f32 %v3670, %v4193
      %v4275 = vadd.f32 %v3672, %v4195
      %v4276 = vadd.f32 %v3675, %v4198
      %v4277 = vadd.f32 %v3677, %v4200
      %v4278 = vadd.f32 %v3680, %v4203
      %v4279 = vadd.f32 %v3682, %v4205
      %v4280 = vadd.f32 %v3685, %v4208
      %v4281 = vadd.f32 %v3687, %v4210
      %v4282 = vadd.f32 %v3690, %v4213
      %v4283 = vadd.f32 %v3692, %v4215
      %v4284 = vadd.f32 %v3695, %v4218
      %v4285 = vadd.f32 %v3697, %v4220
      %v4286 = vpack.c.bf16 %v2587, %v2585
      %v4287 = vpack.c.bf16 %v2591, %v2589
      %v4288 = vpack.c.bf16 %v2595, %v2593
      %v4289 = vpack.c.bf16 %v2599, %v2597
      %v4290 = vpack.c.bf16 %v2607, %v2605
      %v4291 = vpack.c.bf16 %v2611, %v2609
      %v4292 = vpack.c.bf16 %v2615, %v2613
      %v4293 = vpack.c.bf16 %v2619, %v2617
      %v4294 = vpack.c.bf16 %v2627, %v2625
      %v4295 = vpack.c.bf16 %v2631, %v2629
      %v4296 = vpack.c.bf16 %v2635, %v2633
      %v4297 = vpack.c.bf16 %v2639, %v2637
      %v4298 = vpack.c.bf16 %v2647, %v2645
      %v4299 = vpack.c.bf16 %v2651, %v2649
      %v4300 = vpack.c.bf16 %v2655, %v2653
      %v4301 = vpack.c.bf16 %v2659, %v2657
      %v4302 = vpack.c.bf16 %v2667, %v2665
      %v4303 = vpack.c.bf16 %v2671, %v2669
      %v4304 = vpack.c.bf16 %v2675, %v2673
      %v4305 = vpack.c.bf16 %v2679, %v2677
      %v4306 = vpack.c.bf16 %v2687, %v2685
      %v4307 = vpack.c.bf16 %v2691, %v2689
      %v4308 = vpack.c.bf16 %v2695, %v2693
      %v4309 = vpack.c.bf16 %v2699, %v2697
      %v4310 = vpack.c.bf16 %v2707, %v2705
      %v4311 = vpack.c.bf16 %v2711, %v2709
      %v4312 = vpack.c.bf16 %v2715, %v2713
      %v4313 = vpack.c.bf16 %v2719, %v2717
      %v4314 = vpack.c.bf16 %v2727, %v2725
      %v4315 = vpack.c.bf16 %v2731, %v2729
      %v4316 = vpack.c.bf16 %v2735, %v2733
      %v4317 = vpack.c.bf16 %v2739, %v2737
      %s4318 = scalar_lea.vmem %s4, 192
      %v4319 = vld [vmem:[%s4318] sm:$0xf]
      %v4320 = vld [vmem:[%s4318 + $0x4] sm:$0xf]
      %v4321 = vld [vmem:[%s4318 + $0x8] sm:$0xf]
      %v4322 = vld [vmem:[%s4318 + $0xc] sm:$0xf]
      %v4323 = vld [vmem:[%s4318 + $0x10] sm:$0xf]
      %v4324 = vld [vmem:[%s4318 + $0x14] sm:$0xf]
      %v4325 = vld [vmem:[%s4318 + $0x18] sm:$0xf]
      %v4326 = vld [vmem:[%s4318 + $0x1c] sm:$0xf]
      %v4327 = vld [vmem:[%s4318 + $0x20] sm:$0xf]
      %v4328 = vld [vmem:[%s4318 + $0x24] sm:$0xf]
      %v4329 = vld [vmem:[%s4318 + $0x28] sm:$0xf]
      %v4330 = vld [vmem:[%s4318 + $0x2c] sm:$0xf]
      %v4331 = vld [vmem:[%s4318 + $0x30] sm:$0xf]
      %v4332 = vld [vmem:[%s4318 + $0x34] sm:$0xf]
      %v4333 = vld [vmem:[%s4318 + $0x38] sm:$0xf]
      %v4334 = vld [vmem:[%s4318 + $0x3c] sm:$0xf]
      %v4351 = vunpack.c.l.b16 %v4319
      %v4352 = vunpack.c.l.b16 %v4320
      %v4353 = vunpack.c.l.b16 %v4321
      %v4354 = vunpack.c.l.b16 %v4322
      %v4355 = vunpack.c.l.b16 %v4323
      %v4356 = vunpack.c.l.b16 %v4324
      %v4357 = vunpack.c.l.b16 %v4325
      %v4358 = vunpack.c.l.b16 %v4326
      %v4359 = vunpack.c.l.b16 %v4327
      %v4360 = vunpack.c.l.b16 %v4328
      %v4361 = vunpack.c.l.b16 %v4329
      %v4362 = vunpack.c.l.b16 %v4330
      %v4363 = vunpack.c.l.b16 %v4331
      %v4364 = vunpack.c.l.b16 %v4332
      %v4365 = vunpack.c.l.b16 %v4333
      %v4366 = vunpack.c.l.b16 %v4334
      %v4367 = vpack.c.b16 %v4352, %v4351
      %v4368 = vpack.c.b16 %v4354, %v4353
      %v4369 = vpack.c.b16 %v4356, %v4355
      %v4370 = vpack.c.b16 %v4358, %v4357
      %v4371 = vpack.c.b16 %v4360, %v4359
      %v4372 = vpack.c.b16 %v4362, %v4361
      %v4373 = vpack.c.b16 %v4364, %v4363
      %v4374 = vpack.c.b16 %v4366, %v4365
      %4383 = vmatpush.bf16.msra.mxu0 %v4374
      %4384 = vmatpush.bf16.msra.mxu0 %v4373
      %4385 = vmatpush.bf16.msra.mxu0 %v4372
      %4386 = vmatpush.bf16.msra.mxu0 %v4371
      %4387 = vmatpush.bf16.msra.mxu0 %v4370
      %4388 = vmatpush.bf16.msra.mxu0 %v4369
      %4389 = vmatpush.bf16.msra.mxu0 %v4368
      %4390 = vmatpush.bf16.msra.mxu0 %v4367
      %4391 = vmatmul.bf16.gmra.mxu0 %v4286
      %v4392 = vpop.f32.mrf.mxu0
      %v4393 = vadd.f32 0.0, %v4392
      %v4394 = vpop.f32.mrf.mxu0
      %v4395 = vadd.f32 0.0, %v4394
      %4396 = vmatmul.bf16.gmra.mxu0 %v4287
      %v4397 = vpop.f32.mrf.mxu0
      %v4398 = vadd.f32 0.0, %v4397
      %v4399 = vpop.f32.mrf.mxu0
      %v4400 = vadd.f32 0.0, %v4399
      %4401 = vmatmul.bf16.gmra.mxu0 %v4288
      %v4402 = vpop.f32.mrf.mxu0
      %v4403 = vadd.f32 0.0, %v4402
      %v4404 = vpop.f32.mrf.mxu0
      %v4405 = vadd.f32 0.0, %v4404
      %4406 = vmatmul.bf16.gmra.mxu0 %v4289
      %v4407 = vpop.f32.mrf.mxu0
      %v4408 = vadd.f32 0.0, %v4407
      %v4409 = vpop.f32.mrf.mxu0
      %v4410 = vadd.f32 0.0, %v4409
      %4411 = vmatmul.bf16.gmra.mxu0 %v4290
      %v4412 = vpop.f32.mrf.mxu0
      %v4413 = vadd.f32 0.0, %v4412
      %v4414 = vpop.f32.mrf.mxu0
      %v4415 = vadd.f32 0.0, %v4414
      %4416 = vmatmul.bf16.gmra.mxu0 %v4291
      %v4417 = vpop.f32.mrf.mxu0
      %v4418 = vadd.f32 0.0, %v4417
      %v4419 = vpop.f32.mrf.mxu0
      %v4420 = vadd.f32 0.0, %v4419
      %4421 = vmatmul.bf16.gmra.mxu0 %v4292
      %v4422 = vpop.f32.mrf.mxu0
      %v4423 = vadd.f32 0.0, %v4422
      %v4424 = vpop.f32.mrf.mxu0
      %v4425 = vadd.f32 0.0, %v4424
      %4426 = vmatmul.bf16.gmra.mxu0 %v4293
      %v4427 = vpop.f32.mrf.mxu0
      %v4428 = vadd.f32 0.0, %v4427
      %v4429 = vpop.f32.mrf.mxu0
      %v4430 = vadd.f32 0.0, %v4429
      %4431 = vmatmul.bf16.gmra.mxu0 %v4294
      %v4432 = vpop.f32.mrf.mxu0
      %v4433 = vadd.f32 0.0, %v4432
      %v4434 = vpop.f32.mrf.mxu0
      %v4435 = vadd.f32 0.0, %v4434
      %4436 = vmatmul.bf16.gmra.mxu0 %v4295
      %v4437 = vpop.f32.mrf.mxu0
      %v4438 = vadd.f32 0.0, %v4437
      %v4439 = vpop.f32.mrf.mxu0
      %v4440 = vadd.f32 0.0, %v4439
      %4441 = vmatmul.bf16.gmra.mxu0 %v4296
      %v4442 = vpop.f32.mrf.mxu0
      %v4443 = vadd.f32 0.0, %v4442
      %v4444 = vpop.f32.mrf.mxu0
      %v4445 = vadd.f32 0.0, %v4444
      %4446 = vmatmul.bf16.gmra.mxu0 %v4297
      %v4447 = vpop.f32.mrf.mxu0
      %v4448 = vadd.f32 0.0, %v4447
      %v4449 = vpop.f32.mrf.mxu0
      %v4450 = vadd.f32 0.0, %v4449
      %4451 = vmatmul.bf16.gmra.mxu0 %v4298
      %v4452 = vpop.f32.mrf.mxu0
      %v4453 = vadd.f32 0.0, %v4452
      %v4454 = vpop.f32.mrf.mxu0
      %v4455 = vadd.f32 0.0, %v4454
      %4456 = vmatmul.bf16.gmra.mxu0 %v4299
      %v4457 = vpop.f32.mrf.mxu0
      %v4458 = vadd.f32 0.0, %v4457
      %v4459 = vpop.f32.mrf.mxu0
      %v4460 = vadd.f32 0.0, %v4459
      %4461 = vmatmul.bf16.gmra.mxu0 %v4300
      %v4462 = vpop.f32.mrf.mxu0
      %v4463 = vadd.f32 0.0, %v4462
      %v4464 = vpop.f32.mrf.mxu0
      %v4465 = vadd.f32 0.0, %v4464
      %4466 = vmatmul.bf16.gmra.mxu0 %v4301
      %v4467 = vpop.f32.mrf.mxu0
      %v4468 = vadd.f32 0.0, %v4467
      %v4469 = vpop.f32.mrf.mxu0
      %v4470 = vadd.f32 0.0, %v4469
      %4471 = vmatmul.bf16.gmra.mxu0 %v4302
      %v4472 = vpop.f32.mrf.mxu0
      %v4473 = vadd.f32 0.0, %v4472
      %v4474 = vpop.f32.mrf.mxu0
      %v4475 = vadd.f32 0.0, %v4474
      %4476 = vmatmul.bf16.gmra.mxu0 %v4303
      %v4477 = vpop.f32.mrf.mxu0
      %v4478 = vadd.f32 0.0, %v4477
      %v4479 = vpop.f32.mrf.mxu0
      %v4480 = vadd.f32 0.0, %v4479
      %4481 = vmatmul.bf16.gmra.mxu0 %v4304
      %v4482 = vpop.f32.mrf.mxu0
      %v4483 = vadd.f32 0.0, %v4482
      %v4484 = vpop.f32.mrf.mxu0
      %v4485 = vadd.f32 0.0, %v4484
      %4486 = vmatmul.bf16.gmra.mxu0 %v4305
      %v4487 = vpop.f32.mrf.mxu0
      %v4488 = vadd.f32 0.0, %v4487
      %v4489 = vpop.f32.mrf.mxu0
      %v4490 = vadd.f32 0.0, %v4489
      %4491 = vmatmul.bf16.gmra.mxu0 %v4306
      %v4492 = vpop.f32.mrf.mxu0
      %v4493 = vadd.f32 0.0, %v4492
      %v4494 = vpop.f32.mrf.mxu0
      %v4495 = vadd.f32 0.0, %v4494
      %4496 = vmatmul.bf16.gmra.mxu0 %v4307
      %v4497 = vpop.f32.mrf.mxu0
      %v4498 = vadd.f32 0.0, %v4497
      %v4499 = vpop.f32.mrf.mxu0
      %v4500 = vadd.f32 0.0, %v4499
      %4501 = vmatmul.bf16.gmra.mxu0 %v4308
      %v4502 = vpop.f32.mrf.mxu0
      %v4503 = vadd.f32 0.0, %v4502
      %v4504 = vpop.f32.mrf.mxu0
      %v4505 = vadd.f32 0.0, %v4504
      %4506 = vmatmul.bf16.gmra.mxu0 %v4309
      %v4507 = vpop.f32.mrf.mxu0
      %v4508 = vadd.f32 0.0, %v4507
      %v4509 = vpop.f32.mrf.mxu0
      %v4510 = vadd.f32 0.0, %v4509
      %4511 = vmatmul.bf16.gmra.mxu0 %v4310
      %v4512 = vpop.f32.mrf.mxu0
      %v4513 = vadd.f32 0.0, %v4512
      %v4514 = vpop.f32.mrf.mxu0
      %v4515 = vadd.f32 0.0, %v4514
      %4516 = vmatmul.bf16.gmra.mxu0 %v4311
      %v4517 = vpop.f32.mrf.mxu0
      %v4518 = vadd.f32 0.0, %v4517
      %v4519 = vpop.f32.mrf.mxu0
      %v4520 = vadd.f32 0.0, %v4519
      %4521 = vmatmul.bf16.gmra.mxu0 %v4312
      %v4522 = vpop.f32.mrf.mxu0
      %v4523 = vadd.f32 0.0, %v4522
      %v4524 = vpop.f32.mrf.mxu0
      %v4525 = vadd.f32 0.0, %v4524
      %4526 = vmatmul.bf16.gmra.mxu0 %v4313
      %v4527 = vpop.f32.mrf.mxu0
      %v4528 = vadd.f32 0.0, %v4527
      %v4529 = vpop.f32.mrf.mxu0
      %v4530 = vadd.f32 0.0, %v4529
      %4531 = vmatmul.bf16.gmra.mxu0 %v4314
      %v4532 = vpop.f32.mrf.mxu0
      %v4533 = vadd.f32 0.0, %v4532
      %v4534 = vpop.f32.mrf.mxu0
      %v4535 = vadd.f32 0.0, %v4534
      %4536 = vmatmul.bf16.gmra.mxu0 %v4315
      %v4537 = vpop.f32.mrf.mxu0
      %v4538 = vadd.f32 0.0, %v4537
      %v4539 = vpop.f32.mrf.mxu0
      %v4540 = vadd.f32 0.0, %v4539
      %4541 = vmatmul.bf16.gmra.mxu0 %v4316
      %v4542 = vpop.f32.mrf.mxu0
      %v4543 = vadd.f32 0.0, %v4542
      %v4544 = vpop.f32.mrf.mxu0
      %v4545 = vadd.f32 0.0, %v4544
      %4546 = vmatmul.bf16.gmra.mxu0 %v4317
      %v4547 = vpop.f32.mrf.mxu0
      %v4548 = vadd.f32 0.0, %v4547
      %v4549 = vpop.f32.mrf.mxu0
      %v4550 = vadd.f32 0.0, %v4549
      %4551 = vdwg.mxu0
      %v4552 = vadd.f32 %v4222, %v4393
      %v4553 = vadd.f32 %v4223, %v4395
      %v4554 = vadd.f32 %v4224, %v4398
      %v4555 = vadd.f32 %v4225, %v4400
      %v4556 = vadd.f32 %v4226, %v4403
      %v4557 = vadd.f32 %v4227, %v4405
      %v4558 = vadd.f32 %v4228, %v4408
      %v4559 = vadd.f32 %v4229, %v4410
      %v4560 = vadd.f32 %v4230, %v4413
      %v4561 = vadd.f32 %v4231, %v4415
      %v4562 = vadd.f32 %v4232, %v4418
      %v4563 = vadd.f32 %v4233, %v4420
      %v4564 = vadd.f32 %v4234, %v4423
      %v4565 = vadd.f32 %v4235, %v4425
      %v4566 = vadd.f32 %v4236, %v4428
      %v4567 = vadd.f32 %v4237, %v4430
      %v4568 = vadd.f32 %v4238, %v4433
      %v4569 = vadd.f32 %v4239, %v4435
      %v4570 = vadd.f32 %v4240, %v4438
      %v4571 = vadd.f32 %v4241, %v4440
      %v4572 = vadd.f32 %v4242, %v4443
      %v4573 = vadd.f32 %v4243, %v4445
      %v4574 = vadd.f32 %v4244, %v4448
      %v4575 = vadd.f32 %v4245, %v4450
      %v4576 = vadd.f32 %v4246, %v4453
      %v4577 = vadd.f32 %v4247, %v4455
      %v4578 = vadd.f32 %v4248, %v4458
      %v4579 = vadd.f32 %v4249, %v4460
      %v4580 = vadd.f32 %v4250, %v4463
      %v4581 = vadd.f32 %v4251, %v4465
      %v4582 = vadd.f32 %v4252, %v4468
      %v4583 = vadd.f32 %v4253, %v4470
      %v4584 = vadd.f32 %v4254, %v4473
      %v4585 = vadd.f32 %v4255, %v4475
      %v4586 = vadd.f32 %v4256, %v4478
      %v4587 = vadd.f32 %v4257, %v4480
      %v4588 = vadd.f32 %v4258, %v4483
      %v4589 = vadd.f32 %v4259, %v4485
      %v4590 = vadd.f32 %v4260, %v4488
      %v4591 = vadd.f32 %v4261, %v4490
      %v4592 = vadd.f32 %v4262, %v4493
      %v4593 = vadd.f32 %v4263, %v4495
      %v4594 = vadd.f32 %v4264, %v4498
      %v4595 = vadd.f32 %v4265, %v4500
      %v4596 = vadd.f32 %v4266, %v4503
      %v4597 = vadd.f32 %v4267, %v4505
      %v4598 = vadd.f32 %v4268, %v4508
      %v4599 = vadd.f32 %v4269, %v4510
      %v4600 = vadd.f32 %v4270, %v4513
      %v4601 = vadd.f32 %v4271, %v4515
      %v4602 = vadd.f32 %v4272, %v4518
      %v4603 = vadd.f32 %v4273, %v4520
      %v4604 = vadd.f32 %v4274, %v4523
      %v4605 = vadd.f32 %v4275, %v4525
      %v4606 = vadd.f32 %v4276, %v4528
      %v4607 = vadd.f32 %v4277, %v4530
      %v4608 = vadd.f32 %v4278, %v4533
      %v4609 = vadd.f32 %v4279, %v4535
      %v4610 = vadd.f32 %v4280, %v4538
      %v4611 = vadd.f32 %v4281, %v4540
      %v4612 = vadd.f32 %v4282, %v4543
      %v4613 = vadd.f32 %v4283, %v4545
      %v4614 = vadd.f32 %v4284, %v4548
      %v4615 = vadd.f32 %v4285, %v4550
      %v4632 = vrot.slane %v2599, 1
      %v4633 = vrot.slane %v2600, 1
      %v4634 = vsel %vm2959, %v4632, %v4633
      %v4635 = vrot.slane %v2619, 1
      %v4636 = vrot.slane %v2620, 1
      %v4637 = vsel %vm2959, %v4635, %v4636
      %v4638 = vrot.slane %v2639, 1
      %v4639 = vrot.slane %v2640, 1
      %v4640 = vsel %vm2959, %v4638, %v4639
      %v4641 = vrot.slane %v2659, 1
      %v4642 = vrot.slane %v2660, 1
      %v4643 = vsel %vm2959, %v4641, %v4642
      %v4644 = vrot.slane %v2679, 1
      %v4645 = vrot.slane %v2680, 1
      %v4646 = vsel %vm2959, %v4644, %v4645
      %v4647 = vrot.slane %v2699, 1
      %v4648 = vrot.slane %v2700, 1
      %v4649 = vsel %vm2959, %v4647, %v4648
      %v4650 = vrot.slane %v2719, 1
      %v4651 = vrot.slane %v2720, 1
      %v4652 = vsel %vm2959, %v4650, %v4651
      %v4653 = vrot.slane %v2739, 1
      %v4654 = vrot.slane %v2740, 1
      %v4655 = vsel %vm2959, %v4653, %v4654
      %v4664 = vpack.c.bf16 %v2968, %v2965
      %v4665 = vpack.c.bf16 %v2974, %v2971
      %v4666 = vpack.c.bf16 %v2980, %v2977
      %v4667 = vpack.c.bf16 %v4634, %v2983
      %v4668 = vpack.c.bf16 %v2992, %v2989
      %v4669 = vpack.c.bf16 %v2998, %v2995
      %v4670 = vpack.c.bf16 %v3004, %v3001
      %v4671 = vpack.c.bf16 %v4637, %v3007
      %v4672 = vpack.c.bf16 %v3016, %v3013
      %v4673 = vpack.c.bf16 %v3022, %v3019
      %v4674 = vpack.c.bf16 %v3028, %v3025
      %v4675 = vpack.c.bf16 %v4640, %v3031
      %v4676 = vpack.c.bf16 %v3040, %v3037
      %v4677 = vpack.c.bf16 %v3046, %v3043
      %v4678 = vpack.c.bf16 %v3052, %v3049
      %v4679 = vpack.c.bf16 %v4643, %v3055
      %v4680 = vpack.c.bf16 %v3064, %v3061
      %v4681 = vpack.c.bf16 %v3070, %v3067
      %v4682 = vpack.c.bf16 %v3076, %v3073
      %v4683 = vpack.c.bf16 %v4646, %v3079
      %v4684 = vpack.c.bf16 %v3088, %v3085
      %v4685 = vpack.c.bf16 %v3094, %v3091
      %v4686 = vpack.c.bf16 %v3100, %v3097
      %v4687 = vpack.c.bf16 %v4649, %v3103
      %v4688 = vpack.c.bf16 %v3112, %v3109
      %v4689 = vpack.c.bf16 %v3118, %v3115
      %v4690 = vpack.c.bf16 %v3124, %v3121
      %v4691 = vpack.c.bf16 %v4652, %v3127
      %v4692 = vpack.c.bf16 %v3136, %v3133
      %v4693 = vpack.c.bf16 %v3142, %v3139
      %v4694 = vpack.c.bf16 %v3148, %v3145
      %v4695 = vpack.c.bf16 %v4655, %v3151
      %s4696 = scalar_lea.vmem %s4, 256
      %v4697 = vld [vmem:[%s4696] sm:$0xf]
      %v4698 = vld [vmem:[%s4696 + $0x4] sm:$0xf]
      %v4699 = vld [vmem:[%s4696 + $0x8] sm:$0xf]
      %v4700 = vld [vmem:[%s4696 + $0xc] sm:$0xf]
      %v4701 = vld [vmem:[%s4696 + $0x10] sm:$0xf]
      %v4702 = vld [vmem:[%s4696 + $0x14] sm:$0xf]
      %v4703 = vld [vmem:[%s4696 + $0x18] sm:$0xf]
      %v4704 = vld [vmem:[%s4696 + $0x1c] sm:$0xf]
      %v4705 = vld [vmem:[%s4696 + $0x20] sm:$0xf]
      %v4706 = vld [vmem:[%s4696 + $0x24] sm:$0xf]
      %v4707 = vld [vmem:[%s4696 + $0x28] sm:$0xf]
      %v4708 = vld [vmem:[%s4696 + $0x2c] sm:$0xf]
      %v4709 = vld [vmem:[%s4696 + $0x30] sm:$0xf]
      %v4710 = vld [vmem:[%s4696 + $0x34] sm:$0xf]
      %v4711 = vld [vmem:[%s4696 + $0x38] sm:$0xf]
      %v4712 = vld [vmem:[%s4696 + $0x3c] sm:$0xf]
      %v4729 = vunpack.c.l.b16 %v4697
      %v4730 = vunpack.c.l.b16 %v4698
      %v4731 = vunpack.c.l.b16 %v4699
      %v4732 = vunpack.c.l.b16 %v4700
      %v4733 = vunpack.c.l.b16 %v4701
      %v4734 = vunpack.c.l.b16 %v4702
      %v4735 = vunpack.c.l.b16 %v4703
      %v4736 = vunpack.c.l.b16 %v4704
      %v4737 = vunpack.c.l.b16 %v4705
      %v4738 = vunpack.c.l.b16 %v4706
      %v4739 = vunpack.c.l.b16 %v4707
      %v4740 = vunpack.c.l.b16 %v4708
      %v4741 = vunpack.c.l.b16 %v4709
      %v4742 = vunpack.c.l.b16 %v4710
      %v4743 = vunpack.c.l.b16 %v4711
      %v4744 = vunpack.c.l.b16 %v4712
      %v4745 = vpack.c.b16 %v4730, %v4729
      %v4746 = vpack.c.b16 %v4732, %v4731
      %v4747 = vpack.c.b16 %v4734, %v4733
      %v4748 = vpack.c.b16 %v4736, %v4735
      %v4749 = vpack.c.b16 %v4738, %v4737
      %v4750 = vpack.c.b16 %v4740, %v4739
      %v4751 = vpack.c.b16 %v4742, %v4741
      %v4752 = vpack.c.b16 %v4744, %v4743
      %4761 = vmatpush.bf16.msra.mxu0 %v4752
      %4762 = vmatpush.bf16.msra.mxu0 %v4751
      %4763 = vmatpush.bf16.msra.mxu0 %v4750
      %4764 = vmatpush.bf16.msra.mxu0 %v4749
      %4765 = vmatpush.bf16.msra.mxu0 %v4748
      %4766 = vmatpush.bf16.msra.mxu0 %v4747
      %4767 = vmatpush.bf16.msra.mxu0 %v4746
      %4768 = vmatpush.bf16.msra.mxu0 %v4745
      %4769 = vmatmul.bf16.gmra.mxu0 %v4664
      %v4770 = vpop.f32.mrf.mxu0
      %v4771 = vadd.f32 0.0, %v4770
      %v4772 = vpop.f32.mrf.mxu0
      %v4773 = vadd.f32 0.0, %v4772
      %4774 = vmatmul.bf16.gmra.mxu0 %v4665
      %v4775 = vpop.f32.mrf.mxu0
      %v4776 = vadd.f32 0.0, %v4775
      %v4777 = vpop.f32.mrf.mxu0
      %v4778 = vadd.f32 0.0, %v4777
      %4779 = vmatmul.bf16.gmra.mxu0 %v4666
      %v4780 = vpop.f32.mrf.mxu0
      %v4781 = vadd.f32 0.0, %v4780
      %v4782 = vpop.f32.mrf.mxu0
      %v4783 = vadd.f32 0.0, %v4782
      %4784 = vmatmul.bf16.gmra.mxu0 %v4667
      %v4785 = vpop.f32.mrf.mxu0
      %v4786 = vadd.f32 0.0, %v4785
      %v4787 = vpop.f32.mrf.mxu0
      %v4788 = vadd.f32 0.0, %v4787
      %4789 = vmatmul.bf16.gmra.mxu0 %v4668
      %v4790 = vpop.f32.mrf.mxu0
      %v4791 = vadd.f32 0.0, %v4790
      %v4792 = vpop.f32.mrf.mxu0
      %v4793 = vadd.f32 0.0, %v4792
      %4794 = vmatmul.bf16.gmra.mxu0 %v4669
      %v4795 = vpop.f32.mrf.mxu0
      %v4796 = vadd.f32 0.0, %v4795
      %v4797 = vpop.f32.mrf.mxu0
      %v4798 = vadd.f32 0.0, %v4797
      %4799 = vmatmul.bf16.gmra.mxu0 %v4670
      %v4800 = vpop.f32.mrf.mxu0
      %v4801 = vadd.f32 0.0, %v4800
      %v4802 = vpop.f32.mrf.mxu0
      %v4803 = vadd.f32 0.0, %v4802
      %4804 = vmatmul.bf16.gmra.mxu0 %v4671
      %v4805 = vpop.f32.mrf.mxu0
      %v4806 = vadd.f32 0.0, %v4805
      %v4807 = vpop.f32.mrf.mxu0
      %v4808 = vadd.f32 0.0, %v4807
      %4809 = vmatmul.bf16.gmra.mxu0 %v4672
      %v4810 = vpop.f32.mrf.mxu0
      %v4811 = vadd.f32 0.0, %v4810
      %v4812 = vpop.f32.mrf.mxu0
      %v4813 = vadd.f32 0.0, %v4812
      %4814 = vmatmul.bf16.gmra.mxu0 %v4673
      %v4815 = vpop.f32.mrf.mxu0
      %v4816 = vadd.f32 0.0, %v4815
      %v4817 = vpop.f32.mrf.mxu0
      %v4818 = vadd.f32 0.0, %v4817
      %4819 = vmatmul.bf16.gmra.mxu0 %v4674
      %v4820 = vpop.f32.mrf.mxu0
      %v4821 = vadd.f32 0.0, %v4820
      %v4822 = vpop.f32.mrf.mxu0
      %v4823 = vadd.f32 0.0, %v4822
      %4824 = vmatmul.bf16.gmra.mxu0 %v4675
      %v4825 = vpop.f32.mrf.mxu0
      %v4826 = vadd.f32 0.0, %v4825
      %v4827 = vpop.f32.mrf.mxu0
      %v4828 = vadd.f32 0.0, %v4827
      %4829 = vmatmul.bf16.gmra.mxu0 %v4676
      %v4830 = vpop.f32.mrf.mxu0
      %v4831 = vadd.f32 0.0, %v4830
      %v4832 = vpop.f32.mrf.mxu0
      %v4833 = vadd.f32 0.0, %v4832
      %4834 = vmatmul.bf16.gmra.mxu0 %v4677
      %v4835 = vpop.f32.mrf.mxu0
      %v4836 = vadd.f32 0.0, %v4835
      %v4837 = vpop.f32.mrf.mxu0
      %v4838 = vadd.f32 0.0, %v4837
      %4839 = vmatmul.bf16.gmra.mxu0 %v4678
      %v4840 = vpop.f32.mrf.mxu0
      %v4841 = vadd.f32 0.0, %v4840
      %v4842 = vpop.f32.mrf.mxu0
      %v4843 = vadd.f32 0.0, %v4842
      %4844 = vmatmul.bf16.gmra.mxu0 %v4679
      %v4845 = vpop.f32.mrf.mxu0
      %v4846 = vadd.f32 0.0, %v4845
      %v4847 = vpop.f32.mrf.mxu0
      %v4848 = vadd.f32 0.0, %v4847
      %4849 = vmatmul.bf16.gmra.mxu0 %v4680
      %v4850 = vpop.f32.mrf.mxu0
      %v4851 = vadd.f32 0.0, %v4850
      %v4852 = vpop.f32.mrf.mxu0
      %v4853 = vadd.f32 0.0, %v4852
      %4854 = vmatmul.bf16.gmra.mxu0 %v4681
      %v4855 = vpop.f32.mrf.mxu0
      %v4856 = vadd.f32 0.0, %v4855
      %v4857 = vpop.f32.mrf.mxu0
      %v4858 = vadd.f32 0.0, %v4857
      %4859 = vmatmul.bf16.gmra.mxu0 %v4682
      %v4860 = vpop.f32.mrf.mxu0
      %v4861 = vadd.f32 0.0, %v4860
      %v4862 = vpop.f32.mrf.mxu0
      %v4863 = vadd.f32 0.0, %v4862
      %4864 = vmatmul.bf16.gmra.mxu0 %v4683
      %v4865 = vpop.f32.mrf.mxu0
      %v4866 = vadd.f32 0.0, %v4865
      %v4867 = vpop.f32.mrf.mxu0
      %v4868 = vadd.f32 0.0, %v4867
      %4869 = vmatmul.bf16.gmra.mxu0 %v4684
      %v4870 = vpop.f32.mrf.mxu0
      %v4871 = vadd.f32 0.0, %v4870
      %v4872 = vpop.f32.mrf.mxu0
      %v4873 = vadd.f32 0.0, %v4872
      %4874 = vmatmul.bf16.gmra.mxu0 %v4685
      %v4875 = vpop.f32.mrf.mxu0
      %v4876 = vadd.f32 0.0, %v4875
      %v4877 = vpop.f32.mrf.mxu0
      %v4878 = vadd.f32 0.0, %v4877
      %4879 = vmatmul.bf16.gmra.mxu0 %v4686
      %v4880 = vpop.f32.mrf.mxu0
      %v4881 = vadd.f32 0.0, %v4880
      %v4882 = vpop.f32.mrf.mxu0
      %v4883 = vadd.f32 0.0, %v4882
      %4884 = vmatmul.bf16.gmra.mxu0 %v4687
      %v4885 = vpop.f32.mrf.mxu0
      %v4886 = vadd.f32 0.0, %v4885
      %v4887 = vpop.f32.mrf.mxu0
      %v4888 = vadd.f32 0.0, %v4887
      %4889 = vmatmul.bf16.gmra.mxu0 %v4688
      %v4890 = vpop.f32.mrf.mxu0
      %v4891 = vadd.f32 0.0, %v4890
      %v4892 = vpop.f32.mrf.mxu0
      %v4893 = vadd.f32 0.0, %v4892
      %4894 = vmatmul.bf16.gmra.mxu0 %v4689
      %v4895 = vpop.f32.mrf.mxu0
      %v4896 = vadd.f32 0.0, %v4895
      %v4897 = vpop.f32.mrf.mxu0
      %v4898 = vadd.f32 0.0, %v4897
      %4899 = vmatmul.bf16.gmra.mxu0 %v4690
      %v4900 = vpop.f32.mrf.mxu0
      %v4901 = vadd.f32 0.0, %v4900
      %v4902 = vpop.f32.mrf.mxu0
      %v4903 = vadd.f32 0.0, %v4902
      %4904 = vmatmul.bf16.gmra.mxu0 %v4691
      %v4905 = vpop.f32.mrf.mxu0
      %v4906 = vadd.f32 0.0, %v4905
      %v4907 = vpop.f32.mrf.mxu0
      %v4908 = vadd.f32 0.0, %v4907
      %4909 = vmatmul.bf16.gmra.mxu0 %v4692
      %v4910 = vpop.f32.mrf.mxu0
      %v4911 = vadd.f32 0.0, %v4910
      %v4912 = vpop.f32.mrf.mxu0
      %v4913 = vadd.f32 0.0, %v4912
      %4914 = vmatmul.bf16.gmra.mxu0 %v4693
      %v4915 = vpop.f32.mrf.mxu0
      %v4916 = vadd.f32 0.0, %v4915
      %v4917 = vpop.f32.mrf.mxu0
      %v4918 = vadd.f32 0.0, %v4917
      %4919 = vmatmul.bf16.gmra.mxu0 %v4694
      %v4920 = vpop.f32.mrf.mxu0
      %v4921 = vadd.f32 0.0, %v4920
      %v4922 = vpop.f32.mrf.mxu0
      %v4923 = vadd.f32 0.0, %v4922
      %4924 = vmatmul.bf16.gmra.mxu0 %v4695
      %v4925 = vpop.f32.mrf.mxu0
      %v4926 = vadd.f32 0.0, %v4925
      %v4927 = vpop.f32.mrf.mxu0
      %v4928 = vadd.f32 0.0, %v4927
      %4929 = vdwg.mxu0
      %v4930 = vadd.f32 %v4552, %v4771
      %v4931 = vadd.f32 %v4553, %v4773
      %v4932 = vadd.f32 %v4554, %v4776
      %v4933 = vadd.f32 %v4555, %v4778
      %v4934 = vadd.f32 %v4556, %v4781
      %v4935 = vadd.f32 %v4557, %v4783
      %v4936 = vadd.f32 %v4558, %v4786
      %v4937 = vadd.f32 %v4559, %v4788
      %v4938 = vadd.f32 %v4560, %v4791
      %v4939 = vadd.f32 %v4561, %v4793
      %v4940 = vadd.f32 %v4562, %v4796
      %v4941 = vadd.f32 %v4563, %v4798
      %v4942 = vadd.f32 %v4564, %v4801
      %v4943 = vadd.f32 %v4565, %v4803
      %v4944 = vadd.f32 %v4566, %v4806
      %v4945 = vadd.f32 %v4567, %v4808
      %v4946 = vadd.f32 %v4568, %v4811
      %v4947 = vadd.f32 %v4569, %v4813
      %v4948 = vadd.f32 %v4570, %v4816
      %v4949 = vadd.f32 %v4571, %v4818
      %v4950 = vadd.f32 %v4572, %v4821
      %v4951 = vadd.f32 %v4573, %v4823
      %v4952 = vadd.f32 %v4574, %v4826
      %v4953 = vadd.f32 %v4575, %v4828
      %v4954 = vadd.f32 %v4576, %v4831
      %v4955 = vadd.f32 %v4577, %v4833
      %v4956 = vadd.f32 %v4578, %v4836
      %v4957 = vadd.f32 %v4579, %v4838
      %v4958 = vadd.f32 %v4580, %v4841
      %v4959 = vadd.f32 %v4581, %v4843
      %v4960 = vadd.f32 %v4582, %v4846
      %v4961 = vadd.f32 %v4583, %v4848
      %v4962 = vadd.f32 %v4584, %v4851
      %v4963 = vadd.f32 %v4585, %v4853
      %v4964 = vadd.f32 %v4586, %v4856
      %v4965 = vadd.f32 %v4587, %v4858
      %v4966 = vadd.f32 %v4588, %v4861
      %v4967 = vadd.f32 %v4589, %v4863
      %v4968 = vadd.f32 %v4590, %v4866
      %v4969 = vadd.f32 %v4591, %v4868
      %v4970 = vadd.f32 %v4592, %v4871
      %v4971 = vadd.f32 %v4593, %v4873
      %v4972 = vadd.f32 %v4594, %v4876
      %v4973 = vadd.f32 %v4595, %v4878
      %v4974 = vadd.f32 %v4596, %v4881
      %v4975 = vadd.f32 %v4597, %v4883
      %v4976 = vadd.f32 %v4598, %v4886
      %v4977 = vadd.f32 %v4599, %v4888
      %v4978 = vadd.f32 %v4600, %v4891
      %v4979 = vadd.f32 %v4601, %v4893
      %v4980 = vadd.f32 %v4602, %v4896
      %v4981 = vadd.f32 %v4603, %v4898
      %v4982 = vadd.f32 %v4604, %v4901
      %v4983 = vadd.f32 %v4605, %v4903
      %v4984 = vadd.f32 %v4606, %v4906
      %v4985 = vadd.f32 %v4607, %v4908
      %v4986 = vadd.f32 %v4608, %v4911
      %v4987 = vadd.f32 %v4609, %v4913
      %v4988 = vadd.f32 %v4610, %v4916
      %v4989 = vadd.f32 %v4611, %v4918
      %v4990 = vadd.f32 %v4612, %v4921
      %v4991 = vadd.f32 %v4613, %v4923
      %v4992 = vadd.f32 %v4614, %v4926
      %v4993 = vadd.f32 %v4615, %v4928
      %v4994 = vrot.slane %v2599, 2
      %v4995 = vrot.slane %v2600, 2
      %v4996 = vsel %vm3699, %v4994, %v4995
      %v4997 = vrot.slane %v2619, 2
      %v4998 = vrot.slane %v2620, 2
      %v4999 = vsel %vm3699, %v4997, %v4998
      %v5000 = vrot.slane %v2639, 2
      %v5001 = vrot.slane %v2640, 2
      %v5002 = vsel %vm3699, %v5000, %v5001
      %v5003 = vrot.slane %v2659, 2
      %v5004 = vrot.slane %v2660, 2
      %v5005 = vsel %vm3699, %v5003, %v5004
      %v5006 = vrot.slane %v2679, 2
      %v5007 = vrot.slane %v2680, 2
      %v5008 = vsel %vm3699, %v5006, %v5007
      %v5009 = vrot.slane %v2699, 2
      %v5010 = vrot.slane %v2700, 2
      %v5011 = vsel %vm3699, %v5009, %v5010
      %v5012 = vrot.slane %v2719, 2
      %v5013 = vrot.slane %v2720, 2
      %v5014 = vsel %vm3699, %v5012, %v5013
      %v5015 = vrot.slane %v2739, 2
      %v5016 = vrot.slane %v2740, 2
      %v5017 = vsel %vm3699, %v5015, %v5016
      %v5026 = vpack.c.bf16 %v3708, %v3705
      %v5027 = vpack.c.bf16 %v3714, %v3711
      %v5028 = vpack.c.bf16 %v3720, %v3717
      %v5029 = vpack.c.bf16 %v4996, %v3723
      %v5030 = vpack.c.bf16 %v3732, %v3729
      %v5031 = vpack.c.bf16 %v3738, %v3735
      %v5032 = vpack.c.bf16 %v3744, %v3741
      %v5033 = vpack.c.bf16 %v4999, %v3747
      %v5034 = vpack.c.bf16 %v3756, %v3753
      %v5035 = vpack.c.bf16 %v3762, %v3759
      %v5036 = vpack.c.bf16 %v3768, %v3765
      %v5037 = vpack.c.bf16 %v5002, %v3771
      %v5038 = vpack.c.bf16 %v3780, %v3777
      %v5039 = vpack.c.bf16 %v3786, %v3783
      %v5040 = vpack.c.bf16 %v3792, %v3789
      %v5041 = vpack.c.bf16 %v5005, %v3795
      %v5042 = vpack.c.bf16 %v3804, %v3801
      %v5043 = vpack.c.bf16 %v3810, %v3807
      %v5044 = vpack.c.bf16 %v3816, %v3813
      %v5045 = vpack.c.bf16 %v5008, %v3819
      %v5046 = vpack.c.bf16 %v3828, %v3825
      %v5047 = vpack.c.bf16 %v3834, %v3831
      %v5048 = vpack.c.bf16 %v3840, %v3837
      %v5049 = vpack.c.bf16 %v5011, %v3843
      %v5050 = vpack.c.bf16 %v3852, %v3849
      %v5051 = vpack.c.bf16 %v3858, %v3855
      %v5052 = vpack.c.bf16 %v3864, %v3861
      %v5053 = vpack.c.bf16 %v5014, %v3867
      %v5054 = vpack.c.bf16 %v3876, %v3873
      %v5055 = vpack.c.bf16 %v3882, %v3879
      %v5056 = vpack.c.bf16 %v3888, %v3885
      %v5057 = vpack.c.bf16 %v5017, %v3891
      %s5058 = scalar_lea.vmem %s4, 320
      %v5059 = vld [vmem:[%s5058] sm:$0xf]
      %v5060 = vld [vmem:[%s5058 + $0x4] sm:$0xf]
      %v5061 = vld [vmem:[%s5058 + $0x8] sm:$0xf]
      %v5062 = vld [vmem:[%s5058 + $0xc] sm:$0xf]
      %v5063 = vld [vmem:[%s5058 + $0x10] sm:$0xf]
      %v5064 = vld [vmem:[%s5058 + $0x14] sm:$0xf]
      %v5065 = vld [vmem:[%s5058 + $0x18] sm:$0xf]
      %v5066 = vld [vmem:[%s5058 + $0x1c] sm:$0xf]
      %v5067 = vld [vmem:[%s5058 + $0x20] sm:$0xf]
      %v5068 = vld [vmem:[%s5058 + $0x24] sm:$0xf]
      %v5069 = vld [vmem:[%s5058 + $0x28] sm:$0xf]
      %v5070 = vld [vmem:[%s5058 + $0x2c] sm:$0xf]
      %v5071 = vld [vmem:[%s5058 + $0x30] sm:$0xf]
      %v5072 = vld [vmem:[%s5058 + $0x34] sm:$0xf]
      %v5073 = vld [vmem:[%s5058 + $0x38] sm:$0xf]
      %v5074 = vld [vmem:[%s5058 + $0x3c] sm:$0xf]
      %v5091 = vunpack.c.l.b16 %v5059
      %v5092 = vunpack.c.l.b16 %v5060
      %v5093 = vunpack.c.l.b16 %v5061
      %v5094 = vunpack.c.l.b16 %v5062
      %v5095 = vunpack.c.l.b16 %v5063
      %v5096 = vunpack.c.l.b16 %v5064
      %v5097 = vunpack.c.l.b16 %v5065
      %v5098 = vunpack.c.l.b16 %v5066
      %v5099 = vunpack.c.l.b16 %v5067
      %v5100 = vunpack.c.l.b16 %v5068
      %v5101 = vunpack.c.l.b16 %v5069
      %v5102 = vunpack.c.l.b16 %v5070
      %v5103 = vunpack.c.l.b16 %v5071
      %v5104 = vunpack.c.l.b16 %v5072
      %v5105 = vunpack.c.l.b16 %v5073
      %v5106 = vunpack.c.l.b16 %v5074
      %v5107 = vpack.c.b16 %v5092, %v5091
      %v5108 = vpack.c.b16 %v5094, %v5093
      %v5109 = vpack.c.b16 %v5096, %v5095
      %v5110 = vpack.c.b16 %v5098, %v5097
      %v5111 = vpack.c.b16 %v5100, %v5099
      %v5112 = vpack.c.b16 %v5102, %v5101
      %v5113 = vpack.c.b16 %v5104, %v5103
      %v5114 = vpack.c.b16 %v5106, %v5105
      %5123 = vmatpush.bf16.msra.mxu0 %v5114
      %5124 = vmatpush.bf16.msra.mxu0 %v5113
      %5125 = vmatpush.bf16.msra.mxu0 %v5112
      %5126 = vmatpush.bf16.msra.mxu0 %v5111
      %5127 = vmatpush.bf16.msra.mxu0 %v5110
      %5128 = vmatpush.bf16.msra.mxu0 %v5109
      %5129 = vmatpush.bf16.msra.mxu0 %v5108
      %5130 = vmatpush.bf16.msra.mxu0 %v5107
      %5131 = vmatmul.bf16.gmra.mxu0 %v5026
      %v5132 = vpop.f32.mrf.mxu0
      %v5133 = vadd.f32 0.0, %v5132
      %v5134 = vpop.f32.mrf.mxu0
      %v5135 = vadd.f32 0.0, %v5134
      %5136 = vmatmul.bf16.gmra.mxu0 %v5027
      %v5137 = vpop.f32.mrf.mxu0
      %v5138 = vadd.f32 0.0, %v5137
      %v5139 = vpop.f32.mrf.mxu0
      %v5140 = vadd.f32 0.0, %v5139
      %5141 = vmatmul.bf16.gmra.mxu0 %v5028
      %v5142 = vpop.f32.mrf.mxu0
      %v5143 = vadd.f32 0.0, %v5142
      %v5144 = vpop.f32.mrf.mxu0
      %v5145 = vadd.f32 0.0, %v5144
      %5146 = vmatmul.bf16.gmra.mxu0 %v5029
      %v5147 = vpop.f32.mrf.mxu0
      %v5148 = vadd.f32 0.0, %v5147
      %v5149 = vpop.f32.mrf.mxu0
      %v5150 = vadd.f32 0.0, %v5149
      %5151 = vmatmul.bf16.gmra.mxu0 %v5030
      %v5152 = vpop.f32.mrf.mxu0
      %v5153 = vadd.f32 0.0, %v5152
      %v5154 = vpop.f32.mrf.mxu0
      %v5155 = vadd.f32 0.0, %v5154
      %5156 = vmatmul.bf16.gmra.mxu0 %v5031
      %v5157 = vpop.f32.mrf.mxu0
      %v5158 = vadd.f32 0.0, %v5157
      %v5159 = vpop.f32.mrf.mxu0
      %v5160 = vadd.f32 0.0, %v5159
      %5161 = vmatmul.bf16.gmra.mxu0 %v5032
      %v5162 = vpop.f32.mrf.mxu0
      %v5163 = vadd.f32 0.0, %v5162
      %v5164 = vpop.f32.mrf.mxu0
      %v5165 = vadd.f32 0.0, %v5164
      %5166 = vmatmul.bf16.gmra.mxu0 %v5033
      %v5167 = vpop.f32.mrf.mxu0
      %v5168 = vadd.f32 0.0, %v5167
      %v5169 = vpop.f32.mrf.mxu0
      %v5170 = vadd.f32 0.0, %v5169
      %5171 = vmatmul.bf16.gmra.mxu0 %v5034
      %v5172 = vpop.f32.mrf.mxu0
      %v5173 = vadd.f32 0.0, %v5172
      %v5174 = vpop.f32.mrf.mxu0
      %v5175 = vadd.f32 0.0, %v5174
      %5176 = vmatmul.bf16.gmra.mxu0 %v5035
      %v5177 = vpop.f32.mrf.mxu0
      %v5178 = vadd.f32 0.0, %v5177
      %v5179 = vpop.f32.mrf.mxu0
      %v5180 = vadd.f32 0.0, %v5179
      %5181 = vmatmul.bf16.gmra.mxu0 %v5036
      %v5182 = vpop.f32.mrf.mxu0
      %v5183 = vadd.f32 0.0, %v5182
      %v5184 = vpop.f32.mrf.mxu0
      %v5185 = vadd.f32 0.0, %v5184
      %5186 = vmatmul.bf16.gmra.mxu0 %v5037
      %v5187 = vpop.f32.mrf.mxu0
      %v5188 = vadd.f32 0.0, %v5187
      %v5189 = vpop.f32.mrf.mxu0
      %v5190 = vadd.f32 0.0, %v5189
      %5191 = vmatmul.bf16.gmra.mxu0 %v5038
      %v5192 = vpop.f32.mrf.mxu0
      %v5193 = vadd.f32 0.0, %v5192
      %v5194 = vpop.f32.mrf.mxu0
      %v5195 = vadd.f32 0.0, %v5194
      %5196 = vmatmul.bf16.gmra.mxu0 %v5039
      %v5197 = vpop.f32.mrf.mxu0
      %v5198 = vadd.f32 0.0, %v5197
      %v5199 = vpop.f32.mrf.mxu0
      %v5200 = vadd.f32 0.0, %v5199
      %5201 = vmatmul.bf16.gmra.mxu0 %v5040
      %v5202 = vpop.f32.mrf.mxu0
      %v5203 = vadd.f32 0.0, %v5202
      %v5204 = vpop.f32.mrf.mxu0
      %v5205 = vadd.f32 0.0, %v5204
      %5206 = vmatmul.bf16.gmra.mxu0 %v5041
      %v5207 = vpop.f32.mrf.mxu0
      %v5208 = vadd.f32 0.0, %v5207
      %v5209 = vpop.f32.mrf.mxu0
      %v5210 = vadd.f32 0.0, %v5209
      %5211 = vmatmul.bf16.gmra.mxu0 %v5042
      %v5212 = vpop.f32.mrf.mxu0
      %v5213 = vadd.f32 0.0, %v5212
      %v5214 = vpop.f32.mrf.mxu0
      %v5215 = vadd.f32 0.0, %v5214
      %5216 = vmatmul.bf16.gmra.mxu0 %v5043
      %v5217 = vpop.f32.mrf.mxu0
      %v5218 = vadd.f32 0.0, %v5217
      %v5219 = vpop.f32.mrf.mxu0
      %v5220 = vadd.f32 0.0, %v5219
      %5221 = vmatmul.bf16.gmra.mxu0 %v5044
      %v5222 = vpop.f32.mrf.mxu0
      %v5223 = vadd.f32 0.0, %v5222
      %v5224 = vpop.f32.mrf.mxu0
      %v5225 = vadd.f32 0.0, %v5224
      %5226 = vmatmul.bf16.gmra.mxu0 %v5045
      %v5227 = vpop.f32.mrf.mxu0
      %v5228 = vadd.f32 0.0, %v5227
      %v5229 = vpop.f32.mrf.mxu0
      %v5230 = vadd.f32 0.0, %v5229
      %5231 = vmatmul.bf16.gmra.mxu0 %v5046
      %v5232 = vpop.f32.mrf.mxu0
      %v5233 = vadd.f32 0.0, %v5232
      %v5234 = vpop.f32.mrf.mxu0
      %v5235 = vadd.f32 0.0, %v5234
      %5236 = vmatmul.bf16.gmra.mxu0 %v5047
      %v5237 = vpop.f32.mrf.mxu0
      %v5238 = vadd.f32 0.0, %v5237
      %v5239 = vpop.f32.mrf.mxu0
      %v5240 = vadd.f32 0.0, %v5239
      %5241 = vmatmul.bf16.gmra.mxu0 %v5048
      %v5242 = vpop.f32.mrf.mxu0
      %v5243 = vadd.f32 0.0, %v5242
      %v5244 = vpop.f32.mrf.mxu0
      %v5245 = vadd.f32 0.0, %v5244
      %5246 = vmatmul.bf16.gmra.mxu0 %v5049
      %v5247 = vpop.f32.mrf.mxu0
      %v5248 = vadd.f32 0.0, %v5247
      %v5249 = vpop.f32.mrf.mxu0
      %v5250 = vadd.f32 0.0, %v5249
      %5251 = vmatmul.bf16.gmra.mxu0 %v5050
      %v5252 = vpop.f32.mrf.mxu0
      %v5253 = vadd.f32 0.0, %v5252
      %v5254 = vpop.f32.mrf.mxu0
      %v5255 = vadd.f32 0.0, %v5254
      %5256 = vmatmul.bf16.gmra.mxu0 %v5051
      %v5257 = vpop.f32.mrf.mxu0
      %v5258 = vadd.f32 0.0, %v5257
      %v5259 = vpop.f32.mrf.mxu0
      %v5260 = vadd.f32 0.0, %v5259
      %5261 = vmatmul.bf16.gmra.mxu0 %v5052
      %v5262 = vpop.f32.mrf.mxu0
      %v5263 = vadd.f32 0.0, %v5262
      %v5264 = vpop.f32.mrf.mxu0
      %v5265 = vadd.f32 0.0, %v5264
      %5266 = vmatmul.bf16.gmra.mxu0 %v5053
      %v5267 = vpop.f32.mrf.mxu0
      %v5268 = vadd.f32 0.0, %v5267
      %v5269 = vpop.f32.mrf.mxu0
      %v5270 = vadd.f32 0.0, %v5269
      %5271 = vmatmul.bf16.gmra.mxu0 %v5054
      %v5272 = vpop.f32.mrf.mxu0
      %v5273 = vadd.f32 0.0, %v5272
      %v5274 = vpop.f32.mrf.mxu0
      %v5275 = vadd.f32 0.0, %v5274
      %5276 = vmatmul.bf16.gmra.mxu0 %v5055
      %v5277 = vpop.f32.mrf.mxu0
      %v5278 = vadd.f32 0.0, %v5277
      %v5279 = vpop.f32.mrf.mxu0
      %v5280 = vadd.f32 0.0, %v5279
      %5281 = vmatmul.bf16.gmra.mxu0 %v5056
      %v5282 = vpop.f32.mrf.mxu0
      %v5283 = vadd.f32 0.0, %v5282
      %v5284 = vpop.f32.mrf.mxu0
      %v5285 = vadd.f32 0.0, %v5284
      %5286 = vmatmul.bf16.gmra.mxu0 %v5057
      %v5287 = vpop.f32.mrf.mxu0
      %v5288 = vadd.f32 0.0, %v5287
      %v5289 = vpop.f32.mrf.mxu0
      %v5290 = vadd.f32 0.0, %v5289
      %5291 = vdwg.mxu0
      %v5292 = vadd.f32 %v4930, %v5133
      %v5293 = vadd.f32 %v4931, %v5135
      %v5294 = vadd.f32 %v4932, %v5138
      %v5295 = vadd.f32 %v4933, %v5140
      %v5296 = vadd.f32 %v4934, %v5143
      %v5297 = vadd.f32 %v4935, %v5145
      %v5298 = vadd.f32 %v4936, %v5148
      %v5299 = vadd.f32 %v4937, %v5150
      %v5300 = vadd.f32 %v4938, %v5153
      %v5301 = vadd.f32 %v4939, %v5155
      %v5302 = vadd.f32 %v4940, %v5158
      %v5303 = vadd.f32 %v4941, %v5160
      %v5304 = vadd.f32 %v4942, %v5163
      %v5305 = vadd.f32 %v4943, %v5165
      %v5306 = vadd.f32 %v4944, %v5168
      %v5307 = vadd.f32 %v4945, %v5170
      %v5308 = vadd.f32 %v4946, %v5173
      %v5309 = vadd.f32 %v4947, %v5175
      %v5310 = vadd.f32 %v4948, %v5178
      %v5311 = vadd.f32 %v4949, %v5180
      %v5312 = vadd.f32 %v4950, %v5183
      %v5313 = vadd.f32 %v4951, %v5185
      %v5314 = vadd.f32 %v4952, %v5188
      %v5315 = vadd.f32 %v4953, %v5190
      %v5316 = vadd.f32 %v4954, %v5193
      %v5317 = vadd.f32 %v4955, %v5195
      %v5318 = vadd.f32 %v4956, %v5198
      %v5319 = vadd.f32 %v4957, %v5200
      %v5320 = vadd.f32 %v4958, %v5203
      %v5321 = vadd.f32 %v4959, %v5205
      %v5322 = vadd.f32 %v4960, %v5208
      %v5323 = vadd.f32 %v4961, %v5210
      %v5324 = vadd.f32 %v4962, %v5213
      %v5325 = vadd.f32 %v4963, %v5215
      %v5326 = vadd.f32 %v4964, %v5218
      %v5327 = vadd.f32 %v4965, %v5220
      %v5328 = vadd.f32 %v4966, %v5223
      %v5329 = vadd.f32 %v4967, %v5225
      %v5330 = vadd.f32 %v4968, %v5228
      %v5331 = vadd.f32 %v4969, %v5230
      %v5332 = vadd.f32 %v4970, %v5233
      %v5333 = vadd.f32 %v4971, %v5235
      %v5334 = vadd.f32 %v4972, %v5238
      %v5335 = vadd.f32 %v4973, %v5240
      %v5336 = vadd.f32 %v4974, %v5243
      %v5337 = vadd.f32 %v4975, %v5245
      %v5338 = vadd.f32 %v4976, %v5248
      %v5339 = vadd.f32 %v4977, %v5250
      %v5340 = vadd.f32 %v4978, %v5253
      %v5341 = vadd.f32 %v4979, %v5255
      %v5342 = vadd.f32 %v4980, %v5258
      %v5343 = vadd.f32 %v4981, %v5260
      %v5344 = vadd.f32 %v4982, %v5263
      %v5345 = vadd.f32 %v4983, %v5265
      %v5346 = vadd.f32 %v4984, %v5268
      %v5347 = vadd.f32 %v4985, %v5270
      %v5348 = vadd.f32 %v4986, %v5273
      %v5349 = vadd.f32 %v4987, %v5275
      %v5350 = vadd.f32 %v4988, %v5278
      %v5351 = vadd.f32 %v4989, %v5280
      %v5352 = vadd.f32 %v4990, %v5283
      %v5353 = vadd.f32 %v4991, %v5285
      %v5354 = vadd.f32 %v4992, %v5288
      %v5355 = vadd.f32 %v4993, %v5290
      %v5356 = vpack.c.bf16 %v2601, %v2599
      %v5357 = vpack.c.bf16 %v2621, %v2619
      %v5358 = vpack.c.bf16 %v2641, %v2639
      %v5359 = vpack.c.bf16 %v2661, %v2659
      %v5360 = vpack.c.bf16 %v2681, %v2679
      %v5361 = vpack.c.bf16 %v2701, %v2699
      %v5362 = vpack.c.bf16 %v2721, %v2719
      %v5363 = vpack.c.bf16 %v2741, %v2739
      %s5364 = scalar_lea.vmem %s4, 384
      %v5365 = vld [vmem:[%s5364] sm:$0xf]
      %v5366 = vld [vmem:[%s5364 + $0x4] sm:$0xf]
      %v5367 = vld [vmem:[%s5364 + $0x8] sm:$0xf]
      %v5368 = vld [vmem:[%s5364 + $0xc] sm:$0xf]
      %v5369 = vld [vmem:[%s5364 + $0x10] sm:$0xf]
      %v5370 = vld [vmem:[%s5364 + $0x14] sm:$0xf]
      %v5371 = vld [vmem:[%s5364 + $0x18] sm:$0xf]
      %v5372 = vld [vmem:[%s5364 + $0x1c] sm:$0xf]
      %v5373 = vld [vmem:[%s5364 + $0x20] sm:$0xf]
      %v5374 = vld [vmem:[%s5364 + $0x24] sm:$0xf]
      %v5375 = vld [vmem:[%s5364 + $0x28] sm:$0xf]
      %v5376 = vld [vmem:[%s5364 + $0x2c] sm:$0xf]
      %v5377 = vld [vmem:[%s5364 + $0x30] sm:$0xf]
      %v5378 = vld [vmem:[%s5364 + $0x34] sm:$0xf]
      %v5379 = vld [vmem:[%s5364 + $0x38] sm:$0xf]
      %v5380 = vld [vmem:[%s5364 + $0x3c] sm:$0xf]
      %v5397 = vunpack.c.l.b16 %v5365
      %v5398 = vunpack.c.l.b16 %v5366
      %v5399 = vunpack.c.l.b16 %v5367
      %v5400 = vunpack.c.l.b16 %v5368
      %v5401 = vunpack.c.l.b16 %v5369
      %v5402 = vunpack.c.l.b16 %v5370
      %v5403 = vunpack.c.l.b16 %v5371
      %v5404 = vunpack.c.l.b16 %v5372
      %v5405 = vunpack.c.l.b16 %v5373
      %v5406 = vunpack.c.l.b16 %v5374
      %v5407 = vunpack.c.l.b16 %v5375
      %v5408 = vunpack.c.l.b16 %v5376
      %v5409 = vunpack.c.l.b16 %v5377
      %v5410 = vunpack.c.l.b16 %v5378
      %v5411 = vunpack.c.l.b16 %v5379
      %v5412 = vunpack.c.l.b16 %v5380
      %v5413 = vpack.c.b16 %v5398, %v5397
      %v5414 = vpack.c.b16 %v5400, %v5399
      %v5415 = vpack.c.b16 %v5402, %v5401
      %v5416 = vpack.c.b16 %v5404, %v5403
      %v5417 = vpack.c.b16 %v5406, %v5405
      %v5418 = vpack.c.b16 %v5408, %v5407
      %v5419 = vpack.c.b16 %v5410, %v5409
      %v5420 = vpack.c.b16 %v5412, %v5411
      %5429 = vmatpush.bf16.msra.mxu0 %v5420
      %5430 = vmatpush.bf16.msra.mxu0 %v5419
      %5431 = vmatpush.bf16.msra.mxu0 %v5418
      %5432 = vmatpush.bf16.msra.mxu0 %v5417
      %5433 = vmatpush.bf16.msra.mxu0 %v5416
      %5434 = vmatpush.bf16.msra.mxu0 %v5415
      %5435 = vmatpush.bf16.msra.mxu0 %v5414
      %5436 = vmatpush.bf16.msra.mxu0 %v5413
      %5437 = vmatmul.bf16.gmra.mxu0 %v2784
      %v5438 = vpop.f32.mrf.mxu0
      %v5439 = vadd.f32 0.0, %v5438
      %v5440 = vpop.f32.mrf.mxu0
      %v5441 = vadd.f32 0.0, %v5440
      %5442 = vmatmul.bf16.gmra.mxu0 %v2785
      %v5443 = vpop.f32.mrf.mxu0
      %v5444 = vadd.f32 0.0, %v5443
      %v5445 = vpop.f32.mrf.mxu0
      %v5446 = vadd.f32 0.0, %v5445
      %5447 = vmatmul.bf16.gmra.mxu0 %v2786
      %v5448 = vpop.f32.mrf.mxu0
      %v5449 = vadd.f32 0.0, %v5448
      %v5450 = vpop.f32.mrf.mxu0
      %v5451 = vadd.f32 0.0, %v5450
      %5452 = vmatmul.bf16.gmra.mxu0 %v5356
      %v5453 = vpop.f32.mrf.mxu0
      %v5454 = vadd.f32 0.0, %v5453
      %v5455 = vpop.f32.mrf.mxu0
      %v5456 = vadd.f32 0.0, %v5455
      %5457 = vmatmul.bf16.gmra.mxu0 %v2788
      %v5458 = vpop.f32.mrf.mxu0
      %v5459 = vadd.f32 0.0, %v5458
      %v5460 = vpop.f32.mrf.mxu0
      %v5461 = vadd.f32 0.0, %v5460
      %5462 = vmatmul.bf16.gmra.mxu0 %v2789
      %v5463 = vpop.f32.mrf.mxu0
      %v5464 = vadd.f32 0.0, %v5463
      %v5465 = vpop.f32.mrf.mxu0
      %v5466 = vadd.f32 0.0, %v5465
      %5467 = vmatmul.bf16.gmra.mxu0 %v2790
      %v5468 = vpop.f32.mrf.mxu0
      %v5469 = vadd.f32 0.0, %v5468
      %v5470 = vpop.f32.mrf.mxu0
      %v5471 = vadd.f32 0.0, %v5470
      %5472 = vmatmul.bf16.gmra.mxu0 %v5357
      %v5473 = vpop.f32.mrf.mxu0
      %v5474 = vadd.f32 0.0, %v5473
      %v5475 = vpop.f32.mrf.mxu0
      %v5476 = vadd.f32 0.0, %v5475
      %5477 = vmatmul.bf16.gmra.mxu0 %v2792
      %v5478 = vpop.f32.mrf.mxu0
      %v5479 = vadd.f32 0.0, %v5478
      %v5480 = vpop.f32.mrf.mxu0
      %v5481 = vadd.f32 0.0, %v5480
      %5482 = vmatmul.bf16.gmra.mxu0 %v2793
      %v5483 = vpop.f32.mrf.mxu0
      %v5484 = vadd.f32 0.0, %v5483
      %v5485 = vpop.f32.mrf.mxu0
      %v5486 = vadd.f32 0.0, %v5485
      %5487 = vmatmul.bf16.gmra.mxu0 %v2794
      %v5488 = vpop.f32.mrf.mxu0
      %v5489 = vadd.f32 0.0, %v5488
      %v5490 = vpop.f32.mrf.mxu0
      %v5491 = vadd.f32 0.0, %v5490
      %5492 = vmatmul.bf16.gmra.mxu0 %v5358
      %v5493 = vpop.f32.mrf.mxu0
      %v5494 = vadd.f32 0.0, %v5493
      %v5495 = vpop.f32.mrf.mxu0
      %v5496 = vadd.f32 0.0, %v5495
      %5497 = vmatmul.bf16.gmra.mxu0 %v2796
      %v5498 = vpop.f32.mrf.mxu0
      %v5499 = vadd.f32 0.0, %v5498
      %v5500 = vpop.f32.mrf.mxu0
      %v5501 = vadd.f32 0.0, %v5500
      %5502 = vmatmul.bf16.gmra.mxu0 %v2797
      %v5503 = vpop.f32.mrf.mxu0
      %v5504 = vadd.f32 0.0, %v5503
      %v5505 = vpop.f32.mrf.mxu0
      %v5506 = vadd.f32 0.0, %v5505
      %5507 = vmatmul.bf16.gmra.mxu0 %v2798
      %v5508 = vpop.f32.mrf.mxu0
      %v5509 = vadd.f32 0.0, %v5508
      %v5510 = vpop.f32.mrf.mxu0
      %v5511 = vadd.f32 0.0, %v5510
      %5512 = vmatmul.bf16.gmra.mxu0 %v5359
      %v5513 = vpop.f32.mrf.mxu0
      %v5514 = vadd.f32 0.0, %v5513
      %v5515 = vpop.f32.mrf.mxu0
      %v5516 = vadd.f32 0.0, %v5515
      %5517 = vmatmul.bf16.gmra.mxu0 %v2800
      %v5518 = vpop.f32.mrf.mxu0
      %v5519 = vadd.f32 0.0, %v5518
      %v5520 = vpop.f32.mrf.mxu0
      %v5521 = vadd.f32 0.0, %v5520
      %5522 = vmatmul.bf16.gmra.mxu0 %v2801
      %v5523 = vpop.f32.mrf.mxu0
      %v5524 = vadd.f32 0.0, %v5523
      %v5525 = vpop.f32.mrf.mxu0
      %v5526 = vadd.f32 0.0, %v5525
      %5527 = vmatmul.bf16.gmra.mxu0 %v2802
      %v5528 = vpop.f32.mrf.mxu0
      %v5529 = vadd.f32 0.0, %v5528
      %v5530 = vpop.f32.mrf.mxu0
      %v5531 = vadd.f32 0.0, %v5530
      %5532 = vmatmul.bf16.gmra.mxu0 %v5360
      %v5533 = vpop.f32.mrf.mxu0
      %v5534 = vadd.f32 0.0, %v5533
      %v5535 = vpop.f32.mrf.mxu0
      %v5536 = vadd.f32 0.0, %v5535
      %5537 = vmatmul.bf16.gmra.mxu0 %v2804
      %v5538 = vpop.f32.mrf.mxu0
      %v5539 = vadd.f32 0.0, %v5538
      %v5540 = vpop.f32.mrf.mxu0
      %v5541 = vadd.f32 0.0, %v5540
      %5542 = vmatmul.bf16.gmra.mxu0 %v2805
      %v5543 = vpop.f32.mrf.mxu0
      %v5544 = vadd.f32 0.0, %v5543
      %v5545 = vpop.f32.mrf.mxu0
      %v5546 = vadd.f32 0.0, %v5545
      %5547 = vmatmul.bf16.gmra.mxu0 %v2806
      %v5548 = vpop.f32.mrf.mxu0
      %v5549 = vadd.f32 0.0, %v5548
      %v5550 = vpop.f32.mrf.mxu0
      %v5551 = vadd.f32 0.0, %v5550
      %5552 = vmatmul.bf16.gmra.mxu0 %v5361
      %v5553 = vpop.f32.mrf.mxu0
      %v5554 = vadd.f32 0.0, %v5553
      %v5555 = vpop.f32.mrf.mxu0
      %v5556 = vadd.f32 0.0, %v5555
      %5557 = vmatmul.bf16.gmra.mxu0 %v2808
      %v5558 = vpop.f32.mrf.mxu0
      %v5559 = vadd.f32 0.0, %v5558
      %v5560 = vpop.f32.mrf.mxu0
      %v5561 = vadd.f32 0.0, %v5560
      %5562 = vmatmul.bf16.gmra.mxu0 %v2809
      %v5563 = vpop.f32.mrf.mxu0
      %v5564 = vadd.f32 0.0, %v5563
      %v5565 = vpop.f32.mrf.mxu0
      %v5566 = vadd.f32 0.0, %v5565
      %5567 = vmatmul.bf16.gmra.mxu0 %v2810
      %v5568 = vpop.f32.mrf.mxu0
      %v5569 = vadd.f32 0.0, %v5568
      %v5570 = vpop.f32.mrf.mxu0
      %v5571 = vadd.f32 0.0, %v5570
      %5572 = vmatmul.bf16.gmra.mxu0 %v5362
      %v5573 = vpop.f32.mrf.mxu0
      %v5574 = vadd.f32 0.0, %v5573
      %v5575 = vpop.f32.mrf.mxu0
      %v5576 = vadd.f32 0.0, %v5575
      %5577 = vmatmul.bf16.gmra.mxu0 %v2812
      %v5578 = vpop.f32.mrf.mxu0
      %v5579 = vadd.f32 0.0, %v5578
      %v5580 = vpop.f32.mrf.mxu0
      %v5581 = vadd.f32 0.0, %v5580
      %5582 = vmatmul.bf16.gmra.mxu0 %v2813
      %v5583 = vpop.f32.mrf.mxu0
      %v5584 = vadd.f32 0.0, %v5583
      %v5585 = vpop.f32.mrf.mxu0
      %v5586 = vadd.f32 0.0, %v5585
      %5587 = vmatmul.bf16.gmra.mxu0 %v2814
      %v5588 = vpop.f32.mrf.mxu0
      %v5589 = vadd.f32 0.0, %v5588
      %v5590 = vpop.f32.mrf.mxu0
      %v5591 = vadd.f32 0.0, %v5590
      %5592 = vmatmul.bf16.gmra.mxu0 %v5363
      %v5593 = vpop.f32.mrf.mxu0
      %v5594 = vadd.f32 0.0, %v5593
      %v5595 = vpop.f32.mrf.mxu0
      %v5596 = vadd.f32 0.0, %v5595
      %5597 = vdwg.mxu0
      %v5598 = vadd.f32 %v5292, %v5439
      %v5599 = vadd.f32 %v5293, %v5441
      %v5600 = vadd.f32 %v5294, %v5444
      %v5601 = vadd.f32 %v5295, %v5446
      %v5602 = vadd.f32 %v5296, %v5449
      %v5603 = vadd.f32 %v5297, %v5451
      %v5604 = vadd.f32 %v5298, %v5454
      %v5605 = vadd.f32 %v5299, %v5456
      %v5606 = vadd.f32 %v5300, %v5459
      %v5607 = vadd.f32 %v5301, %v5461
      %v5608 = vadd.f32 %v5302, %v5464
      %v5609 = vadd.f32 %v5303, %v5466
      %v5610 = vadd.f32 %v5304, %v5469
      %v5611 = vadd.f32 %v5305, %v5471
      %v5612 = vadd.f32 %v5306, %v5474
      %v5613 = vadd.f32 %v5307, %v5476
      %v5614 = vadd.f32 %v5308, %v5479
      %v5615 = vadd.f32 %v5309, %v5481
      %v5616 = vadd.f32 %v5310, %v5484
      %v5617 = vadd.f32 %v5311, %v5486
      %v5618 = vadd.f32 %v5312, %v5489
      %v5619 = vadd.f32 %v5313, %v5491
      %v5620 = vadd.f32 %v5314, %v5494
      %v5621 = vadd.f32 %v5315, %v5496
      %v5622 = vadd.f32 %v5316, %v5499
      %v5623 = vadd.f32 %v5317, %v5501
      %v5624 = vadd.f32 %v5318, %v5504
      %v5625 = vadd.f32 %v5319, %v5506
      %v5626 = vadd.f32 %v5320, %v5509
      %v5627 = vadd.f32 %v5321, %v5511
      %v5628 = vadd.f32 %v5322, %v5514
      %v5629 = vadd.f32 %v5323, %v5516
      %v5630 = vadd.f32 %v5324, %v5519
      %v5631 = vadd.f32 %v5325, %v5521
      %v5632 = vadd.f32 %v5326, %v5524
      %v5633 = vadd.f32 %v5327, %v5526
      %v5634 = vadd.f32 %v5328, %v5529
      %v5635 = vadd.f32 %v5329, %v5531
      %v5636 = vadd.f32 %v5330, %v5534
      %v5637 = vadd.f32 %v5331, %v5536
      %v5638 = vadd.f32 %v5332, %v5539
      %v5639 = vadd.f32 %v5333, %v5541
      %v5640 = vadd.f32 %v5334, %v5544
      %v5641 = vadd.f32 %v5335, %v5546
      %v5642 = vadd.f32 %v5336, %v5549
      %v5643 = vadd.f32 %v5337, %v5551
      %v5644 = vadd.f32 %v5338, %v5554
      %v5645 = vadd.f32 %v5339, %v5556
      %v5646 = vadd.f32 %v5340, %v5559
      %v5647 = vadd.f32 %v5341, %v5561
      %v5648 = vadd.f32 %v5342, %v5564
      %v5649 = vadd.f32 %v5343, %v5566
      %v5650 = vadd.f32 %v5344, %v5569
      %v5651 = vadd.f32 %v5345, %v5571
      %v5652 = vadd.f32 %v5346, %v5574
      %v5653 = vadd.f32 %v5347, %v5576
      %v5654 = vadd.f32 %v5348, %v5579
      %v5655 = vadd.f32 %v5349, %v5581
      %v5656 = vadd.f32 %v5350, %v5584
      %v5657 = vadd.f32 %v5351, %v5586
      %v5658 = vadd.f32 %v5352, %v5589
      %v5659 = vadd.f32 %v5353, %v5591
      %v5660 = vadd.f32 %v5354, %v5594
      %v5661 = vadd.f32 %v5355, %v5596
      %v5678 = vrot.slane %v2601, 1
      %v5679 = vrot.slane %v2602, 1
      %v5680 = vsel %vm2959, %v5678, %v5679
      %v5681 = vrot.slane %v2621, 1
      %v5682 = vrot.slane %v2622, 1
      %v5683 = vsel %vm2959, %v5681, %v5682
      %v5684 = vrot.slane %v2641, 1
      %v5685 = vrot.slane %v2642, 1
      %v5686 = vsel %vm2959, %v5684, %v5685
      %v5687 = vrot.slane %v2661, 1
      %v5688 = vrot.slane %v2662, 1
      %v5689 = vsel %vm2959, %v5687, %v5688
      %v5690 = vrot.slane %v2681, 1
      %v5691 = vrot.slane %v2682, 1
      %v5692 = vsel %vm2959, %v5690, %v5691
      %v5693 = vrot.slane %v2701, 1
      %v5694 = vrot.slane %v2702, 1
      %v5695 = vsel %vm2959, %v5693, %v5694
      %v5696 = vrot.slane %v2721, 1
      %v5697 = vrot.slane %v2722, 1
      %v5698 = vsel %vm2959, %v5696, %v5697
      %v5699 = vrot.slane %v2741, 1
      %v5700 = vrot.slane %v2742, 1
      %v5701 = vsel %vm2959, %v5699, %v5700
      %v5710 = vpack.c.bf16 %v5680, %v4634
      %v5711 = vpack.c.bf16 %v5683, %v4637
      %v5712 = vpack.c.bf16 %v5686, %v4640
      %v5713 = vpack.c.bf16 %v5689, %v4643
      %v5714 = vpack.c.bf16 %v5692, %v4646
      %v5715 = vpack.c.bf16 %v5695, %v4649
      %v5716 = vpack.c.bf16 %v5698, %v4652
      %v5717 = vpack.c.bf16 %v5701, %v4655
      %s5718 = scalar_lea.vmem %s4, 448
      %v5719 = vld [vmem:[%s5718] sm:$0xf]
      %v5720 = vld [vmem:[%s5718 + $0x4] sm:$0xf]
      %v5721 = vld [vmem:[%s5718 + $0x8] sm:$0xf]
      %v5722 = vld [vmem:[%s5718 + $0xc] sm:$0xf]
      %v5723 = vld [vmem:[%s5718 + $0x10] sm:$0xf]
      %v5724 = vld [vmem:[%s5718 + $0x14] sm:$0xf]
      %v5725 = vld [vmem:[%s5718 + $0x18] sm:$0xf]
      %v5726 = vld [vmem:[%s5718 + $0x1c] sm:$0xf]
      %v5727 = vld [vmem:[%s5718 + $0x20] sm:$0xf]
      %v5728 = vld [vmem:[%s5718 + $0x24] sm:$0xf]
      %v5729 = vld [vmem:[%s5718 + $0x28] sm:$0xf]
      %v5730 = vld [vmem:[%s5718 + $0x2c] sm:$0xf]
      %v5731 = vld [vmem:[%s5718 + $0x30] sm:$0xf]
      %v5732 = vld [vmem:[%s5718 + $0x34] sm:$0xf]
      %v5733 = vld [vmem:[%s5718 + $0x38] sm:$0xf]
      %v5734 = vld [vmem:[%s5718 + $0x3c] sm:$0xf]
      %v5751 = vunpack.c.l.b16 %v5719
      %v5752 = vunpack.c.l.b16 %v5720
      %v5753 = vunpack.c.l.b16 %v5721
      %v5754 = vunpack.c.l.b16 %v5722
      %v5755 = vunpack.c.l.b16 %v5723
      %v5756 = vunpack.c.l.b16 %v5724
      %v5757 = vunpack.c.l.b16 %v5725
      %v5758 = vunpack.c.l.b16 %v5726
      %v5759 = vunpack.c.l.b16 %v5727
      %v5760 = vunpack.c.l.b16 %v5728
      %v5761 = vunpack.c.l.b16 %v5729
      %v5762 = vunpack.c.l.b16 %v5730
      %v5763 = vunpack.c.l.b16 %v5731
      %v5764 = vunpack.c.l.b16 %v5732
      %v5765 = vunpack.c.l.b16 %v5733
      %v5766 = vunpack.c.l.b16 %v5734
      %v5767 = vpack.c.b16 %v5752, %v5751
      %v5768 = vpack.c.b16 %v5754, %v5753
      %v5769 = vpack.c.b16 %v5756, %v5755
      %v5770 = vpack.c.b16 %v5758, %v5757
      %v5771 = vpack.c.b16 %v5760, %v5759
      %v5772 = vpack.c.b16 %v5762, %v5761
      %v5773 = vpack.c.b16 %v5764, %v5763
      %v5774 = vpack.c.b16 %v5766, %v5765
      %5783 = vmatpush.bf16.msra.mxu0 %v5774
      %5784 = vmatpush.bf16.msra.mxu0 %v5773
      %5785 = vmatpush.bf16.msra.mxu0 %v5772
      %5786 = vmatpush.bf16.msra.mxu0 %v5771
      %5787 = vmatpush.bf16.msra.mxu0 %v5770
      %5788 = vmatpush.bf16.msra.mxu0 %v5769
      %5789 = vmatpush.bf16.msra.mxu0 %v5768
      %5790 = vmatpush.bf16.msra.mxu0 %v5767
      %5791 = vmatmul.bf16.gmra.mxu0 %v3217
      %v5792 = vpop.f32.mrf.mxu0
      %v5793 = vadd.f32 0.0, %v5792
      %v5794 = vpop.f32.mrf.mxu0
      %v5795 = vadd.f32 0.0, %v5794
      %5796 = vmatmul.bf16.gmra.mxu0 %v3218
      %v5797 = vpop.f32.mrf.mxu0
      %v5798 = vadd.f32 0.0, %v5797
      %v5799 = vpop.f32.mrf.mxu0
      %v5800 = vadd.f32 0.0, %v5799
      %5801 = vmatmul.bf16.gmra.mxu0 %v3219
      %v5802 = vpop.f32.mrf.mxu0
      %v5803 = vadd.f32 0.0, %v5802
      %v5804 = vpop.f32.mrf.mxu0
      %v5805 = vadd.f32 0.0, %v5804
      %5806 = vmatmul.bf16.gmra.mxu0 %v5710
      %v5807 = vpop.f32.mrf.mxu0
      %v5808 = vadd.f32 0.0, %v5807
      %v5809 = vpop.f32.mrf.mxu0
      %v5810 = vadd.f32 0.0, %v5809
      %5811 = vmatmul.bf16.gmra.mxu0 %v3221
      %v5812 = vpop.f32.mrf.mxu0
      %v5813 = vadd.f32 0.0, %v5812
      %v5814 = vpop.f32.mrf.mxu0
      %v5815 = vadd.f32 0.0, %v5814
      %5816 = vmatmul.bf16.gmra.mxu0 %v3222
      %v5817 = vpop.f32.mrf.mxu0
      %v5818 = vadd.f32 0.0, %v5817
      %v5819 = vpop.f32.mrf.mxu0
      %v5820 = vadd.f32 0.0, %v5819
      %5821 = vmatmul.bf16.gmra.mxu0 %v3223
      %v5822 = vpop.f32.mrf.mxu0
      %v5823 = vadd.f32 0.0, %v5822
      %v5824 = vpop.f32.mrf.mxu0
      %v5825 = vadd.f32 0.0, %v5824
      %5826 = vmatmul.bf16.gmra.mxu0 %v5711
      %v5827 = vpop.f32.mrf.mxu0
      %v5828 = vadd.f32 0.0, %v5827
      %v5829 = vpop.f32.mrf.mxu0
      %v5830 = vadd.f32 0.0, %v5829
      %5831 = vmatmul.bf16.gmra.mxu0 %v3225
      %v5832 = vpop.f32.mrf.mxu0
      %v5833 = vadd.f32 0.0, %v5832
      %v5834 = vpop.f32.mrf.mxu0
      %v5835 = vadd.f32 0.0, %v5834
      %5836 = vmatmul.bf16.gmra.mxu0 %v3226
      %v5837 = vpop.f32.mrf.mxu0
      %v5838 = vadd.f32 0.0, %v5837
      %v5839 = vpop.f32.mrf.mxu0
      %v5840 = vadd.f32 0.0, %v5839
      %5841 = vmatmul.bf16.gmra.mxu0 %v3227
      %v5842 = vpop.f32.mrf.mxu0
      %v5843 = vadd.f32 0.0, %v5842
      %v5844 = vpop.f32.mrf.mxu0
      %v5845 = vadd.f32 0.0, %v5844
      %5846 = vmatmul.bf16.gmra.mxu0 %v5712
      %v5847 = vpop.f32.mrf.mxu0
      %v5848 = vadd.f32 0.0, %v5847
      %v5849 = vpop.f32.mrf.mxu0
      %v5850 = vadd.f32 0.0, %v5849
      %5851 = vmatmul.bf16.gmra.mxu0 %v3229
      %v5852 = vpop.f32.mrf.mxu0
      %v5853 = vadd.f32 0.0, %v5852
      %v5854 = vpop.f32.mrf.mxu0
      %v5855 = vadd.f32 0.0, %v5854
      %5856 = vmatmul.bf16.gmra.mxu0 %v3230
      %v5857 = vpop.f32.mrf.mxu0
      %v5858 = vadd.f32 0.0, %v5857
      %v5859 = vpop.f32.mrf.mxu0
      %v5860 = vadd.f32 0.0, %v5859
      %5861 = vmatmul.bf16.gmra.mxu0 %v3231
      %v5862 = vpop.f32.mrf.mxu0
      %v5863 = vadd.f32 0.0, %v5862
      %v5864 = vpop.f32.mrf.mxu0
      %v5865 = vadd.f32 0.0, %v5864
      %5866 = vmatmul.bf16.gmra.mxu0 %v5713
      %v5867 = vpop.f32.mrf.mxu0
      %v5868 = vadd.f32 0.0, %v5867
      %v5869 = vpop.f32.mrf.mxu0
      %v5870 = vadd.f32 0.0, %v5869
      %5871 = vmatmul.bf16.gmra.mxu0 %v3233
      %v5872 = vpop.f32.mrf.mxu0
      %v5873 = vadd.f32 0.0, %v5872
      %v5874 = vpop.f32.mrf.mxu0
      %v5875 = vadd.f32 0.0, %v5874
      %5876 = vmatmul.bf16.gmra.mxu0 %v3234
      %v5877 = vpop.f32.mrf.mxu0
      %v5878 = vadd.f32 0.0, %v5877
      %v5879 = vpop.f32.mrf.mxu0
      %v5880 = vadd.f32 0.0, %v5879
      %5881 = vmatmul.bf16.gmra.mxu0 %v3235
      %v5882 = vpop.f32.mrf.mxu0
      %v5883 = vadd.f32 0.0, %v5882
      %v5884 = vpop.f32.mrf.mxu0
      %v5885 = vadd.f32 0.0, %v5884
      %5886 = vmatmul.bf16.gmra.mxu0 %v5714
      %v5887 = vpop.f32.mrf.mxu0
      %v5888 = vadd.f32 0.0, %v5887
      %v5889 = vpop.f32.mrf.mxu0
      %v5890 = vadd.f32 0.0, %v5889
      %5891 = vmatmul.bf16.gmra.mxu0 %v3237
      %v5892 = vpop.f32.mrf.mxu0
      %v5893 = vadd.f32 0.0, %v5892
      %v5894 = vpop.f32.mrf.mxu0
      %v5895 = vadd.f32 0.0, %v5894
      %5896 = vmatmul.bf16.gmra.mxu0 %v3238
      %v5897 = vpop.f32.mrf.mxu0
      %v5898 = vadd.f32 0.0, %v5897
      %v5899 = vpop.f32.mrf.mxu0
      %v5900 = vadd.f32 0.0, %v5899
      %5901 = vmatmul.bf16.gmra.mxu0 %v3239
      %v5902 = vpop.f32.mrf.mxu0
      %v5903 = vadd.f32 0.0, %v5902
      %v5904 = vpop.f32.mrf.mxu0
      %v5905 = vadd.f32 0.0, %v5904
      %5906 = vmatmul.bf16.gmra.mxu0 %v5715
      %v5907 = vpop.f32.mrf.mxu0
      %v5908 = vadd.f32 0.0, %v5907
      %v5909 = vpop.f32.mrf.mxu0
      %v5910 = vadd.f32 0.0, %v5909
      %5911 = vmatmul.bf16.gmra.mxu0 %v3241
      %v5912 = vpop.f32.mrf.mxu0
      %v5913 = vadd.f32 0.0, %v5912
      %v5914 = vpop.f32.mrf.mxu0
      %v5915 = vadd.f32 0.0, %v5914
      %5916 = vmatmul.bf16.gmra.mxu0 %v3242
      %v5917 = vpop.f32.mrf.mxu0
      %v5918 = vadd.f32 0.0, %v5917
      %v5919 = vpop.f32.mrf.mxu0
      %v5920 = vadd.f32 0.0, %v5919
      %5921 = vmatmul.bf16.gmra.mxu0 %v3243
      %v5922 = vpop.f32.mrf.mxu0
      %v5923 = vadd.f32 0.0, %v5922
      %v5924 = vpop.f32.mrf.mxu0
      %v5925 = vadd.f32 0.0, %v5924
      %5926 = vmatmul.bf16.gmra.mxu0 %v5716
      %v5927 = vpop.f32.mrf.mxu0
      %v5928 = vadd.f32 0.0, %v5927
      %v5929 = vpop.f32.mrf.mxu0
      %v5930 = vadd.f32 0.0, %v5929
      %5931 = vmatmul.bf16.gmra.mxu0 %v3245
      %v5932 = vpop.f32.mrf.mxu0
      %v5933 = vadd.f32 0.0, %v5932
      %v5934 = vpop.f32.mrf.mxu0
      %v5935 = vadd.f32 0.0, %v5934
      %5936 = vmatmul.bf16.gmra.mxu0 %v3246
      %v5937 = vpop.f32.mrf.mxu0
      %v5938 = vadd.f32 0.0, %v5937
      %v5939 = vpop.f32.mrf.mxu0
      %v5940 = vadd.f32 0.0, %v5939
      %5941 = vmatmul.bf16.gmra.mxu0 %v3247
      %v5942 = vpop.f32.mrf.mxu0
      %v5943 = vadd.f32 0.0, %v5942
      %v5944 = vpop.f32.mrf.mxu0
      %v5945 = vadd.f32 0.0, %v5944
      %5946 = vmatmul.bf16.gmra.mxu0 %v5717
      %v5947 = vpop.f32.mrf.mxu0
      %v5948 = vadd.f32 0.0, %v5947
      %v5949 = vpop.f32.mrf.mxu0
      %v5950 = vadd.f32 0.0, %v5949
      %5951 = vdwg.mxu0
      %v5952 = vadd.f32 %v5598, %v5793
      %v5953 = vadd.f32 %v5599, %v5795
      %v5954 = vadd.f32 %v5600, %v5798
      %v5955 = vadd.f32 %v5601, %v5800
      %v5956 = vadd.f32 %v5602, %v5803
      %v5957 = vadd.f32 %v5603, %v5805
      %v5958 = vadd.f32 %v5604, %v5808
      %v5959 = vadd.f32 %v5605, %v5810
      %v5960 = vadd.f32 %v5606, %v5813
      %v5961 = vadd.f32 %v5607, %v5815
      %v5962 = vadd.f32 %v5608, %v5818
      %v5963 = vadd.f32 %v5609, %v5820
      %v5964 = vadd.f32 %v5610, %v5823
      %v5965 = vadd.f32 %v5611, %v5825
      %v5966 = vadd.f32 %v5612, %v5828
      %v5967 = vadd.f32 %v5613, %v5830
      %v5968 = vadd.f32 %v5614, %v5833
      %v5969 = vadd.f32 %v5615, %v5835
      %v5970 = vadd.f32 %v5616, %v5838
      %v5971 = vadd.f32 %v5617, %v5840
      %v5972 = vadd.f32 %v5618, %v5843
      %v5973 = vadd.f32 %v5619, %v5845
      %v5974 = vadd.f32 %v5620, %v5848
      %v5975 = vadd.f32 %v5621, %v5850
      %v5976 = vadd.f32 %v5622, %v5853
      %v5977 = vadd.f32 %v5623, %v5855
      %v5978 = vadd.f32 %v5624, %v5858
      %v5979 = vadd.f32 %v5625, %v5860
      %v5980 = vadd.f32 %v5626, %v5863
      %v5981 = vadd.f32 %v5627, %v5865
      %v5982 = vadd.f32 %v5628, %v5868
      %v5983 = vadd.f32 %v5629, %v5870
      %v5984 = vadd.f32 %v5630, %v5873
      %v5985 = vadd.f32 %v5631, %v5875
      %v5986 = vadd.f32 %v5632, %v5878
      %v5987 = vadd.f32 %v5633, %v5880
      %v5988 = vadd.f32 %v5634, %v5883
      %v5989 = vadd.f32 %v5635, %v5885
      %v5990 = vadd.f32 %v5636, %v5888
      %v5991 = vadd.f32 %v5637, %v5890
      %v5992 = vadd.f32 %v5638, %v5893
      %v5993 = vadd.f32 %v5639, %v5895
      %v5994 = vadd.f32 %v5640, %v5898
      %v5995 = vadd.f32 %v5641, %v5900
      %v5996 = vadd.f32 %v5642, %v5903
      %v5997 = vadd.f32 %v5643, %v5905
      %v5998 = vadd.f32 %v5644, %v5908
      %v5999 = vadd.f32 %v5645, %v5910
      %v6000 = vadd.f32 %v5646, %v5913
      %v6001 = vadd.f32 %v5647, %v5915
      %v6002 = vadd.f32 %v5648, %v5918
      %v6003 = vadd.f32 %v5649, %v5920
      %v6004 = vadd.f32 %v5650, %v5923
      %v6005 = vadd.f32 %v5651, %v5925
      %v6006 = vadd.f32 %v5652, %v5928
      %v6007 = vadd.f32 %v5653, %v5930
      %v6008 = vadd.f32 %v5654, %v5933
      %v6009 = vadd.f32 %v5655, %v5935
      %v6010 = vadd.f32 %v5656, %v5938
      %v6011 = vadd.f32 %v5657, %v5940
      %v6012 = vadd.f32 %v5658, %v5943
      %v6013 = vadd.f32 %v5659, %v5945
      %v6014 = vadd.f32 %v5660, %v5948
      %v6015 = vadd.f32 %v5661, %v5950
      %v6016 = vrot.slane %v2601, 2
      %v6017 = vrot.slane %v2602, 2
      %v6018 = vsel %vm3699, %v6016, %v6017
      %v6019 = vrot.slane %v2621, 2
      %v6020 = vrot.slane %v2622, 2
      %v6021 = vsel %vm3699, %v6019, %v6020
      %v6022 = vrot.slane %v2641, 2
      %v6023 = vrot.slane %v2642, 2
      %v6024 = vsel %vm3699, %v6022, %v6023
      %v6025 = vrot.slane %v2661, 2
      %v6026 = vrot.slane %v2662, 2
      %v6027 = vsel %vm3699, %v6025, %v6026
      %v6028 = vrot.slane %v2681, 2
      %v6029 = vrot.slane %v2682, 2
      %v6030 = vsel %vm3699, %v6028, %v6029
      %v6031 = vrot.slane %v2701, 2
      %v6032 = vrot.slane %v2702, 2
      %v6033 = vsel %vm3699, %v6031, %v6032
      %v6034 = vrot.slane %v2721, 2
      %v6035 = vrot.slane %v2722, 2
      %v6036 = vsel %vm3699, %v6034, %v6035
      %v6037 = vrot.slane %v2741, 2
      %v6038 = vrot.slane %v2742, 2
      %v6039 = vsel %vm3699, %v6037, %v6038
      %v6048 = vpack.c.bf16 %v6018, %v4996
      %v6049 = vpack.c.bf16 %v6021, %v4999
      %v6050 = vpack.c.bf16 %v6024, %v5002
      %v6051 = vpack.c.bf16 %v6027, %v5005
      %v6052 = vpack.c.bf16 %v6030, %v5008
      %v6053 = vpack.c.bf16 %v6033, %v5011
      %v6054 = vpack.c.bf16 %v6036, %v5014
      %v6055 = vpack.c.bf16 %v6039, %v5017
      %s6056 = scalar_lea.vmem %s4, 512
      %v6057 = vld [vmem:[%s6056] sm:$0xf]
      %v6058 = vld [vmem:[%s6056 + $0x4] sm:$0xf]
      %v6059 = vld [vmem:[%s6056 + $0x8] sm:$0xf]
      %v6060 = vld [vmem:[%s6056 + $0xc] sm:$0xf]
      %v6061 = vld [vmem:[%s6056 + $0x10] sm:$0xf]
      %v6062 = vld [vmem:[%s6056 + $0x14] sm:$0xf]
      %v6063 = vld [vmem:[%s6056 + $0x18] sm:$0xf]
      %v6064 = vld [vmem:[%s6056 + $0x1c] sm:$0xf]
      %v6065 = vld [vmem:[%s6056 + $0x20] sm:$0xf]
      %v6066 = vld [vmem:[%s6056 + $0x24] sm:$0xf]
      %v6067 = vld [vmem:[%s6056 + $0x28] sm:$0xf]
      %v6068 = vld [vmem:[%s6056 + $0x2c] sm:$0xf]
      %v6069 = vld [vmem:[%s6056 + $0x30] sm:$0xf]
      %v6070 = vld [vmem:[%s6056 + $0x34] sm:$0xf]
      %v6071 = vld [vmem:[%s6056 + $0x38] sm:$0xf]
      %v6072 = vld [vmem:[%s6056 + $0x3c] sm:$0xf]
      %v6089 = vunpack.c.l.b16 %v6057
      %v6090 = vunpack.c.l.b16 %v6058
      %v6091 = vunpack.c.l.b16 %v6059
      %v6092 = vunpack.c.l.b16 %v6060
      %v6093 = vunpack.c.l.b16 %v6061
      %v6094 = vunpack.c.l.b16 %v6062
      %v6095 = vunpack.c.l.b16 %v6063
      %v6096 = vunpack.c.l.b16 %v6064
      %v6097 = vunpack.c.l.b16 %v6065
      %v6098 = vunpack.c.l.b16 %v6066
      %v6099 = vunpack.c.l.b16 %v6067
      %v6100 = vunpack.c.l.b16 %v6068
      %v6101 = vunpack.c.l.b16 %v6069
      %v6102 = vunpack.c.l.b16 %v6070
      %v6103 = vunpack.c.l.b16 %v6071
      %v6104 = vunpack.c.l.b16 %v6072
      %v6105 = vpack.c.b16 %v6090, %v6089
      %v6106 = vpack.c.b16 %v6092, %v6091
      %v6107 = vpack.c.b16 %v6094, %v6093
      %v6108 = vpack.c.b16 %v6096, %v6095
      %v6109 = vpack.c.b16 %v6098, %v6097
      %v6110 = vpack.c.b16 %v6100, %v6099
      %v6111 = vpack.c.b16 %v6102, %v6101
      %v6112 = vpack.c.b16 %v6104, %v6103
      %6121 = vmatpush.bf16.msra.mxu0 %v6112
      %6122 = vmatpush.bf16.msra.mxu0 %v6111
      %6123 = vmatpush.bf16.msra.mxu0 %v6110
      %6124 = vmatpush.bf16.msra.mxu0 %v6109
      %6125 = vmatpush.bf16.msra.mxu0 %v6108
      %6126 = vmatpush.bf16.msra.mxu0 %v6107
      %6127 = vmatpush.bf16.msra.mxu0 %v6106
      %6128 = vmatpush.bf16.msra.mxu0 %v6105
      %6129 = vmatmul.bf16.gmra.mxu0 %v3957
      %v6130 = vpop.f32.mrf.mxu0
      %v6131 = vadd.f32 0.0, %v6130
      %v6132 = vpop.f32.mrf.mxu0
      %v6133 = vadd.f32 0.0, %v6132
      %6134 = vmatmul.bf16.gmra.mxu0 %v3958
      %v6135 = vpop.f32.mrf.mxu0
      %v6136 = vadd.f32 0.0, %v6135
      %v6137 = vpop.f32.mrf.mxu0
      %v6138 = vadd.f32 0.0, %v6137
      %6139 = vmatmul.bf16.gmra.mxu0 %v3959
      %v6140 = vpop.f32.mrf.mxu0
      %v6141 = vadd.f32 0.0, %v6140
      %v6142 = vpop.f32.mrf.mxu0
      %v6143 = vadd.f32 0.0, %v6142
      %6144 = vmatmul.bf16.gmra.mxu0 %v6048
      %v6145 = vpop.f32.mrf.mxu0
      %v6146 = vadd.f32 0.0, %v6145
      %v6147 = vpop.f32.mrf.mxu0
      %v6148 = vadd.f32 0.0, %v6147
      %6149 = vmatmul.bf16.gmra.mxu0 %v3961
      %v6150 = vpop.f32.mrf.mxu0
      %v6151 = vadd.f32 0.0, %v6150
      %v6152 = vpop.f32.mrf.mxu0
      %v6153 = vadd.f32 0.0, %v6152
      %6154 = vmatmul.bf16.gmra.mxu0 %v3962
      %v6155 = vpop.f32.mrf.mxu0
      %v6156 = vadd.f32 0.0, %v6155
      %v6157 = vpop.f32.mrf.mxu0
      %v6158 = vadd.f32 0.0, %v6157
      %6159 = vmatmul.bf16.gmra.mxu0 %v3963
      %v6160 = vpop.f32.mrf.mxu0
      %v6161 = vadd.f32 0.0, %v6160
      %v6162 = vpop.f32.mrf.mxu0
      %v6163 = vadd.f32 0.0, %v6162
      %6164 = vmatmul.bf16.gmra.mxu0 %v6049
      %v6165 = vpop.f32.mrf.mxu0
      %v6166 = vadd.f32 0.0, %v6165
      %v6167 = vpop.f32.mrf.mxu0
      %v6168 = vadd.f32 0.0, %v6167
      %6169 = vmatmul.bf16.gmra.mxu0 %v3965
      %v6170 = vpop.f32.mrf.mxu0
      %v6171 = vadd.f32 0.0, %v6170
      %v6172 = vpop.f32.mrf.mxu0
      %v6173 = vadd.f32 0.0, %v6172
      %6174 = vmatmul.bf16.gmra.mxu0 %v3966
      %v6175 = vpop.f32.mrf.mxu0
      %v6176 = vadd.f32 0.0, %v6175
      %v6177 = vpop.f32.mrf.mxu0
      %v6178 = vadd.f32 0.0, %v6177
      %6179 = vmatmul.bf16.gmra.mxu0 %v3967
      %v6180 = vpop.f32.mrf.mxu0
      %v6181 = vadd.f32 0.0, %v6180
      %v6182 = vpop.f32.mrf.mxu0
      %v6183 = vadd.f32 0.0, %v6182
      %6184 = vmatmul.bf16.gmra.mxu0 %v6050
      %v6185 = vpop.f32.mrf.mxu0
      %v6186 = vadd.f32 0.0, %v6185
      %v6187 = vpop.f32.mrf.mxu0
      %v6188 = vadd.f32 0.0, %v6187
      %6189 = vmatmul.bf16.gmra.mxu0 %v3969
      %v6190 = vpop.f32.mrf.mxu0
      %v6191 = vadd.f32 0.0, %v6190
      %v6192 = vpop.f32.mrf.mxu0
      %v6193 = vadd.f32 0.0, %v6192
      %6194 = vmatmul.bf16.gmra.mxu0 %v3970
      %v6195 = vpop.f32.mrf.mxu0
      %v6196 = vadd.f32 0.0, %v6195
      %v6197 = vpop.f32.mrf.mxu0
      %v6198 = vadd.f32 0.0, %v6197
      %6199 = vmatmul.bf16.gmra.mxu0 %v3971
      %v6200 = vpop.f32.mrf.mxu0
      %v6201 = vadd.f32 0.0, %v6200
      %v6202 = vpop.f32.mrf.mxu0
      %v6203 = vadd.f32 0.0, %v6202
      %6204 = vmatmul.bf16.gmra.mxu0 %v6051
      %v6205 = vpop.f32.mrf.mxu0
      %v6206 = vadd.f32 0.0, %v6205
      %v6207 = vpop.f32.mrf.mxu0
      %v6208 = vadd.f32 0.0, %v6207
      %6209 = vmatmul.bf16.gmra.mxu0 %v3973
      %v6210 = vpop.f32.mrf.mxu0
      %v6211 = vadd.f32 0.0, %v6210
      %v6212 = vpop.f32.mrf.mxu0
      %v6213 = vadd.f32 0.0, %v6212
      %6214 = vmatmul.bf16.gmra.mxu0 %v3974
      %v6215 = vpop.f32.mrf.mxu0
      %v6216 = vadd.f32 0.0, %v6215
      %v6217 = vpop.f32.mrf.mxu0
      %v6218 = vadd.f32 0.0, %v6217
      %6219 = vmatmul.bf16.gmra.mxu0 %v3975
      %v6220 = vpop.f32.mrf.mxu0
      %v6221 = vadd.f32 0.0, %v6220
      %v6222 = vpop.f32.mrf.mxu0
      %v6223 = vadd.f32 0.0, %v6222
      %6224 = vmatmul.bf16.gmra.mxu0 %v6052
      %v6225 = vpop.f32.mrf.mxu0
      %v6226 = vadd.f32 0.0, %v6225
      %v6227 = vpop.f32.mrf.mxu0
      %v6228 = vadd.f32 0.0, %v6227
      %6229 = vmatmul.bf16.gmra.mxu0 %v3977
      %v6230 = vpop.f32.mrf.mxu0
      %v6231 = vadd.f32 0.0, %v6230
      %v6232 = vpop.f32.mrf.mxu0
      %v6233 = vadd.f32 0.0, %v6232
      %6234 = vmatmul.bf16.gmra.mxu0 %v3978
      %v6235 = vpop.f32.mrf.mxu0
      %v6236 = vadd.f32 0.0, %v6235
      %v6237 = vpop.f32.mrf.mxu0
      %v6238 = vadd.f32 0.0, %v6237
      %6239 = vmatmul.bf16.gmra.mxu0 %v3979
      %v6240 = vpop.f32.mrf.mxu0
      %v6241 = vadd.f32 0.0, %v6240
      %v6242 = vpop.f32.mrf.mxu0
      %v6243 = vadd.f32 0.0, %v6242
      %6244 = vmatmul.bf16.gmra.mxu0 %v6053
      %v6245 = vpop.f32.mrf.mxu0
      %v6246 = vadd.f32 0.0, %v6245
      %v6247 = vpop.f32.mrf.mxu0
      %v6248 = vadd.f32 0.0, %v6247
      %6249 = vmatmul.bf16.gmra.mxu0 %v3981
      %v6250 = vpop.f32.mrf.mxu0
      %v6251 = vadd.f32 0.0, %v6250
      %v6252 = vpop.f32.mrf.mxu0
      %v6253 = vadd.f32 0.0, %v6252
      %6254 = vmatmul.bf16.gmra.mxu0 %v3982
      %v6255 = vpop.f32.mrf.mxu0
      %v6256 = vadd.f32 0.0, %v6255
      %v6257 = vpop.f32.mrf.mxu0
      %v6258 = vadd.f32 0.0, %v6257
      %6259 = vmatmul.bf16.gmra.mxu0 %v3983
      %v6260 = vpop.f32.mrf.mxu0
      %v6261 = vadd.f32 0.0, %v6260
      %v6262 = vpop.f32.mrf.mxu0
      %v6263 = vadd.f32 0.0, %v6262
      %6264 = vmatmul.bf16.gmra.mxu0 %v6054
      %v6265 = vpop.f32.mrf.mxu0
      %v6266 = vadd.f32 0.0, %v6265
      %v6267 = vpop.f32.mrf.mxu0
      %v6268 = vadd.f32 0.0, %v6267
      %6269 = vmatmul.bf16.gmra.mxu0 %v3985
      %v6270 = vpop.f32.mrf.mxu0
      %v6271 = vadd.f32 0.0, %v6270
      %v6272 = vpop.f32.mrf.mxu0
      %v6273 = vadd.f32 0.0, %v6272
      %6274 = vmatmul.bf16.gmra.mxu0 %v3986
      %v6275 = vpop.f32.mrf.mxu0
      %v6276 = vadd.f32 0.0, %v6275
      %v6277 = vpop.f32.mrf.mxu0
      %v6278 = vadd.f32 0.0, %v6277
      %6279 = vmatmul.bf16.gmra.mxu0 %v3987
      %v6280 = vpop.f32.mrf.mxu0
      %v6281 = vadd.f32 0.0, %v6280
      %v6282 = vpop.f32.mrf.mxu0
      %v6283 = vadd.f32 0.0, %v6282
      %6284 = vmatmul.bf16.gmra.mxu0 %v6055
      %v6285 = vpop.f32.mrf.mxu0
      %v6286 = vadd.f32 0.0, %v6285
      %v6287 = vpop.f32.mrf.mxu0
      %v6288 = vadd.f32 0.0, %v6287
      %6289 = vdwg.mxu0
      %v6290 = vadd.f32 %v5952, %v6131
      %v6291 = vadd.f32 %v5953, %v6133
      %v6292 = vadd.f32 %v5954, %v6136
      %v6293 = vadd.f32 %v5955, %v6138
      %v6294 = vadd.f32 %v5956, %v6141
      %v6295 = vadd.f32 %v5957, %v6143
      %v6296 = vadd.f32 %v5958, %v6146
      %v6297 = vadd.f32 %v5959, %v6148
      %v6298 = vadd.f32 %v5960, %v6151
      %v6299 = vadd.f32 %v5961, %v6153
      %v6300 = vadd.f32 %v5962, %v6156
      %v6301 = vadd.f32 %v5963, %v6158
      %v6302 = vadd.f32 %v5964, %v6161
      %v6303 = vadd.f32 %v5965, %v6163
      %v6304 = vadd.f32 %v5966, %v6166
      %v6305 = vadd.f32 %v5967, %v6168
      %v6306 = vadd.f32 %v5968, %v6171
      %v6307 = vadd.f32 %v5969, %v6173
      %v6308 = vadd.f32 %v5970, %v6176
      %v6309 = vadd.f32 %v5971, %v6178
      %v6310 = vadd.f32 %v5972, %v6181
      %v6311 = vadd.f32 %v5973, %v6183
      %v6312 = vadd.f32 %v5974, %v6186
      %v6313 = vadd.f32 %v5975, %v6188
      %v6314 = vadd.f32 %v5976, %v6191
      %v6315 = vadd.f32 %v5977, %v6193
      %v6316 = vadd.f32 %v5978, %v6196
      %v6317 = vadd.f32 %v5979, %v6198
      %v6318 = vadd.f32 %v5980, %v6201
      %v6319 = vadd.f32 %v5981, %v6203
      %v6320 = vadd.f32 %v5982, %v6206
      %v6321 = vadd.f32 %v5983, %v6208
      %v6322 = vadd.f32 %v5984, %v6211
      %v6323 = vadd.f32 %v5985, %v6213
      %v6324 = vadd.f32 %v5986, %v6216
      %v6325 = vadd.f32 %v5987, %v6218
      %v6326 = vadd.f32 %v5988, %v6221
      %v6327 = vadd.f32 %v5989, %v6223
      %v6328 = vadd.f32 %v5990, %v6226
      %v6329 = vadd.f32 %v5991, %v6228
      %v6330 = vadd.f32 %v5992, %v6231
      %v6331 = vadd.f32 %v5993, %v6233
      %v6332 = vadd.f32 %v5994, %v6236
      %v6333 = vadd.f32 %v5995, %v6238
      %v6334 = vadd.f32 %v5996, %v6241
      %v6335 = vadd.f32 %v5997, %v6243
      %v6336 = vadd.f32 %v5998, %v6246
      %v6337 = vadd.f32 %v5999, %v6248
      %v6338 = vadd.f32 %v6000, %v6251
      %v6339 = vadd.f32 %v6001, %v6253
      %v6340 = vadd.f32 %v6002, %v6256
      %v6341 = vadd.f32 %v6003, %v6258
      %v6342 = vadd.f32 %v6004, %v6261
      %v6343 = vadd.f32 %v6005, %v6263
      %v6344 = vadd.f32 %v6006, %v6266
      %v6345 = vadd.f32 %v6007, %v6268
      %v6346 = vadd.f32 %v6008, %v6271
      %v6347 = vadd.f32 %v6009, %v6273
      %v6348 = vadd.f32 %v6010, %v6276
      %v6349 = vadd.f32 %v6011, %v6278
      %v6350 = vadd.f32 %v6012, %v6281
      %v6351 = vadd.f32 %v6013, %v6283
      %v6352 = vadd.f32 %v6014, %v6286
      %v6353 = vadd.f32 %v6015, %v6288
      %v6354 = vpack.c.bf16 %v2745, %v2743
      %v6355 = vpack.c.bf16 %v2749, %v2747
      %v6356 = vpack.c.bf16 %v2753, %v2751
      %v6357 = vpack.c.bf16 %v2757, %v2755
      %s6358 = scalar_lea.vmem %s4, 576
      %v6359 = vld [vmem:[%s6358] sm:$0xf]
      %v6360 = vld [vmem:[%s6358 + $0x4] sm:$0xf]
      %v6361 = vld [vmem:[%s6358 + $0x8] sm:$0xf]
      %v6362 = vld [vmem:[%s6358 + $0xc] sm:$0xf]
      %v6363 = vld [vmem:[%s6358 + $0x10] sm:$0xf]
      %v6364 = vld [vmem:[%s6358 + $0x14] sm:$0xf]
      %v6365 = vld [vmem:[%s6358 + $0x18] sm:$0xf]
      %v6366 = vld [vmem:[%s6358 + $0x1c] sm:$0xf]
      %v6367 = vld [vmem:[%s6358 + $0x20] sm:$0xf]
      %v6368 = vld [vmem:[%s6358 + $0x24] sm:$0xf]
      %v6369 = vld [vmem:[%s6358 + $0x28] sm:$0xf]
      %v6370 = vld [vmem:[%s6358 + $0x2c] sm:$0xf]
      %v6371 = vld [vmem:[%s6358 + $0x30] sm:$0xf]
      %v6372 = vld [vmem:[%s6358 + $0x34] sm:$0xf]
      %v6373 = vld [vmem:[%s6358 + $0x38] sm:$0xf]
      %v6374 = vld [vmem:[%s6358 + $0x3c] sm:$0xf]
      %v6391 = vunpack.c.l.b16 %v6359
      %v6392 = vunpack.c.l.b16 %v6360
      %v6393 = vunpack.c.l.b16 %v6361
      %v6394 = vunpack.c.l.b16 %v6362
      %v6395 = vunpack.c.l.b16 %v6363
      %v6396 = vunpack.c.l.b16 %v6364
      %v6397 = vunpack.c.l.b16 %v6365
      %v6398 = vunpack.c.l.b16 %v6366
      %v6399 = vunpack.c.l.b16 %v6367
      %v6400 = vunpack.c.l.b16 %v6368
      %v6401 = vunpack.c.l.b16 %v6369
      %v6402 = vunpack.c.l.b16 %v6370
      %v6403 = vunpack.c.l.b16 %v6371
      %v6404 = vunpack.c.l.b16 %v6372
      %v6405 = vunpack.c.l.b16 %v6373
      %v6406 = vunpack.c.l.b16 %v6374
      %v6407 = vpack.c.b16 %v6392, %v6391
      %v6408 = vpack.c.b16 %v6394, %v6393
      %v6409 = vpack.c.b16 %v6396, %v6395
      %v6410 = vpack.c.b16 %v6398, %v6397
      %v6411 = vpack.c.b16 %v6400, %v6399
      %v6412 = vpack.c.b16 %v6402, %v6401
      %v6413 = vpack.c.b16 %v6404, %v6403
      %v6414 = vpack.c.b16 %v6406, %v6405
      %6423 = vmatpush.bf16.msra.mxu0 %v6414
      %6424 = vmatpush.bf16.msra.mxu0 %v6413
      %6425 = vmatpush.bf16.msra.mxu0 %v6412
      %6426 = vmatpush.bf16.msra.mxu0 %v6411
      %6427 = vmatpush.bf16.msra.mxu0 %v6410
      %6428 = vmatpush.bf16.msra.mxu0 %v6409
      %6429 = vmatpush.bf16.msra.mxu0 %v6408
      %6430 = vmatpush.bf16.msra.mxu0 %v6407
      %6431 = vmatmul.bf16.gmra.mxu0 %v2787
      %v6432 = vpop.f32.mrf.mxu0
      %v6433 = vadd.f32 0.0, %v6432
      %v6434 = vpop.f32.mrf.mxu0
      %v6435 = vadd.f32 0.0, %v6434
      %6436 = vmatmul.bf16.gmra.mxu0 %v2788
      %v6437 = vpop.f32.mrf.mxu0
      %v6438 = vadd.f32 0.0, %v6437
      %v6439 = vpop.f32.mrf.mxu0
      %v6440 = vadd.f32 0.0, %v6439
      %6441 = vmatmul.bf16.gmra.mxu0 %v2789
      %v6442 = vpop.f32.mrf.mxu0
      %v6443 = vadd.f32 0.0, %v6442
      %v6444 = vpop.f32.mrf.mxu0
      %v6445 = vadd.f32 0.0, %v6444
      %6446 = vmatmul.bf16.gmra.mxu0 %v2790
      %v6447 = vpop.f32.mrf.mxu0
      %v6448 = vadd.f32 0.0, %v6447
      %v6449 = vpop.f32.mrf.mxu0
      %v6450 = vadd.f32 0.0, %v6449
      %6451 = vmatmul.bf16.gmra.mxu0 %v2791
      %v6452 = vpop.f32.mrf.mxu0
      %v6453 = vadd.f32 0.0, %v6452
      %v6454 = vpop.f32.mrf.mxu0
      %v6455 = vadd.f32 0.0, %v6454
      %6456 = vmatmul.bf16.gmra.mxu0 %v2792
      %v6457 = vpop.f32.mrf.mxu0
      %v6458 = vadd.f32 0.0, %v6457
      %v6459 = vpop.f32.mrf.mxu0
      %v6460 = vadd.f32 0.0, %v6459
      %6461 = vmatmul.bf16.gmra.mxu0 %v2793
      %v6462 = vpop.f32.mrf.mxu0
      %v6463 = vadd.f32 0.0, %v6462
      %v6464 = vpop.f32.mrf.mxu0
      %v6465 = vadd.f32 0.0, %v6464
      %6466 = vmatmul.bf16.gmra.mxu0 %v2794
      %v6467 = vpop.f32.mrf.mxu0
      %v6468 = vadd.f32 0.0, %v6467
      %v6469 = vpop.f32.mrf.mxu0
      %v6470 = vadd.f32 0.0, %v6469
      %6471 = vmatmul.bf16.gmra.mxu0 %v2795
      %v6472 = vpop.f32.mrf.mxu0
      %v6473 = vadd.f32 0.0, %v6472
      %v6474 = vpop.f32.mrf.mxu0
      %v6475 = vadd.f32 0.0, %v6474
      %6476 = vmatmul.bf16.gmra.mxu0 %v2796
      %v6477 = vpop.f32.mrf.mxu0
      %v6478 = vadd.f32 0.0, %v6477
      %v6479 = vpop.f32.mrf.mxu0
      %v6480 = vadd.f32 0.0, %v6479
      %6481 = vmatmul.bf16.gmra.mxu0 %v2797
      %v6482 = vpop.f32.mrf.mxu0
      %v6483 = vadd.f32 0.0, %v6482
      %v6484 = vpop.f32.mrf.mxu0
      %v6485 = vadd.f32 0.0, %v6484
      %6486 = vmatmul.bf16.gmra.mxu0 %v2798
      %v6487 = vpop.f32.mrf.mxu0
      %v6488 = vadd.f32 0.0, %v6487
      %v6489 = vpop.f32.mrf.mxu0
      %v6490 = vadd.f32 0.0, %v6489
      %6491 = vmatmul.bf16.gmra.mxu0 %v2799
      %v6492 = vpop.f32.mrf.mxu0
      %v6493 = vadd.f32 0.0, %v6492
      %v6494 = vpop.f32.mrf.mxu0
      %v6495 = vadd.f32 0.0, %v6494
      %6496 = vmatmul.bf16.gmra.mxu0 %v2800
      %v6497 = vpop.f32.mrf.mxu0
      %v6498 = vadd.f32 0.0, %v6497
      %v6499 = vpop.f32.mrf.mxu0
      %v6500 = vadd.f32 0.0, %v6499
      %6501 = vmatmul.bf16.gmra.mxu0 %v2801
      %v6502 = vpop.f32.mrf.mxu0
      %v6503 = vadd.f32 0.0, %v6502
      %v6504 = vpop.f32.mrf.mxu0
      %v6505 = vadd.f32 0.0, %v6504
      %6506 = vmatmul.bf16.gmra.mxu0 %v2802
      %v6507 = vpop.f32.mrf.mxu0
      %v6508 = vadd.f32 0.0, %v6507
      %v6509 = vpop.f32.mrf.mxu0
      %v6510 = vadd.f32 0.0, %v6509
      %6511 = vmatmul.bf16.gmra.mxu0 %v2803
      %v6512 = vpop.f32.mrf.mxu0
      %v6513 = vadd.f32 0.0, %v6512
      %v6514 = vpop.f32.mrf.mxu0
      %v6515 = vadd.f32 0.0, %v6514
      %6516 = vmatmul.bf16.gmra.mxu0 %v2804
      %v6517 = vpop.f32.mrf.mxu0
      %v6518 = vadd.f32 0.0, %v6517
      %v6519 = vpop.f32.mrf.mxu0
      %v6520 = vadd.f32 0.0, %v6519
      %6521 = vmatmul.bf16.gmra.mxu0 %v2805
      %v6522 = vpop.f32.mrf.mxu0
      %v6523 = vadd.f32 0.0, %v6522
      %v6524 = vpop.f32.mrf.mxu0
      %v6525 = vadd.f32 0.0, %v6524
      %6526 = vmatmul.bf16.gmra.mxu0 %v2806
      %v6527 = vpop.f32.mrf.mxu0
      %v6528 = vadd.f32 0.0, %v6527
      %v6529 = vpop.f32.mrf.mxu0
      %v6530 = vadd.f32 0.0, %v6529
      %6531 = vmatmul.bf16.gmra.mxu0 %v2807
      %v6532 = vpop.f32.mrf.mxu0
      %v6533 = vadd.f32 0.0, %v6532
      %v6534 = vpop.f32.mrf.mxu0
      %v6535 = vadd.f32 0.0, %v6534
      %6536 = vmatmul.bf16.gmra.mxu0 %v2808
      %v6537 = vpop.f32.mrf.mxu0
      %v6538 = vadd.f32 0.0, %v6537
      %v6539 = vpop.f32.mrf.mxu0
      %v6540 = vadd.f32 0.0, %v6539
      %6541 = vmatmul.bf16.gmra.mxu0 %v2809
      %v6542 = vpop.f32.mrf.mxu0
      %v6543 = vadd.f32 0.0, %v6542
      %v6544 = vpop.f32.mrf.mxu0
      %v6545 = vadd.f32 0.0, %v6544
      %6546 = vmatmul.bf16.gmra.mxu0 %v2810
      %v6547 = vpop.f32.mrf.mxu0
      %v6548 = vadd.f32 0.0, %v6547
      %v6549 = vpop.f32.mrf.mxu0
      %v6550 = vadd.f32 0.0, %v6549
      %6551 = vmatmul.bf16.gmra.mxu0 %v2811
      %v6552 = vpop.f32.mrf.mxu0
      %v6553 = vadd.f32 0.0, %v6552
      %v6554 = vpop.f32.mrf.mxu0
      %v6555 = vadd.f32 0.0, %v6554
      %6556 = vmatmul.bf16.gmra.mxu0 %v2812
      %v6557 = vpop.f32.mrf.mxu0
      %v6558 = vadd.f32 0.0, %v6557
      %v6559 = vpop.f32.mrf.mxu0
      %v6560 = vadd.f32 0.0, %v6559
      %6561 = vmatmul.bf16.gmra.mxu0 %v2813
      %v6562 = vpop.f32.mrf.mxu0
      %v6563 = vadd.f32 0.0, %v6562
      %v6564 = vpop.f32.mrf.mxu0
      %v6565 = vadd.f32 0.0, %v6564
      %6566 = vmatmul.bf16.gmra.mxu0 %v2814
      %v6567 = vpop.f32.mrf.mxu0
      %v6568 = vadd.f32 0.0, %v6567
      %v6569 = vpop.f32.mrf.mxu0
      %v6570 = vadd.f32 0.0, %v6569
      %6571 = vmatmul.bf16.gmra.mxu0 %v6354
      %v6572 = vpop.f32.mrf.mxu0
      %v6573 = vadd.f32 0.0, %v6572
      %v6574 = vpop.f32.mrf.mxu0
      %v6575 = vadd.f32 0.0, %v6574
      %6576 = vmatmul.bf16.gmra.mxu0 %v6355
      %v6577 = vpop.f32.mrf.mxu0
      %v6578 = vadd.f32 0.0, %v6577
      %v6579 = vpop.f32.mrf.mxu0
      %v6580 = vadd.f32 0.0, %v6579
      %6581 = vmatmul.bf16.gmra.mxu0 %v6356
      %v6582 = vpop.f32.mrf.mxu0
      %v6583 = vadd.f32 0.0, %v6582
      %v6584 = vpop.f32.mrf.mxu0
      %v6585 = vadd.f32 0.0, %v6584
      %6586 = vmatmul.bf16.gmra.mxu0 %v6357
      %v6587 = vpop.f32.mrf.mxu0
      %v6588 = vadd.f32 0.0, %v6587
      %v6589 = vpop.f32.mrf.mxu0
      %v6590 = vadd.f32 0.0, %v6589
      %6591 = vdwg.mxu0
      %v6592 = vadd.f32 %v6290, %v6433
      %v6593 = vadd.f32 %v6291, %v6435
      %v6594 = vadd.f32 %v6292, %v6438
      %v6595 = vadd.f32 %v6293, %v6440
      %v6596 = vadd.f32 %v6294, %v6443
      %v6597 = vadd.f32 %v6295, %v6445
      %v6598 = vadd.f32 %v6296, %v6448
      %v6599 = vadd.f32 %v6297, %v6450
      %v6600 = vadd.f32 %v6298, %v6453
      %v6601 = vadd.f32 %v6299, %v6455
      %v6602 = vadd.f32 %v6300, %v6458
      %v6603 = vadd.f32 %v6301, %v6460
      %v6604 = vadd.f32 %v6302, %v6463
      %v6605 = vadd.f32 %v6303, %v6465
      %v6606 = vadd.f32 %v6304, %v6468
      %v6607 = vadd.f32 %v6305, %v6470
      %v6608 = vadd.f32 %v6306, %v6473
      %v6609 = vadd.f32 %v6307, %v6475
      %v6610 = vadd.f32 %v6308, %v6478
      %v6611 = vadd.f32 %v6309, %v6480
      %v6612 = vadd.f32 %v6310, %v6483
      %v6613 = vadd.f32 %v6311, %v6485
      %v6614 = vadd.f32 %v6312, %v6488
      %v6615 = vadd.f32 %v6313, %v6490
      %v6616 = vadd.f32 %v6314, %v6493
      %v6617 = vadd.f32 %v6315, %v6495
      %v6618 = vadd.f32 %v6316, %v6498
      %v6619 = vadd.f32 %v6317, %v6500
      %v6620 = vadd.f32 %v6318, %v6503
      %v6621 = vadd.f32 %v6319, %v6505
      %v6622 = vadd.f32 %v6320, %v6508
      %v6623 = vadd.f32 %v6321, %v6510
      %v6624 = vadd.f32 %v6322, %v6513
      %v6625 = vadd.f32 %v6323, %v6515
      %v6626 = vadd.f32 %v6324, %v6518
      %v6627 = vadd.f32 %v6325, %v6520
      %v6628 = vadd.f32 %v6326, %v6523
      %v6629 = vadd.f32 %v6327, %v6525
      %v6630 = vadd.f32 %v6328, %v6528
      %v6631 = vadd.f32 %v6329, %v6530
      %v6632 = vadd.f32 %v6330, %v6533
      %v6633 = vadd.f32 %v6331, %v6535
      %v6634 = vadd.f32 %v6332, %v6538
      %v6635 = vadd.f32 %v6333, %v6540
      %v6636 = vadd.f32 %v6334, %v6543
      %v6637 = vadd.f32 %v6335, %v6545
      %v6638 = vadd.f32 %v6336, %v6548
      %v6639 = vadd.f32 %v6337, %v6550
      %v6640 = vadd.f32 %v6338, %v6553
      %v6641 = vadd.f32 %v6339, %v6555
      %v6642 = vadd.f32 %v6340, %v6558
      %v6643 = vadd.f32 %v6341, %v6560
      %v6644 = vadd.f32 %v6342, %v6563
      %v6645 = vadd.f32 %v6343, %v6565
      %v6646 = vadd.f32 %v6344, %v6568
      %v6647 = vadd.f32 %v6345, %v6570
      %v6648 = vadd.f32 %v6346, %v6573
      %v6649 = vadd.f32 %v6347, %v6575
      %v6650 = vadd.f32 %v6348, %v6578
      %v6651 = vadd.f32 %v6349, %v6580
      %v6652 = vadd.f32 %v6350, %v6583
      %v6653 = vadd.f32 %v6351, %v6585
      %v6654 = vadd.f32 %v6352, %v6588
      %v6655 = vadd.f32 %v6353, %v6590
      %v6672 = vrot.slane %v2743, 1
      %v6673 = vrot.slane %v2744, 1
      %v6674 = vsel %vm2959, %v6672, %v6673
      %v6675 = vrot.slane %v2745, 1
      %v6676 = vrot.slane %v2746, 1
      %v6677 = vsel %vm2959, %v6675, %v6676
      %v6678 = vrot.slane %v2747, 1
      %v6679 = vrot.slane %v2748, 1
      %v6680 = vsel %vm2959, %v6678, %v6679
      %v6681 = vrot.slane %v2749, 1
      %v6682 = vrot.slane %v2750, 1
      %v6683 = vsel %vm2959, %v6681, %v6682
      %v6684 = vrot.slane %v2751, 1
      %v6685 = vrot.slane %v2752, 1
      %v6686 = vsel %vm2959, %v6684, %v6685
      %v6687 = vrot.slane %v2753, 1
      %v6688 = vrot.slane %v2754, 1
      %v6689 = vsel %vm2959, %v6687, %v6688
      %v6690 = vrot.slane %v2755, 1
      %v6691 = vrot.slane %v2756, 1
      %v6692 = vsel %vm2959, %v6690, %v6691
      %v6693 = vrot.slane %v2757, 1
      %v6694 = vrot.slane %v2758, 1
      %v6695 = vsel %vm2959, %v6693, %v6694
      %v6704 = vpack.c.bf16 %v6677, %v6674
      %v6705 = vpack.c.bf16 %v6683, %v6680
      %v6706 = vpack.c.bf16 %v6689, %v6686
      %v6707 = vpack.c.bf16 %v6695, %v6692
      %s6708 = scalar_lea.vmem %s4, 640
      %v6709 = vld [vmem:[%s6708] sm:$0xf]
      %v6710 = vld [vmem:[%s6708 + $0x4] sm:$0xf]
      %v6711 = vld [vmem:[%s6708 + $0x8] sm:$0xf]
      %v6712 = vld [vmem:[%s6708 + $0xc] sm:$0xf]
      %v6713 = vld [vmem:[%s6708 + $0x10] sm:$0xf]
      %v6714 = vld [vmem:[%s6708 + $0x14] sm:$0xf]
      %v6715 = vld [vmem:[%s6708 + $0x18] sm:$0xf]
      %v6716 = vld [vmem:[%s6708 + $0x1c] sm:$0xf]
      %v6717 = vld [vmem:[%s6708 + $0x20] sm:$0xf]
      %v6718 = vld [vmem:[%s6708 + $0x24] sm:$0xf]
      %v6719 = vld [vmem:[%s6708 + $0x28] sm:$0xf]
      %v6720 = vld [vmem:[%s6708 + $0x2c] sm:$0xf]
      %v6721 = vld [vmem:[%s6708 + $0x30] sm:$0xf]
      %v6722 = vld [vmem:[%s6708 + $0x34] sm:$0xf]
      %v6723 = vld [vmem:[%s6708 + $0x38] sm:$0xf]
      %v6724 = vld [vmem:[%s6708 + $0x3c] sm:$0xf]
      %v6741 = vunpack.c.l.b16 %v6709
      %v6742 = vunpack.c.l.b16 %v6710
      %v6743 = vunpack.c.l.b16 %v6711
      %v6744 = vunpack.c.l.b16 %v6712
      %v6745 = vunpack.c.l.b16 %v6713
      %v6746 = vunpack.c.l.b16 %v6714
      %v6747 = vunpack.c.l.b16 %v6715
      %v6748 = vunpack.c.l.b16 %v6716
      %v6749 = vunpack.c.l.b16 %v6717
      %v6750 = vunpack.c.l.b16 %v6718
      %v6751 = vunpack.c.l.b16 %v6719
      %v6752 = vunpack.c.l.b16 %v6720
      %v6753 = vunpack.c.l.b16 %v6721
      %v6754 = vunpack.c.l.b16 %v6722
      %v6755 = vunpack.c.l.b16 %v6723
      %v6756 = vunpack.c.l.b16 %v6724
      %v6757 = vpack.c.b16 %v6742, %v6741
      %v6758 = vpack.c.b16 %v6744, %v6743
      %v6759 = vpack.c.b16 %v6746, %v6745
      %v6760 = vpack.c.b16 %v6748, %v6747
      %v6761 = vpack.c.b16 %v6750, %v6749
      %v6762 = vpack.c.b16 %v6752, %v6751
      %v6763 = vpack.c.b16 %v6754, %v6753
      %v6764 = vpack.c.b16 %v6756, %v6755
      %6773 = vmatpush.bf16.msra.mxu0 %v6764
      %6774 = vmatpush.bf16.msra.mxu0 %v6763
      %6775 = vmatpush.bf16.msra.mxu0 %v6762
      %6776 = vmatpush.bf16.msra.mxu0 %v6761
      %6777 = vmatpush.bf16.msra.mxu0 %v6760
      %6778 = vmatpush.bf16.msra.mxu0 %v6759
      %6779 = vmatpush.bf16.msra.mxu0 %v6758
      %6780 = vmatpush.bf16.msra.mxu0 %v6757
      %6781 = vmatmul.bf16.gmra.mxu0 %v3220
      %v6782 = vpop.f32.mrf.mxu0
      %v6783 = vadd.f32 0.0, %v6782
      %v6784 = vpop.f32.mrf.mxu0
      %v6785 = vadd.f32 0.0, %v6784
      %6786 = vmatmul.bf16.gmra.mxu0 %v3221
      %v6787 = vpop.f32.mrf.mxu0
      %v6788 = vadd.f32 0.0, %v6787
      %v6789 = vpop.f32.mrf.mxu0
      %v6790 = vadd.f32 0.0, %v6789
      %6791 = vmatmul.bf16.gmra.mxu0 %v3222
      %v6792 = vpop.f32.mrf.mxu0
      %v6793 = vadd.f32 0.0, %v6792
      %v6794 = vpop.f32.mrf.mxu0
      %v6795 = vadd.f32 0.0, %v6794
      %6796 = vmatmul.bf16.gmra.mxu0 %v3223
      %v6797 = vpop.f32.mrf.mxu0
      %v6798 = vadd.f32 0.0, %v6797
      %v6799 = vpop.f32.mrf.mxu0
      %v6800 = vadd.f32 0.0, %v6799
      %6801 = vmatmul.bf16.gmra.mxu0 %v3224
      %v6802 = vpop.f32.mrf.mxu0
      %v6803 = vadd.f32 0.0, %v6802
      %v6804 = vpop.f32.mrf.mxu0
      %v6805 = vadd.f32 0.0, %v6804
      %6806 = vmatmul.bf16.gmra.mxu0 %v3225
      %v6807 = vpop.f32.mrf.mxu0
      %v6808 = vadd.f32 0.0, %v6807
      %v6809 = vpop.f32.mrf.mxu0
      %v6810 = vadd.f32 0.0, %v6809
      %6811 = vmatmul.bf16.gmra.mxu0 %v3226
      %v6812 = vpop.f32.mrf.mxu0
      %v6813 = vadd.f32 0.0, %v6812
      %v6814 = vpop.f32.mrf.mxu0
      %v6815 = vadd.f32 0.0, %v6814
      %6816 = vmatmul.bf16.gmra.mxu0 %v3227
      %v6817 = vpop.f32.mrf.mxu0
      %v6818 = vadd.f32 0.0, %v6817
      %v6819 = vpop.f32.mrf.mxu0
      %v6820 = vadd.f32 0.0, %v6819
      %6821 = vmatmul.bf16.gmra.mxu0 %v3228
      %v6822 = vpop.f32.mrf.mxu0
      %v6823 = vadd.f32 0.0, %v6822
      %v6824 = vpop.f32.mrf.mxu0
      %v6825 = vadd.f32 0.0, %v6824
      %6826 = vmatmul.bf16.gmra.mxu0 %v3229
      %v6827 = vpop.f32.mrf.mxu0
      %v6828 = vadd.f32 0.0, %v6827
      %v6829 = vpop.f32.mrf.mxu0
      %v6830 = vadd.f32 0.0, %v6829
      %6831 = vmatmul.bf16.gmra.mxu0 %v3230
      %v6832 = vpop.f32.mrf.mxu0
      %v6833 = vadd.f32 0.0, %v6832
      %v6834 = vpop.f32.mrf.mxu0
      %v6835 = vadd.f32 0.0, %v6834
      %6836 = vmatmul.bf16.gmra.mxu0 %v3231
      %v6837 = vpop.f32.mrf.mxu0
      %v6838 = vadd.f32 0.0, %v6837
      %v6839 = vpop.f32.mrf.mxu0
      %v6840 = vadd.f32 0.0, %v6839
      %6841 = vmatmul.bf16.gmra.mxu0 %v3232
      %v6842 = vpop.f32.mrf.mxu0
      %v6843 = vadd.f32 0.0, %v6842
      %v6844 = vpop.f32.mrf.mxu0
      %v6845 = vadd.f32 0.0, %v6844
      %6846 = vmatmul.bf16.gmra.mxu0 %v3233
      %v6847 = vpop.f32.mrf.mxu0
      %v6848 = vadd.f32 0.0, %v6847
      %v6849 = vpop.f32.mrf.mxu0
      %v6850 = vadd.f32 0.0, %v6849
      %6851 = vmatmul.bf16.gmra.mxu0 %v3234
      %v6852 = vpop.f32.mrf.mxu0
      %v6853 = vadd.f32 0.0, %v6852
      %v6854 = vpop.f32.mrf.mxu0
      %v6855 = vadd.f32 0.0, %v6854
      %6856 = vmatmul.bf16.gmra.mxu0 %v3235
      %v6857 = vpop.f32.mrf.mxu0
      %v6858 = vadd.f32 0.0, %v6857
      %v6859 = vpop.f32.mrf.mxu0
      %v6860 = vadd.f32 0.0, %v6859
      %6861 = vmatmul.bf16.gmra.mxu0 %v3236
      %v6862 = vpop.f32.mrf.mxu0
      %v6863 = vadd.f32 0.0, %v6862
      %v6864 = vpop.f32.mrf.mxu0
      %v6865 = vadd.f32 0.0, %v6864
      %6866 = vmatmul.bf16.gmra.mxu0 %v3237
      %v6867 = vpop.f32.mrf.mxu0
      %v6868 = vadd.f32 0.0, %v6867
      %v6869 = vpop.f32.mrf.mxu0
      %v6870 = vadd.f32 0.0, %v6869
      %6871 = vmatmul.bf16.gmra.mxu0 %v3238
      %v6872 = vpop.f32.mrf.mxu0
      %v6873 = vadd.f32 0.0, %v6872
      %v6874 = vpop.f32.mrf.mxu0
      %v6875 = vadd.f32 0.0, %v6874
      %6876 = vmatmul.bf16.gmra.mxu0 %v3239
      %v6877 = vpop.f32.mrf.mxu0
      %v6878 = vadd.f32 0.0, %v6877
      %v6879 = vpop.f32.mrf.mxu0
      %v6880 = vadd.f32 0.0, %v6879
      %6881 = vmatmul.bf16.gmra.mxu0 %v3240
      %v6882 = vpop.f32.mrf.mxu0
      %v6883 = vadd.f32 0.0, %v6882
      %v6884 = vpop.f32.mrf.mxu0
      %v6885 = vadd.f32 0.0, %v6884
      %6886 = vmatmul.bf16.gmra.mxu0 %v3241
      %v6887 = vpop.f32.mrf.mxu0
      %v6888 = vadd.f32 0.0, %v6887
      %v6889 = vpop.f32.mrf.mxu0
      %v6890 = vadd.f32 0.0, %v6889
      %6891 = vmatmul.bf16.gmra.mxu0 %v3242
      %v6892 = vpop.f32.mrf.mxu0
      %v6893 = vadd.f32 0.0, %v6892
      %v6894 = vpop.f32.mrf.mxu0
      %v6895 = vadd.f32 0.0, %v6894
      %6896 = vmatmul.bf16.gmra.mxu0 %v3243
      %v6897 = vpop.f32.mrf.mxu0
      %v6898 = vadd.f32 0.0, %v6897
      %v6899 = vpop.f32.mrf.mxu0
      %v6900 = vadd.f32 0.0, %v6899
      %6901 = vmatmul.bf16.gmra.mxu0 %v3244
      %v6902 = vpop.f32.mrf.mxu0
      %v6903 = vadd.f32 0.0, %v6902
      %v6904 = vpop.f32.mrf.mxu0
      %v6905 = vadd.f32 0.0, %v6904
      %6906 = vmatmul.bf16.gmra.mxu0 %v3245
      %v6907 = vpop.f32.mrf.mxu0
      %v6908 = vadd.f32 0.0, %v6907
      %v6909 = vpop.f32.mrf.mxu0
      %v6910 = vadd.f32 0.0, %v6909
      %6911 = vmatmul.bf16.gmra.mxu0 %v3246
      %v6912 = vpop.f32.mrf.mxu0
      %v6913 = vadd.f32 0.0, %v6912
      %v6914 = vpop.f32.mrf.mxu0
      %v6915 = vadd.f32 0.0, %v6914
      %6916 = vmatmul.bf16.gmra.mxu0 %v3247
      %v6917 = vpop.f32.mrf.mxu0
      %v6918 = vadd.f32 0.0, %v6917
      %v6919 = vpop.f32.mrf.mxu0
      %v6920 = vadd.f32 0.0, %v6919
      %6921 = vmatmul.bf16.gmra.mxu0 %v6704
      %v6922 = vpop.f32.mrf.mxu0
      %v6923 = vadd.f32 0.0, %v6922
      %v6924 = vpop.f32.mrf.mxu0
      %v6925 = vadd.f32 0.0, %v6924
      %6926 = vmatmul.bf16.gmra.mxu0 %v6705
      %v6927 = vpop.f32.mrf.mxu0
      %v6928 = vadd.f32 0.0, %v6927
      %v6929 = vpop.f32.mrf.mxu0
      %v6930 = vadd.f32 0.0, %v6929
      %6931 = vmatmul.bf16.gmra.mxu0 %v6706
      %v6932 = vpop.f32.mrf.mxu0
      %v6933 = vadd.f32 0.0, %v6932
      %v6934 = vpop.f32.mrf.mxu0
      %v6935 = vadd.f32 0.0, %v6934
      %6936 = vmatmul.bf16.gmra.mxu0 %v6707
      %v6937 = vpop.f32.mrf.mxu0
      %v6938 = vadd.f32 0.0, %v6937
      %v6939 = vpop.f32.mrf.mxu0
      %v6940 = vadd.f32 0.0, %v6939
      %6941 = vdwg.mxu0
      %v6942 = vadd.f32 %v6592, %v6783
      %v6943 = vadd.f32 %v6593, %v6785
      %v6944 = vadd.f32 %v6594, %v6788
      %v6945 = vadd.f32 %v6595, %v6790
      %v6946 = vadd.f32 %v6596, %v6793
      %v6947 = vadd.f32 %v6597, %v6795
      %v6948 = vadd.f32 %v6598, %v6798
      %v6949 = vadd.f32 %v6599, %v6800
      %v6950 = vadd.f32 %v6600, %v6803
      %v6951 = vadd.f32 %v6601, %v6805
      %v6952 = vadd.f32 %v6602, %v6808
      %v6953 = vadd.f32 %v6603, %v6810
      %v6954 = vadd.f32 %v6604, %v6813
      %v6955 = vadd.f32 %v6605, %v6815
      %v6956 = vadd.f32 %v6606, %v6818
      %v6957 = vadd.f32 %v6607, %v6820
      %v6958 = vadd.f32 %v6608, %v6823
      %v6959 = vadd.f32 %v6609, %v6825
      %v6960 = vadd.f32 %v6610, %v6828
      %v6961 = vadd.f32 %v6611, %v6830
      %v6962 = vadd.f32 %v6612, %v6833
      %v6963 = vadd.f32 %v6613, %v6835
      %v6964 = vadd.f32 %v6614, %v6838
      %v6965 = vadd.f32 %v6615, %v6840
      %v6966 = vadd.f32 %v6616, %v6843
      %v6967 = vadd.f32 %v6617, %v6845
      %v6968 = vadd.f32 %v6618, %v6848
      %v6969 = vadd.f32 %v6619, %v6850
      %v6970 = vadd.f32 %v6620, %v6853
      %v6971 = vadd.f32 %v6621, %v6855
      %v6972 = vadd.f32 %v6622, %v6858
      %v6973 = vadd.f32 %v6623, %v6860
      %v6974 = vadd.f32 %v6624, %v6863
      %v6975 = vadd.f32 %v6625, %v6865
      %v6976 = vadd.f32 %v6626, %v6868
      %v6977 = vadd.f32 %v6627, %v6870
      %v6978 = vadd.f32 %v6628, %v6873
      %v6979 = vadd.f32 %v6629, %v6875
      %v6980 = vadd.f32 %v6630, %v6878
      %v6981 = vadd.f32 %v6631, %v6880
      %v6982 = vadd.f32 %v6632, %v6883
      %v6983 = vadd.f32 %v6633, %v6885
      %v6984 = vadd.f32 %v6634, %v6888
      %v6985 = vadd.f32 %v6635, %v6890
      %v6986 = vadd.f32 %v6636, %v6893
      %v6987 = vadd.f32 %v6637, %v6895
      %v6988 = vadd.f32 %v6638, %v6898
      %v6989 = vadd.f32 %v6639, %v6900
      %v6990 = vadd.f32 %v6640, %v6903
      %v6991 = vadd.f32 %v6641, %v6905
      %v6992 = vadd.f32 %v6642, %v6908
      %v6993 = vadd.f32 %v6643, %v6910
      %v6994 = vadd.f32 %v6644, %v6913
      %v6995 = vadd.f32 %v6645, %v6915
      %v6996 = vadd.f32 %v6646, %v6918
      %v6997 = vadd.f32 %v6647, %v6920
      %v6998 = vadd.f32 %v6648, %v6923
      %v6999 = vadd.f32 %v6649, %v6925
      %v7000 = vadd.f32 %v6650, %v6928
      %v7001 = vadd.f32 %v6651, %v6930
      %v7002 = vadd.f32 %v6652, %v6933
      %v7003 = vadd.f32 %v6653, %v6935
      %v7004 = vadd.f32 %v6654, %v6938
      %v7005 = vadd.f32 %v6655, %v6940
      %v7006 = vrot.slane %v2743, 2
      %v7007 = vrot.slane %v2744, 2
      %v7008 = vsel %vm3699, %v7006, %v7007
      %v7009 = vrot.slane %v2745, 2
      %v7010 = vrot.slane %v2746, 2
      %v7011 = vsel %vm3699, %v7009, %v7010
      %v7012 = vrot.slane %v2747, 2
      %v7013 = vrot.slane %v2748, 2
      %v7014 = vsel %vm3699, %v7012, %v7013
      %v7015 = vrot.slane %v2749, 2
      %v7016 = vrot.slane %v2750, 2
      %v7017 = vsel %vm3699, %v7015, %v7016
      %v7018 = vrot.slane %v2751, 2
      %v7019 = vrot.slane %v2752, 2
      %v7020 = vsel %vm3699, %v7018, %v7019
      %v7021 = vrot.slane %v2753, 2
      %v7022 = vrot.slane %v2754, 2
      %v7023 = vsel %vm3699, %v7021, %v7022
      %v7024 = vrot.slane %v2755, 2
      %v7025 = vrot.slane %v2756, 2
      %v7026 = vsel %vm3699, %v7024, %v7025
      %v7027 = vrot.slane %v2757, 2
      %v7028 = vrot.slane %v2758, 2
      %v7029 = vsel %vm3699, %v7027, %v7028
      %v7038 = vpack.c.bf16 %v7011, %v7008
      %v7039 = vpack.c.bf16 %v7017, %v7014
      %v7040 = vpack.c.bf16 %v7023, %v7020
      %v7041 = vpack.c.bf16 %v7029, %v7026
      %s7042 = scalar_lea.vmem %s4, 704
      %v7043 = vld [vmem:[%s7042] sm:$0xf]
      %v7044 = vld [vmem:[%s7042 + $0x4] sm:$0xf]
      %v7045 = vld [vmem:[%s7042 + $0x8] sm:$0xf]
      %v7046 = vld [vmem:[%s7042 + $0xc] sm:$0xf]
      %v7047 = vld [vmem:[%s7042 + $0x10] sm:$0xf]
      %v7048 = vld [vmem:[%s7042 + $0x14] sm:$0xf]
      %v7049 = vld [vmem:[%s7042 + $0x18] sm:$0xf]
      %v7050 = vld [vmem:[%s7042 + $0x1c] sm:$0xf]
      %v7051 = vld [vmem:[%s7042 + $0x20] sm:$0xf]
      %v7052 = vld [vmem:[%s7042 + $0x24] sm:$0xf]
      %v7053 = vld [vmem:[%s7042 + $0x28] sm:$0xf]
      %v7054 = vld [vmem:[%s7042 + $0x2c] sm:$0xf]
      %v7055 = vld [vmem:[%s7042 + $0x30] sm:$0xf]
      %v7056 = vld [vmem:[%s7042 + $0x34] sm:$0xf]
      %v7057 = vld [vmem:[%s7042 + $0x38] sm:$0xf]
      %v7058 = vld [vmem:[%s7042 + $0x3c] sm:$0xf]
      %v7075 = vunpack.c.l.b16 %v7043
      %v7076 = vunpack.c.l.b16 %v7044
      %v7077 = vunpack.c.l.b16 %v7045
      %v7078 = vunpack.c.l.b16 %v7046
      %v7079 = vunpack.c.l.b16 %v7047
      %v7080 = vunpack.c.l.b16 %v7048
      %v7081 = vunpack.c.l.b16 %v7049
      %v7082 = vunpack.c.l.b16 %v7050
      %v7083 = vunpack.c.l.b16 %v7051
      %v7084 = vunpack.c.l.b16 %v7052
      %v7085 = vunpack.c.l.b16 %v7053
      %v7086 = vunpack.c.l.b16 %v7054
      %v7087 = vunpack.c.l.b16 %v7055
      %v7088 = vunpack.c.l.b16 %v7056
      %v7089 = vunpack.c.l.b16 %v7057
      %v7090 = vunpack.c.l.b16 %v7058
      %v7091 = vpack.c.b16 %v7076, %v7075
      %v7092 = vpack.c.b16 %v7078, %v7077
      %v7093 = vpack.c.b16 %v7080, %v7079
      %v7094 = vpack.c.b16 %v7082, %v7081
      %v7095 = vpack.c.b16 %v7084, %v7083
      %v7096 = vpack.c.b16 %v7086, %v7085
      %v7097 = vpack.c.b16 %v7088, %v7087
      %v7098 = vpack.c.b16 %v7090, %v7089
      %7107 = vmatpush.bf16.msra.mxu0 %v7098
      %7108 = vmatpush.bf16.msra.mxu0 %v7097
      %7109 = vmatpush.bf16.msra.mxu0 %v7096
      %7110 = vmatpush.bf16.msra.mxu0 %v7095
      %7111 = vmatpush.bf16.msra.mxu0 %v7094
      %7112 = vmatpush.bf16.msra.mxu0 %v7093
      %7113 = vmatpush.bf16.msra.mxu0 %v7092
      %7114 = vmatpush.bf16.msra.mxu0 %v7091
      %7115 = vmatmul.bf16.gmra.mxu0 %v3960
      %v7116 = vpop.f32.mrf.mxu0
      %v7117 = vadd.f32 0.0, %v7116
      %v7118 = vpop.f32.mrf.mxu0
      %v7119 = vadd.f32 0.0, %v7118
      %7120 = vmatmul.bf16.gmra.mxu0 %v3961
      %v7121 = vpop.f32.mrf.mxu0
      %v7122 = vadd.f32 0.0, %v7121
      %v7123 = vpop.f32.mrf.mxu0
      %v7124 = vadd.f32 0.0, %v7123
      %7125 = vmatmul.bf16.gmra.mxu0 %v3962
      %v7126 = vpop.f32.mrf.mxu0
      %v7127 = vadd.f32 0.0, %v7126
      %v7128 = vpop.f32.mrf.mxu0
      %v7129 = vadd.f32 0.0, %v7128
      %7130 = vmatmul.bf16.gmra.mxu0 %v3963
      %v7131 = vpop.f32.mrf.mxu0
      %v7132 = vadd.f32 0.0, %v7131
      %v7133 = vpop.f32.mrf.mxu0
      %v7134 = vadd.f32 0.0, %v7133
      %7135 = vmatmul.bf16.gmra.mxu0 %v3964
      %v7136 = vpop.f32.mrf.mxu0
      %v7137 = vadd.f32 0.0, %v7136
      %v7138 = vpop.f32.mrf.mxu0
      %v7139 = vadd.f32 0.0, %v7138
      %7140 = vmatmul.bf16.gmra.mxu0 %v3965
      %v7141 = vpop.f32.mrf.mxu0
      %v7142 = vadd.f32 0.0, %v7141
      %v7143 = vpop.f32.mrf.mxu0
      %v7144 = vadd.f32 0.0, %v7143
      %7145 = vmatmul.bf16.gmra.mxu0 %v3966
      %v7146 = vpop.f32.mrf.mxu0
      %v7147 = vadd.f32 0.0, %v7146
      %v7148 = vpop.f32.mrf.mxu0
      %v7149 = vadd.f32 0.0, %v7148
      %7150 = vmatmul.bf16.gmra.mxu0 %v3967
      %v7151 = vpop.f32.mrf.mxu0
      %v7152 = vadd.f32 0.0, %v7151
      %v7153 = vpop.f32.mrf.mxu0
      %v7154 = vadd.f32 0.0, %v7153
      %7155 = vmatmul.bf16.gmra.mxu0 %v3968
      %v7156 = vpop.f32.mrf.mxu0
      %v7157 = vadd.f32 0.0, %v7156
      %v7158 = vpop.f32.mrf.mxu0
      %v7159 = vadd.f32 0.0, %v7158
      %7160 = vmatmul.bf16.gmra.mxu0 %v3969
      %v7161 = vpop.f32.mrf.mxu0
      %v7162 = vadd.f32 0.0, %v7161
      %v7163 = vpop.f32.mrf.mxu0
      %v7164 = vadd.f32 0.0, %v7163
      %7165 = vmatmul.bf16.gmra.mxu0 %v3970
      %v7166 = vpop.f32.mrf.mxu0
      %v7167 = vadd.f32 0.0, %v7166
      %v7168 = vpop.f32.mrf.mxu0
      %v7169 = vadd.f32 0.0, %v7168
      %7170 = vmatmul.bf16.gmra.mxu0 %v3971
      %v7171 = vpop.f32.mrf.mxu0
      %v7172 = vadd.f32 0.0, %v7171
      %v7173 = vpop.f32.mrf.mxu0
      %v7174 = vadd.f32 0.0, %v7173
      %7175 = vmatmul.bf16.gmra.mxu0 %v3972
      %v7176 = vpop.f32.mrf.mxu0
      %v7177 = vadd.f32 0.0, %v7176
      %v7178 = vpop.f32.mrf.mxu0
      %v7179 = vadd.f32 0.0, %v7178
      %7180 = vmatmul.bf16.gmra.mxu0 %v3973
      %v7181 = vpop.f32.mrf.mxu0
      %v7182 = vadd.f32 0.0, %v7181
      %v7183 = vpop.f32.mrf.mxu0
      %v7184 = vadd.f32 0.0, %v7183
      %7185 = vmatmul.bf16.gmra.mxu0 %v3974
      %v7186 = vpop.f32.mrf.mxu0
      %v7187 = vadd.f32 0.0, %v7186
      %v7188 = vpop.f32.mrf.mxu0
      %v7189 = vadd.f32 0.0, %v7188
      %7190 = vmatmul.bf16.gmra.mxu0 %v3975
      %v7191 = vpop.f32.mrf.mxu0
      %v7192 = vadd.f32 0.0, %v7191
      %v7193 = vpop.f32.mrf.mxu0
      %v7194 = vadd.f32 0.0, %v7193
      %7195 = vmatmul.bf16.gmra.mxu0 %v3976
      %v7196 = vpop.f32.mrf.mxu0
      %v7197 = vadd.f32 0.0, %v7196
      %v7198 = vpop.f32.mrf.mxu0
      %v7199 = vadd.f32 0.0, %v7198
      %7200 = vmatmul.bf16.gmra.mxu0 %v3977
      %v7201 = vpop.f32.mrf.mxu0
      %v7202 = vadd.f32 0.0, %v7201
      %v7203 = vpop.f32.mrf.mxu0
      %v7204 = vadd.f32 0.0, %v7203
      %7205 = vmatmul.bf16.gmra.mxu0 %v3978
      %v7206 = vpop.f32.mrf.mxu0
      %v7207 = vadd.f32 0.0, %v7206
      %v7208 = vpop.f32.mrf.mxu0
      %v7209 = vadd.f32 0.0, %v7208
      %7210 = vmatmul.bf16.gmra.mxu0 %v3979
      %v7211 = vpop.f32.mrf.mxu0
      %v7212 = vadd.f32 0.0, %v7211
      %v7213 = vpop.f32.mrf.mxu0
      %v7214 = vadd.f32 0.0, %v7213
      %7215 = vmatmul.bf16.gmra.mxu0 %v3980
      %v7216 = vpop.f32.mrf.mxu0
      %v7217 = vadd.f32 0.0, %v7216
      %v7218 = vpop.f32.mrf.mxu0
      %v7219 = vadd.f32 0.0, %v7218
      %7220 = vmatmul.bf16.gmra.mxu0 %v3981
      %v7221 = vpop.f32.mrf.mxu0
      %v7222 = vadd.f32 0.0, %v7221
      %v7223 = vpop.f32.mrf.mxu0
      %v7224 = vadd.f32 0.0, %v7223
      %7225 = vmatmul.bf16.gmra.mxu0 %v3982
      %v7226 = vpop.f32.mrf.mxu0
      %v7227 = vadd.f32 0.0, %v7226
      %v7228 = vpop.f32.mrf.mxu0
      %v7229 = vadd.f32 0.0, %v7228
      %7230 = vmatmul.bf16.gmra.mxu0 %v3983
      %v7231 = vpop.f32.mrf.mxu0
      %v7232 = vadd.f32 0.0, %v7231
      %v7233 = vpop.f32.mrf.mxu0
      %v7234 = vadd.f32 0.0, %v7233
      %7235 = vmatmul.bf16.gmra.mxu0 %v3984
      %v7236 = vpop.f32.mrf.mxu0
      %v7237 = vadd.f32 0.0, %v7236
      %v7238 = vpop.f32.mrf.mxu0
      %v7239 = vadd.f32 0.0, %v7238
      %7240 = vmatmul.bf16.gmra.mxu0 %v3985
      %v7241 = vpop.f32.mrf.mxu0
      %v7242 = vadd.f32 0.0, %v7241
      %v7243 = vpop.f32.mrf.mxu0
      %v7244 = vadd.f32 0.0, %v7243
      %7245 = vmatmul.bf16.gmra.mxu0 %v3986
      %v7246 = vpop.f32.mrf.mxu0
      %v7247 = vadd.f32 0.0, %v7246
      %v7248 = vpop.f32.mrf.mxu0
      %v7249 = vadd.f32 0.0, %v7248
      %7250 = vmatmul.bf16.gmra.mxu0 %v3987
      %v7251 = vpop.f32.mrf.mxu0
      %v7252 = vadd.f32 0.0, %v7251
      %v7253 = vpop.f32.mrf.mxu0
      %v7254 = vadd.f32 0.0, %v7253
      %7255 = vmatmul.bf16.gmra.mxu0 %v7038
      %v7256 = vpop.f32.mrf.mxu0
      %v7257 = vadd.f32 0.0, %v7256
      %v7258 = vpop.f32.mrf.mxu0
      %v7259 = vadd.f32 0.0, %v7258
      %7260 = vmatmul.bf16.gmra.mxu0 %v7039
      %v7261 = vpop.f32.mrf.mxu0
      %v7262 = vadd.f32 0.0, %v7261
      %v7263 = vpop.f32.mrf.mxu0
      %v7264 = vadd.f32 0.0, %v7263
      %7265 = vmatmul.bf16.gmra.mxu0 %v7040
      %v7266 = vpop.f32.mrf.mxu0
      %v7267 = vadd.f32 0.0, %v7266
      %v7268 = vpop.f32.mrf.mxu0
      %v7269 = vadd.f32 0.0, %v7268
      %7270 = vmatmul.bf16.gmra.mxu0 %v7041
      %v7271 = vpop.f32.mrf.mxu0
      %v7272 = vadd.f32 0.0, %v7271
      %v7273 = vpop.f32.mrf.mxu0
      %v7274 = vadd.f32 0.0, %v7273
      %7275 = vdwg.mxu0
      %v7276 = vadd.f32 %v6942, %v7117
      %v7277 = vadd.f32 %v6943, %v7119
      %v7278 = vadd.f32 %v6944, %v7122
      %v7279 = vadd.f32 %v6945, %v7124
      %v7280 = vadd.f32 %v6946, %v7127
      %v7281 = vadd.f32 %v6947, %v7129
      %v7282 = vadd.f32 %v6948, %v7132
      %v7283 = vadd.f32 %v6949, %v7134
      %v7284 = vadd.f32 %v6950, %v7137
      %v7285 = vadd.f32 %v6951, %v7139
      %v7286 = vadd.f32 %v6952, %v7142
      %v7287 = vadd.f32 %v6953, %v7144
      %v7288 = vadd.f32 %v6954, %v7147
      %v7289 = vadd.f32 %v6955, %v7149
      %v7290 = vadd.f32 %v6956, %v7152
      %v7291 = vadd.f32 %v6957, %v7154
      %v7292 = vadd.f32 %v6958, %v7157
      %v7293 = vadd.f32 %v6959, %v7159
      %v7294 = vadd.f32 %v6960, %v7162
      %v7295 = vadd.f32 %v6961, %v7164
      %v7296 = vadd.f32 %v6962, %v7167
      %v7297 = vadd.f32 %v6963, %v7169
      %v7298 = vadd.f32 %v6964, %v7172
      %v7299 = vadd.f32 %v6965, %v7174
      %v7300 = vadd.f32 %v6966, %v7177
      %v7301 = vadd.f32 %v6967, %v7179
      %v7302 = vadd.f32 %v6968, %v7182
      %v7303 = vadd.f32 %v6969, %v7184
      %v7304 = vadd.f32 %v6970, %v7187
      %v7305 = vadd.f32 %v6971, %v7189
      %v7306 = vadd.f32 %v6972, %v7192
      %v7307 = vadd.f32 %v6973, %v7194
      %v7308 = vadd.f32 %v6974, %v7197
      %v7309 = vadd.f32 %v6975, %v7199
      %v7310 = vadd.f32 %v6976, %v7202
      %v7311 = vadd.f32 %v6977, %v7204
      %v7312 = vadd.f32 %v6978, %v7207
      %v7313 = vadd.f32 %v6979, %v7209
      %v7314 = vadd.f32 %v6980, %v7212
      %v7315 = vadd.f32 %v6981, %v7214
      %v7316 = vadd.f32 %v6982, %v7217
      %v7317 = vadd.f32 %v6983, %v7219
      %v7318 = vadd.f32 %v6984, %v7222
      %v7319 = vadd.f32 %v6985, %v7224
      %v7320 = vadd.f32 %v6986, %v7227
      %v7321 = vadd.f32 %v6987, %v7229
      %v7322 = vadd.f32 %v6988, %v7232
      %v7323 = vadd.f32 %v6989, %v7234
      %v7324 = vadd.f32 %v6990, %v7237
      %v7325 = vadd.f32 %v6991, %v7239
      %v7326 = vadd.f32 %v6992, %v7242
      %v7327 = vadd.f32 %v6993, %v7244
      %v7328 = vadd.f32 %v6994, %v7247
      %v7329 = vadd.f32 %v6995, %v7249
      %v7330 = vadd.f32 %v6996, %v7252
      %v7331 = vadd.f32 %v6997, %v7254
      %v7332 = vadd.f32 %v6998, %v7257
      %v7333 = vadd.f32 %v6999, %v7259
      %v7334 = vadd.f32 %v7000, %v7262
      %v7335 = vadd.f32 %v7001, %v7264
      %v7336 = vadd.f32 %v7002, %v7267
      %v7337 = vadd.f32 %v7003, %v7269
      %v7338 = vadd.f32 %v7004, %v7272
      %v7339 = vadd.f32 %v7005, %v7274
      %v7340 = vpack.c.bf16 %v2747, %v2745
      %v7341 = vpack.c.bf16 %v2751, %v2749
      %v7342 = vpack.c.bf16 %v2755, %v2753
      %v7343 = vpack.c.bf16 %v2759, %v2757
      %s7344 = scalar_lea.vmem %s4, 768
      %v7345 = vld [vmem:[%s7344] sm:$0xf]
      %v7346 = vld [vmem:[%s7344 + $0x4] sm:$0xf]
      %v7347 = vld [vmem:[%s7344 + $0x8] sm:$0xf]
      %v7348 = vld [vmem:[%s7344 + $0xc] sm:$0xf]
      %v7349 = vld [vmem:[%s7344 + $0x10] sm:$0xf]
      %v7350 = vld [vmem:[%s7344 + $0x14] sm:$0xf]
      %v7351 = vld [vmem:[%s7344 + $0x18] sm:$0xf]
      %v7352 = vld [vmem:[%s7344 + $0x1c] sm:$0xf]
      %v7353 = vld [vmem:[%s7344 + $0x20] sm:$0xf]
      %v7354 = vld [vmem:[%s7344 + $0x24] sm:$0xf]
      %v7355 = vld [vmem:[%s7344 + $0x28] sm:$0xf]
      %v7356 = vld [vmem:[%s7344 + $0x2c] sm:$0xf]
      %v7357 = vld [vmem:[%s7344 + $0x30] sm:$0xf]
      %v7358 = vld [vmem:[%s7344 + $0x34] sm:$0xf]
      %v7359 = vld [vmem:[%s7344 + $0x38] sm:$0xf]
      %v7360 = vld [vmem:[%s7344 + $0x3c] sm:$0xf]
      %v7377 = vunpack.c.l.b16 %v7345
      %v7378 = vunpack.c.l.b16 %v7346
      %v7379 = vunpack.c.l.b16 %v7347
      %v7380 = vunpack.c.l.b16 %v7348
      %v7381 = vunpack.c.l.b16 %v7349
      %v7382 = vunpack.c.l.b16 %v7350
      %v7383 = vunpack.c.l.b16 %v7351
      %v7384 = vunpack.c.l.b16 %v7352
      %v7385 = vunpack.c.l.b16 %v7353
      %v7386 = vunpack.c.l.b16 %v7354
      %v7387 = vunpack.c.l.b16 %v7355
      %v7388 = vunpack.c.l.b16 %v7356
      %v7389 = vunpack.c.l.b16 %v7357
      %v7390 = vunpack.c.l.b16 %v7358
      %v7391 = vunpack.c.l.b16 %v7359
      %v7392 = vunpack.c.l.b16 %v7360
      %v7393 = vpack.c.b16 %v7378, %v7377
      %v7394 = vpack.c.b16 %v7380, %v7379
      %v7395 = vpack.c.b16 %v7382, %v7381
      %v7396 = vpack.c.b16 %v7384, %v7383
      %v7397 = vpack.c.b16 %v7386, %v7385
      %v7398 = vpack.c.b16 %v7388, %v7387
      %v7399 = vpack.c.b16 %v7390, %v7389
      %v7400 = vpack.c.b16 %v7392, %v7391
      %7409 = vmatpush.bf16.msra.mxu0 %v7400
      %7410 = vmatpush.bf16.msra.mxu0 %v7399
      %7411 = vmatpush.bf16.msra.mxu0 %v7398
      %7412 = vmatpush.bf16.msra.mxu0 %v7397
      %7413 = vmatpush.bf16.msra.mxu0 %v7396
      %7414 = vmatpush.bf16.msra.mxu0 %v7395
      %7415 = vmatpush.bf16.msra.mxu0 %v7394
      %7416 = vmatpush.bf16.msra.mxu0 %v7393
      %7417 = vmatmul.bf16.gmra.mxu0 %v4290
      %v7418 = vpop.f32.mrf.mxu0
      %v7419 = vadd.f32 0.0, %v7418
      %v7420 = vpop.f32.mrf.mxu0
      %v7421 = vadd.f32 0.0, %v7420
      %7422 = vmatmul.bf16.gmra.mxu0 %v4291
      %v7423 = vpop.f32.mrf.mxu0
      %v7424 = vadd.f32 0.0, %v7423
      %v7425 = vpop.f32.mrf.mxu0
      %v7426 = vadd.f32 0.0, %v7425
      %7427 = vmatmul.bf16.gmra.mxu0 %v4292
      %v7428 = vpop.f32.mrf.mxu0
      %v7429 = vadd.f32 0.0, %v7428
      %v7430 = vpop.f32.mrf.mxu0
      %v7431 = vadd.f32 0.0, %v7430
      %7432 = vmatmul.bf16.gmra.mxu0 %v4293
      %v7433 = vpop.f32.mrf.mxu0
      %v7434 = vadd.f32 0.0, %v7433
      %v7435 = vpop.f32.mrf.mxu0
      %v7436 = vadd.f32 0.0, %v7435
      %7437 = vmatmul.bf16.gmra.mxu0 %v4294
      %v7438 = vpop.f32.mrf.mxu0
      %v7439 = vadd.f32 0.0, %v7438
      %v7440 = vpop.f32.mrf.mxu0
      %v7441 = vadd.f32 0.0, %v7440
      %7442 = vmatmul.bf16.gmra.mxu0 %v4295
      %v7443 = vpop.f32.mrf.mxu0
      %v7444 = vadd.f32 0.0, %v7443
      %v7445 = vpop.f32.mrf.mxu0
      %v7446 = vadd.f32 0.0, %v7445
      %7447 = vmatmul.bf16.gmra.mxu0 %v4296
      %v7448 = vpop.f32.mrf.mxu0
      %v7449 = vadd.f32 0.0, %v7448
      %v7450 = vpop.f32.mrf.mxu0
      %v7451 = vadd.f32 0.0, %v7450
      %7452 = vmatmul.bf16.gmra.mxu0 %v4297
      %v7453 = vpop.f32.mrf.mxu0
      %v7454 = vadd.f32 0.0, %v7453
      %v7455 = vpop.f32.mrf.mxu0
      %v7456 = vadd.f32 0.0, %v7455
      %7457 = vmatmul.bf16.gmra.mxu0 %v4298
      %v7458 = vpop.f32.mrf.mxu0
      %v7459 = vadd.f32 0.0, %v7458
      %v7460 = vpop.f32.mrf.mxu0
      %v7461 = vadd.f32 0.0, %v7460
      %7462 = vmatmul.bf16.gmra.mxu0 %v4299
      %v7463 = vpop.f32.mrf.mxu0
      %v7464 = vadd.f32 0.0, %v7463
      %v7465 = vpop.f32.mrf.mxu0
      %v7466 = vadd.f32 0.0, %v7465
      %7467 = vmatmul.bf16.gmra.mxu0 %v4300
      %v7468 = vpop.f32.mrf.mxu0
      %v7469 = vadd.f32 0.0, %v7468
      %v7470 = vpop.f32.mrf.mxu0
      %v7471 = vadd.f32 0.0, %v7470
      %7472 = vmatmul.bf16.gmra.mxu0 %v4301
      %v7473 = vpop.f32.mrf.mxu0
      %v7474 = vadd.f32 0.0, %v7473
      %v7475 = vpop.f32.mrf.mxu0
      %v7476 = vadd.f32 0.0, %v7475
      %7477 = vmatmul.bf16.gmra.mxu0 %v4302
      %v7478 = vpop.f32.mrf.mxu0
      %v7479 = vadd.f32 0.0, %v7478
      %v7480 = vpop.f32.mrf.mxu0
      %v7481 = vadd.f32 0.0, %v7480
      %7482 = vmatmul.bf16.gmra.mxu0 %v4303
      %v7483 = vpop.f32.mrf.mxu0
      %v7484 = vadd.f32 0.0, %v7483
      %v7485 = vpop.f32.mrf.mxu0
      %v7486 = vadd.f32 0.0, %v7485
      %7487 = vmatmul.bf16.gmra.mxu0 %v4304
      %v7488 = vpop.f32.mrf.mxu0
      %v7489 = vadd.f32 0.0, %v7488
      %v7490 = vpop.f32.mrf.mxu0
      %v7491 = vadd.f32 0.0, %v7490
      %7492 = vmatmul.bf16.gmra.mxu0 %v4305
      %v7493 = vpop.f32.mrf.mxu0
      %v7494 = vadd.f32 0.0, %v7493
      %v7495 = vpop.f32.mrf.mxu0
      %v7496 = vadd.f32 0.0, %v7495
      %7497 = vmatmul.bf16.gmra.mxu0 %v4306
      %v7498 = vpop.f32.mrf.mxu0
      %v7499 = vadd.f32 0.0, %v7498
      %v7500 = vpop.f32.mrf.mxu0
      %v7501 = vadd.f32 0.0, %v7500
      %7502 = vmatmul.bf16.gmra.mxu0 %v4307
      %v7503 = vpop.f32.mrf.mxu0
      %v7504 = vadd.f32 0.0, %v7503
      %v7505 = vpop.f32.mrf.mxu0
      %v7506 = vadd.f32 0.0, %v7505
      %7507 = vmatmul.bf16.gmra.mxu0 %v4308
      %v7508 = vpop.f32.mrf.mxu0
      %v7509 = vadd.f32 0.0, %v7508
      %v7510 = vpop.f32.mrf.mxu0
      %v7511 = vadd.f32 0.0, %v7510
      %7512 = vmatmul.bf16.gmra.mxu0 %v4309
      %v7513 = vpop.f32.mrf.mxu0
      %v7514 = vadd.f32 0.0, %v7513
      %v7515 = vpop.f32.mrf.mxu0
      %v7516 = vadd.f32 0.0, %v7515
      %7517 = vmatmul.bf16.gmra.mxu0 %v4310
      %v7518 = vpop.f32.mrf.mxu0
      %v7519 = vadd.f32 0.0, %v7518
      %v7520 = vpop.f32.mrf.mxu0
      %v7521 = vadd.f32 0.0, %v7520
      %7522 = vmatmul.bf16.gmra.mxu0 %v4311
      %v7523 = vpop.f32.mrf.mxu0
      %v7524 = vadd.f32 0.0, %v7523
      %v7525 = vpop.f32.mrf.mxu0
      %v7526 = vadd.f32 0.0, %v7525
      %7527 = vmatmul.bf16.gmra.mxu0 %v4312
      %v7528 = vpop.f32.mrf.mxu0
      %v7529 = vadd.f32 0.0, %v7528
      %v7530 = vpop.f32.mrf.mxu0
      %v7531 = vadd.f32 0.0, %v7530
      %7532 = vmatmul.bf16.gmra.mxu0 %v4313
      %v7533 = vpop.f32.mrf.mxu0
      %v7534 = vadd.f32 0.0, %v7533
      %v7535 = vpop.f32.mrf.mxu0
      %v7536 = vadd.f32 0.0, %v7535
      %7537 = vmatmul.bf16.gmra.mxu0 %v4314
      %v7538 = vpop.f32.mrf.mxu0
      %v7539 = vadd.f32 0.0, %v7538
      %v7540 = vpop.f32.mrf.mxu0
      %v7541 = vadd.f32 0.0, %v7540
      %7542 = vmatmul.bf16.gmra.mxu0 %v4315
      %v7543 = vpop.f32.mrf.mxu0
      %v7544 = vadd.f32 0.0, %v7543
      %v7545 = vpop.f32.mrf.mxu0
      %v7546 = vadd.f32 0.0, %v7545
      %7547 = vmatmul.bf16.gmra.mxu0 %v4316
      %v7548 = vpop.f32.mrf.mxu0
      %v7549 = vadd.f32 0.0, %v7548
      %v7550 = vpop.f32.mrf.mxu0
      %v7551 = vadd.f32 0.0, %v7550
      %7552 = vmatmul.bf16.gmra.mxu0 %v4317
      %v7553 = vpop.f32.mrf.mxu0
      %v7554 = vadd.f32 0.0, %v7553
      %v7555 = vpop.f32.mrf.mxu0
      %v7556 = vadd.f32 0.0, %v7555
      %7557 = vmatmul.bf16.gmra.mxu0 %v7340
      %v7558 = vpop.f32.mrf.mxu0
      %v7559 = vadd.f32 0.0, %v7558
      %v7560 = vpop.f32.mrf.mxu0
      %v7561 = vadd.f32 0.0, %v7560
      %7562 = vmatmul.bf16.gmra.mxu0 %v7341
      %v7563 = vpop.f32.mrf.mxu0
      %v7564 = vadd.f32 0.0, %v7563
      %v7565 = vpop.f32.mrf.mxu0
      %v7566 = vadd.f32 0.0, %v7565
      %7567 = vmatmul.bf16.gmra.mxu0 %v7342
      %v7568 = vpop.f32.mrf.mxu0
      %v7569 = vadd.f32 0.0, %v7568
      %v7570 = vpop.f32.mrf.mxu0
      %v7571 = vadd.f32 0.0, %v7570
      %7572 = vmatmul.bf16.gmra.mxu0 %v7343
      %v7573 = vpop.f32.mrf.mxu0
      %v7574 = vadd.f32 0.0, %v7573
      %v7575 = vpop.f32.mrf.mxu0
      %v7576 = vadd.f32 0.0, %v7575
      %7577 = vdwg.mxu0
      %v7578 = vadd.f32 %v7276, %v7419
      %v7579 = vadd.f32 %v7277, %v7421
      %v7580 = vadd.f32 %v7278, %v7424
      %v7581 = vadd.f32 %v7279, %v7426
      %v7582 = vadd.f32 %v7280, %v7429
      %v7583 = vadd.f32 %v7281, %v7431
      %v7584 = vadd.f32 %v7282, %v7434
      %v7585 = vadd.f32 %v7283, %v7436
      %v7586 = vadd.f32 %v7284, %v7439
      %v7587 = vadd.f32 %v7285, %v7441
      %v7588 = vadd.f32 %v7286, %v7444
      %v7589 = vadd.f32 %v7287, %v7446
      %v7590 = vadd.f32 %v7288, %v7449
      %v7591 = vadd.f32 %v7289, %v7451
      %v7592 = vadd.f32 %v7290, %v7454
      %v7593 = vadd.f32 %v7291, %v7456
      %v7594 = vadd.f32 %v7292, %v7459
      %v7595 = vadd.f32 %v7293, %v7461
      %v7596 = vadd.f32 %v7294, %v7464
      %v7597 = vadd.f32 %v7295, %v7466
      %v7598 = vadd.f32 %v7296, %v7469
      %v7599 = vadd.f32 %v7297, %v7471
      %v7600 = vadd.f32 %v7298, %v7474
      %v7601 = vadd.f32 %v7299, %v7476
      %v7602 = vadd.f32 %v7300, %v7479
      %v7603 = vadd.f32 %v7301, %v7481
      %v7604 = vadd.f32 %v7302, %v7484
      %v7605 = vadd.f32 %v7303, %v7486
      %v7606 = vadd.f32 %v7304, %v7489
      %v7607 = vadd.f32 %v7305, %v7491
      %v7608 = vadd.f32 %v7306, %v7494
      %v7609 = vadd.f32 %v7307, %v7496
      %v7610 = vadd.f32 %v7308, %v7499
      %v7611 = vadd.f32 %v7309, %v7501
      %v7612 = vadd.f32 %v7310, %v7504
      %v7613 = vadd.f32 %v7311, %v7506
      %v7614 = vadd.f32 %v7312, %v7509
      %v7615 = vadd.f32 %v7313, %v7511
      %v7616 = vadd.f32 %v7314, %v7514
      %v7617 = vadd.f32 %v7315, %v7516
      %v7618 = vadd.f32 %v7316, %v7519
      %v7619 = vadd.f32 %v7317, %v7521
      %v7620 = vadd.f32 %v7318, %v7524
      %v7621 = vadd.f32 %v7319, %v7526
      %v7622 = vadd.f32 %v7320, %v7529
      %v7623 = vadd.f32 %v7321, %v7531
      %v7624 = vadd.f32 %v7322, %v7534
      %v7625 = vadd.f32 %v7323, %v7536
      %v7626 = vadd.f32 %v7324, %v7539
      %v7627 = vadd.f32 %v7325, %v7541
      %v7628 = vadd.f32 %v7326, %v7544
      %v7629 = vadd.f32 %v7327, %v7546
      %v7630 = vadd.f32 %v7328, %v7549
      %v7631 = vadd.f32 %v7329, %v7551
      %v7632 = vadd.f32 %v7330, %v7554
      %v7633 = vadd.f32 %v7331, %v7556
      %v7634 = vadd.f32 %v7332, %v7559
      %v7635 = vadd.f32 %v7333, %v7561
      %v7636 = vadd.f32 %v7334, %v7564
      %v7637 = vadd.f32 %v7335, %v7566
      %v7638 = vadd.f32 %v7336, %v7569
      %v7639 = vadd.f32 %v7337, %v7571
      %v7640 = vadd.f32 %v7338, %v7574
      %v7641 = vadd.f32 %v7339, %v7576
      %v7644 = vrot.slane %v2759, 1
      %v7645 = vrot.slane %v2760, 1
      %v7646 = vsel %vm2959, %v7644, %v7645
      %v7648 = vpack.c.bf16 %v6680, %v6677
      %v7649 = vpack.c.bf16 %v6686, %v6683
      %v7650 = vpack.c.bf16 %v6692, %v6689
      %v7651 = vpack.c.bf16 %v7646, %v6695
      %s7652 = scalar_lea.vmem %s4, 832
      %v7653 = vld [vmem:[%s7652] sm:$0xf]
      %v7654 = vld [vmem:[%s7652 + $0x4] sm:$0xf]
      %v7655 = vld [vmem:[%s7652 + $0x8] sm:$0xf]
      %v7656 = vld [vmem:[%s7652 + $0xc] sm:$0xf]
      %v7657 = vld [vmem:[%s7652 + $0x10] sm:$0xf]
      %v7658 = vld [vmem:[%s7652 + $0x14] sm:$0xf]
      %v7659 = vld [vmem:[%s7652 + $0x18] sm:$0xf]
      %v7660 = vld [vmem:[%s7652 + $0x1c] sm:$0xf]
      %v7661 = vld [vmem:[%s7652 + $0x20] sm:$0xf]
      %v7662 = vld [vmem:[%s7652 + $0x24] sm:$0xf]
      %v7663 = vld [vmem:[%s7652 + $0x28] sm:$0xf]
      %v7664 = vld [vmem:[%s7652 + $0x2c] sm:$0xf]
      %v7665 = vld [vmem:[%s7652 + $0x30] sm:$0xf]
      %v7666 = vld [vmem:[%s7652 + $0x34] sm:$0xf]
      %v7667 = vld [vmem:[%s7652 + $0x38] sm:$0xf]
      %v7668 = vld [vmem:[%s7652 + $0x3c] sm:$0xf]
      %v7685 = vunpack.c.l.b16 %v7653
      %v7686 = vunpack.c.l.b16 %v7654
      %v7687 = vunpack.c.l.b16 %v7655
      %v7688 = vunpack.c.l.b16 %v7656
      %v7689 = vunpack.c.l.b16 %v7657
      %v7690 = vunpack.c.l.b16 %v7658
      %v7691 = vunpack.c.l.b16 %v7659
      %v7692 = vunpack.c.l.b16 %v7660
      %v7693 = vunpack.c.l.b16 %v7661
      %v7694 = vunpack.c.l.b16 %v7662
      %v7695 = vunpack.c.l.b16 %v7663
      %v7696 = vunpack.c.l.b16 %v7664
      %v7697 = vunpack.c.l.b16 %v7665
      %v7698 = vunpack.c.l.b16 %v7666
      %v7699 = vunpack.c.l.b16 %v7667
      %v7700 = vunpack.c.l.b16 %v7668
      %v7701 = vpack.c.b16 %v7686, %v7685
      %v7702 = vpack.c.b16 %v7688, %v7687
      %v7703 = vpack.c.b16 %v7690, %v7689
      %v7704 = vpack.c.b16 %v7692, %v7691
      %v7705 = vpack.c.b16 %v7694, %v7693
      %v7706 = vpack.c.b16 %v7696, %v7695
      %v7707 = vpack.c.b16 %v7698, %v7697
      %v7708 = vpack.c.b16 %v7700, %v7699
      %7717 = vmatpush.bf16.msra.mxu0 %v7708
      %7718 = vmatpush.bf16.msra.mxu0 %v7707
      %7719 = vmatpush.bf16.msra.mxu0 %v7706
      %7720 = vmatpush.bf16.msra.mxu0 %v7705
      %7721 = vmatpush.bf16.msra.mxu0 %v7704
      %7722 = vmatpush.bf16.msra.mxu0 %v7703
      %7723 = vmatpush.bf16.msra.mxu0 %v7702
      %7724 = vmatpush.bf16.msra.mxu0 %v7701
      %7725 = vmatmul.bf16.gmra.mxu0 %v4668
      %v7726 = vpop.f32.mrf.mxu0
      %v7727 = vadd.f32 0.0, %v7726
      %v7728 = vpop.f32.mrf.mxu0
      %v7729 = vadd.f32 0.0, %v7728
      %7730 = vmatmul.bf16.gmra.mxu0 %v4669
      %v7731 = vpop.f32.mrf.mxu0
      %v7732 = vadd.f32 0.0, %v7731
      %v7733 = vpop.f32.mrf.mxu0
      %v7734 = vadd.f32 0.0, %v7733
      %7735 = vmatmul.bf16.gmra.mxu0 %v4670
      %v7736 = vpop.f32.mrf.mxu0
      %v7737 = vadd.f32 0.0, %v7736
      %v7738 = vpop.f32.mrf.mxu0
      %v7739 = vadd.f32 0.0, %v7738
      %7740 = vmatmul.bf16.gmra.mxu0 %v4671
      %v7741 = vpop.f32.mrf.mxu0
      %v7742 = vadd.f32 0.0, %v7741
      %v7743 = vpop.f32.mrf.mxu0
      %v7744 = vadd.f32 0.0, %v7743
      %7745 = vmatmul.bf16.gmra.mxu0 %v4672
      %v7746 = vpop.f32.mrf.mxu0
      %v7747 = vadd.f32 0.0, %v7746
      %v7748 = vpop.f32.mrf.mxu0
      %v7749 = vadd.f32 0.0, %v7748
      %7750 = vmatmul.bf16.gmra.mxu0 %v4673
      %v7751 = vpop.f32.mrf.mxu0
      %v7752 = vadd.f32 0.0, %v7751
      %v7753 = vpop.f32.mrf.mxu0
      %v7754 = vadd.f32 0.0, %v7753
      %7755 = vmatmul.bf16.gmra.mxu0 %v4674
      %v7756 = vpop.f32.mrf.mxu0
      %v7757 = vadd.f32 0.0, %v7756
      %v7758 = vpop.f32.mrf.mxu0
      %v7759 = vadd.f32 0.0, %v7758
      %7760 = vmatmul.bf16.gmra.mxu0 %v4675
      %v7761 = vpop.f32.mrf.mxu0
      %v7762 = vadd.f32 0.0, %v7761
      %v7763 = vpop.f32.mrf.mxu0
      %v7764 = vadd.f32 0.0, %v7763
      %7765 = vmatmul.bf16.gmra.mxu0 %v4676
      %v7766 = vpop.f32.mrf.mxu0
      %v7767 = vadd.f32 0.0, %v7766
      %v7768 = vpop.f32.mrf.mxu0
      %v7769 = vadd.f32 0.0, %v7768
      %7770 = vmatmul.bf16.gmra.mxu0 %v4677
      %v7771 = vpop.f32.mrf.mxu0
      %v7772 = vadd.f32 0.0, %v7771
      %v7773 = vpop.f32.mrf.mxu0
      %v7774 = vadd.f32 0.0, %v7773
      %7775 = vmatmul.bf16.gmra.mxu0 %v4678
      %v7776 = vpop.f32.mrf.mxu0
      %v7777 = vadd.f32 0.0, %v7776
      %v7778 = vpop.f32.mrf.mxu0
      %v7779 = vadd.f32 0.0, %v7778
      %7780 = vmatmul.bf16.gmra.mxu0 %v4679
      %v7781 = vpop.f32.mrf.mxu0
      %v7782 = vadd.f32 0.0, %v7781
      %v7783 = vpop.f32.mrf.mxu0
      %v7784 = vadd.f32 0.0, %v7783
      %7785 = vmatmul.bf16.gmra.mxu0 %v4680
      %v7786 = vpop.f32.mrf.mxu0
      %v7787 = vadd.f32 0.0, %v7786
      %v7788 = vpop.f32.mrf.mxu0
      %v7789 = vadd.f32 0.0, %v7788
      %7790 = vmatmul.bf16.gmra.mxu0 %v4681
      %v7791 = vpop.f32.mrf.mxu0
      %v7792 = vadd.f32 0.0, %v7791
      %v7793 = vpop.f32.mrf.mxu0
      %v7794 = vadd.f32 0.0, %v7793
      %7795 = vmatmul.bf16.gmra.mxu0 %v4682
      %v7796 = vpop.f32.mrf.mxu0
      %v7797 = vadd.f32 0.0, %v7796
      %v7798 = vpop.f32.mrf.mxu0
      %v7799 = vadd.f32 0.0, %v7798
      %7800 = vmatmul.bf16.gmra.mxu0 %v4683
      %v7801 = vpop.f32.mrf.mxu0
      %v7802 = vadd.f32 0.0, %v7801
      %v7803 = vpop.f32.mrf.mxu0
      %v7804 = vadd.f32 0.0, %v7803
      %7805 = vmatmul.bf16.gmra.mxu0 %v4684
      %v7806 = vpop.f32.mrf.mxu0
      %v7807 = vadd.f32 0.0, %v7806
      %v7808 = vpop.f32.mrf.mxu0
      %v7809 = vadd.f32 0.0, %v7808
      %7810 = vmatmul.bf16.gmra.mxu0 %v4685
      %v7811 = vpop.f32.mrf.mxu0
      %v7812 = vadd.f32 0.0, %v7811
      %v7813 = vpop.f32.mrf.mxu0
      %v7814 = vadd.f32 0.0, %v7813
      %7815 = vmatmul.bf16.gmra.mxu0 %v4686
      %v7816 = vpop.f32.mrf.mxu0
      %v7817 = vadd.f32 0.0, %v7816
      %v7818 = vpop.f32.mrf.mxu0
      %v7819 = vadd.f32 0.0, %v7818
      %7820 = vmatmul.bf16.gmra.mxu0 %v4687
      %v7821 = vpop.f32.mrf.mxu0
      %v7822 = vadd.f32 0.0, %v7821
      %v7823 = vpop.f32.mrf.mxu0
      %v7824 = vadd.f32 0.0, %v7823
      %7825 = vmatmul.bf16.gmra.mxu0 %v4688
      %v7826 = vpop.f32.mrf.mxu0
      %v7827 = vadd.f32 0.0, %v7826
      %v7828 = vpop.f32.mrf.mxu0
      %v7829 = vadd.f32 0.0, %v7828
      %7830 = vmatmul.bf16.gmra.mxu0 %v4689
      %v7831 = vpop.f32.mrf.mxu0
      %v7832 = vadd.f32 0.0, %v7831
      %v7833 = vpop.f32.mrf.mxu0
      %v7834 = vadd.f32 0.0, %v7833
      %7835 = vmatmul.bf16.gmra.mxu0 %v4690
      %v7836 = vpop.f32.mrf.mxu0
      %v7837 = vadd.f32 0.0, %v7836
      %v7838 = vpop.f32.mrf.mxu0
      %v7839 = vadd.f32 0.0, %v7838
      %7840 = vmatmul.bf16.gmra.mxu0 %v4691
      %v7841 = vpop.f32.mrf.mxu0
      %v7842 = vadd.f32 0.0, %v7841
      %v7843 = vpop.f32.mrf.mxu0
      %v7844 = vadd.f32 0.0, %v7843
      %7845 = vmatmul.bf16.gmra.mxu0 %v4692
      %v7846 = vpop.f32.mrf.mxu0
      %v7847 = vadd.f32 0.0, %v7846
      %v7848 = vpop.f32.mrf.mxu0
      %v7849 = vadd.f32 0.0, %v7848
      %7850 = vmatmul.bf16.gmra.mxu0 %v4693
      %v7851 = vpop.f32.mrf.mxu0
      %v7852 = vadd.f32 0.0, %v7851
      %v7853 = vpop.f32.mrf.mxu0
      %v7854 = vadd.f32 0.0, %v7853
      %7855 = vmatmul.bf16.gmra.mxu0 %v4694
      %v7856 = vpop.f32.mrf.mxu0
      %v7857 = vadd.f32 0.0, %v7856
      %v7858 = vpop.f32.mrf.mxu0
      %v7859 = vadd.f32 0.0, %v7858
      %7860 = vmatmul.bf16.gmra.mxu0 %v4695
      %v7861 = vpop.f32.mrf.mxu0
      %v7862 = vadd.f32 0.0, %v7861
      %v7863 = vpop.f32.mrf.mxu0
      %v7864 = vadd.f32 0.0, %v7863
      %7865 = vmatmul.bf16.gmra.mxu0 %v7648
      %v7866 = vpop.f32.mrf.mxu0
      %v7867 = vadd.f32 0.0, %v7866
      %v7868 = vpop.f32.mrf.mxu0
      %v7869 = vadd.f32 0.0, %v7868
      %7870 = vmatmul.bf16.gmra.mxu0 %v7649
      %v7871 = vpop.f32.mrf.mxu0
      %v7872 = vadd.f32 0.0, %v7871
      %v7873 = vpop.f32.mrf.mxu0
      %v7874 = vadd.f32 0.0, %v7873
      %7875 = vmatmul.bf16.gmra.mxu0 %v7650
      %v7876 = vpop.f32.mrf.mxu0
      %v7877 = vadd.f32 0.0, %v7876
      %v7878 = vpop.f32.mrf.mxu0
      %v7879 = vadd.f32 0.0, %v7878
      %7880 = vmatmul.bf16.gmra.mxu0 %v7651
      %v7881 = vpop.f32.mrf.mxu0
      %v7882 = vadd.f32 0.0, %v7881
      %v7883 = vpop.f32.mrf.mxu0
      %v7884 = vadd.f32 0.0, %v7883
      %7885 = vdwg.mxu0
      %v7886 = vadd.f32 %v7578, %v7727
      %v7887 = vadd.f32 %v7579, %v7729
      %v7888 = vadd.f32 %v7580, %v7732
      %v7889 = vadd.f32 %v7581, %v7734
      %v7890 = vadd.f32 %v7582, %v7737
      %v7891 = vadd.f32 %v7583, %v7739
      %v7892 = vadd.f32 %v7584, %v7742
      %v7893 = vadd.f32 %v7585, %v7744
      %v7894 = vadd.f32 %v7586, %v7747
      %v7895 = vadd.f32 %v7587, %v7749
      %v7896 = vadd.f32 %v7588, %v7752
      %v7897 = vadd.f32 %v7589, %v7754
      %v7898 = vadd.f32 %v7590, %v7757
      %v7899 = vadd.f32 %v7591, %v7759
      %v7900 = vadd.f32 %v7592, %v7762
      %v7901 = vadd.f32 %v7593, %v7764
      %v7902 = vadd.f32 %v7594, %v7767
      %v7903 = vadd.f32 %v7595, %v7769
      %v7904 = vadd.f32 %v7596, %v7772
      %v7905 = vadd.f32 %v7597, %v7774
      %v7906 = vadd.f32 %v7598, %v7777
      %v7907 = vadd.f32 %v7599, %v7779
      %v7908 = vadd.f32 %v7600, %v7782
      %v7909 = vadd.f32 %v7601, %v7784
      %v7910 = vadd.f32 %v7602, %v7787
      %v7911 = vadd.f32 %v7603, %v7789
      %v7912 = vadd.f32 %v7604, %v7792
      %v7913 = vadd.f32 %v7605, %v7794
      %v7914 = vadd.f32 %v7606, %v7797
      %v7915 = vadd.f32 %v7607, %v7799
      %v7916 = vadd.f32 %v7608, %v7802
      %v7917 = vadd.f32 %v7609, %v7804
      %v7918 = vadd.f32 %v7610, %v7807
      %v7919 = vadd.f32 %v7611, %v7809
      %v7920 = vadd.f32 %v7612, %v7812
      %v7921 = vadd.f32 %v7613, %v7814
      %v7922 = vadd.f32 %v7614, %v7817
      %v7923 = vadd.f32 %v7615, %v7819
      %v7924 = vadd.f32 %v7616, %v7822
      %v7925 = vadd.f32 %v7617, %v7824
      %v7926 = vadd.f32 %v7618, %v7827
      %v7927 = vadd.f32 %v7619, %v7829
      %v7928 = vadd.f32 %v7620, %v7832
      %v7929 = vadd.f32 %v7621, %v7834
      %v7930 = vadd.f32 %v7622, %v7837
      %v7931 = vadd.f32 %v7623, %v7839
      %v7932 = vadd.f32 %v7624, %v7842
      %v7933 = vadd.f32 %v7625, %v7844
      %v7934 = vadd.f32 %v7626, %v7847
      %v7935 = vadd.f32 %v7627, %v7849
      %v7936 = vadd.f32 %v7628, %v7852
      %v7937 = vadd.f32 %v7629, %v7854
      %v7938 = vadd.f32 %v7630, %v7857
      %v7939 = vadd.f32 %v7631, %v7859
      %v7940 = vadd.f32 %v7632, %v7862
      %v7941 = vadd.f32 %v7633, %v7864
      %v7942 = vadd.f32 %v7634, %v7867
      %v7943 = vadd.f32 %v7635, %v7869
      %v7944 = vadd.f32 %v7636, %v7872
      %v7945 = vadd.f32 %v7637, %v7874
      %v7946 = vadd.f32 %v7638, %v7877
      %v7947 = vadd.f32 %v7639, %v7879
      %v7948 = vadd.f32 %v7640, %v7882
      %v7949 = vadd.f32 %v7641, %v7884
      %v7950 = vrot.slane %v2759, 2
      %v7951 = vrot.slane %v2760, 2
      %v7952 = vsel %vm3699, %v7950, %v7951
      %v7954 = vpack.c.bf16 %v7014, %v7011
      %v7955 = vpack.c.bf16 %v7020, %v7017
      %v7956 = vpack.c.bf16 %v7026, %v7023
      %v7957 = vpack.c.bf16 %v7952, %v7029
      %s7958 = scalar_lea.vmem %s4, 896
      %v7959 = vld [vmem:[%s7958] sm:$0xf]
      %v7960 = vld [vmem:[%s7958 + $0x4] sm:$0xf]
      %v7961 = vld [vmem:[%s7958 + $0x8] sm:$0xf]
      %v7962 = vld [vmem:[%s7958 + $0xc] sm:$0xf]
      %v7963 = vld [vmem:[%s7958 + $0x10] sm:$0xf]
      %v7964 = vld [vmem:[%s7958 + $0x14] sm:$0xf]
      %v7965 = vld [vmem:[%s7958 + $0x18] sm:$0xf]
      %v7966 = vld [vmem:[%s7958 + $0x1c] sm:$0xf]
      %v7967 = vld [vmem:[%s7958 + $0x20] sm:$0xf]
      %v7968 = vld [vmem:[%s7958 + $0x24] sm:$0xf]
      %v7969 = vld [vmem:[%s7958 + $0x28] sm:$0xf]
      %v7970 = vld [vmem:[%s7958 + $0x2c] sm:$0xf]
      %v7971 = vld [vmem:[%s7958 + $0x30] sm:$0xf]
      %v7972 = vld [vmem:[%s7958 + $0x34] sm:$0xf]
      %v7973 = vld [vmem:[%s7958 + $0x38] sm:$0xf]
      %v7974 = vld [vmem:[%s7958 + $0x3c] sm:$0xf]
      %v7991 = vunpack.c.l.b16 %v7959
      %v7992 = vunpack.c.l.b16 %v7960
      %v7993 = vunpack.c.l.b16 %v7961
      %v7994 = vunpack.c.l.b16 %v7962
      %v7995 = vunpack.c.l.b16 %v7963
      %v7996 = vunpack.c.l.b16 %v7964
      %v7997 = vunpack.c.l.b16 %v7965
      %v7998 = vunpack.c.l.b16 %v7966
      %v7999 = vunpack.c.l.b16 %v7967
      %v8000 = vunpack.c.l.b16 %v7968
      %v8001 = vunpack.c.l.b16 %v7969
      %v8002 = vunpack.c.l.b16 %v7970
      %v8003 = vunpack.c.l.b16 %v7971
      %v8004 = vunpack.c.l.b16 %v7972
      %v8005 = vunpack.c.l.b16 %v7973
      %v8006 = vunpack.c.l.b16 %v7974
      %v8007 = vpack.c.b16 %v7992, %v7991
      %v8008 = vpack.c.b16 %v7994, %v7993
      %v8009 = vpack.c.b16 %v7996, %v7995
      %v8010 = vpack.c.b16 %v7998, %v7997
      %v8011 = vpack.c.b16 %v8000, %v7999
      %v8012 = vpack.c.b16 %v8002, %v8001
      %v8013 = vpack.c.b16 %v8004, %v8003
      %v8014 = vpack.c.b16 %v8006, %v8005
      %8023 = vmatpush.bf16.msra.mxu0 %v8014
      %8024 = vmatpush.bf16.msra.mxu0 %v8013
      %8025 = vmatpush.bf16.msra.mxu0 %v8012
      %8026 = vmatpush.bf16.msra.mxu0 %v8011
      %8027 = vmatpush.bf16.msra.mxu0 %v8010
      %8028 = vmatpush.bf16.msra.mxu0 %v8009
      %8029 = vmatpush.bf16.msra.mxu0 %v8008
      %8030 = vmatpush.bf16.msra.mxu0 %v8007
      %8031 = vmatmul.bf16.gmra.mxu0 %v5030
      %v8032 = vpop.f32.mrf.mxu0
      %v8033 = vadd.f32 0.0, %v8032
      %v8034 = vpop.f32.mrf.mxu0
      %v8035 = vadd.f32 0.0, %v8034
      %8036 = vmatmul.bf16.gmra.mxu0 %v5031
      %v8037 = vpop.f32.mrf.mxu0
      %v8038 = vadd.f32 0.0, %v8037
      %v8039 = vpop.f32.mrf.mxu0
      %v8040 = vadd.f32 0.0, %v8039
      %8041 = vmatmul.bf16.gmra.mxu0 %v5032
      %v8042 = vpop.f32.mrf.mxu0
      %v8043 = vadd.f32 0.0, %v8042
      %v8044 = vpop.f32.mrf.mxu0
      %v8045 = vadd.f32 0.0, %v8044
      %8046 = vmatmul.bf16.gmra.mxu0 %v5033
      %v8047 = vpop.f32.mrf.mxu0
      %v8048 = vadd.f32 0.0, %v8047
      %v8049 = vpop.f32.mrf.mxu0
      %v8050 = vadd.f32 0.0, %v8049
      %8051 = vmatmul.bf16.gmra.mxu0 %v5034
      %v8052 = vpop.f32.mrf.mxu0
      %v8053 = vadd.f32 0.0, %v8052
      %v8054 = vpop.f32.mrf.mxu0
      %v8055 = vadd.f32 0.0, %v8054
      %8056 = vmatmul.bf16.gmra.mxu0 %v5035
      %v8057 = vpop.f32.mrf.mxu0
      %v8058 = vadd.f32 0.0, %v8057
      %v8059 = vpop.f32.mrf.mxu0
      %v8060 = vadd.f32 0.0, %v8059
      %8061 = vmatmul.bf16.gmra.mxu0 %v5036
      %v8062 = vpop.f32.mrf.mxu0
      %v8063 = vadd.f32 0.0, %v8062
      %v8064 = vpop.f32.mrf.mxu0
      %v8065 = vadd.f32 0.0, %v8064
      %8066 = vmatmul.bf16.gmra.mxu0 %v5037
      %v8067 = vpop.f32.mrf.mxu0
      %v8068 = vadd.f32 0.0, %v8067
      %v8069 = vpop.f32.mrf.mxu0
      %v8070 = vadd.f32 0.0, %v8069
      %8071 = vmatmul.bf16.gmra.mxu0 %v5038
      %v8072 = vpop.f32.mrf.mxu0
      %v8073 = vadd.f32 0.0, %v8072
      %v8074 = vpop.f32.mrf.mxu0
      %v8075 = vadd.f32 0.0, %v8074
      %8076 = vmatmul.bf16.gmra.mxu0 %v5039
      %v8077 = vpop.f32.mrf.mxu0
      %v8078 = vadd.f32 0.0, %v8077
      %v8079 = vpop.f32.mrf.mxu0
      %v8080 = vadd.f32 0.0, %v8079
      %8081 = vmatmul.bf16.gmra.mxu0 %v5040
      %v8082 = vpop.f32.mrf.mxu0
      %v8083 = vadd.f32 0.0, %v8082
      %v8084 = vpop.f32.mrf.mxu0
      %v8085 = vadd.f32 0.0, %v8084
      %8086 = vmatmul.bf16.gmra.mxu0 %v5041
      %v8087 = vpop.f32.mrf.mxu0
      %v8088 = vadd.f32 0.0, %v8087
      %v8089 = vpop.f32.mrf.mxu0
      %v8090 = vadd.f32 0.0, %v8089
      %8091 = vmatmul.bf16.gmra.mxu0 %v5042
      %v8092 = vpop.f32.mrf.mxu0
      %v8093 = vadd.f32 0.0, %v8092
      %v8094 = vpop.f32.mrf.mxu0
      %v8095 = vadd.f32 0.0, %v8094
      %8096 = vmatmul.bf16.gmra.mxu0 %v5043
      %v8097 = vpop.f32.mrf.mxu0
      %v8098 = vadd.f32 0.0, %v8097
      %v8099 = vpop.f32.mrf.mxu0
      %v8100 = vadd.f32 0.0, %v8099
      %8101 = vmatmul.bf16.gmra.mxu0 %v5044
      %v8102 = vpop.f32.mrf.mxu0
      %v8103 = vadd.f32 0.0, %v8102
      %v8104 = vpop.f32.mrf.mxu0
      %v8105 = vadd.f32 0.0, %v8104
      %8106 = vmatmul.bf16.gmra.mxu0 %v5045
      %v8107 = vpop.f32.mrf.mxu0
      %v8108 = vadd.f32 0.0, %v8107
      %v8109 = vpop.f32.mrf.mxu0
      %v8110 = vadd.f32 0.0, %v8109
      %8111 = vmatmul.bf16.gmra.mxu0 %v5046
      %v8112 = vpop.f32.mrf.mxu0
      %v8113 = vadd.f32 0.0, %v8112
      %v8114 = vpop.f32.mrf.mxu0
      %v8115 = vadd.f32 0.0, %v8114
      %8116 = vmatmul.bf16.gmra.mxu0 %v5047
      %v8117 = vpop.f32.mrf.mxu0
      %v8118 = vadd.f32 0.0, %v8117
      %v8119 = vpop.f32.mrf.mxu0
      %v8120 = vadd.f32 0.0, %v8119
      %8121 = vmatmul.bf16.gmra.mxu0 %v5048
      %v8122 = vpop.f32.mrf.mxu0
      %v8123 = vadd.f32 0.0, %v8122
      %v8124 = vpop.f32.mrf.mxu0
      %v8125 = vadd.f32 0.0, %v8124
      %8126 = vmatmul.bf16.gmra.mxu0 %v5049
      %v8127 = vpop.f32.mrf.mxu0
      %v8128 = vadd.f32 0.0, %v8127
      %v8129 = vpop.f32.mrf.mxu0
      %v8130 = vadd.f32 0.0, %v8129
      %8131 = vmatmul.bf16.gmra.mxu0 %v5050
      %v8132 = vpop.f32.mrf.mxu0
      %v8133 = vadd.f32 0.0, %v8132
      %v8134 = vpop.f32.mrf.mxu0
      %v8135 = vadd.f32 0.0, %v8134
      %8136 = vmatmul.bf16.gmra.mxu0 %v5051
      %v8137 = vpop.f32.mrf.mxu0
      %v8138 = vadd.f32 0.0, %v8137
      %v8139 = vpop.f32.mrf.mxu0
      %v8140 = vadd.f32 0.0, %v8139
      %8141 = vmatmul.bf16.gmra.mxu0 %v5052
      %v8142 = vpop.f32.mrf.mxu0
      %v8143 = vadd.f32 0.0, %v8142
      %v8144 = vpop.f32.mrf.mxu0
      %v8145 = vadd.f32 0.0, %v8144
      %8146 = vmatmul.bf16.gmra.mxu0 %v5053
      %v8147 = vpop.f32.mrf.mxu0
      %v8148 = vadd.f32 0.0, %v8147
      %v8149 = vpop.f32.mrf.mxu0
      %v8150 = vadd.f32 0.0, %v8149
      %8151 = vmatmul.bf16.gmra.mxu0 %v5054
      %v8152 = vpop.f32.mrf.mxu0
      %v8153 = vadd.f32 0.0, %v8152
      %v8154 = vpop.f32.mrf.mxu0
      %v8155 = vadd.f32 0.0, %v8154
      %8156 = vmatmul.bf16.gmra.mxu0 %v5055
      %v8157 = vpop.f32.mrf.mxu0
      %v8158 = vadd.f32 0.0, %v8157
      %v8159 = vpop.f32.mrf.mxu0
      %v8160 = vadd.f32 0.0, %v8159
      %8161 = vmatmul.bf16.gmra.mxu0 %v5056
      %v8162 = vpop.f32.mrf.mxu0
      %v8163 = vadd.f32 0.0, %v8162
      %v8164 = vpop.f32.mrf.mxu0
      %v8165 = vadd.f32 0.0, %v8164
      %8166 = vmatmul.bf16.gmra.mxu0 %v5057
      %v8167 = vpop.f32.mrf.mxu0
      %v8168 = vadd.f32 0.0, %v8167
      %v8169 = vpop.f32.mrf.mxu0
      %v8170 = vadd.f32 0.0, %v8169
      %8171 = vmatmul.bf16.gmra.mxu0 %v7954
      %v8172 = vpop.f32.mrf.mxu0
      %v8173 = vadd.f32 0.0, %v8172
      %v8174 = vpop.f32.mrf.mxu0
      %v8175 = vadd.f32 0.0, %v8174
      %8176 = vmatmul.bf16.gmra.mxu0 %v7955
      %v8177 = vpop.f32.mrf.mxu0
      %v8178 = vadd.f32 0.0, %v8177
      %v8179 = vpop.f32.mrf.mxu0
      %v8180 = vadd.f32 0.0, %v8179
      %8181 = vmatmul.bf16.gmra.mxu0 %v7956
      %v8182 = vpop.f32.mrf.mxu0
      %v8183 = vadd.f32 0.0, %v8182
      %v8184 = vpop.f32.mrf.mxu0
      %v8185 = vadd.f32 0.0, %v8184
      %8186 = vmatmul.bf16.gmra.mxu0 %v7957
      %v8187 = vpop.f32.mrf.mxu0
      %v8188 = vadd.f32 0.0, %v8187
      %v8189 = vpop.f32.mrf.mxu0
      %v8190 = vadd.f32 0.0, %v8189
      %8191 = vdwg.mxu0
      %v8192 = vadd.f32 %v7886, %v8033
      %v8193 = vadd.f32 %v7887, %v8035
      %v8194 = vadd.f32 %v7888, %v8038
      %v8195 = vadd.f32 %v7889, %v8040
      %v8196 = vadd.f32 %v7890, %v8043
      %v8197 = vadd.f32 %v7891, %v8045
      %v8198 = vadd.f32 %v7892, %v8048
      %v8199 = vadd.f32 %v7893, %v8050
      %v8200 = vadd.f32 %v7894, %v8053
      %v8201 = vadd.f32 %v7895, %v8055
      %v8202 = vadd.f32 %v7896, %v8058
      %v8203 = vadd.f32 %v7897, %v8060
      %v8204 = vadd.f32 %v7898, %v8063
      %v8205 = vadd.f32 %v7899, %v8065
      %v8206 = vadd.f32 %v7900, %v8068
      %v8207 = vadd.f32 %v7901, %v8070
      %v8208 = vadd.f32 %v7902, %v8073
      %v8209 = vadd.f32 %v7903, %v8075
      %v8210 = vadd.f32 %v7904, %v8078
      %v8211 = vadd.f32 %v7905, %v8080
      %v8212 = vadd.f32 %v7906, %v8083
      %v8213 = vadd.f32 %v7907, %v8085
      %v8214 = vadd.f32 %v7908, %v8088
      %v8215 = vadd.f32 %v7909, %v8090
      %v8216 = vadd.f32 %v7910, %v8093
      %v8217 = vadd.f32 %v7911, %v8095
      %v8218 = vadd.f32 %v7912, %v8098
      %v8219 = vadd.f32 %v7913, %v8100
      %v8220 = vadd.f32 %v7914, %v8103
      %v8221 = vadd.f32 %v7915, %v8105
      %v8222 = vadd.f32 %v7916, %v8108
      %v8223 = vadd.f32 %v7917, %v8110
      %v8224 = vadd.f32 %v7918, %v8113
      %v8225 = vadd.f32 %v7919, %v8115
      %v8226 = vadd.f32 %v7920, %v8118
      %v8227 = vadd.f32 %v7921, %v8120
      %v8228 = vadd.f32 %v7922, %v8123
      %v8229 = vadd.f32 %v7923, %v8125
      %v8230 = vadd.f32 %v7924, %v8128
      %v8231 = vadd.f32 %v7925, %v8130
      %v8232 = vadd.f32 %v7926, %v8133
      %v8233 = vadd.f32 %v7927, %v8135
      %v8234 = vadd.f32 %v7928, %v8138
      %v8235 = vadd.f32 %v7929, %v8140
      %v8236 = vadd.f32 %v7930, %v8143
      %v8237 = vadd.f32 %v7931, %v8145
      %v8238 = vadd.f32 %v7932, %v8148
      %v8239 = vadd.f32 %v7933, %v8150
      %v8240 = vadd.f32 %v7934, %v8153
      %v8241 = vadd.f32 %v7935, %v8155
      %v8242 = vadd.f32 %v7936, %v8158
      %v8243 = vadd.f32 %v7937, %v8160
      %v8244 = vadd.f32 %v7938, %v8163
      %v8245 = vadd.f32 %v7939, %v8165
      %v8246 = vadd.f32 %v7940, %v8168
      %v8247 = vadd.f32 %v7941, %v8170
      %v8248 = vadd.f32 %v7942, %v8173
      %v8249 = vadd.f32 %v7943, %v8175
      %v8250 = vadd.f32 %v7944, %v8178
      %v8251 = vadd.f32 %v7945, %v8180
      %v8252 = vadd.f32 %v7946, %v8183
      %v8253 = vadd.f32 %v7947, %v8185
      %v8254 = vadd.f32 %v7948, %v8188
      %v8255 = vadd.f32 %v7949, %v8190
      %v8256 = vpack.c.bf16 %v2761, %v2759
      %s8257 = scalar_lea.vmem %s4, 960
      %v8258 = vld [vmem:[%s8257] sm:$0xf]
      %v8259 = vld [vmem:[%s8257 + $0x4] sm:$0xf]
      %v8260 = vld [vmem:[%s8257 + $0x8] sm:$0xf]
      %v8261 = vld [vmem:[%s8257 + $0xc] sm:$0xf]
      %v8262 = vld [vmem:[%s8257 + $0x10] sm:$0xf]
      %v8263 = vld [vmem:[%s8257 + $0x14] sm:$0xf]
      %v8264 = vld [vmem:[%s8257 + $0x18] sm:$0xf]
      %v8265 = vld [vmem:[%s8257 + $0x1c] sm:$0xf]
      %v8266 = vld [vmem:[%s8257 + $0x20] sm:$0xf]
      %v8267 = vld [vmem:[%s8257 + $0x24] sm:$0xf]
      %v8268 = vld [vmem:[%s8257 + $0x28] sm:$0xf]
      %v8269 = vld [vmem:[%s8257 + $0x2c] sm:$0xf]
      %v8270 = vld [vmem:[%s8257 + $0x30] sm:$0xf]
      %v8271 = vld [vmem:[%s8257 + $0x34] sm:$0xf]
      %v8272 = vld [vmem:[%s8257 + $0x38] sm:$0xf]
      %v8273 = vld [vmem:[%s8257 + $0x3c] sm:$0xf]
      %v8290 = vunpack.c.l.b16 %v8258
      %v8291 = vunpack.c.l.b16 %v8259
      %v8292 = vunpack.c.l.b16 %v8260
      %v8293 = vunpack.c.l.b16 %v8261
      %v8294 = vunpack.c.l.b16 %v8262
      %v8295 = vunpack.c.l.b16 %v8263
      %v8296 = vunpack.c.l.b16 %v8264
      %v8297 = vunpack.c.l.b16 %v8265
      %v8298 = vunpack.c.l.b16 %v8266
      %v8299 = vunpack.c.l.b16 %v8267
      %v8300 = vunpack.c.l.b16 %v8268
      %v8301 = vunpack.c.l.b16 %v8269
      %v8302 = vunpack.c.l.b16 %v8270
      %v8303 = vunpack.c.l.b16 %v8271
      %v8304 = vunpack.c.l.b16 %v8272
      %v8305 = vunpack.c.l.b16 %v8273
      %v8306 = vpack.c.b16 %v8291, %v8290
      %v8307 = vpack.c.b16 %v8293, %v8292
      %v8308 = vpack.c.b16 %v8295, %v8294
      %v8309 = vpack.c.b16 %v8297, %v8296
      %v8310 = vpack.c.b16 %v8299, %v8298
      %v8311 = vpack.c.b16 %v8301, %v8300
      %v8312 = vpack.c.b16 %v8303, %v8302
      %v8313 = vpack.c.b16 %v8305, %v8304
      %8322 = vmatpush.bf16.msra.mxu0 %v8313
      %8323 = vmatpush.bf16.msra.mxu0 %v8312
      %8324 = vmatpush.bf16.msra.mxu0 %v8311
      %8325 = vmatpush.bf16.msra.mxu0 %v8310
      %8326 = vmatpush.bf16.msra.mxu0 %v8309
      %8327 = vmatpush.bf16.msra.mxu0 %v8308
      %8328 = vmatpush.bf16.msra.mxu0 %v8307
      %8329 = vmatpush.bf16.msra.mxu0 %v8306
      %8330 = vmatmul.bf16.gmra.mxu0 %v2788
      %v8331 = vpop.f32.mrf.mxu0
      %v8332 = vadd.f32 0.0, %v8331
      %v8333 = vpop.f32.mrf.mxu0
      %v8334 = vadd.f32 0.0, %v8333
      %8335 = vmatmul.bf16.gmra.mxu0 %v2789
      %v8336 = vpop.f32.mrf.mxu0
      %v8337 = vadd.f32 0.0, %v8336
      %v8338 = vpop.f32.mrf.mxu0
      %v8339 = vadd.f32 0.0, %v8338
      %8340 = vmatmul.bf16.gmra.mxu0 %v2790
      %v8341 = vpop.f32.mrf.mxu0
      %v8342 = vadd.f32 0.0, %v8341
      %v8343 = vpop.f32.mrf.mxu0
      %v8344 = vadd.f32 0.0, %v8343
      %8345 = vmatmul.bf16.gmra.mxu0 %v5357
      %v8346 = vpop.f32.mrf.mxu0
      %v8347 = vadd.f32 0.0, %v8346
      %v8348 = vpop.f32.mrf.mxu0
      %v8349 = vadd.f32 0.0, %v8348
      %8350 = vmatmul.bf16.gmra.mxu0 %v2792
      %v8351 = vpop.f32.mrf.mxu0
      %v8352 = vadd.f32 0.0, %v8351
      %v8353 = vpop.f32.mrf.mxu0
      %v8354 = vadd.f32 0.0, %v8353
      %8355 = vmatmul.bf16.gmra.mxu0 %v2793
      %v8356 = vpop.f32.mrf.mxu0
      %v8357 = vadd.f32 0.0, %v8356
      %v8358 = vpop.f32.mrf.mxu0
      %v8359 = vadd.f32 0.0, %v8358
      %8360 = vmatmul.bf16.gmra.mxu0 %v2794
      %v8361 = vpop.f32.mrf.mxu0
      %v8362 = vadd.f32 0.0, %v8361
      %v8363 = vpop.f32.mrf.mxu0
      %v8364 = vadd.f32 0.0, %v8363
      %8365 = vmatmul.bf16.gmra.mxu0 %v5358
      %v8366 = vpop.f32.mrf.mxu0
      %v8367 = vadd.f32 0.0, %v8366
      %v8368 = vpop.f32.mrf.mxu0
      %v8369 = vadd.f32 0.0, %v8368
      %8370 = vmatmul.bf16.gmra.mxu0 %v2796
      %v8371 = vpop.f32.mrf.mxu0
      %v8372 = vadd.f32 0.0, %v8371
      %v8373 = vpop.f32.mrf.mxu0
      %v8374 = vadd.f32 0.0, %v8373
      %8375 = vmatmul.bf16.gmra.mxu0 %v2797
      %v8376 = vpop.f32.mrf.mxu0
      %v8377 = vadd.f32 0.0, %v8376
      %v8378 = vpop.f32.mrf.mxu0
      %v8379 = vadd.f32 0.0, %v8378
      %8380 = vmatmul.bf16.gmra.mxu0 %v2798
      %v8381 = vpop.f32.mrf.mxu0
      %v8382 = vadd.f32 0.0, %v8381
      %v8383 = vpop.f32.mrf.mxu0
      %v8384 = vadd.f32 0.0, %v8383
      %8385 = vmatmul.bf16.gmra.mxu0 %v5359
      %v8386 = vpop.f32.mrf.mxu0
      %v8387 = vadd.f32 0.0, %v8386
      %v8388 = vpop.f32.mrf.mxu0
      %v8389 = vadd.f32 0.0, %v8388
      %8390 = vmatmul.bf16.gmra.mxu0 %v2800
      %v8391 = vpop.f32.mrf.mxu0
      %v8392 = vadd.f32 0.0, %v8391
      %v8393 = vpop.f32.mrf.mxu0
      %v8394 = vadd.f32 0.0, %v8393
      %8395 = vmatmul.bf16.gmra.mxu0 %v2801
      %v8396 = vpop.f32.mrf.mxu0
      %v8397 = vadd.f32 0.0, %v8396
      %v8398 = vpop.f32.mrf.mxu0
      %v8399 = vadd.f32 0.0, %v8398
      %8400 = vmatmul.bf16.gmra.mxu0 %v2802
      %v8401 = vpop.f32.mrf.mxu0
      %v8402 = vadd.f32 0.0, %v8401
      %v8403 = vpop.f32.mrf.mxu0
      %v8404 = vadd.f32 0.0, %v8403
      %8405 = vmatmul.bf16.gmra.mxu0 %v5360
      %v8406 = vpop.f32.mrf.mxu0
      %v8407 = vadd.f32 0.0, %v8406
      %v8408 = vpop.f32.mrf.mxu0
      %v8409 = vadd.f32 0.0, %v8408
      %8410 = vmatmul.bf16.gmra.mxu0 %v2804
      %v8411 = vpop.f32.mrf.mxu0
      %v8412 = vadd.f32 0.0, %v8411
      %v8413 = vpop.f32.mrf.mxu0
      %v8414 = vadd.f32 0.0, %v8413
      %8415 = vmatmul.bf16.gmra.mxu0 %v2805
      %v8416 = vpop.f32.mrf.mxu0
      %v8417 = vadd.f32 0.0, %v8416
      %v8418 = vpop.f32.mrf.mxu0
      %v8419 = vadd.f32 0.0, %v8418
      %8420 = vmatmul.bf16.gmra.mxu0 %v2806
      %v8421 = vpop.f32.mrf.mxu0
      %v8422 = vadd.f32 0.0, %v8421
      %v8423 = vpop.f32.mrf.mxu0
      %v8424 = vadd.f32 0.0, %v8423
      %8425 = vmatmul.bf16.gmra.mxu0 %v5361
      %v8426 = vpop.f32.mrf.mxu0
      %v8427 = vadd.f32 0.0, %v8426
      %v8428 = vpop.f32.mrf.mxu0
      %v8429 = vadd.f32 0.0, %v8428
      %8430 = vmatmul.bf16.gmra.mxu0 %v2808
      %v8431 = vpop.f32.mrf.mxu0
      %v8432 = vadd.f32 0.0, %v8431
      %v8433 = vpop.f32.mrf.mxu0
      %v8434 = vadd.f32 0.0, %v8433
      %8435 = vmatmul.bf16.gmra.mxu0 %v2809
      %v8436 = vpop.f32.mrf.mxu0
      %v8437 = vadd.f32 0.0, %v8436
      %v8438 = vpop.f32.mrf.mxu0
      %v8439 = vadd.f32 0.0, %v8438
      %8440 = vmatmul.bf16.gmra.mxu0 %v2810
      %v8441 = vpop.f32.mrf.mxu0
      %v8442 = vadd.f32 0.0, %v8441
      %v8443 = vpop.f32.mrf.mxu0
      %v8444 = vadd.f32 0.0, %v8443
      %8445 = vmatmul.bf16.gmra.mxu0 %v5362
      %v8446 = vpop.f32.mrf.mxu0
      %v8447 = vadd.f32 0.0, %v8446
      %v8448 = vpop.f32.mrf.mxu0
      %v8449 = vadd.f32 0.0, %v8448
      %8450 = vmatmul.bf16.gmra.mxu0 %v2812
      %v8451 = vpop.f32.mrf.mxu0
      %v8452 = vadd.f32 0.0, %v8451
      %v8453 = vpop.f32.mrf.mxu0
      %v8454 = vadd.f32 0.0, %v8453
      %8455 = vmatmul.bf16.gmra.mxu0 %v2813
      %v8456 = vpop.f32.mrf.mxu0
      %v8457 = vadd.f32 0.0, %v8456
      %v8458 = vpop.f32.mrf.mxu0
      %v8459 = vadd.f32 0.0, %v8458
      %8460 = vmatmul.bf16.gmra.mxu0 %v2814
      %v8461 = vpop.f32.mrf.mxu0
      %v8462 = vadd.f32 0.0, %v8461
      %v8463 = vpop.f32.mrf.mxu0
      %v8464 = vadd.f32 0.0, %v8463
      %8465 = vmatmul.bf16.gmra.mxu0 %v5363
      %v8466 = vpop.f32.mrf.mxu0
      %v8467 = vadd.f32 0.0, %v8466
      %v8468 = vpop.f32.mrf.mxu0
      %v8469 = vadd.f32 0.0, %v8468
      %8470 = vmatmul.bf16.gmra.mxu0 %v6355
      %v8471 = vpop.f32.mrf.mxu0
      %v8472 = vadd.f32 0.0, %v8471
      %v8473 = vpop.f32.mrf.mxu0
      %v8474 = vadd.f32 0.0, %v8473
      %8475 = vmatmul.bf16.gmra.mxu0 %v6356
      %v8476 = vpop.f32.mrf.mxu0
      %v8477 = vadd.f32 0.0, %v8476
      %v8478 = vpop.f32.mrf.mxu0
      %v8479 = vadd.f32 0.0, %v8478
      %8480 = vmatmul.bf16.gmra.mxu0 %v6357
      %v8481 = vpop.f32.mrf.mxu0
      %v8482 = vadd.f32 0.0, %v8481
      %v8483 = vpop.f32.mrf.mxu0
      %v8484 = vadd.f32 0.0, %v8483
      %8485 = vmatmul.bf16.gmra.mxu0 %v8256
      %v8486 = vpop.f32.mrf.mxu0
      %v8487 = vadd.f32 0.0, %v8486
      %v8488 = vpop.f32.mrf.mxu0
      %v8489 = vadd.f32 0.0, %v8488
      %8490 = vdwg.mxu0
      %v8491 = vadd.f32 %v8192, %v8332
      %v8492 = vadd.f32 %v8193, %v8334
      %v8493 = vadd.f32 %v8194, %v8337
      %v8494 = vadd.f32 %v8195, %v8339
      %v8495 = vadd.f32 %v8196, %v8342
      %v8496 = vadd.f32 %v8197, %v8344
      %v8497 = vadd.f32 %v8198, %v8347
      %v8498 = vadd.f32 %v8199, %v8349
      %v8499 = vadd.f32 %v8200, %v8352
      %v8500 = vadd.f32 %v8201, %v8354
      %v8501 = vadd.f32 %v8202, %v8357
      %v8502 = vadd.f32 %v8203, %v8359
      %v8503 = vadd.f32 %v8204, %v8362
      %v8504 = vadd.f32 %v8205, %v8364
      %v8505 = vadd.f32 %v8206, %v8367
      %v8506 = vadd.f32 %v8207, %v8369
      %v8507 = vadd.f32 %v8208, %v8372
      %v8508 = vadd.f32 %v8209, %v8374
      %v8509 = vadd.f32 %v8210, %v8377
      %v8510 = vadd.f32 %v8211, %v8379
      %v8511 = vadd.f32 %v8212, %v8382
      %v8512 = vadd.f32 %v8213, %v8384
      %v8513 = vadd.f32 %v8214, %v8387
      %v8514 = vadd.f32 %v8215, %v8389
      %v8515 = vadd.f32 %v8216, %v8392
      %v8516 = vadd.f32 %v8217, %v8394
      %v8517 = vadd.f32 %v8218, %v8397
      %v8518 = vadd.f32 %v8219, %v8399
      %v8519 = vadd.f32 %v8220, %v8402
      %v8520 = vadd.f32 %v8221, %v8404
      %v8521 = vadd.f32 %v8222, %v8407
      %v8522 = vadd.f32 %v8223, %v8409
      %v8523 = vadd.f32 %v8224, %v8412
      %v8524 = vadd.f32 %v8225, %v8414
      %v8525 = vadd.f32 %v8226, %v8417
      %v8526 = vadd.f32 %v8227, %v8419
      %v8527 = vadd.f32 %v8228, %v8422
      %v8528 = vadd.f32 %v8229, %v8424
      %v8529 = vadd.f32 %v8230, %v8427
      %v8530 = vadd.f32 %v8231, %v8429
      %v8531 = vadd.f32 %v8232, %v8432
      %v8532 = vadd.f32 %v8233, %v8434
      %v8533 = vadd.f32 %v8234, %v8437
      %v8534 = vadd.f32 %v8235, %v8439
      %v8535 = vadd.f32 %v8236, %v8442
      %v8536 = vadd.f32 %v8237, %v8444
      %v8537 = vadd.f32 %v8238, %v8447
      %v8538 = vadd.f32 %v8239, %v8449
      %v8539 = vadd.f32 %v8240, %v8452
      %v8540 = vadd.f32 %v8241, %v8454
      %v8541 = vadd.f32 %v8242, %v8457
      %v8542 = vadd.f32 %v8243, %v8459
      %v8543 = vadd.f32 %v8244, %v8462
      %v8544 = vadd.f32 %v8245, %v8464
      %v8545 = vadd.f32 %v8246, %v8467
      %v8546 = vadd.f32 %v8247, %v8469
      %v8547 = vadd.f32 %v8248, %v8472
      %v8548 = vadd.f32 %v8249, %v8474
      %v8549 = vadd.f32 %v8250, %v8477
      %v8550 = vadd.f32 %v8251, %v8479
      %v8551 = vadd.f32 %v8252, %v8482
      %v8552 = vadd.f32 %v8253, %v8484
      %v8553 = vadd.f32 %v8254, %v8487
      %v8554 = vadd.f32 %v8255, %v8489
      %v8557 = vrot.slane %v2761, 1
      %v8558 = vrot.slane %v2762, 1
      %v8559 = vsel %vm2959, %v8557, %v8558
      %v8561 = vpack.c.bf16 %v8559, %v7646
      %s8562 = scalar_lea.vmem %s4, 1024
      %v8563 = vld [vmem:[%s8562] sm:$0xf]
      %v8564 = vld [vmem:[%s8562 + $0x4] sm:$0xf]
      %v8565 = vld [vmem:[%s8562 + $0x8] sm:$0xf]
      %v8566 = vld [vmem:[%s8562 + $0xc] sm:$0xf]
      %v8567 = vld [vmem:[%s8562 + $0x10] sm:$0xf]
      %v8568 = vld [vmem:[%s8562 + $0x14] sm:$0xf]
      %v8569 = vld [vmem:[%s8562 + $0x18] sm:$0xf]
      %v8570 = vld [vmem:[%s8562 + $0x1c] sm:$0xf]
      %v8571 = vld [vmem:[%s8562 + $0x20] sm:$0xf]
      %v8572 = vld [vmem:[%s8562 + $0x24] sm:$0xf]
      %v8573 = vld [vmem:[%s8562 + $0x28] sm:$0xf]
      %v8574 = vld [vmem:[%s8562 + $0x2c] sm:$0xf]
      %v8575 = vld [vmem:[%s8562 + $0x30] sm:$0xf]
      %v8576 = vld [vmem:[%s8562 + $0x34] sm:$0xf]
      %v8577 = vld [vmem:[%s8562 + $0x38] sm:$0xf]
      %v8578 = vld [vmem:[%s8562 + $0x3c] sm:$0xf]
      %v8595 = vunpack.c.l.b16 %v8563
      %v8596 = vunpack.c.l.b16 %v8564
      %v8597 = vunpack.c.l.b16 %v8565
      %v8598 = vunpack.c.l.b16 %v8566
      %v8599 = vunpack.c.l.b16 %v8567
      %v8600 = vunpack.c.l.b16 %v8568
      %v8601 = vunpack.c.l.b16 %v8569
      %v8602 = vunpack.c.l.b16 %v8570
      %v8603 = vunpack.c.l.b16 %v8571
      %v8604 = vunpack.c.l.b16 %v8572
      %v8605 = vunpack.c.l.b16 %v8573
      %v8606 = vunpack.c.l.b16 %v8574
      %v8607 = vunpack.c.l.b16 %v8575
      %v8608 = vunpack.c.l.b16 %v8576
      %v8609 = vunpack.c.l.b16 %v8577
      %v8610 = vunpack.c.l.b16 %v8578
      %v8611 = vpack.c.b16 %v8596, %v8595
      %v8612 = vpack.c.b16 %v8598, %v8597
      %v8613 = vpack.c.b16 %v8600, %v8599
      %v8614 = vpack.c.b16 %v8602, %v8601
      %v8615 = vpack.c.b16 %v8604, %v8603
      %v8616 = vpack.c.b16 %v8606, %v8605
      %v8617 = vpack.c.b16 %v8608, %v8607
      %v8618 = vpack.c.b16 %v8610, %v8609
      %8627 = vmatpush.bf16.msra.mxu0 %v8618
      %8628 = vmatpush.bf16.msra.mxu0 %v8617
      %8629 = vmatpush.bf16.msra.mxu0 %v8616
      %8630 = vmatpush.bf16.msra.mxu0 %v8615
      %8631 = vmatpush.bf16.msra.mxu0 %v8614
      %8632 = vmatpush.bf16.msra.mxu0 %v8613
      %8633 = vmatpush.bf16.msra.mxu0 %v8612
      %8634 = vmatpush.bf16.msra.mxu0 %v8611
      %8635 = vmatmul.bf16.gmra.mxu0 %v3221
      %v8636 = vpop.f32.mrf.mxu0
      %v8637 = vadd.f32 0.0, %v8636
      %v8638 = vpop.f32.mrf.mxu0
      %v8639 = vadd.f32 0.0, %v8638
      %8640 = vmatmul.bf16.gmra.mxu0 %v3222
      %v8641 = vpop.f32.mrf.mxu0
      %v8642 = vadd.f32 0.0, %v8641
      %v8643 = vpop.f32.mrf.mxu0
      %v8644 = vadd.f32 0.0, %v8643
      %8645 = vmatmul.bf16.gmra.mxu0 %v3223
      %v8646 = vpop.f32.mrf.mxu0
      %v8647 = vadd.f32 0.0, %v8646
      %v8648 = vpop.f32.mrf.mxu0
      %v8649 = vadd.f32 0.0, %v8648
      %8650 = vmatmul.bf16.gmra.mxu0 %v5711
      %v8651 = vpop.f32.mrf.mxu0
      %v8652 = vadd.f32 0.0, %v8651
      %v8653 = vpop.f32.mrf.mxu0
      %v8654 = vadd.f32 0.0, %v8653
      %8655 = vmatmul.bf16.gmra.mxu0 %v3225
      %v8656 = vpop.f32.mrf.mxu0
      %v8657 = vadd.f32 0.0, %v8656
      %v8658 = vpop.f32.mrf.mxu0
      %v8659 = vadd.f32 0.0, %v8658
      %8660 = vmatmul.bf16.gmra.mxu0 %v3226
      %v8661 = vpop.f32.mrf.mxu0
      %v8662 = vadd.f32 0.0, %v8661
      %v8663 = vpop.f32.mrf.mxu0
      %v8664 = vadd.f32 0.0, %v8663
      %8665 = vmatmul.bf16.gmra.mxu0 %v3227
      %v8666 = vpop.f32.mrf.mxu0
      %v8667 = vadd.f32 0.0, %v8666
      %v8668 = vpop.f32.mrf.mxu0
      %v8669 = vadd.f32 0.0, %v8668
      %8670 = vmatmul.bf16.gmra.mxu0 %v5712
      %v8671 = vpop.f32.mrf.mxu0
      %v8672 = vadd.f32 0.0, %v8671
      %v8673 = vpop.f32.mrf.mxu0
      %v8674 = vadd.f32 0.0, %v8673
      %8675 = vmatmul.bf16.gmra.mxu0 %v3229
      %v8676 = vpop.f32.mrf.mxu0
      %v8677 = vadd.f32 0.0, %v8676
      %v8678 = vpop.f32.mrf.mxu0
      %v8679 = vadd.f32 0.0, %v8678
      %8680 = vmatmul.bf16.gmra.mxu0 %v3230
      %v8681 = vpop.f32.mrf.mxu0
      %v8682 = vadd.f32 0.0, %v8681
      %v8683 = vpop.f32.mrf.mxu0
      %v8684 = vadd.f32 0.0, %v8683
      %8685 = vmatmul.bf16.gmra.mxu0 %v3231
      %v8686 = vpop.f32.mrf.mxu0
      %v8687 = vadd.f32 0.0, %v8686
      %v8688 = vpop.f32.mrf.mxu0
      %v8689 = vadd.f32 0.0, %v8688
      %8690 = vmatmul.bf16.gmra.mxu0 %v5713
      %v8691 = vpop.f32.mrf.mxu0
      %v8692 = vadd.f32 0.0, %v8691
      %v8693 = vpop.f32.mrf.mxu0
      %v8694 = vadd.f32 0.0, %v8693
      %8695 = vmatmul.bf16.gmra.mxu0 %v3233
      %v8696 = vpop.f32.mrf.mxu0
      %v8697 = vadd.f32 0.0, %v8696
      %v8698 = vpop.f32.mrf.mxu0
      %v8699 = vadd.f32 0.0, %v8698
      %8700 = vmatmul.bf16.gmra.mxu0 %v3234
      %v8701 = vpop.f32.mrf.mxu0
      %v8702 = vadd.f32 0.0, %v8701
      %v8703 = vpop.f32.mrf.mxu0
      %v8704 = vadd.f32 0.0, %v8703
      %8705 = vmatmul.bf16.gmra.mxu0 %v3235
      %v8706 = vpop.f32.mrf.mxu0
      %v8707 = vadd.f32 0.0, %v8706
      %v8708 = vpop.f32.mrf.mxu0
      %v8709 = vadd.f32 0.0, %v8708
      %8710 = vmatmul.bf16.gmra.mxu0 %v5714
      %v8711 = vpop.f32.mrf.mxu0
      %v8712 = vadd.f32 0.0, %v8711
      %v8713 = vpop.f32.mrf.mxu0
      %v8714 = vadd.f32 0.0, %v8713
      %8715 = vmatmul.bf16.gmra.mxu0 %v3237
      %v8716 = vpop.f32.mrf.mxu0
      %v8717 = vadd.f32 0.0, %v8716
      %v8718 = vpop.f32.mrf.mxu0
      %v8719 = vadd.f32 0.0, %v8718
      %8720 = vmatmul.bf16.gmra.mxu0 %v3238
      %v8721 = vpop.f32.mrf.mxu0
      %v8722 = vadd.f32 0.0, %v8721
      %v8723 = vpop.f32.mrf.mxu0
      %v8724 = vadd.f32 0.0, %v8723
      %8725 = vmatmul.bf16.gmra.mxu0 %v3239
      %v8726 = vpop.f32.mrf.mxu0
      %v8727 = vadd.f32 0.0, %v8726
      %v8728 = vpop.f32.mrf.mxu0
      %v8729 = vadd.f32 0.0, %v8728
      %8730 = vmatmul.bf16.gmra.mxu0 %v5715
      %v8731 = vpop.f32.mrf.mxu0
      %v8732 = vadd.f32 0.0, %v8731
      %v8733 = vpop.f32.mrf.mxu0
      %v8734 = vadd.f32 0.0, %v8733
      %8735 = vmatmul.bf16.gmra.mxu0 %v3241
      %v8736 = vpop.f32.mrf.mxu0
      %v8737 = vadd.f32 0.0, %v8736
      %v8738 = vpop.f32.mrf.mxu0
      %v8739 = vadd.f32 0.0, %v8738
      %8740 = vmatmul.bf16.gmra.mxu0 %v3242
      %v8741 = vpop.f32.mrf.mxu0
      %v8742 = vadd.f32 0.0, %v8741
      %v8743 = vpop.f32.mrf.mxu0
      %v8744 = vadd.f32 0.0, %v8743
      %8745 = vmatmul.bf16.gmra.mxu0 %v3243
      %v8746 = vpop.f32.mrf.mxu0
      %v8747 = vadd.f32 0.0, %v8746
      %v8748 = vpop.f32.mrf.mxu0
      %v8749 = vadd.f32 0.0, %v8748
      %8750 = vmatmul.bf16.gmra.mxu0 %v5716
      %v8751 = vpop.f32.mrf.mxu0
      %v8752 = vadd.f32 0.0, %v8751
      %v8753 = vpop.f32.mrf.mxu0
      %v8754 = vadd.f32 0.0, %v8753
      %8755 = vmatmul.bf16.gmra.mxu0 %v3245
      %v8756 = vpop.f32.mrf.mxu0
      %v8757 = vadd.f32 0.0, %v8756
      %v8758 = vpop.f32.mrf.mxu0
      %v8759 = vadd.f32 0.0, %v8758
      %8760 = vmatmul.bf16.gmra.mxu0 %v3246
      %v8761 = vpop.f32.mrf.mxu0
      %v8762 = vadd.f32 0.0, %v8761
      %v8763 = vpop.f32.mrf.mxu0
      %v8764 = vadd.f32 0.0, %v8763
      %8765 = vmatmul.bf16.gmra.mxu0 %v3247
      %v8766 = vpop.f32.mrf.mxu0
      %v8767 = vadd.f32 0.0, %v8766
      %v8768 = vpop.f32.mrf.mxu0
      %v8769 = vadd.f32 0.0, %v8768
      %8770 = vmatmul.bf16.gmra.mxu0 %v5717
      %v8771 = vpop.f32.mrf.mxu0
      %v8772 = vadd.f32 0.0, %v8771
      %v8773 = vpop.f32.mrf.mxu0
      %v8774 = vadd.f32 0.0, %v8773
      %8775 = vmatmul.bf16.gmra.mxu0 %v6705
      %v8776 = vpop.f32.mrf.mxu0
      %v8777 = vadd.f32 0.0, %v8776
      %v8778 = vpop.f32.mrf.mxu0
      %v8779 = vadd.f32 0.0, %v8778
      %8780 = vmatmul.bf16.gmra.mxu0 %v6706
      %v8781 = vpop.f32.mrf.mxu0
      %v8782 = vadd.f32 0.0, %v8781
      %v8783 = vpop.f32.mrf.mxu0
      %v8784 = vadd.f32 0.0, %v8783
      %8785 = vmatmul.bf16.gmra.mxu0 %v6707
      %v8786 = vpop.f32.mrf.mxu0
      %v8787 = vadd.f32 0.0, %v8786
      %v8788 = vpop.f32.mrf.mxu0
      %v8789 = vadd.f32 0.0, %v8788
      %8790 = vmatmul.bf16.gmra.mxu0 %v8561
      %v8791 = vpop.f32.mrf.mxu0
      %v8792 = vadd.f32 0.0, %v8791
      %v8793 = vpop.f32.mrf.mxu0
      %v8794 = vadd.f32 0.0, %v8793
      %8795 = vdwg.mxu0
      %v8796 = vadd.f32 %v8491, %v8637
      %v8797 = vadd.f32 %v8492, %v8639
      %v8798 = vadd.f32 %v8493, %v8642
      %v8799 = vadd.f32 %v8494, %v8644
      %v8800 = vadd.f32 %v8495, %v8647
      %v8801 = vadd.f32 %v8496, %v8649
      %v8802 = vadd.f32 %v8497, %v8652
      %v8803 = vadd.f32 %v8498, %v8654
      %v8804 = vadd.f32 %v8499, %v8657
      %v8805 = vadd.f32 %v8500, %v8659
      %v8806 = vadd.f32 %v8501, %v8662
      %v8807 = vadd.f32 %v8502, %v8664
      %v8808 = vadd.f32 %v8503, %v8667
      %v8809 = vadd.f32 %v8504, %v8669
      %v8810 = vadd.f32 %v8505, %v8672
      %v8811 = vadd.f32 %v8506, %v8674
      %v8812 = vadd.f32 %v8507, %v8677
      %v8813 = vadd.f32 %v8508, %v8679
      %v8814 = vadd.f32 %v8509, %v8682
      %v8815 = vadd.f32 %v8510, %v8684
      %v8816 = vadd.f32 %v8511, %v8687
      %v8817 = vadd.f32 %v8512, %v8689
      %v8818 = vadd.f32 %v8513, %v8692
      %v8819 = vadd.f32 %v8514, %v8694
      %v8820 = vadd.f32 %v8515, %v8697
      %v8821 = vadd.f32 %v8516, %v8699
      %v8822 = vadd.f32 %v8517, %v8702
      %v8823 = vadd.f32 %v8518, %v8704
      %v8824 = vadd.f32 %v8519, %v8707
      %v8825 = vadd.f32 %v8520, %v8709
      %v8826 = vadd.f32 %v8521, %v8712
      %v8827 = vadd.f32 %v8522, %v8714
      %v8828 = vadd.f32 %v8523, %v8717
      %v8829 = vadd.f32 %v8524, %v8719
      %v8830 = vadd.f32 %v8525, %v8722
      %v8831 = vadd.f32 %v8526, %v8724
      %v8832 = vadd.f32 %v8527, %v8727
      %v8833 = vadd.f32 %v8528, %v8729
      %v8834 = vadd.f32 %v8529, %v8732
      %v8835 = vadd.f32 %v8530, %v8734
      %v8836 = vadd.f32 %v8531, %v8737
      %v8837 = vadd.f32 %v8532, %v8739
      %v8838 = vadd.f32 %v8533, %v8742
      %v8839 = vadd.f32 %v8534, %v8744
      %v8840 = vadd.f32 %v8535, %v8747
      %v8841 = vadd.f32 %v8536, %v8749
      %v8842 = vadd.f32 %v8537, %v8752
      %v8843 = vadd.f32 %v8538, %v8754
      %v8844 = vadd.f32 %v8539, %v8757
      %v8845 = vadd.f32 %v8540, %v8759
      %v8846 = vadd.f32 %v8541, %v8762
      %v8847 = vadd.f32 %v8542, %v8764
      %v8848 = vadd.f32 %v8543, %v8767
      %v8849 = vadd.f32 %v8544, %v8769
      %v8850 = vadd.f32 %v8545, %v8772
      %v8851 = vadd.f32 %v8546, %v8774
      %v8852 = vadd.f32 %v8547, %v8777
      %v8853 = vadd.f32 %v8548, %v8779
      %v8854 = vadd.f32 %v8549, %v8782
      %v8855 = vadd.f32 %v8550, %v8784
      %v8856 = vadd.f32 %v8551, %v8787
      %v8857 = vadd.f32 %v8552, %v8789
      %v8858 = vadd.f32 %v8553, %v8792
      %v8859 = vadd.f32 %v8554, %v8794
      %v8860 = vrot.slane %v2761, 2
      %v8861 = vrot.slane %v2762, 2
      %v8862 = vsel %vm3699, %v8860, %v8861
      %v8864 = vpack.c.bf16 %v8862, %v7952
      %s8865 = scalar_lea.vmem %s4, 1088
      %v8866 = vld [vmem:[%s8865] sm:$0xf]
      %v8867 = vld [vmem:[%s8865 + $0x4] sm:$0xf]
      %v8868 = vld [vmem:[%s8865 + $0x8] sm:$0xf]
      %v8869 = vld [vmem:[%s8865 + $0xc] sm:$0xf]
      %v8870 = vld [vmem:[%s8865 + $0x10] sm:$0xf]
      %v8871 = vld [vmem:[%s8865 + $0x14] sm:$0xf]
      %v8872 = vld [vmem:[%s8865 + $0x18] sm:$0xf]
      %v8873 = vld [vmem:[%s8865 + $0x1c] sm:$0xf]
      %v8874 = vld [vmem:[%s8865 + $0x20] sm:$0xf]
      %v8875 = vld [vmem:[%s8865 + $0x24] sm:$0xf]
      %v8876 = vld [vmem:[%s8865 + $0x28] sm:$0xf]
      %v8877 = vld [vmem:[%s8865 + $0x2c] sm:$0xf]
      %v8878 = vld [vmem:[%s8865 + $0x30] sm:$0xf]
      %v8879 = vld [vmem:[%s8865 + $0x34] sm:$0xf]
      %v8880 = vld [vmem:[%s8865 + $0x38] sm:$0xf]
      %v8881 = vld [vmem:[%s8865 + $0x3c] sm:$0xf]
      %v8898 = vunpack.c.l.b16 %v8866
      %v8899 = vunpack.c.l.b16 %v8867
      %v8900 = vunpack.c.l.b16 %v8868
      %v8901 = vunpack.c.l.b16 %v8869
      %v8902 = vunpack.c.l.b16 %v8870
      %v8903 = vunpack.c.l.b16 %v8871
      %v8904 = vunpack.c.l.b16 %v8872
      %v8905 = vunpack.c.l.b16 %v8873
      %v8906 = vunpack.c.l.b16 %v8874
      %v8907 = vunpack.c.l.b16 %v8875
      %v8908 = vunpack.c.l.b16 %v8876
      %v8909 = vunpack.c.l.b16 %v8877
      %v8910 = vunpack.c.l.b16 %v8878
      %v8911 = vunpack.c.l.b16 %v8879
      %v8912 = vunpack.c.l.b16 %v8880
      %v8913 = vunpack.c.l.b16 %v8881
      %v8914 = vpack.c.b16 %v8899, %v8898
      %v8915 = vpack.c.b16 %v8901, %v8900
      %v8916 = vpack.c.b16 %v8903, %v8902
      %v8917 = vpack.c.b16 %v8905, %v8904
      %v8918 = vpack.c.b16 %v8907, %v8906
      %v8919 = vpack.c.b16 %v8909, %v8908
      %v8920 = vpack.c.b16 %v8911, %v8910
      %v8921 = vpack.c.b16 %v8913, %v8912
      %8930 = vmatpush.bf16.msra.mxu0 %v8921
      %8931 = vmatpush.bf16.msra.mxu0 %v8920
      %8932 = vmatpush.bf16.msra.mxu0 %v8919
      %8933 = vmatpush.bf16.msra.mxu0 %v8918
      %8934 = vmatpush.bf16.msra.mxu0 %v8917
      %8935 = vmatpush.bf16.msra.mxu0 %v8916
      %8936 = vmatpush.bf16.msra.mxu0 %v8915
      %8937 = vmatpush.bf16.msra.mxu0 %v8914
      %8938 = vmatmul.bf16.gmra.mxu0 %v3961
      %v8939 = vpop.f32.mrf.mxu0
      %v8940 = vadd.f32 0.0, %v8939
      %v8941 = vpop.f32.mrf.mxu0
      %v8942 = vadd.f32 0.0, %v8941
      %8943 = vmatmul.bf16.gmra.mxu0 %v3962
      %v8944 = vpop.f32.mrf.mxu0
      %v8945 = vadd.f32 0.0, %v8944
      %v8946 = vpop.f32.mrf.mxu0
      %v8947 = vadd.f32 0.0, %v8946
      %8948 = vmatmul.bf16.gmra.mxu0 %v3963
      %v8949 = vpop.f32.mrf.mxu0
      %v8950 = vadd.f32 0.0, %v8949
      %v8951 = vpop.f32.mrf.mxu0
      %v8952 = vadd.f32 0.0, %v8951
      %8953 = vmatmul.bf16.gmra.mxu0 %v6049
      %v8954 = vpop.f32.mrf.mxu0
      %v8955 = vadd.f32 0.0, %v8954
      %v8956 = vpop.f32.mrf.mxu0
      %v8957 = vadd.f32 0.0, %v8956
      %8958 = vmatmul.bf16.gmra.mxu0 %v3965
      %v8959 = vpop.f32.mrf.mxu0
      %v8960 = vadd.f32 0.0, %v8959
      %v8961 = vpop.f32.mrf.mxu0
      %v8962 = vadd.f32 0.0, %v8961
      %8963 = vmatmul.bf16.gmra.mxu0 %v3966
      %v8964 = vpop.f32.mrf.mxu0
      %v8965 = vadd.f32 0.0, %v8964
      %v8966 = vpop.f32.mrf.mxu0
      %v8967 = vadd.f32 0.0, %v8966
      %8968 = vmatmul.bf16.gmra.mxu0 %v3967
      %v8969 = vpop.f32.mrf.mxu0
      %v8970 = vadd.f32 0.0, %v8969
      %v8971 = vpop.f32.mrf.mxu0
      %v8972 = vadd.f32 0.0, %v8971
      %8973 = vmatmul.bf16.gmra.mxu0 %v6050
      %v8974 = vpop.f32.mrf.mxu0
      %v8975 = vadd.f32 0.0, %v8974
      %v8976 = vpop.f32.mrf.mxu0
      %v8977 = vadd.f32 0.0, %v8976
      %8978 = vmatmul.bf16.gmra.mxu0 %v3969
      %v8979 = vpop.f32.mrf.mxu0
      %v8980 = vadd.f32 0.0, %v8979
      %v8981 = vpop.f32.mrf.mxu0
      %v8982 = vadd.f32 0.0, %v8981
      %8983 = vmatmul.bf16.gmra.mxu0 %v3970
      %v8984 = vpop.f32.mrf.mxu0
      %v8985 = vadd.f32 0.0, %v8984
      %v8986 = vpop.f32.mrf.mxu0
      %v8987 = vadd.f32 0.0, %v8986
      %8988 = vmatmul.bf16.gmra.mxu0 %v3971
      %v8989 = vpop.f32.mrf.mxu0
      %v8990 = vadd.f32 0.0, %v8989
      %v8991 = vpop.f32.mrf.mxu0
      %v8992 = vadd.f32 0.0, %v8991
      %8993 = vmatmul.bf16.gmra.mxu0 %v6051
      %v8994 = vpop.f32.mrf.mxu0
      %v8995 = vadd.f32 0.0, %v8994
      %v8996 = vpop.f32.mrf.mxu0
      %v8997 = vadd.f32 0.0, %v8996
      %8998 = vmatmul.bf16.gmra.mxu0 %v3973
      %v8999 = vpop.f32.mrf.mxu0
      %v9000 = vadd.f32 0.0, %v8999
      %v9001 = vpop.f32.mrf.mxu0
      %v9002 = vadd.f32 0.0, %v9001
      %9003 = vmatmul.bf16.gmra.mxu0 %v3974
      %v9004 = vpop.f32.mrf.mxu0
      %v9005 = vadd.f32 0.0, %v9004
      %v9006 = vpop.f32.mrf.mxu0
      %v9007 = vadd.f32 0.0, %v9006
      %9008 = vmatmul.bf16.gmra.mxu0 %v3975
      %v9009 = vpop.f32.mrf.mxu0
      %v9010 = vadd.f32 0.0, %v9009
      %v9011 = vpop.f32.mrf.mxu0
      %v9012 = vadd.f32 0.0, %v9011
      %9013 = vmatmul.bf16.gmra.mxu0 %v6052
      %v9014 = vpop.f32.mrf.mxu0
      %v9015 = vadd.f32 0.0, %v9014
      %v9016 = vpop.f32.mrf.mxu0
      %v9017 = vadd.f32 0.0, %v9016
      %9018 = vmatmul.bf16.gmra.mxu0 %v3977
      %v9019 = vpop.f32.mrf.mxu0
      %v9020 = vadd.f32 0.0, %v9019
      %v9021 = vpop.f32.mrf.mxu0
      %v9022 = vadd.f32 0.0, %v9021
      %9023 = vmatmul.bf16.gmra.mxu0 %v3978
      %v9024 = vpop.f32.mrf.mxu0
      %v9025 = vadd.f32 0.0, %v9024
      %v9026 = vpop.f32.mrf.mxu0
      %v9027 = vadd.f32 0.0, %v9026
      %9028 = vmatmul.bf16.gmra.mxu0 %v3979
      %v9029 = vpop.f32.mrf.mxu0
      %v9030 = vadd.f32 0.0, %v9029
      %v9031 = vpop.f32.mrf.mxu0
      %v9032 = vadd.f32 0.0, %v9031
      %9033 = vmatmul.bf16.gmra.mxu0 %v6053
      %v9034 = vpop.f32.mrf.mxu0
      %v9035 = vadd.f32 0.0, %v9034
      %v9036 = vpop.f32.mrf.mxu0
      %v9037 = vadd.f32 0.0, %v9036
      %9038 = vmatmul.bf16.gmra.mxu0 %v3981
      %v9039 = vpop.f32.mrf.mxu0
      %v9040 = vadd.f32 0.0, %v9039
      %v9041 = vpop.f32.mrf.mxu0
      %v9042 = vadd.f32 0.0, %v9041
      %9043 = vmatmul.bf16.gmra.mxu0 %v3982
      %v9044 = vpop.f32.mrf.mxu0
      %v9045 = vadd.f32 0.0, %v9044
      %v9046 = vpop.f32.mrf.mxu0
      %v9047 = vadd.f32 0.0, %v9046
      %9048 = vmatmul.bf16.gmra.mxu0 %v3983
      %v9049 = vpop.f32.mrf.mxu0
      %v9050 = vadd.f32 0.0, %v9049
      %v9051 = vpop.f32.mrf.mxu0
      %v9052 = vadd.f32 0.0, %v9051
      %9053 = vmatmul.bf16.gmra.mxu0 %v6054
      %v9054 = vpop.f32.mrf.mxu0
      %v9055 = vadd.f32 0.0, %v9054
      %v9056 = vpop.f32.mrf.mxu0
      %v9057 = vadd.f32 0.0, %v9056
      %9058 = vmatmul.bf16.gmra.mxu0 %v3985
      %v9059 = vpop.f32.mrf.mxu0
      %v9060 = vadd.f32 0.0, %v9059
      %v9061 = vpop.f32.mrf.mxu0
      %v9062 = vadd.f32 0.0, %v9061
      %9063 = vmatmul.bf16.gmra.mxu0 %v3986
      %v9064 = vpop.f32.mrf.mxu0
      %v9065 = vadd.f32 0.0, %v9064
      %v9066 = vpop.f32.mrf.mxu0
      %v9067 = vadd.f32 0.0, %v9066
      %9068 = vmatmul.bf16.gmra.mxu0 %v3987
      %v9069 = vpop.f32.mrf.mxu0
      %v9070 = vadd.f32 0.0, %v9069
      %v9071 = vpop.f32.mrf.mxu0
      %v9072 = vadd.f32 0.0, %v9071
      %9073 = vmatmul.bf16.gmra.mxu0 %v6055
      %v9074 = vpop.f32.mrf.mxu0
      %v9075 = vadd.f32 0.0, %v9074
      %v9076 = vpop.f32.mrf.mxu0
      %v9077 = vadd.f32 0.0, %v9076
      %9078 = vmatmul.bf16.gmra.mxu0 %v7039
      %v9079 = vpop.f32.mrf.mxu0
      %v9080 = vadd.f32 0.0, %v9079
      %v9081 = vpop.f32.mrf.mxu0
      %v9082 = vadd.f32 0.0, %v9081
      %9083 = vmatmul.bf16.gmra.mxu0 %v7040
      %v9084 = vpop.f32.mrf.mxu0
      %v9085 = vadd.f32 0.0, %v9084
      %v9086 = vpop.f32.mrf.mxu0
      %v9087 = vadd.f32 0.0, %v9086
      %9088 = vmatmul.bf16.gmra.mxu0 %v7041
      %v9089 = vpop.f32.mrf.mxu0
      %v9090 = vadd.f32 0.0, %v9089
      %v9091 = vpop.f32.mrf.mxu0
      %v9092 = vadd.f32 0.0, %v9091
      %9093 = vmatmul.bf16.gmra.mxu0 %v8864
      %v9094 = vpop.f32.mrf.mxu0
      %v9095 = vadd.f32 0.0, %v9094
      %v9096 = vpop.f32.mrf.mxu0
      %v9097 = vadd.f32 0.0, %v9096
      %9098 = vdwg.mxu0
      %v9099 = vadd.f32 %v8796, %v8940
      %v9100 = vadd.f32 %v8797, %v8942
      %v9101 = vadd.f32 %v8798, %v8945
      %v9102 = vadd.f32 %v8799, %v8947
      %v9103 = vadd.f32 %v8800, %v8950
      %v9104 = vadd.f32 %v8801, %v8952
      %v9105 = vadd.f32 %v8802, %v8955
      %v9106 = vadd.f32 %v8803, %v8957
      %v9107 = vadd.f32 %v8804, %v8960
      %v9108 = vadd.f32 %v8805, %v8962
      %v9109 = vadd.f32 %v8806, %v8965
      %v9110 = vadd.f32 %v8807, %v8967
      %v9111 = vadd.f32 %v8808, %v8970
      %v9112 = vadd.f32 %v8809, %v8972
      %v9113 = vadd.f32 %v8810, %v8975
      %v9114 = vadd.f32 %v8811, %v8977
      %v9115 = vadd.f32 %v8812, %v8980
      %v9116 = vadd.f32 %v8813, %v8982
      %v9117 = vadd.f32 %v8814, %v8985
      %v9118 = vadd.f32 %v8815, %v8987
      %v9119 = vadd.f32 %v8816, %v8990
      %v9120 = vadd.f32 %v8817, %v8992
      %v9121 = vadd.f32 %v8818, %v8995
      %v9122 = vadd.f32 %v8819, %v8997
      %v9123 = vadd.f32 %v8820, %v9000
      %v9124 = vadd.f32 %v8821, %v9002
      %v9125 = vadd.f32 %v8822, %v9005
      %v9126 = vadd.f32 %v8823, %v9007
      %v9127 = vadd.f32 %v8824, %v9010
      %v9128 = vadd.f32 %v8825, %v9012
      %v9129 = vadd.f32 %v8826, %v9015
      %v9130 = vadd.f32 %v8827, %v9017
      %v9131 = vadd.f32 %v8828, %v9020
      %v9132 = vadd.f32 %v8829, %v9022
      %v9133 = vadd.f32 %v8830, %v9025
      %v9134 = vadd.f32 %v8831, %v9027
      %v9135 = vadd.f32 %v8832, %v9030
      %v9136 = vadd.f32 %v8833, %v9032
      %v9137 = vadd.f32 %v8834, %v9035
      %v9138 = vadd.f32 %v8835, %v9037
      %v9139 = vadd.f32 %v8836, %v9040
      %v9140 = vadd.f32 %v8837, %v9042
      %v9141 = vadd.f32 %v8838, %v9045
      %v9142 = vadd.f32 %v8839, %v9047
      %v9143 = vadd.f32 %v8840, %v9050
      %v9144 = vadd.f32 %v8841, %v9052
      %v9145 = vadd.f32 %v8842, %v9055
      %v9146 = vadd.f32 %v8843, %v9057
      %v9147 = vadd.f32 %v8844, %v9060
      %v9148 = vadd.f32 %v8845, %v9062
      %v9149 = vadd.f32 %v8846, %v9065
      %v9150 = vadd.f32 %v8847, %v9067
      %v9151 = vadd.f32 %v8848, %v9070
      %v9152 = vadd.f32 %v8849, %v9072
      %v9153 = vadd.f32 %v8850, %v9075
      %v9154 = vadd.f32 %v8851, %v9077
      %v9155 = vadd.f32 %v8852, %v9080
      %v9156 = vadd.f32 %v8853, %v9082
      %v9157 = vadd.f32 %v8854, %v9085
      %v9158 = vadd.f32 %v8855, %v9087
      %v9159 = vadd.f32 %v8856, %v9090
      %v9160 = vadd.f32 %v8857, %v9092
      %v9161 = vadd.f32 %v8858, %v9095
      %v9162 = vadd.f32 %v8859, %v9097
      %v9163 = vpack.c.bf16 %v2765, %v2763
      %v9164 = vpack.c.bf16 %v2769, %v2767
      %v9165 = vpack.c.bf16 %v2773, %v2771
      %v9166 = vpack.c.bf16 %v2777, %v2775
      %s9167 = scalar_lea.vmem %s4, 1152
      %v9168 = vld [vmem:[%s9167] sm:$0xf]
      %v9169 = vld [vmem:[%s9167 + $0x4] sm:$0xf]
      %v9170 = vld [vmem:[%s9167 + $0x8] sm:$0xf]
      %v9171 = vld [vmem:[%s9167 + $0xc] sm:$0xf]
      %v9172 = vld [vmem:[%s9167 + $0x10] sm:$0xf]
      %v9173 = vld [vmem:[%s9167 + $0x14] sm:$0xf]
      %v9174 = vld [vmem:[%s9167 + $0x18] sm:$0xf]
      %v9175 = vld [vmem:[%s9167 + $0x1c] sm:$0xf]
      %v9176 = vld [vmem:[%s9167 + $0x20] sm:$0xf]
      %v9177 = vld [vmem:[%s9167 + $0x24] sm:$0xf]
      %v9178 = vld [vmem:[%s9167 + $0x28] sm:$0xf]
      %v9179 = vld [vmem:[%s9167 + $0x2c] sm:$0xf]
      %v9180 = vld [vmem:[%s9167 + $0x30] sm:$0xf]
      %v9181 = vld [vmem:[%s9167 + $0x34] sm:$0xf]
      %v9182 = vld [vmem:[%s9167 + $0x38] sm:$0xf]
      %v9183 = vld [vmem:[%s9167 + $0x3c] sm:$0xf]
      %v9200 = vunpack.c.l.b16 %v9168
      %v9201 = vunpack.c.l.b16 %v9169
      %v9202 = vunpack.c.l.b16 %v9170
      %v9203 = vunpack.c.l.b16 %v9171
      %v9204 = vunpack.c.l.b16 %v9172
      %v9205 = vunpack.c.l.b16 %v9173
      %v9206 = vunpack.c.l.b16 %v9174
      %v9207 = vunpack.c.l.b16 %v9175
      %v9208 = vunpack.c.l.b16 %v9176
      %v9209 = vunpack.c.l.b16 %v9177
      %v9210 = vunpack.c.l.b16 %v9178
      %v9211 = vunpack.c.l.b16 %v9179
      %v9212 = vunpack.c.l.b16 %v9180
      %v9213 = vunpack.c.l.b16 %v9181
      %v9214 = vunpack.c.l.b16 %v9182
      %v9215 = vunpack.c.l.b16 %v9183
      %v9216 = vpack.c.b16 %v9201, %v9200
      %v9217 = vpack.c.b16 %v9203, %v9202
      %v9218 = vpack.c.b16 %v9205, %v9204
      %v9219 = vpack.c.b16 %v9207, %v9206
      %v9220 = vpack.c.b16 %v9209, %v9208
      %v9221 = vpack.c.b16 %v9211, %v9210
      %v9222 = vpack.c.b16 %v9213, %v9212
      %v9223 = vpack.c.b16 %v9215, %v9214
      %9232 = vmatpush.bf16.msra.mxu0 %v9223
      %9233 = vmatpush.bf16.msra.mxu0 %v9222
      %9234 = vmatpush.bf16.msra.mxu0 %v9221
      %9235 = vmatpush.bf16.msra.mxu0 %v9220
      %9236 = vmatpush.bf16.msra.mxu0 %v9219
      %9237 = vmatpush.bf16.msra.mxu0 %v9218
      %9238 = vmatpush.bf16.msra.mxu0 %v9217
      %9239 = vmatpush.bf16.msra.mxu0 %v9216
      %9240 = vmatmul.bf16.gmra.mxu0 %v2791
      %v9241 = vpop.f32.mrf.mxu0
      %v9242 = vadd.f32 0.0, %v9241
      %v9243 = vpop.f32.mrf.mxu0
      %v9244 = vadd.f32 0.0, %v9243
      %9245 = vmatmul.bf16.gmra.mxu0 %v2792
      %v9246 = vpop.f32.mrf.mxu0
      %v9247 = vadd.f32 0.0, %v9246
      %v9248 = vpop.f32.mrf.mxu0
      %v9249 = vadd.f32 0.0, %v9248
      %9250 = vmatmul.bf16.gmra.mxu0 %v2793
      %v9251 = vpop.f32.mrf.mxu0
      %v9252 = vadd.f32 0.0, %v9251
      %v9253 = vpop.f32.mrf.mxu0
      %v9254 = vadd.f32 0.0, %v9253
      %9255 = vmatmul.bf16.gmra.mxu0 %v2794
      %v9256 = vpop.f32.mrf.mxu0
      %v9257 = vadd.f32 0.0, %v9256
      %v9258 = vpop.f32.mrf.mxu0
      %v9259 = vadd.f32 0.0, %v9258
      %9260 = vmatmul.bf16.gmra.mxu0 %v2795
      %v9261 = vpop.f32.mrf.mxu0
      %v9262 = vadd.f32 0.0, %v9261
      %v9263 = vpop.f32.mrf.mxu0
      %v9264 = vadd.f32 0.0, %v9263
      %9265 = vmatmul.bf16.gmra.mxu0 %v2796
      %v9266 = vpop.f32.mrf.mxu0
      %v9267 = vadd.f32 0.0, %v9266
      %v9268 = vpop.f32.mrf.mxu0
      %v9269 = vadd.f32 0.0, %v9268
      %9270 = vmatmul.bf16.gmra.mxu0 %v2797
      %v9271 = vpop.f32.mrf.mxu0
      %v9272 = vadd.f32 0.0, %v9271
      %v9273 = vpop.f32.mrf.mxu0
      %v9274 = vadd.f32 0.0, %v9273
      %9275 = vmatmul.bf16.gmra.mxu0 %v2798
      %v9276 = vpop.f32.mrf.mxu0
      %v9277 = vadd.f32 0.0, %v9276
      %v9278 = vpop.f32.mrf.mxu0
      %v9279 = vadd.f32 0.0, %v9278
      %9280 = vmatmul.bf16.gmra.mxu0 %v2799
      %v9281 = vpop.f32.mrf.mxu0
      %v9282 = vadd.f32 0.0, %v9281
      %v9283 = vpop.f32.mrf.mxu0
      %v9284 = vadd.f32 0.0, %v9283
      %9285 = vmatmul.bf16.gmra.mxu0 %v2800
      %v9286 = vpop.f32.mrf.mxu0
      %v9287 = vadd.f32 0.0, %v9286
      %v9288 = vpop.f32.mrf.mxu0
      %v9289 = vadd.f32 0.0, %v9288
      %9290 = vmatmul.bf16.gmra.mxu0 %v2801
      %v9291 = vpop.f32.mrf.mxu0
      %v9292 = vadd.f32 0.0, %v9291
      %v9293 = vpop.f32.mrf.mxu0
      %v9294 = vadd.f32 0.0, %v9293
      %9295 = vmatmul.bf16.gmra.mxu0 %v2802
      %v9296 = vpop.f32.mrf.mxu0
      %v9297 = vadd.f32 0.0, %v9296
      %v9298 = vpop.f32.mrf.mxu0
      %v9299 = vadd.f32 0.0, %v9298
      %9300 = vmatmul.bf16.gmra.mxu0 %v2803
      %v9301 = vpop.f32.mrf.mxu0
      %v9302 = vadd.f32 0.0, %v9301
      %v9303 = vpop.f32.mrf.mxu0
      %v9304 = vadd.f32 0.0, %v9303
      %9305 = vmatmul.bf16.gmra.mxu0 %v2804
      %v9306 = vpop.f32.mrf.mxu0
      %v9307 = vadd.f32 0.0, %v9306
      %v9308 = vpop.f32.mrf.mxu0
      %v9309 = vadd.f32 0.0, %v9308
      %9310 = vmatmul.bf16.gmra.mxu0 %v2805
      %v9311 = vpop.f32.mrf.mxu0
      %v9312 = vadd.f32 0.0, %v9311
      %v9313 = vpop.f32.mrf.mxu0
      %v9314 = vadd.f32 0.0, %v9313
      %9315 = vmatmul.bf16.gmra.mxu0 %v2806
      %v9316 = vpop.f32.mrf.mxu0
      %v9317 = vadd.f32 0.0, %v9316
      %v9318 = vpop.f32.mrf.mxu0
      %v9319 = vadd.f32 0.0, %v9318
      %9320 = vmatmul.bf16.gmra.mxu0 %v2807
      %v9321 = vpop.f32.mrf.mxu0
      %v9322 = vadd.f32 0.0, %v9321
      %v9323 = vpop.f32.mrf.mxu0
      %v9324 = vadd.f32 0.0, %v9323
      %9325 = vmatmul.bf16.gmra.mxu0 %v2808
      %v9326 = vpop.f32.mrf.mxu0
      %v9327 = vadd.f32 0.0, %v9326
      %v9328 = vpop.f32.mrf.mxu0
      %v9329 = vadd.f32 0.0, %v9328
      %9330 = vmatmul.bf16.gmra.mxu0 %v2809
      %v9331 = vpop.f32.mrf.mxu0
      %v9332 = vadd.f32 0.0, %v9331
      %v9333 = vpop.f32.mrf.mxu0
      %v9334 = vadd.f32 0.0, %v9333
      %9335 = vmatmul.bf16.gmra.mxu0 %v2810
      %v9336 = vpop.f32.mrf.mxu0
      %v9337 = vadd.f32 0.0, %v9336
      %v9338 = vpop.f32.mrf.mxu0
      %v9339 = vadd.f32 0.0, %v9338
      %9340 = vmatmul.bf16.gmra.mxu0 %v2811
      %v9341 = vpop.f32.mrf.mxu0
      %v9342 = vadd.f32 0.0, %v9341
      %v9343 = vpop.f32.mrf.mxu0
      %v9344 = vadd.f32 0.0, %v9343
      %9345 = vmatmul.bf16.gmra.mxu0 %v2812
      %v9346 = vpop.f32.mrf.mxu0
      %v9347 = vadd.f32 0.0, %v9346
      %v9348 = vpop.f32.mrf.mxu0
      %v9349 = vadd.f32 0.0, %v9348
      %9350 = vmatmul.bf16.gmra.mxu0 %v2813
      %v9351 = vpop.f32.mrf.mxu0
      %v9352 = vadd.f32 0.0, %v9351
      %v9353 = vpop.f32.mrf.mxu0
      %v9354 = vadd.f32 0.0, %v9353
      %9355 = vmatmul.bf16.gmra.mxu0 %v2814
      %v9356 = vpop.f32.mrf.mxu0
      %v9357 = vadd.f32 0.0, %v9356
      %v9358 = vpop.f32.mrf.mxu0
      %v9359 = vadd.f32 0.0, %v9358
      %9360 = vmatmul.bf16.gmra.mxu0 %v6354
      %v9361 = vpop.f32.mrf.mxu0
      %v9362 = vadd.f32 0.0, %v9361
      %v9363 = vpop.f32.mrf.mxu0
      %v9364 = vadd.f32 0.0, %v9363
      %9365 = vmatmul.bf16.gmra.mxu0 %v6355
      %v9366 = vpop.f32.mrf.mxu0
      %v9367 = vadd.f32 0.0, %v9366
      %v9368 = vpop.f32.mrf.mxu0
      %v9369 = vadd.f32 0.0, %v9368
      %9370 = vmatmul.bf16.gmra.mxu0 %v6356
      %v9371 = vpop.f32.mrf.mxu0
      %v9372 = vadd.f32 0.0, %v9371
      %v9373 = vpop.f32.mrf.mxu0
      %v9374 = vadd.f32 0.0, %v9373
      %9375 = vmatmul.bf16.gmra.mxu0 %v6357
      %v9376 = vpop.f32.mrf.mxu0
      %v9377 = vadd.f32 0.0, %v9376
      %v9378 = vpop.f32.mrf.mxu0
      %v9379 = vadd.f32 0.0, %v9378
      %9380 = vmatmul.bf16.gmra.mxu0 %v9163
      %v9381 = vpop.f32.mrf.mxu0
      %v9382 = vadd.f32 0.0, %v9381
      %v9383 = vpop.f32.mrf.mxu0
      %v9384 = vadd.f32 0.0, %v9383
      %9385 = vmatmul.bf16.gmra.mxu0 %v9164
      %v9386 = vpop.f32.mrf.mxu0
      %v9387 = vadd.f32 0.0, %v9386
      %v9388 = vpop.f32.mrf.mxu0
      %v9389 = vadd.f32 0.0, %v9388
      %9390 = vmatmul.bf16.gmra.mxu0 %v9165
      %v9391 = vpop.f32.mrf.mxu0
      %v9392 = vadd.f32 0.0, %v9391
      %v9393 = vpop.f32.mrf.mxu0
      %v9394 = vadd.f32 0.0, %v9393
      %9395 = vmatmul.bf16.gmra.mxu0 %v9166
      %v9396 = vpop.f32.mrf.mxu0
      %v9397 = vadd.f32 0.0, %v9396
      %v9398 = vpop.f32.mrf.mxu0
      %v9399 = vadd.f32 0.0, %v9398
      %9400 = vdwg.mxu0
      %v9401 = vadd.f32 %v9099, %v9242
      %v9402 = vadd.f32 %v9100, %v9244
      %v9403 = vadd.f32 %v9101, %v9247
      %v9404 = vadd.f32 %v9102, %v9249
      %v9405 = vadd.f32 %v9103, %v9252
      %v9406 = vadd.f32 %v9104, %v9254
      %v9407 = vadd.f32 %v9105, %v9257
      %v9408 = vadd.f32 %v9106, %v9259
      %v9409 = vadd.f32 %v9107, %v9262
      %v9410 = vadd.f32 %v9108, %v9264
      %v9411 = vadd.f32 %v9109, %v9267
      %v9412 = vadd.f32 %v9110, %v9269
      %v9413 = vadd.f32 %v9111, %v9272
      %v9414 = vadd.f32 %v9112, %v9274
      %v9415 = vadd.f32 %v9113, %v9277
      %v9416 = vadd.f32 %v9114, %v9279
      %v9417 = vadd.f32 %v9115, %v9282
      %v9418 = vadd.f32 %v9116, %v9284
      %v9419 = vadd.f32 %v9117, %v9287
      %v9420 = vadd.f32 %v9118, %v9289
      %v9421 = vadd.f32 %v9119, %v9292
      %v9422 = vadd.f32 %v9120, %v9294
      %v9423 = vadd.f32 %v9121, %v9297
      %v9424 = vadd.f32 %v9122, %v9299
      %v9425 = vadd.f32 %v9123, %v9302
      %v9426 = vadd.f32 %v9124, %v9304
      %v9427 = vadd.f32 %v9125, %v9307
      %v9428 = vadd.f32 %v9126, %v9309
      %v9429 = vadd.f32 %v9127, %v9312
      %v9430 = vadd.f32 %v9128, %v9314
      %v9431 = vadd.f32 %v9129, %v9317
      %v9432 = vadd.f32 %v9130, %v9319
      %v9433 = vadd.f32 %v9131, %v9322
      %v9434 = vadd.f32 %v9132, %v9324
      %v9435 = vadd.f32 %v9133, %v9327
      %v9436 = vadd.f32 %v9134, %v9329
      %v9437 = vadd.f32 %v9135, %v9332
      %v9438 = vadd.f32 %v9136, %v9334
      %v9439 = vadd.f32 %v9137, %v9337
      %v9440 = vadd.f32 %v9138, %v9339
      %v9441 = vadd.f32 %v9139, %v9342
      %v9442 = vadd.f32 %v9140, %v9344
      %v9443 = vadd.f32 %v9141, %v9347
      %v9444 = vadd.f32 %v9142, %v9349
      %v9445 = vadd.f32 %v9143, %v9352
      %v9446 = vadd.f32 %v9144, %v9354
      %v9447 = vadd.f32 %v9145, %v9357
      %v9448 = vadd.f32 %v9146, %v9359
      %v9449 = vadd.f32 %v9147, %v9362
      %v9450 = vadd.f32 %v9148, %v9364
      %v9451 = vadd.f32 %v9149, %v9367
      %v9452 = vadd.f32 %v9150, %v9369
      %v9453 = vadd.f32 %v9151, %v9372
      %v9454 = vadd.f32 %v9152, %v9374
      %v9455 = vadd.f32 %v9153, %v9377
      %v9456 = vadd.f32 %v9154, %v9379
      %v9457 = vadd.f32 %v9155, %v9382
      %v9458 = vadd.f32 %v9156, %v9384
      %v9459 = vadd.f32 %v9157, %v9387
      %v9460 = vadd.f32 %v9158, %v9389
      %v9461 = vadd.f32 %v9159, %v9392
      %v9462 = vadd.f32 %v9160, %v9394
      %v9463 = vadd.f32 %v9161, %v9397
      %v9464 = vadd.f32 %v9162, %v9399
      %v9481 = vrot.slane %v2763, 1
      %v9482 = vrot.slane %v2764, 1
      %v9483 = vsel %vm2959, %v9481, %v9482
      %v9484 = vrot.slane %v2765, 1
      %v9485 = vrot.slane %v2766, 1
      %v9486 = vsel %vm2959, %v9484, %v9485
      %v9487 = vrot.slane %v2767, 1
      %v9488 = vrot.slane %v2768, 1
      %v9489 = vsel %vm2959, %v9487, %v9488
      %v9490 = vrot.slane %v2769, 1
      %v9491 = vrot.slane %v2770, 1
      %v9492 = vsel %vm2959, %v9490, %v9491
      %v9493 = vrot.slane %v2771, 1
      %v9494 = vrot.slane %v2772, 1
      %v9495 = vsel %vm2959, %v9493, %v9494
      %v9496 = vrot.slane %v2773, 1
      %v9497 = vrot.slane %v2774, 1
      %v9498 = vsel %vm2959, %v9496, %v9497
      %v9499 = vrot.slane %v2775, 1
      %v9500 = vrot.slane %v2776, 1
      %v9501 = vsel %vm2959, %v9499, %v9500
      %v9502 = vrot.slane %v2777, 1
      %v9503 = vrot.slane %v2778, 1
      %v9504 = vsel %vm2959, %v9502, %v9503
      %v9513 = vpack.c.bf16 %v9486, %v9483
      %v9514 = vpack.c.bf16 %v9492, %v9489
      %v9515 = vpack.c.bf16 %v9498, %v9495
      %v9516 = vpack.c.bf16 %v9504, %v9501
      %s9517 = scalar_lea.vmem %s4, 1216
      %v9518 = vld [vmem:[%s9517] sm:$0xf]
      %v9519 = vld [vmem:[%s9517 + $0x4] sm:$0xf]
      %v9520 = vld [vmem:[%s9517 + $0x8] sm:$0xf]
      %v9521 = vld [vmem:[%s9517 + $0xc] sm:$0xf]
      %v9522 = vld [vmem:[%s9517 + $0x10] sm:$0xf]
      %v9523 = vld [vmem:[%s9517 + $0x14] sm:$0xf]
      %v9524 = vld [vmem:[%s9517 + $0x18] sm:$0xf]
      %v9525 = vld [vmem:[%s9517 + $0x1c] sm:$0xf]
      %v9526 = vld [vmem:[%s9517 + $0x20] sm:$0xf]
      %v9527 = vld [vmem:[%s9517 + $0x24] sm:$0xf]
      %v9528 = vld [vmem:[%s9517 + $0x28] sm:$0xf]
      %v9529 = vld [vmem:[%s9517 + $0x2c] sm:$0xf]
      %v9530 = vld [vmem:[%s9517 + $0x30] sm:$0xf]
      %v9531 = vld [vmem:[%s9517 + $0x34] sm:$0xf]
      %v9532 = vld [vmem:[%s9517 + $0x38] sm:$0xf]
      %v9533 = vld [vmem:[%s9517 + $0x3c] sm:$0xf]
      %v9550 = vunpack.c.l.b16 %v9518
      %v9551 = vunpack.c.l.b16 %v9519
      %v9552 = vunpack.c.l.b16 %v9520
      %v9553 = vunpack.c.l.b16 %v9521
      %v9554 = vunpack.c.l.b16 %v9522
      %v9555 = vunpack.c.l.b16 %v9523
      %v9556 = vunpack.c.l.b16 %v9524
      %v9557 = vunpack.c.l.b16 %v9525
      %v9558 = vunpack.c.l.b16 %v9526
      %v9559 = vunpack.c.l.b16 %v9527
      %v9560 = vunpack.c.l.b16 %v9528
      %v9561 = vunpack.c.l.b16 %v9529
      %v9562 = vunpack.c.l.b16 %v9530
      %v9563 = vunpack.c.l.b16 %v9531
      %v9564 = vunpack.c.l.b16 %v9532
      %v9565 = vunpack.c.l.b16 %v9533
      %v9566 = vpack.c.b16 %v9551, %v9550
      %v9567 = vpack.c.b16 %v9553, %v9552
      %v9568 = vpack.c.b16 %v9555, %v9554
      %v9569 = vpack.c.b16 %v9557, %v9556
      %v9570 = vpack.c.b16 %v9559, %v9558
      %v9571 = vpack.c.b16 %v9561, %v9560
      %v9572 = vpack.c.b16 %v9563, %v9562
      %v9573 = vpack.c.b16 %v9565, %v9564
      %9582 = vmatpush.bf16.msra.mxu0 %v9573
      %9583 = vmatpush.bf16.msra.mxu0 %v9572
      %9584 = vmatpush.bf16.msra.mxu0 %v9571
      %9585 = vmatpush.bf16.msra.mxu0 %v9570
      %9586 = vmatpush.bf16.msra.mxu0 %v9569
      %9587 = vmatpush.bf16.msra.mxu0 %v9568
      %9588 = vmatpush.bf16.msra.mxu0 %v9567
      %9589 = vmatpush.bf16.msra.mxu0 %v9566
      %9590 = vmatmul.bf16.gmra.mxu0 %v3224
      %v9591 = vpop.f32.mrf.mxu0
      %v9592 = vadd.f32 0.0, %v9591
      %v9593 = vpop.f32.mrf.mxu0
      %v9594 = vadd.f32 0.0, %v9593
      %9595 = vmatmul.bf16.gmra.mxu0 %v3225
      %v9596 = vpop.f32.mrf.mxu0
      %v9597 = vadd.f32 0.0, %v9596
      %v9598 = vpop.f32.mrf.mxu0
      %v9599 = vadd.f32 0.0, %v9598
      %9600 = vmatmul.bf16.gmra.mxu0 %v3226
      %v9601 = vpop.f32.mrf.mxu0
      %v9602 = vadd.f32 0.0, %v9601
      %v9603 = vpop.f32.mrf.mxu0
      %v9604 = vadd.f32 0.0, %v9603
      %9605 = vmatmul.bf16.gmra.mxu0 %v3227
      %v9606 = vpop.f32.mrf.mxu0
      %v9607 = vadd.f32 0.0, %v9606
      %v9608 = vpop.f32.mrf.mxu0
      %v9609 = vadd.f32 0.0, %v9608
      %9610 = vmatmul.bf16.gmra.mxu0 %v3228
      %v9611 = vpop.f32.mrf.mxu0
      %v9612 = vadd.f32 0.0, %v9611
      %v9613 = vpop.f32.mrf.mxu0
      %v9614 = vadd.f32 0.0, %v9613
      %9615 = vmatmul.bf16.gmra.mxu0 %v3229
      %v9616 = vpop.f32.mrf.mxu0
      %v9617 = vadd.f32 0.0, %v9616
      %v9618 = vpop.f32.mrf.mxu0
      %v9619 = vadd.f32 0.0, %v9618
      %9620 = vmatmul.bf16.gmra.mxu0 %v3230
      %v9621 = vpop.f32.mrf.mxu0
      %v9622 = vadd.f32 0.0, %v9621
      %v9623 = vpop.f32.mrf.mxu0
      %v9624 = vadd.f32 0.0, %v9623
      %9625 = vmatmul.bf16.gmra.mxu0 %v3231
      %v9626 = vpop.f32.mrf.mxu0
      %v9627 = vadd.f32 0.0, %v9626
      %v9628 = vpop.f32.mrf.mxu0
      %v9629 = vadd.f32 0.0, %v9628
      %9630 = vmatmul.bf16.gmra.mxu0 %v3232
      %v9631 = vpop.f32.mrf.mxu0
      %v9632 = vadd.f32 0.0, %v9631
      %v9633 = vpop.f32.mrf.mxu0
      %v9634 = vadd.f32 0.0, %v9633
      %9635 = vmatmul.bf16.gmra.mxu0 %v3233
      %v9636 = vpop.f32.mrf.mxu0
      %v9637 = vadd.f32 0.0, %v9636
      %v9638 = vpop.f32.mrf.mxu0
      %v9639 = vadd.f32 0.0, %v9638
      %9640 = vmatmul.bf16.gmra.mxu0 %v3234
      %v9641 = vpop.f32.mrf.mxu0
      %v9642 = vadd.f32 0.0, %v9641
      %v9643 = vpop.f32.mrf.mxu0
      %v9644 = vadd.f32 0.0, %v9643
      %9645 = vmatmul.bf16.gmra.mxu0 %v3235
      %v9646 = vpop.f32.mrf.mxu0
      %v9647 = vadd.f32 0.0, %v9646
      %v9648 = vpop.f32.mrf.mxu0
      %v9649 = vadd.f32 0.0, %v9648
      %9650 = vmatmul.bf16.gmra.mxu0 %v3236
      %v9651 = vpop.f32.mrf.mxu0
      %v9652 = vadd.f32 0.0, %v9651
      %v9653 = vpop.f32.mrf.mxu0
      %v9654 = vadd.f32 0.0, %v9653
      %9655 = vmatmul.bf16.gmra.mxu0 %v3237
      %v9656 = vpop.f32.mrf.mxu0
      %v9657 = vadd.f32 0.0, %v9656
      %v9658 = vpop.f32.mrf.mxu0
      %v9659 = vadd.f32 0.0, %v9658
      %9660 = vmatmul.bf16.gmra.mxu0 %v3238
      %v9661 = vpop.f32.mrf.mxu0
      %v9662 = vadd.f32 0.0, %v9661
      %v9663 = vpop.f32.mrf.mxu0
      %v9664 = vadd.f32 0.0, %v9663
      %9665 = vmatmul.bf16.gmra.mxu0 %v3239
      %v9666 = vpop.f32.mrf.mxu0
      %v9667 = vadd.f32 0.0, %v9666
      %v9668 = vpop.f32.mrf.mxu0
      %v9669 = vadd.f32 0.0, %v9668
      %9670 = vmatmul.bf16.gmra.mxu0 %v3240
      %v9671 = vpop.f32.mrf.mxu0
      %v9672 = vadd.f32 0.0, %v9671
      %v9673 = vpop.f32.mrf.mxu0
      %v9674 = vadd.f32 0.0, %v9673
      %9675 = vmatmul.bf16.gmra.mxu0 %v3241
      %v9676 = vpop.f32.mrf.mxu0
      %v9677 = vadd.f32 0.0, %v9676
      %v9678 = vpop.f32.mrf.mxu0
      %v9679 = vadd.f32 0.0, %v9678
      %9680 = vmatmul.bf16.gmra.mxu0 %v3242
      %v9681 = vpop.f32.mrf.mxu0
      %v9682 = vadd.f32 0.0, %v9681
      %v9683 = vpop.f32.mrf.mxu0
      %v9684 = vadd.f32 0.0, %v9683
      %9685 = vmatmul.bf16.gmra.mxu0 %v3243
      %v9686 = vpop.f32.mrf.mxu0
      %v9687 = vadd.f32 0.0, %v9686
      %v9688 = vpop.f32.mrf.mxu0
      %v9689 = vadd.f32 0.0, %v9688
      %9690 = vmatmul.bf16.gmra.mxu0 %v3244
      %v9691 = vpop.f32.mrf.mxu0
      %v9692 = vadd.f32 0.0, %v9691
      %v9693 = vpop.f32.mrf.mxu0
      %v9694 = vadd.f32 0.0, %v9693
      %9695 = vmatmul.bf16.gmra.mxu0 %v3245
      %v9696 = vpop.f32.mrf.mxu0
      %v9697 = vadd.f32 0.0, %v9696
      %v9698 = vpop.f32.mrf.mxu0
      %v9699 = vadd.f32 0.0, %v9698
      %9700 = vmatmul.bf16.gmra.mxu0 %v3246
      %v9701 = vpop.f32.mrf.mxu0
      %v9702 = vadd.f32 0.0, %v9701
      %v9703 = vpop.f32.mrf.mxu0
      %v9704 = vadd.f32 0.0, %v9703
      %9705 = vmatmul.bf16.gmra.mxu0 %v3247
      %v9706 = vpop.f32.mrf.mxu0
      %v9707 = vadd.f32 0.0, %v9706
      %v9708 = vpop.f32.mrf.mxu0
      %v9709 = vadd.f32 0.0, %v9708
      %9710 = vmatmul.bf16.gmra.mxu0 %v6704
      %v9711 = vpop.f32.mrf.mxu0
      %v9712 = vadd.f32 0.0, %v9711
      %v9713 = vpop.f32.mrf.mxu0
      %v9714 = vadd.f32 0.0, %v9713
      %9715 = vmatmul.bf16.gmra.mxu0 %v6705
      %v9716 = vpop.f32.mrf.mxu0
      %v9717 = vadd.f32 0.0, %v9716
      %v9718 = vpop.f32.mrf.mxu0
      %v9719 = vadd.f32 0.0, %v9718
      %9720 = vmatmul.bf16.gmra.mxu0 %v6706
      %v9721 = vpop.f32.mrf.mxu0
      %v9722 = vadd.f32 0.0, %v9721
      %v9723 = vpop.f32.mrf.mxu0
      %v9724 = vadd.f32 0.0, %v9723
      %9725 = vmatmul.bf16.gmra.mxu0 %v6707
      %v9726 = vpop.f32.mrf.mxu0
      %v9727 = vadd.f32 0.0, %v9726
      %v9728 = vpop.f32.mrf.mxu0
      %v9729 = vadd.f32 0.0, %v9728
      %9730 = vmatmul.bf16.gmra.mxu0 %v9513
      %v9731 = vpop.f32.mrf.mxu0
      %v9732 = vadd.f32 0.0, %v9731
      %v9733 = vpop.f32.mrf.mxu0
      %v9734 = vadd.f32 0.0, %v9733
      %9735 = vmatmul.bf16.gmra.mxu0 %v9514
      %v9736 = vpop.f32.mrf.mxu0
      %v9737 = vadd.f32 0.0, %v9736
      %v9738 = vpop.f32.mrf.mxu0
      %v9739 = vadd.f32 0.0, %v9738
      %9740 = vmatmul.bf16.gmra.mxu0 %v9515
      %v9741 = vpop.f32.mrf.mxu0
      %v9742 = vadd.f32 0.0, %v9741
      %v9743 = vpop.f32.mrf.mxu0
      %v9744 = vadd.f32 0.0, %v9743
      %9745 = vmatmul.bf16.gmra.mxu0 %v9516
      %v9746 = vpop.f32.mrf.mxu0
      %v9747 = vadd.f32 0.0, %v9746
      %v9748 = vpop.f32.mrf.mxu0
      %v9749 = vadd.f32 0.0, %v9748
      %9750 = vdwg.mxu0
      %v9751 = vadd.f32 %v9401, %v9592
      %v9752 = vadd.f32 %v9402, %v9594
      %v9753 = vadd.f32 %v9403, %v9597
      %v9754 = vadd.f32 %v9404, %v9599
      %v9755 = vadd.f32 %v9405, %v9602
      %v9756 = vadd.f32 %v9406, %v9604
      %v9757 = vadd.f32 %v9407, %v9607
      %v9758 = vadd.f32 %v9408, %v9609
      %v9759 = vadd.f32 %v9409, %v9612
      %v9760 = vadd.f32 %v9410, %v9614
      %v9761 = vadd.f32 %v9411, %v9617
      %v9762 = vadd.f32 %v9412, %v9619
      %v9763 = vadd.f32 %v9413, %v9622
      %v9764 = vadd.f32 %v9414, %v9624
      %v9765 = vadd.f32 %v9415, %v9627
      %v9766 = vadd.f32 %v9416, %v9629
      %v9767 = vadd.f32 %v9417, %v9632
      %v9768 = vadd.f32 %v9418, %v9634
      %v9769 = vadd.f32 %v9419, %v9637
      %v9770 = vadd.f32 %v9420, %v9639
      %v9771 = vadd.f32 %v9421, %v9642
      %v9772 = vadd.f32 %v9422, %v9644
      %v9773 = vadd.f32 %v9423, %v9647
      %v9774 = vadd.f32 %v9424, %v9649
      %v9775 = vadd.f32 %v9425, %v9652
      %v9776 = vadd.f32 %v9426, %v9654
      %v9777 = vadd.f32 %v9427, %v9657
      %v9778 = vadd.f32 %v9428, %v9659
      %v9779 = vadd.f32 %v9429, %v9662
      %v9780 = vadd.f32 %v9430, %v9664
      %v9781 = vadd.f32 %v9431, %v9667
      %v9782 = vadd.f32 %v9432, %v9669
      %v9783 = vadd.f32 %v9433, %v9672
      %v9784 = vadd.f32 %v9434, %v9674
      %v9785 = vadd.f32 %v9435, %v9677
      %v9786 = vadd.f32 %v9436, %v9679
      %v9787 = vadd.f32 %v9437, %v9682
      %v9788 = vadd.f32 %v9438, %v9684
      %v9789 = vadd.f32 %v9439, %v9687
      %v9790 = vadd.f32 %v9440, %v9689
      %v9791 = vadd.f32 %v9441, %v9692
      %v9792 = vadd.f32 %v9442, %v9694
      %v9793 = vadd.f32 %v9443, %v9697
      %v9794 = vadd.f32 %v9444, %v9699
      %v9795 = vadd.f32 %v9445, %v9702
      %v9796 = vadd.f32 %v9446, %v9704
      %v9797 = vadd.f32 %v9447, %v9707
      %v9798 = vadd.f32 %v9448, %v9709
      %v9799 = vadd.f32 %v9449, %v9712
      %v9800 = vadd.f32 %v9450, %v9714
      %v9801 = vadd.f32 %v9451, %v9717
      %v9802 = vadd.f32 %v9452, %v9719
      %v9803 = vadd.f32 %v9453, %v9722
      %v9804 = vadd.f32 %v9454, %v9724
      %v9805 = vadd.f32 %v9455, %v9727
      %v9806 = vadd.f32 %v9456, %v9729
      %v9807 = vadd.f32 %v9457, %v9732
      %v9808 = vadd.f32 %v9458, %v9734
      %v9809 = vadd.f32 %v9459, %v9737
      %v9810 = vadd.f32 %v9460, %v9739
      %v9811 = vadd.f32 %v9461, %v9742
      %v9812 = vadd.f32 %v9462, %v9744
      %v9813 = vadd.f32 %v9463, %v9747
      %v9814 = vadd.f32 %v9464, %v9749
      %v9815 = vrot.slane %v2763, 2
      %v9816 = vrot.slane %v2764, 2
      %v9817 = vsel %vm3699, %v9815, %v9816
      %v9818 = vrot.slane %v2765, 2
      %v9819 = vrot.slane %v2766, 2
      %v9820 = vsel %vm3699, %v9818, %v9819
      %v9821 = vrot.slane %v2767, 2
      %v9822 = vrot.slane %v2768, 2
      %v9823 = vsel %vm3699, %v9821, %v9822
      %v9824 = vrot.slane %v2769, 2
      %v9825 = vrot.slane %v2770, 2
      %v9826 = vsel %vm3699, %v9824, %v9825
      %v9827 = vrot.slane %v2771, 2
      %v9828 = vrot.slane %v2772, 2
      %v9829 = vsel %vm3699, %v9827, %v9828
      %v9830 = vrot.slane %v2773, 2
      %v9831 = vrot.slane %v2774, 2
      %v9832 = vsel %vm3699, %v9830, %v9831
      %v9833 = vrot.slane %v2775, 2
      %v9834 = vrot.slane %v2776, 2
      %v9835 = vsel %vm3699, %v9833, %v9834
      %v9836 = vrot.slane %v2777, 2
      %v9837 = vrot.slane %v2778, 2
      %v9838 = vsel %vm3699, %v9836, %v9837
      %v9847 = vpack.c.bf16 %v9820, %v9817
      %v9848 = vpack.c.bf16 %v9826, %v9823
      %v9849 = vpack.c.bf16 %v9832, %v9829
      %v9850 = vpack.c.bf16 %v9838, %v9835
      %s9851 = scalar_lea.vmem %s4, 1280
      %v9852 = vld [vmem:[%s9851] sm:$0xf]
      %v9853 = vld [vmem:[%s9851 + $0x4] sm:$0xf]
      %v9854 = vld [vmem:[%s9851 + $0x8] sm:$0xf]
      %v9855 = vld [vmem:[%s9851 + $0xc] sm:$0xf]
      %v9856 = vld [vmem:[%s9851 + $0x10] sm:$0xf]
      %v9857 = vld [vmem:[%s9851 + $0x14] sm:$0xf]
      %v9858 = vld [vmem:[%s9851 + $0x18] sm:$0xf]
      %v9859 = vld [vmem:[%s9851 + $0x1c] sm:$0xf]
      %v9860 = vld [vmem:[%s9851 + $0x20] sm:$0xf]
      %v9861 = vld [vmem:[%s9851 + $0x24] sm:$0xf]
      %v9862 = vld [vmem:[%s9851 + $0x28] sm:$0xf]
      %v9863 = vld [vmem:[%s9851 + $0x2c] sm:$0xf]
      %v9864 = vld [vmem:[%s9851 + $0x30] sm:$0xf]
      %v9865 = vld [vmem:[%s9851 + $0x34] sm:$0xf]
      %v9866 = vld [vmem:[%s9851 + $0x38] sm:$0xf]
      %v9867 = vld [vmem:[%s9851 + $0x3c] sm:$0xf]
      %v9884 = vunpack.c.l.b16 %v9852
      %v9885 = vunpack.c.l.b16 %v9853
      %v9886 = vunpack.c.l.b16 %v9854
      %v9887 = vunpack.c.l.b16 %v9855
      %v9888 = vunpack.c.l.b16 %v9856
      %v9889 = vunpack.c.l.b16 %v9857
      %v9890 = vunpack.c.l.b16 %v9858
      %v9891 = vunpack.c.l.b16 %v9859
      %v9892 = vunpack.c.l.b16 %v9860
      %v9893 = vunpack.c.l.b16 %v9861
      %v9894 = vunpack.c.l.b16 %v9862
      %v9895 = vunpack.c.l.b16 %v9863
      %v9896 = vunpack.c.l.b16 %v9864
      %v9897 = vunpack.c.l.b16 %v9865
      %v9898 = vunpack.c.l.b16 %v9866
      %v9899 = vunpack.c.l.b16 %v9867
      %v9900 = vpack.c.b16 %v9885, %v9884
      %v9901 = vpack.c.b16 %v9887, %v9886
      %v9902 = vpack.c.b16 %v9889, %v9888
      %v9903 = vpack.c.b16 %v9891, %v9890
      %v9904 = vpack.c.b16 %v9893, %v9892
      %v9905 = vpack.c.b16 %v9895, %v9894
      %v9906 = vpack.c.b16 %v9897, %v9896
      %v9907 = vpack.c.b16 %v9899, %v9898
      %9916 = vmatpush.bf16.msra.mxu0 %v9907
      %9917 = vmatpush.bf16.msra.mxu0 %v9906
      %9918 = vmatpush.bf16.msra.mxu0 %v9905
      %9919 = vmatpush.bf16.msra.mxu0 %v9904
      %9920 = vmatpush.bf16.msra.mxu0 %v9903
      %9921 = vmatpush.bf16.msra.mxu0 %v9902
      %9922 = vmatpush.bf16.msra.mxu0 %v9901
      %9923 = vmatpush.bf16.msra.mxu0 %v9900
      %9924 = vmatmul.bf16.gmra.mxu0 %v3964
      %v9925 = vpop.f32.mrf.mxu0
      %v9926 = vadd.f32 0.0, %v9925
      %v9927 = vpop.f32.mrf.mxu0
      %v9928 = vadd.f32 0.0, %v9927
      %9929 = vmatmul.bf16.gmra.mxu0 %v3965
      %v9930 = vpop.f32.mrf.mxu0
      %v9931 = vadd.f32 0.0, %v9930
      %v9932 = vpop.f32.mrf.mxu0
      %v9933 = vadd.f32 0.0, %v9932
      %9934 = vmatmul.bf16.gmra.mxu0 %v3966
      %v9935 = vpop.f32.mrf.mxu0
      %v9936 = vadd.f32 0.0, %v9935
      %v9937 = vpop.f32.mrf.mxu0
      %v9938 = vadd.f32 0.0, %v9937
      %9939 = vmatmul.bf16.gmra.mxu0 %v3967
      %v9940 = vpop.f32.mrf.mxu0
      %v9941 = vadd.f32 0.0, %v9940
      %v9942 = vpop.f32.mrf.mxu0
      %v9943 = vadd.f32 0.0, %v9942
      %9944 = vmatmul.bf16.gmra.mxu0 %v3968
      %v9945 = vpop.f32.mrf.mxu0
      %v9946 = vadd.f32 0.0, %v9945
      %v9947 = vpop.f32.mrf.mxu0
      %v9948 = vadd.f32 0.0, %v9947
      %9949 = vmatmul.bf16.gmra.mxu0 %v3969
      %v9950 = vpop.f32.mrf.mxu0
      %v9951 = vadd.f32 0.0, %v9950
      %v9952 = vpop.f32.mrf.mxu0
      %v9953 = vadd.f32 0.0, %v9952
      %9954 = vmatmul.bf16.gmra.mxu0 %v3970
      %v9955 = vpop.f32.mrf.mxu0
      %v9956 = vadd.f32 0.0, %v9955
      %v9957 = vpop.f32.mrf.mxu0
      %v9958 = vadd.f32 0.0, %v9957
      %9959 = vmatmul.bf16.gmra.mxu0 %v3971
      %v9960 = vpop.f32.mrf.mxu0
      %v9961 = vadd.f32 0.0, %v9960
      %v9962 = vpop.f32.mrf.mxu0
      %v9963 = vadd.f32 0.0, %v9962
      %9964 = vmatmul.bf16.gmra.mxu0 %v3972
      %v9965 = vpop.f32.mrf.mxu0
      %v9966 = vadd.f32 0.0, %v9965
      %v9967 = vpop.f32.mrf.mxu0
      %v9968 = vadd.f32 0.0, %v9967
      %9969 = vmatmul.bf16.gmra.mxu0 %v3973
      %v9970 = vpop.f32.mrf.mxu0
      %v9971 = vadd.f32 0.0, %v9970
      %v9972 = vpop.f32.mrf.mxu0
      %v9973 = vadd.f32 0.0, %v9972
      %9974 = vmatmul.bf16.gmra.mxu0 %v3974
      %v9975 = vpop.f32.mrf.mxu0
      %v9976 = vadd.f32 0.0, %v9975
      %v9977 = vpop.f32.mrf.mxu0
      %v9978 = vadd.f32 0.0, %v9977
      %9979 = vmatmul.bf16.gmra.mxu0 %v3975
      %v9980 = vpop.f32.mrf.mxu0
      %v9981 = vadd.f32 0.0, %v9980
      %v9982 = vpop.f32.mrf.mxu0
      %v9983 = vadd.f32 0.0, %v9982
      %9984 = vmatmul.bf16.gmra.mxu0 %v3976
      %v9985 = vpop.f32.mrf.mxu0
      %v9986 = vadd.f32 0.0, %v9985
      %v9987 = vpop.f32.mrf.mxu0
      %v9988 = vadd.f32 0.0, %v9987
      %9989 = vmatmul.bf16.gmra.mxu0 %v3977
      %v9990 = vpop.f32.mrf.mxu0
      %v9991 = vadd.f32 0.0, %v9990
      %v9992 = vpop.f32.mrf.mxu0
      %v9993 = vadd.f32 0.0, %v9992
      %9994 = vmatmul.bf16.gmra.mxu0 %v3978
      %v9995 = vpop.f32.mrf.mxu0
      %v9996 = vadd.f32 0.0, %v9995
      %v9997 = vpop.f32.mrf.mxu0
      %v9998 = vadd.f32 0.0, %v9997
      %9999 = vmatmul.bf16.gmra.mxu0 %v3979
      %v10000 = vpop.f32.mrf.mxu0
      %v10001 = vadd.f32 0.0, %v10000
      %v10002 = vpop.f32.mrf.mxu0
      %v10003 = vadd.f32 0.0, %v10002
      %10004 = vmatmul.bf16.gmra.mxu0 %v3980
      %v10005 = vpop.f32.mrf.mxu0
      %v10006 = vadd.f32 0.0, %v10005
      %v10007 = vpop.f32.mrf.mxu0
      %v10008 = vadd.f32 0.0, %v10007
      %10009 = vmatmul.bf16.gmra.mxu0 %v3981
      %v10010 = vpop.f32.mrf.mxu0
      %v10011 = vadd.f32 0.0, %v10010
      %v10012 = vpop.f32.mrf.mxu0
      %v10013 = vadd.f32 0.0, %v10012
      %10014 = vmatmul.bf16.gmra.mxu0 %v3982
      %v10015 = vpop.f32.mrf.mxu0
      %v10016 = vadd.f32 0.0, %v10015
      %v10017 = vpop.f32.mrf.mxu0
      %v10018 = vadd.f32 0.0, %v10017
      %10019 = vmatmul.bf16.gmra.mxu0 %v3983
      %v10020 = vpop.f32.mrf.mxu0
      %v10021 = vadd.f32 0.0, %v10020
      %v10022 = vpop.f32.mrf.mxu0
      %v10023 = vadd.f32 0.0, %v10022
      %10024 = vmatmul.bf16.gmra.mxu0 %v3984
      %v10025 = vpop.f32.mrf.mxu0
      %v10026 = vadd.f32 0.0, %v10025
      %v10027 = vpop.f32.mrf.mxu0
      %v10028 = vadd.f32 0.0, %v10027
      %10029 = vmatmul.bf16.gmra.mxu0 %v3985
      %v10030 = vpop.f32.mrf.mxu0
      %v10031 = vadd.f32 0.0, %v10030
      %v10032 = vpop.f32.mrf.mxu0
      %v10033 = vadd.f32 0.0, %v10032
      %10034 = vmatmul.bf16.gmra.mxu0 %v3986
      %v10035 = vpop.f32.mrf.mxu0
      %v10036 = vadd.f32 0.0, %v10035
      %v10037 = vpop.f32.mrf.mxu0
      %v10038 = vadd.f32 0.0, %v10037
      %10039 = vmatmul.bf16.gmra.mxu0 %v3987
      %v10040 = vpop.f32.mrf.mxu0
      %v10041 = vadd.f32 0.0, %v10040
      %v10042 = vpop.f32.mrf.mxu0
      %v10043 = vadd.f32 0.0, %v10042
      %10044 = vmatmul.bf16.gmra.mxu0 %v7038
      %v10045 = vpop.f32.mrf.mxu0
      %v10046 = vadd.f32 0.0, %v10045
      %v10047 = vpop.f32.mrf.mxu0
      %v10048 = vadd.f32 0.0, %v10047
      %10049 = vmatmul.bf16.gmra.mxu0 %v7039
      %v10050 = vpop.f32.mrf.mxu0
      %v10051 = vadd.f32 0.0, %v10050
      %v10052 = vpop.f32.mrf.mxu0
      %v10053 = vadd.f32 0.0, %v10052
      %10054 = vmatmul.bf16.gmra.mxu0 %v7040
      %v10055 = vpop.f32.mrf.mxu0
      %v10056 = vadd.f32 0.0, %v10055
      %v10057 = vpop.f32.mrf.mxu0
      %v10058 = vadd.f32 0.0, %v10057
      %10059 = vmatmul.bf16.gmra.mxu0 %v7041
      %v10060 = vpop.f32.mrf.mxu0
      %v10061 = vadd.f32 0.0, %v10060
      %v10062 = vpop.f32.mrf.mxu0
      %v10063 = vadd.f32 0.0, %v10062
      %10064 = vmatmul.bf16.gmra.mxu0 %v9847
      %v10065 = vpop.f32.mrf.mxu0
      %v10066 = vadd.f32 0.0, %v10065
      %v10067 = vpop.f32.mrf.mxu0
      %v10068 = vadd.f32 0.0, %v10067
      %10069 = vmatmul.bf16.gmra.mxu0 %v9848
      %v10070 = vpop.f32.mrf.mxu0
      %v10071 = vadd.f32 0.0, %v10070
      %v10072 = vpop.f32.mrf.mxu0
      %v10073 = vadd.f32 0.0, %v10072
      %10074 = vmatmul.bf16.gmra.mxu0 %v9849
      %v10075 = vpop.f32.mrf.mxu0
      %v10076 = vadd.f32 0.0, %v10075
      %v10077 = vpop.f32.mrf.mxu0
      %v10078 = vadd.f32 0.0, %v10077
      %10079 = vmatmul.bf16.gmra.mxu0 %v9850
      %v10080 = vpop.f32.mrf.mxu0
      %v10081 = vadd.f32 0.0, %v10080
      %v10082 = vpop.f32.mrf.mxu0
      %v10083 = vadd.f32 0.0, %v10082
      %10084 = vdwg.mxu0
      %v10085 = vadd.f32 %v9751, %v9926
      %v10086 = vadd.f32 %v9752, %v9928
      %v10087 = vadd.f32 %v9753, %v9931
      %v10088 = vadd.f32 %v9754, %v9933
      %v10089 = vadd.f32 %v9755, %v9936
      %v10090 = vadd.f32 %v9756, %v9938
      %v10091 = vadd.f32 %v9757, %v9941
      %v10092 = vadd.f32 %v9758, %v9943
      %v10093 = vadd.f32 %v9759, %v9946
      %v10094 = vadd.f32 %v9760, %v9948
      %v10095 = vadd.f32 %v9761, %v9951
      %v10096 = vadd.f32 %v9762, %v9953
      %v10097 = vadd.f32 %v9763, %v9956
      %v10098 = vadd.f32 %v9764, %v9958
      %v10099 = vadd.f32 %v9765, %v9961
      %v10100 = vadd.f32 %v9766, %v9963
      %v10101 = vadd.f32 %v9767, %v9966
      %v10102 = vadd.f32 %v9768, %v9968
      %v10103 = vadd.f32 %v9769, %v9971
      %v10104 = vadd.f32 %v9770, %v9973
      %v10105 = vadd.f32 %v9771, %v9976
      %v10106 = vadd.f32 %v9772, %v9978
      %v10107 = vadd.f32 %v9773, %v9981
      %v10108 = vadd.f32 %v9774, %v9983
      %v10109 = vadd.f32 %v9775, %v9986
      %v10110 = vadd.f32 %v9776, %v9988
      %v10111 = vadd.f32 %v9777, %v9991
      %v10112 = vadd.f32 %v9778, %v9993
      %v10113 = vadd.f32 %v9779, %v9996
      %v10114 = vadd.f32 %v9780, %v9998
      %v10115 = vadd.f32 %v9781, %v10001
      %v10116 = vadd.f32 %v9782, %v10003
      %v10117 = vadd.f32 %v9783, %v10006
      %v10118 = vadd.f32 %v9784, %v10008
      %v10119 = vadd.f32 %v9785, %v10011
      %v10120 = vadd.f32 %v9786, %v10013
      %v10121 = vadd.f32 %v9787, %v10016
      %v10122 = vadd.f32 %v9788, %v10018
      %v10123 = vadd.f32 %v9789, %v10021
      %v10124 = vadd.f32 %v9790, %v10023
      %v10125 = vadd.f32 %v9791, %v10026
      %v10126 = vadd.f32 %v9792, %v10028
      %v10127 = vadd.f32 %v9793, %v10031
      %v10128 = vadd.f32 %v9794, %v10033
      %v10129 = vadd.f32 %v9795, %v10036
      %v10130 = vadd.f32 %v9796, %v10038
      %v10131 = vadd.f32 %v9797, %v10041
      %v10132 = vadd.f32 %v9798, %v10043
      %v10133 = vadd.f32 %v9799, %v10046
      %v10134 = vadd.f32 %v9800, %v10048
      %v10135 = vadd.f32 %v9801, %v10051
      %v10136 = vadd.f32 %v9802, %v10053
      %v10137 = vadd.f32 %v9803, %v10056
      %v10138 = vadd.f32 %v9804, %v10058
      %v10139 = vadd.f32 %v9805, %v10061
      %v10140 = vadd.f32 %v9806, %v10063
      %v10141 = vadd.f32 %v9807, %v10066
      %v10142 = vadd.f32 %v9808, %v10068
      %v10143 = vadd.f32 %v9809, %v10071
      %v10144 = vadd.f32 %v9810, %v10073
      %v10145 = vadd.f32 %v9811, %v10076
      %v10146 = vadd.f32 %v9812, %v10078
      %v10147 = vadd.f32 %v9813, %v10081
      %v10148 = vadd.f32 %v9814, %v10083
      %v10149 = vpack.c.bf16 %v2767, %v2765
      %v10150 = vpack.c.bf16 %v2771, %v2769
      %v10151 = vpack.c.bf16 %v2775, %v2773
      %v10152 = vpack.c.bf16 %v2779, %v2777
      %s10153 = scalar_lea.vmem %s4, 1344
      %v10154 = vld [vmem:[%s10153] sm:$0xf]
      %v10155 = vld [vmem:[%s10153 + $0x4] sm:$0xf]
      %v10156 = vld [vmem:[%s10153 + $0x8] sm:$0xf]
      %v10157 = vld [vmem:[%s10153 + $0xc] sm:$0xf]
      %v10158 = vld [vmem:[%s10153 + $0x10] sm:$0xf]
      %v10159 = vld [vmem:[%s10153 + $0x14] sm:$0xf]
      %v10160 = vld [vmem:[%s10153 + $0x18] sm:$0xf]
      %v10161 = vld [vmem:[%s10153 + $0x1c] sm:$0xf]
      %v10162 = vld [vmem:[%s10153 + $0x20] sm:$0xf]
      %v10163 = vld [vmem:[%s10153 + $0x24] sm:$0xf]
      %v10164 = vld [vmem:[%s10153 + $0x28] sm:$0xf]
      %v10165 = vld [vmem:[%s10153 + $0x2c] sm:$0xf]
      %v10166 = vld [vmem:[%s10153 + $0x30] sm:$0xf]
      %v10167 = vld [vmem:[%s10153 + $0x34] sm:$0xf]
      %v10168 = vld [vmem:[%s10153 + $0x38] sm:$0xf]
      %v10169 = vld [vmem:[%s10153 + $0x3c] sm:$0xf]
      %v10186 = vunpack.c.l.b16 %v10154
      %v10187 = vunpack.c.l.b16 %v10155
      %v10188 = vunpack.c.l.b16 %v10156
      %v10189 = vunpack.c.l.b16 %v10157
      %v10190 = vunpack.c.l.b16 %v10158
      %v10191 = vunpack.c.l.b16 %v10159
      %v10192 = vunpack.c.l.b16 %v10160
      %v10193 = vunpack.c.l.b16 %v10161
      %v10194 = vunpack.c.l.b16 %v10162
      %v10195 = vunpack.c.l.b16 %v10163
      %v10196 = vunpack.c.l.b16 %v10164
      %v10197 = vunpack.c.l.b16 %v10165
      %v10198 = vunpack.c.l.b16 %v10166
      %v10199 = vunpack.c.l.b16 %v10167
      %v10200 = vunpack.c.l.b16 %v10168
      %v10201 = vunpack.c.l.b16 %v10169
      %v10202 = vpack.c.b16 %v10187, %v10186
      %v10203 = vpack.c.b16 %v10189, %v10188
      %v10204 = vpack.c.b16 %v10191, %v10190
      %v10205 = vpack.c.b16 %v10193, %v10192
      %v10206 = vpack.c.b16 %v10195, %v10194
      %v10207 = vpack.c.b16 %v10197, %v10196
      %v10208 = vpack.c.b16 %v10199, %v10198
      %v10209 = vpack.c.b16 %v10201, %v10200
      %10218 = vmatpush.bf16.msra.mxu0 %v10209
      %10219 = vmatpush.bf16.msra.mxu0 %v10208
      %10220 = vmatpush.bf16.msra.mxu0 %v10207
      %10221 = vmatpush.bf16.msra.mxu0 %v10206
      %10222 = vmatpush.bf16.msra.mxu0 %v10205
      %10223 = vmatpush.bf16.msra.mxu0 %v10204
      %10224 = vmatpush.bf16.msra.mxu0 %v10203
      %10225 = vmatpush.bf16.msra.mxu0 %v10202
      %10226 = vmatmul.bf16.gmra.mxu0 %v4294
      %v10227 = vpop.f32.mrf.mxu0
      %v10228 = vadd.f32 0.0, %v10227
      %v10229 = vpop.f32.mrf.mxu0
      %v10230 = vadd.f32 0.0, %v10229
      %10231 = vmatmul.bf16.gmra.mxu0 %v4295
      %v10232 = vpop.f32.mrf.mxu0
      %v10233 = vadd.f32 0.0, %v10232
      %v10234 = vpop.f32.mrf.mxu0
      %v10235 = vadd.f32 0.0, %v10234
      %10236 = vmatmul.bf16.gmra.mxu0 %v4296
      %v10237 = vpop.f32.mrf.mxu0
      %v10238 = vadd.f32 0.0, %v10237
      %v10239 = vpop.f32.mrf.mxu0
      %v10240 = vadd.f32 0.0, %v10239
      %10241 = vmatmul.bf16.gmra.mxu0 %v4297
      %v10242 = vpop.f32.mrf.mxu0
      %v10243 = vadd.f32 0.0, %v10242
      %v10244 = vpop.f32.mrf.mxu0
      %v10245 = vadd.f32 0.0, %v10244
      %10246 = vmatmul.bf16.gmra.mxu0 %v4298
      %v10247 = vpop.f32.mrf.mxu0
      %v10248 = vadd.f32 0.0, %v10247
      %v10249 = vpop.f32.mrf.mxu0
      %v10250 = vadd.f32 0.0, %v10249
      %10251 = vmatmul.bf16.gmra.mxu0 %v4299
      %v10252 = vpop.f32.mrf.mxu0
      %v10253 = vadd.f32 0.0, %v10252
      %v10254 = vpop.f32.mrf.mxu0
      %v10255 = vadd.f32 0.0, %v10254
      %10256 = vmatmul.bf16.gmra.mxu0 %v4300
      %v10257 = vpop.f32.mrf.mxu0
      %v10258 = vadd.f32 0.0, %v10257
      %v10259 = vpop.f32.mrf.mxu0
      %v10260 = vadd.f32 0.0, %v10259
      %10261 = vmatmul.bf16.gmra.mxu0 %v4301
      %v10262 = vpop.f32.mrf.mxu0
      %v10263 = vadd.f32 0.0, %v10262
      %v10264 = vpop.f32.mrf.mxu0
      %v10265 = vadd.f32 0.0, %v10264
      %10266 = vmatmul.bf16.gmra.mxu0 %v4302
      %v10267 = vpop.f32.mrf.mxu0
      %v10268 = vadd.f32 0.0, %v10267
      %v10269 = vpop.f32.mrf.mxu0
      %v10270 = vadd.f32 0.0, %v10269
      %10271 = vmatmul.bf16.gmra.mxu0 %v4303
      %v10272 = vpop.f32.mrf.mxu0
      %v10273 = vadd.f32 0.0, %v10272
      %v10274 = vpop.f32.mrf.mxu0
      %v10275 = vadd.f32 0.0, %v10274
      %10276 = vmatmul.bf16.gmra.mxu0 %v4304
      %v10277 = vpop.f32.mrf.mxu0
      %v10278 = vadd.f32 0.0, %v10277
      %v10279 = vpop.f32.mrf.mxu0
      %v10280 = vadd.f32 0.0, %v10279
      %10281 = vmatmul.bf16.gmra.mxu0 %v4305
      %v10282 = vpop.f32.mrf.mxu0
      %v10283 = vadd.f32 0.0, %v10282
      %v10284 = vpop.f32.mrf.mxu0
      %v10285 = vadd.f32 0.0, %v10284
      %10286 = vmatmul.bf16.gmra.mxu0 %v4306
      %v10287 = vpop.f32.mrf.mxu0
      %v10288 = vadd.f32 0.0, %v10287
      %v10289 = vpop.f32.mrf.mxu0
      %v10290 = vadd.f32 0.0, %v10289
      %10291 = vmatmul.bf16.gmra.mxu0 %v4307
      %v10292 = vpop.f32.mrf.mxu0
      %v10293 = vadd.f32 0.0, %v10292
      %v10294 = vpop.f32.mrf.mxu0
      %v10295 = vadd.f32 0.0, %v10294
      %10296 = vmatmul.bf16.gmra.mxu0 %v4308
      %v10297 = vpop.f32.mrf.mxu0
      %v10298 = vadd.f32 0.0, %v10297
      %v10299 = vpop.f32.mrf.mxu0
      %v10300 = vadd.f32 0.0, %v10299
      %10301 = vmatmul.bf16.gmra.mxu0 %v4309
      %v10302 = vpop.f32.mrf.mxu0
      %v10303 = vadd.f32 0.0, %v10302
      %v10304 = vpop.f32.mrf.mxu0
      %v10305 = vadd.f32 0.0, %v10304
      %10306 = vmatmul.bf16.gmra.mxu0 %v4310
      %v10307 = vpop.f32.mrf.mxu0
      %v10308 = vadd.f32 0.0, %v10307
      %v10309 = vpop.f32.mrf.mxu0
      %v10310 = vadd.f32 0.0, %v10309
      %10311 = vmatmul.bf16.gmra.mxu0 %v4311
      %v10312 = vpop.f32.mrf.mxu0
      %v10313 = vadd.f32 0.0, %v10312
      %v10314 = vpop.f32.mrf.mxu0
      %v10315 = vadd.f32 0.0, %v10314
      %10316 = vmatmul.bf16.gmra.mxu0 %v4312
      %v10317 = vpop.f32.mrf.mxu0
      %v10318 = vadd.f32 0.0, %v10317
      %v10319 = vpop.f32.mrf.mxu0
      %v10320 = vadd.f32 0.0, %v10319
      %10321 = vmatmul.bf16.gmra.mxu0 %v4313
      %v10322 = vpop.f32.mrf.mxu0
      %v10323 = vadd.f32 0.0, %v10322
      %v10324 = vpop.f32.mrf.mxu0
      %v10325 = vadd.f32 0.0, %v10324
      %10326 = vmatmul.bf16.gmra.mxu0 %v4314
      %v10327 = vpop.f32.mrf.mxu0
      %v10328 = vadd.f32 0.0, %v10327
      %v10329 = vpop.f32.mrf.mxu0
      %v10330 = vadd.f32 0.0, %v10329
      %10331 = vmatmul.bf16.gmra.mxu0 %v4315
      %v10332 = vpop.f32.mrf.mxu0
      %v10333 = vadd.f32 0.0, %v10332
      %v10334 = vpop.f32.mrf.mxu0
      %v10335 = vadd.f32 0.0, %v10334
      %10336 = vmatmul.bf16.gmra.mxu0 %v4316
      %v10337 = vpop.f32.mrf.mxu0
      %v10338 = vadd.f32 0.0, %v10337
      %v10339 = vpop.f32.mrf.mxu0
      %v10340 = vadd.f32 0.0, %v10339
      %10341 = vmatmul.bf16.gmra.mxu0 %v4317
      %v10342 = vpop.f32.mrf.mxu0
      %v10343 = vadd.f32 0.0, %v10342
      %v10344 = vpop.f32.mrf.mxu0
      %v10345 = vadd.f32 0.0, %v10344
      %10346 = vmatmul.bf16.gmra.mxu0 %v7340
      %v10347 = vpop.f32.mrf.mxu0
      %v10348 = vadd.f32 0.0, %v10347
      %v10349 = vpop.f32.mrf.mxu0
      %v10350 = vadd.f32 0.0, %v10349
      %10351 = vmatmul.bf16.gmra.mxu0 %v7341
      %v10352 = vpop.f32.mrf.mxu0
      %v10353 = vadd.f32 0.0, %v10352
      %v10354 = vpop.f32.mrf.mxu0
      %v10355 = vadd.f32 0.0, %v10354
      %10356 = vmatmul.bf16.gmra.mxu0 %v7342
      %v10357 = vpop.f32.mrf.mxu0
      %v10358 = vadd.f32 0.0, %v10357
      %v10359 = vpop.f32.mrf.mxu0
      %v10360 = vadd.f32 0.0, %v10359
      %10361 = vmatmul.bf16.gmra.mxu0 %v7343
      %v10362 = vpop.f32.mrf.mxu0
      %v10363 = vadd.f32 0.0, %v10362
      %v10364 = vpop.f32.mrf.mxu0
      %v10365 = vadd.f32 0.0, %v10364
      %10366 = vmatmul.bf16.gmra.mxu0 %v10149
      %v10367 = vpop.f32.mrf.mxu0
      %v10368 = vadd.f32 0.0, %v10367
      %v10369 = vpop.f32.mrf.mxu0
      %v10370 = vadd.f32 0.0, %v10369
      %10371 = vmatmul.bf16.gmra.mxu0 %v10150
      %v10372 = vpop.f32.mrf.mxu0
      %v10373 = vadd.f32 0.0, %v10372
      %v10374 = vpop.f32.mrf.mxu0
      %v10375 = vadd.f32 0.0, %v10374
      %10376 = vmatmul.bf16.gmra.mxu0 %v10151
      %v10377 = vpop.f32.mrf.mxu0
      %v10378 = vadd.f32 0.0, %v10377
      %v10379 = vpop.f32.mrf.mxu0
      %v10380 = vadd.f32 0.0, %v10379
      %10381 = vmatmul.bf16.gmra.mxu0 %v10152
      %v10382 = vpop.f32.mrf.mxu0
      %v10383 = vadd.f32 0.0, %v10382
      %v10384 = vpop.f32.mrf.mxu0
      %v10385 = vadd.f32 0.0, %v10384
      %10386 = vdwg.mxu0
      %v10387 = vadd.f32 %v10085, %v10228
      %v10388 = vadd.f32 %v10086, %v10230
      %v10389 = vadd.f32 %v10087, %v10233
      %v10390 = vadd.f32 %v10088, %v10235
      %v10391 = vadd.f32 %v10089, %v10238
      %v10392 = vadd.f32 %v10090, %v10240
      %v10393 = vadd.f32 %v10091, %v10243
      %v10394 = vadd.f32 %v10092, %v10245
      %v10395 = vadd.f32 %v10093, %v10248
      %v10396 = vadd.f32 %v10094, %v10250
      %v10397 = vadd.f32 %v10095, %v10253
      %v10398 = vadd.f32 %v10096, %v10255
      %v10399 = vadd.f32 %v10097, %v10258
      %v10400 = vadd.f32 %v10098, %v10260
      %v10401 = vadd.f32 %v10099, %v10263
      %v10402 = vadd.f32 %v10100, %v10265
      %v10403 = vadd.f32 %v10101, %v10268
      %v10404 = vadd.f32 %v10102, %v10270
      %v10405 = vadd.f32 %v10103, %v10273
      %v10406 = vadd.f32 %v10104, %v10275
      %v10407 = vadd.f32 %v10105, %v10278
      %v10408 = vadd.f32 %v10106, %v10280
      %v10409 = vadd.f32 %v10107, %v10283
      %v10410 = vadd.f32 %v10108, %v10285
      %v10411 = vadd.f32 %v10109, %v10288
      %v10412 = vadd.f32 %v10110, %v10290
      %v10413 = vadd.f32 %v10111, %v10293
      %v10414 = vadd.f32 %v10112, %v10295
      %v10415 = vadd.f32 %v10113, %v10298
      %v10416 = vadd.f32 %v10114, %v10300
      %v10417 = vadd.f32 %v10115, %v10303
      %v10418 = vadd.f32 %v10116, %v10305
      %v10419 = vadd.f32 %v10117, %v10308
      %v10420 = vadd.f32 %v10118, %v10310
      %v10421 = vadd.f32 %v10119, %v10313
      %v10422 = vadd.f32 %v10120, %v10315
      %v10423 = vadd.f32 %v10121, %v10318
      %v10424 = vadd.f32 %v10122, %v10320
      %v10425 = vadd.f32 %v10123, %v10323
      %v10426 = vadd.f32 %v10124, %v10325
      %v10427 = vadd.f32 %v10125, %v10328
      %v10428 = vadd.f32 %v10126, %v10330
      %v10429 = vadd.f32 %v10127, %v10333
      %v10430 = vadd.f32 %v10128, %v10335
      %v10431 = vadd.f32 %v10129, %v10338
      %v10432 = vadd.f32 %v10130, %v10340
      %v10433 = vadd.f32 %v10131, %v10343
      %v10434 = vadd.f32 %v10132, %v10345
      %v10435 = vadd.f32 %v10133, %v10348
      %v10436 = vadd.f32 %v10134, %v10350
      %v10437 = vadd.f32 %v10135, %v10353
      %v10438 = vadd.f32 %v10136, %v10355
      %v10439 = vadd.f32 %v10137, %v10358
      %v10440 = vadd.f32 %v10138, %v10360
      %v10441 = vadd.f32 %v10139, %v10363
      %v10442 = vadd.f32 %v10140, %v10365
      %v10443 = vadd.f32 %v10141, %v10368
      %v10444 = vadd.f32 %v10142, %v10370
      %v10445 = vadd.f32 %v10143, %v10373
      %v10446 = vadd.f32 %v10144, %v10375
      %v10447 = vadd.f32 %v10145, %v10378
      %v10448 = vadd.f32 %v10146, %v10380
      %v10449 = vadd.f32 %v10147, %v10383
      %v10450 = vadd.f32 %v10148, %v10385
      %v10453 = vrot.slane %v2779, 1
      %v10454 = vrot.slane %v2780, 1
      %v10455 = vsel %vm2959, %v10453, %v10454
      %v10457 = vpack.c.bf16 %v9489, %v9486
      %v10458 = vpack.c.bf16 %v9495, %v9492
      %v10459 = vpack.c.bf16 %v9501, %v9498
      %v10460 = vpack.c.bf16 %v10455, %v9504
      %s10461 = scalar_lea.vmem %s4, 1408
      %v10462 = vld [vmem:[%s10461] sm:$0xf]
      %v10463 = vld [vmem:[%s10461 + $0x4] sm:$0xf]
      %v10464 = vld [vmem:[%s10461 + $0x8] sm:$0xf]
      %v10465 = vld [vmem:[%s10461 + $0xc] sm:$0xf]
      %v10466 = vld [vmem:[%s10461 + $0x10] sm:$0xf]
      %v10467 = vld [vmem:[%s10461 + $0x14] sm:$0xf]
      %v10468 = vld [vmem:[%s10461 + $0x18] sm:$0xf]
      %v10469 = vld [vmem:[%s10461 + $0x1c] sm:$0xf]
      %v10470 = vld [vmem:[%s10461 + $0x20] sm:$0xf]
      %v10471 = vld [vmem:[%s10461 + $0x24] sm:$0xf]
      %v10472 = vld [vmem:[%s10461 + $0x28] sm:$0xf]
      %v10473 = vld [vmem:[%s10461 + $0x2c] sm:$0xf]
      %v10474 = vld [vmem:[%s10461 + $0x30] sm:$0xf]
      %v10475 = vld [vmem:[%s10461 + $0x34] sm:$0xf]
      %v10476 = vld [vmem:[%s10461 + $0x38] sm:$0xf]
      %v10477 = vld [vmem:[%s10461 + $0x3c] sm:$0xf]
      %v10494 = vunpack.c.l.b16 %v10462
      %v10495 = vunpack.c.l.b16 %v10463
      %v10496 = vunpack.c.l.b16 %v10464
      %v10497 = vunpack.c.l.b16 %v10465
      %v10498 = vunpack.c.l.b16 %v10466
      %v10499 = vunpack.c.l.b16 %v10467
      %v10500 = vunpack.c.l.b16 %v10468
      %v10501 = vunpack.c.l.b16 %v10469
      %v10502 = vunpack.c.l.b16 %v10470
      %v10503 = vunpack.c.l.b16 %v10471
      %v10504 = vunpack.c.l.b16 %v10472
      %v10505 = vunpack.c.l.b16 %v10473
      %v10506 = vunpack.c.l.b16 %v10474
      %v10507 = vunpack.c.l.b16 %v10475
      %v10508 = vunpack.c.l.b16 %v10476
      %v10509 = vunpack.c.l.b16 %v10477
      %v10510 = vpack.c.b16 %v10495, %v10494
      %v10511 = vpack.c.b16 %v10497, %v10496
      %v10512 = vpack.c.b16 %v10499, %v10498
      %v10513 = vpack.c.b16 %v10501, %v10500
      %v10514 = vpack.c.b16 %v10503, %v10502
      %v10515 = vpack.c.b16 %v10505, %v10504
      %v10516 = vpack.c.b16 %v10507, %v10506
      %v10517 = vpack.c.b16 %v10509, %v10508
      %10526 = vmatpush.bf16.msra.mxu0 %v10517
      %10527 = vmatpush.bf16.msra.mxu0 %v10516
      %10528 = vmatpush.bf16.msra.mxu0 %v10515
      %10529 = vmatpush.bf16.msra.mxu0 %v10514
      %10530 = vmatpush.bf16.msra.mxu0 %v10513
      %10531 = vmatpush.bf16.msra.mxu0 %v10512
      %10532 = vmatpush.bf16.msra.mxu0 %v10511
      %10533 = vmatpush.bf16.msra.mxu0 %v10510
      %10534 = vmatmul.bf16.gmra.mxu0 %v4672
      %v10535 = vpop.f32.mrf.mxu0
      %v10536 = vadd.f32 0.0, %v10535
      %v10537 = vpop.f32.mrf.mxu0
      %v10538 = vadd.f32 0.0, %v10537
      %10539 = vmatmul.bf16.gmra.mxu0 %v4673
      %v10540 = vpop.f32.mrf.mxu0
      %v10541 = vadd.f32 0.0, %v10540
      %v10542 = vpop.f32.mrf.mxu0
      %v10543 = vadd.f32 0.0, %v10542
      %10544 = vmatmul.bf16.gmra.mxu0 %v4674
      %v10545 = vpop.f32.mrf.mxu0
      %v10546 = vadd.f32 0.0, %v10545
      %v10547 = vpop.f32.mrf.mxu0
      %v10548 = vadd.f32 0.0, %v10547
      %10549 = vmatmul.bf16.gmra.mxu0 %v4675
      %v10550 = vpop.f32.mrf.mxu0
      %v10551 = vadd.f32 0.0, %v10550
      %v10552 = vpop.f32.mrf.mxu0
      %v10553 = vadd.f32 0.0, %v10552
      %10554 = vmatmul.bf16.gmra.mxu0 %v4676
      %v10555 = vpop.f32.mrf.mxu0
      %v10556 = vadd.f32 0.0, %v10555
      %v10557 = vpop.f32.mrf.mxu0
      %v10558 = vadd.f32 0.0, %v10557
      %10559 = vmatmul.bf16.gmra.mxu0 %v4677
      %v10560 = vpop.f32.mrf.mxu0
      %v10561 = vadd.f32 0.0, %v10560
      %v10562 = vpop.f32.mrf.mxu0
      %v10563 = vadd.f32 0.0, %v10562
      %10564 = vmatmul.bf16.gmra.mxu0 %v4678
      %v10565 = vpop.f32.mrf.mxu0
      %v10566 = vadd.f32 0.0, %v10565
      %v10567 = vpop.f32.mrf.mxu0
      %v10568 = vadd.f32 0.0, %v10567
      %10569 = vmatmul.bf16.gmra.mxu0 %v4679
      %v10570 = vpop.f32.mrf.mxu0
      %v10571 = vadd.f32 0.0, %v10570
      %v10572 = vpop.f32.mrf.mxu0
      %v10573 = vadd.f32 0.0, %v10572
      %10574 = vmatmul.bf16.gmra.mxu0 %v4680
      %v10575 = vpop.f32.mrf.mxu0
      %v10576 = vadd.f32 0.0, %v10575
      %v10577 = vpop.f32.mrf.mxu0
      %v10578 = vadd.f32 0.0, %v10577
      %10579 = vmatmul.bf16.gmra.mxu0 %v4681
      %v10580 = vpop.f32.mrf.mxu0
      %v10581 = vadd.f32 0.0, %v10580
      %v10582 = vpop.f32.mrf.mxu0
      %v10583 = vadd.f32 0.0, %v10582
      %10584 = vmatmul.bf16.gmra.mxu0 %v4682
      %v10585 = vpop.f32.mrf.mxu0
      %v10586 = vadd.f32 0.0, %v10585
      %v10587 = vpop.f32.mrf.mxu0
      %v10588 = vadd.f32 0.0, %v10587
      %10589 = vmatmul.bf16.gmra.mxu0 %v4683
      %v10590 = vpop.f32.mrf.mxu0
      %v10591 = vadd.f32 0.0, %v10590
      %v10592 = vpop.f32.mrf.mxu0
      %v10593 = vadd.f32 0.0, %v10592
      %10594 = vmatmul.bf16.gmra.mxu0 %v4684
      %v10595 = vpop.f32.mrf.mxu0
      %v10596 = vadd.f32 0.0, %v10595
      %v10597 = vpop.f32.mrf.mxu0
      %v10598 = vadd.f32 0.0, %v10597
      %10599 = vmatmul.bf16.gmra.mxu0 %v4685
      %v10600 = vpop.f32.mrf.mxu0
      %v10601 = vadd.f32 0.0, %v10600
      %v10602 = vpop.f32.mrf.mxu0
      %v10603 = vadd.f32 0.0, %v10602
      %10604 = vmatmul.bf16.gmra.mxu0 %v4686
      %v10605 = vpop.f32.mrf.mxu0
      %v10606 = vadd.f32 0.0, %v10605
      %v10607 = vpop.f32.mrf.mxu0
      %v10608 = vadd.f32 0.0, %v10607
      %10609 = vmatmul.bf16.gmra.mxu0 %v4687
      %v10610 = vpop.f32.mrf.mxu0
      %v10611 = vadd.f32 0.0, %v10610
      %v10612 = vpop.f32.mrf.mxu0
      %v10613 = vadd.f32 0.0, %v10612
      %10614 = vmatmul.bf16.gmra.mxu0 %v4688
      %v10615 = vpop.f32.mrf.mxu0
      %v10616 = vadd.f32 0.0, %v10615
      %v10617 = vpop.f32.mrf.mxu0
      %v10618 = vadd.f32 0.0, %v10617
      %10619 = vmatmul.bf16.gmra.mxu0 %v4689
      %v10620 = vpop.f32.mrf.mxu0
      %v10621 = vadd.f32 0.0, %v10620
      %v10622 = vpop.f32.mrf.mxu0
      %v10623 = vadd.f32 0.0, %v10622
      %10624 = vmatmul.bf16.gmra.mxu0 %v4690
      %v10625 = vpop.f32.mrf.mxu0
      %v10626 = vadd.f32 0.0, %v10625
      %v10627 = vpop.f32.mrf.mxu0
      %v10628 = vadd.f32 0.0, %v10627
      %10629 = vmatmul.bf16.gmra.mxu0 %v4691
      %v10630 = vpop.f32.mrf.mxu0
      %v10631 = vadd.f32 0.0, %v10630
      %v10632 = vpop.f32.mrf.mxu0
      %v10633 = vadd.f32 0.0, %v10632
      %10634 = vmatmul.bf16.gmra.mxu0 %v4692
      %v10635 = vpop.f32.mrf.mxu0
      %v10636 = vadd.f32 0.0, %v10635
      %v10637 = vpop.f32.mrf.mxu0
      %v10638 = vadd.f32 0.0, %v10637
      %10639 = vmatmul.bf16.gmra.mxu0 %v4693
      %v10640 = vpop.f32.mrf.mxu0
      %v10641 = vadd.f32 0.0, %v10640
      %v10642 = vpop.f32.mrf.mxu0
      %v10643 = vadd.f32 0.0, %v10642
      %10644 = vmatmul.bf16.gmra.mxu0 %v4694
      %v10645 = vpop.f32.mrf.mxu0
      %v10646 = vadd.f32 0.0, %v10645
      %v10647 = vpop.f32.mrf.mxu0
      %v10648 = vadd.f32 0.0, %v10647
      %10649 = vmatmul.bf16.gmra.mxu0 %v4695
      %v10650 = vpop.f32.mrf.mxu0
      %v10651 = vadd.f32 0.0, %v10650
      %v10652 = vpop.f32.mrf.mxu0
      %v10653 = vadd.f32 0.0, %v10652
      %10654 = vmatmul.bf16.gmra.mxu0 %v7648
      %v10655 = vpop.f32.mrf.mxu0
      %v10656 = vadd.f32 0.0, %v10655
      %v10657 = vpop.f32.mrf.mxu0
      %v10658 = vadd.f32 0.0, %v10657
      %10659 = vmatmul.bf16.gmra.mxu0 %v7649
      %v10660 = vpop.f32.mrf.mxu0
      %v10661 = vadd.f32 0.0, %v10660
      %v10662 = vpop.f32.mrf.mxu0
      %v10663 = vadd.f32 0.0, %v10662
      %10664 = vmatmul.bf16.gmra.mxu0 %v7650
      %v10665 = vpop.f32.mrf.mxu0
      %v10666 = vadd.f32 0.0, %v10665
      %v10667 = vpop.f32.mrf.mxu0
      %v10668 = vadd.f32 0.0, %v10667
      %10669 = vmatmul.bf16.gmra.mxu0 %v7651
      %v10670 = vpop.f32.mrf.mxu0
      %v10671 = vadd.f32 0.0, %v10670
      %v10672 = vpop.f32.mrf.mxu0
      %v10673 = vadd.f32 0.0, %v10672
      %10674 = vmatmul.bf16.gmra.mxu0 %v10457
      %v10675 = vpop.f32.mrf.mxu0
      %v10676 = vadd.f32 0.0, %v10675
      %v10677 = vpop.f32.mrf.mxu0
      %v10678 = vadd.f32 0.0, %v10677
      %10679 = vmatmul.bf16.gmra.mxu0 %v10458
      %v10680 = vpop.f32.mrf.mxu0
      %v10681 = vadd.f32 0.0, %v10680
      %v10682 = vpop.f32.mrf.mxu0
      %v10683 = vadd.f32 0.0, %v10682
      %10684 = vmatmul.bf16.gmra.mxu0 %v10459
      %v10685 = vpop.f32.mrf.mxu0
      %v10686 = vadd.f32 0.0, %v10685
      %v10687 = vpop.f32.mrf.mxu0
      %v10688 = vadd.f32 0.0, %v10687
      %10689 = vmatmul.bf16.gmra.mxu0 %v10460
      %v10690 = vpop.f32.mrf.mxu0
      %v10691 = vadd.f32 0.0, %v10690
      %v10692 = vpop.f32.mrf.mxu0
      %v10693 = vadd.f32 0.0, %v10692
      %10694 = vdwg.mxu0
      %v10695 = vadd.f32 %v10387, %v10536
      %v10696 = vadd.f32 %v10388, %v10538
      %v10697 = vadd.f32 %v10389, %v10541
      %v10698 = vadd.f32 %v10390, %v10543
      %v10699 = vadd.f32 %v10391, %v10546
      %v10700 = vadd.f32 %v10392, %v10548
      %v10701 = vadd.f32 %v10393, %v10551
      %v10702 = vadd.f32 %v10394, %v10553
      %v10703 = vadd.f32 %v10395, %v10556
      %v10704 = vadd.f32 %v10396, %v10558
      %v10705 = vadd.f32 %v10397, %v10561
      %v10706 = vadd.f32 %v10398, %v10563
      %v10707 = vadd.f32 %v10399, %v10566
      %v10708 = vadd.f32 %v10400, %v10568
      %v10709 = vadd.f32 %v10401, %v10571
      %v10710 = vadd.f32 %v10402, %v10573
      %v10711 = vadd.f32 %v10403, %v10576
      %v10712 = vadd.f32 %v10404, %v10578
      %v10713 = vadd.f32 %v10405, %v10581
      %v10714 = vadd.f32 %v10406, %v10583
      %v10715 = vadd.f32 %v10407, %v10586
      %v10716 = vadd.f32 %v10408, %v10588
      %v10717 = vadd.f32 %v10409, %v10591
      %v10718 = vadd.f32 %v10410, %v10593
      %v10719 = vadd.f32 %v10411, %v10596
      %v10720 = vadd.f32 %v10412, %v10598
      %v10721 = vadd.f32 %v10413, %v10601
      %v10722 = vadd.f32 %v10414, %v10603
      %v10723 = vadd.f32 %v10415, %v10606
      %v10724 = vadd.f32 %v10416, %v10608
      %v10725 = vadd.f32 %v10417, %v10611
      %v10726 = vadd.f32 %v10418, %v10613
      %v10727 = vadd.f32 %v10419, %v10616
      %v10728 = vadd.f32 %v10420, %v10618
      %v10729 = vadd.f32 %v10421, %v10621
      %v10730 = vadd.f32 %v10422, %v10623
      %v10731 = vadd.f32 %v10423, %v10626
      %v10732 = vadd.f32 %v10424, %v10628
      %v10733 = vadd.f32 %v10425, %v10631
      %v10734 = vadd.f32 %v10426, %v10633
      %v10735 = vadd.f32 %v10427, %v10636
      %v10736 = vadd.f32 %v10428, %v10638
      %v10737 = vadd.f32 %v10429, %v10641
      %v10738 = vadd.f32 %v10430, %v10643
      %v10739 = vadd.f32 %v10431, %v10646
      %v10740 = vadd.f32 %v10432, %v10648
      %v10741 = vadd.f32 %v10433, %v10651
      %v10742 = vadd.f32 %v10434, %v10653
      %v10743 = vadd.f32 %v10435, %v10656
      %v10744 = vadd.f32 %v10436, %v10658
      %v10745 = vadd.f32 %v10437, %v10661
      %v10746 = vadd.f32 %v10438, %v10663
      %v10747 = vadd.f32 %v10439, %v10666
      %v10748 = vadd.f32 %v10440, %v10668
      %v10749 = vadd.f32 %v10441, %v10671
      %v10750 = vadd.f32 %v10442, %v10673
      %v10751 = vadd.f32 %v10443, %v10676
      %v10752 = vadd.f32 %v10444, %v10678
      %v10753 = vadd.f32 %v10445, %v10681
      %v10754 = vadd.f32 %v10446, %v10683
      %v10755 = vadd.f32 %v10447, %v10686
      %v10756 = vadd.f32 %v10448, %v10688
      %v10757 = vadd.f32 %v10449, %v10691
      %v10758 = vadd.f32 %v10450, %v10693
      %v10759 = vrot.slane %v2779, 2
      %v10760 = vrot.slane %v2780, 2
      %v10761 = vsel %vm3699, %v10759, %v10760
      %v10763 = vpack.c.bf16 %v9823, %v9820
      %v10764 = vpack.c.bf16 %v9829, %v9826
      %v10765 = vpack.c.bf16 %v9835, %v9832
      %v10766 = vpack.c.bf16 %v10761, %v9838
      %s10767 = scalar_lea.vmem %s4, 1472
      %v10768 = vld [vmem:[%s10767] sm:$0xf]
      %v10769 = vld [vmem:[%s10767 + $0x4] sm:$0xf]
      %v10770 = vld [vmem:[%s10767 + $0x8] sm:$0xf]
      %v10771 = vld [vmem:[%s10767 + $0xc] sm:$0xf]
      %v10772 = vld [vmem:[%s10767 + $0x10] sm:$0xf]
      %v10773 = vld [vmem:[%s10767 + $0x14] sm:$0xf]
      %v10774 = vld [vmem:[%s10767 + $0x18] sm:$0xf]
      %v10775 = vld [vmem:[%s10767 + $0x1c] sm:$0xf]
      %v10776 = vld [vmem:[%s10767 + $0x20] sm:$0xf]
      %v10777 = vld [vmem:[%s10767 + $0x24] sm:$0xf]
      %v10778 = vld [vmem:[%s10767 + $0x28] sm:$0xf]
      %v10779 = vld [vmem:[%s10767 + $0x2c] sm:$0xf]
      %v10780 = vld [vmem:[%s10767 + $0x30] sm:$0xf]
      %v10781 = vld [vmem:[%s10767 + $0x34] sm:$0xf]
      %v10782 = vld [vmem:[%s10767 + $0x38] sm:$0xf]
      %v10783 = vld [vmem:[%s10767 + $0x3c] sm:$0xf]
      %v10800 = vunpack.c.l.b16 %v10768
      %v10801 = vunpack.c.l.b16 %v10769
      %v10802 = vunpack.c.l.b16 %v10770
      %v10803 = vunpack.c.l.b16 %v10771
      %v10804 = vunpack.c.l.b16 %v10772
      %v10805 = vunpack.c.l.b16 %v10773
      %v10806 = vunpack.c.l.b16 %v10774
      %v10807 = vunpack.c.l.b16 %v10775
      %v10808 = vunpack.c.l.b16 %v10776
      %v10809 = vunpack.c.l.b16 %v10777
      %v10810 = vunpack.c.l.b16 %v10778
      %v10811 = vunpack.c.l.b16 %v10779
      %v10812 = vunpack.c.l.b16 %v10780
      %v10813 = vunpack.c.l.b16 %v10781
      %v10814 = vunpack.c.l.b16 %v10782
      %v10815 = vunpack.c.l.b16 %v10783
      %v10816 = vpack.c.b16 %v10801, %v10800
      %v10817 = vpack.c.b16 %v10803, %v10802
      %v10818 = vpack.c.b16 %v10805, %v10804
      %v10819 = vpack.c.b16 %v10807, %v10806
      %v10820 = vpack.c.b16 %v10809, %v10808
      %v10821 = vpack.c.b16 %v10811, %v10810
      %v10822 = vpack.c.b16 %v10813, %v10812
      %v10823 = vpack.c.b16 %v10815, %v10814
      %10832 = vmatpush.bf16.msra.mxu0 %v10823
      %10833 = vmatpush.bf16.msra.mxu0 %v10822
      %10834 = vmatpush.bf16.msra.mxu0 %v10821
      %10835 = vmatpush.bf16.msra.mxu0 %v10820
      %10836 = vmatpush.bf16.msra.mxu0 %v10819
      %10837 = vmatpush.bf16.msra.mxu0 %v10818
      %10838 = vmatpush.bf16.msra.mxu0 %v10817
      %10839 = vmatpush.bf16.msra.mxu0 %v10816
      %10840 = vmatmul.bf16.gmra.mxu0 %v5034
      %v10841 = vpop.f32.mrf.mxu0
      %v10842 = vadd.f32 0.0, %v10841
      %v10843 = vpop.f32.mrf.mxu0
      %v10844 = vadd.f32 0.0, %v10843
      %10845 = vmatmul.bf16.gmra.mxu0 %v5035
      %v10846 = vpop.f32.mrf.mxu0
      %v10847 = vadd.f32 0.0, %v10846
      %v10848 = vpop.f32.mrf.mxu0
      %v10849 = vadd.f32 0.0, %v10848
      %10850 = vmatmul.bf16.gmra.mxu0 %v5036
      %v10851 = vpop.f32.mrf.mxu0
      %v10852 = vadd.f32 0.0, %v10851
      %v10853 = vpop.f32.mrf.mxu0
      %v10854 = vadd.f32 0.0, %v10853
      %10855 = vmatmul.bf16.gmra.mxu0 %v5037
      %v10856 = vpop.f32.mrf.mxu0
      %v10857 = vadd.f32 0.0, %v10856
      %v10858 = vpop.f32.mrf.mxu0
      %v10859 = vadd.f32 0.0, %v10858
      %10860 = vmatmul.bf16.gmra.mxu0 %v5038
      %v10861 = vpop.f32.mrf.mxu0
      %v10862 = vadd.f32 0.0, %v10861
      %v10863 = vpop.f32.mrf.mxu0
      %v10864 = vadd.f32 0.0, %v10863
      %10865 = vmatmul.bf16.gmra.mxu0 %v5039
      %v10866 = vpop.f32.mrf.mxu0
      %v10867 = vadd.f32 0.0, %v10866
      %v10868 = vpop.f32.mrf.mxu0
      %v10869 = vadd.f32 0.0, %v10868
      %10870 = vmatmul.bf16.gmra.mxu0 %v5040
      %v10871 = vpop.f32.mrf.mxu0
      %v10872 = vadd.f32 0.0, %v10871
      %v10873 = vpop.f32.mrf.mxu0
      %v10874 = vadd.f32 0.0, %v10873
      %10875 = vmatmul.bf16.gmra.mxu0 %v5041
      %v10876 = vpop.f32.mrf.mxu0
      %v10877 = vadd.f32 0.0, %v10876
      %v10878 = vpop.f32.mrf.mxu0
      %v10879 = vadd.f32 0.0, %v10878
      %10880 = vmatmul.bf16.gmra.mxu0 %v5042
      %v10881 = vpop.f32.mrf.mxu0
      %v10882 = vadd.f32 0.0, %v10881
      %v10883 = vpop.f32.mrf.mxu0
      %v10884 = vadd.f32 0.0, %v10883
      %10885 = vmatmul.bf16.gmra.mxu0 %v5043
      %v10886 = vpop.f32.mrf.mxu0
      %v10887 = vadd.f32 0.0, %v10886
      %v10888 = vpop.f32.mrf.mxu0
      %v10889 = vadd.f32 0.0, %v10888
      %10890 = vmatmul.bf16.gmra.mxu0 %v5044
      %v10891 = vpop.f32.mrf.mxu0
      %v10892 = vadd.f32 0.0, %v10891
      %v10893 = vpop.f32.mrf.mxu0
      %v10894 = vadd.f32 0.0, %v10893
      %10895 = vmatmul.bf16.gmra.mxu0 %v5045
      %v10896 = vpop.f32.mrf.mxu0
      %v10897 = vadd.f32 0.0, %v10896
      %v10898 = vpop.f32.mrf.mxu0
      %v10899 = vadd.f32 0.0, %v10898
      %10900 = vmatmul.bf16.gmra.mxu0 %v5046
      %v10901 = vpop.f32.mrf.mxu0
      %v10902 = vadd.f32 0.0, %v10901
      %v10903 = vpop.f32.mrf.mxu0
      %v10904 = vadd.f32 0.0, %v10903
      %10905 = vmatmul.bf16.gmra.mxu0 %v5047
      %v10906 = vpop.f32.mrf.mxu0
      %v10907 = vadd.f32 0.0, %v10906
      %v10908 = vpop.f32.mrf.mxu0
      %v10909 = vadd.f32 0.0, %v10908
      %10910 = vmatmul.bf16.gmra.mxu0 %v5048
      %v10911 = vpop.f32.mrf.mxu0
      %v10912 = vadd.f32 0.0, %v10911
      %v10913 = vpop.f32.mrf.mxu0
      %v10914 = vadd.f32 0.0, %v10913
      %10915 = vmatmul.bf16.gmra.mxu0 %v5049
      %v10916 = vpop.f32.mrf.mxu0
      %v10917 = vadd.f32 0.0, %v10916
      %v10918 = vpop.f32.mrf.mxu0
      %v10919 = vadd.f32 0.0, %v10918
      %10920 = vmatmul.bf16.gmra.mxu0 %v5050
      %v10921 = vpop.f32.mrf.mxu0
      %v10922 = vadd.f32 0.0, %v10921
      %v10923 = vpop.f32.mrf.mxu0
      %v10924 = vadd.f32 0.0, %v10923
      %10925 = vmatmul.bf16.gmra.mxu0 %v5051
      %v10926 = vpop.f32.mrf.mxu0
      %v10927 = vadd.f32 0.0, %v10926
      %v10928 = vpop.f32.mrf.mxu0
      %v10929 = vadd.f32 0.0, %v10928
      %10930 = vmatmul.bf16.gmra.mxu0 %v5052
      %v10931 = vpop.f32.mrf.mxu0
      %v10932 = vadd.f32 0.0, %v10931
      %v10933 = vpop.f32.mrf.mxu0
      %v10934 = vadd.f32 0.0, %v10933
      %10935 = vmatmul.bf16.gmra.mxu0 %v5053
      %v10936 = vpop.f32.mrf.mxu0
      %v10937 = vadd.f32 0.0, %v10936
      %v10938 = vpop.f32.mrf.mxu0
      %v10939 = vadd.f32 0.0, %v10938
      %10940 = vmatmul.bf16.gmra.mxu0 %v5054
      %v10941 = vpop.f32.mrf.mxu0
      %v10942 = vadd.f32 0.0, %v10941
      %v10943 = vpop.f32.mrf.mxu0
      %v10944 = vadd.f32 0.0, %v10943
      %10945 = vmatmul.bf16.gmra.mxu0 %v5055
      %v10946 = vpop.f32.mrf.mxu0
      %v10947 = vadd.f32 0.0, %v10946
      %v10948 = vpop.f32.mrf.mxu0
      %v10949 = vadd.f32 0.0, %v10948
      %10950 = vmatmul.bf16.gmra.mxu0 %v5056
      %v10951 = vpop.f32.mrf.mxu0
      %v10952 = vadd.f32 0.0, %v10951
      %v10953 = vpop.f32.mrf.mxu0
      %v10954 = vadd.f32 0.0, %v10953
      %10955 = vmatmul.bf16.gmra.mxu0 %v5057
      %v10956 = vpop.f32.mrf.mxu0
      %v10957 = vadd.f32 0.0, %v10956
      %v10958 = vpop.f32.mrf.mxu0
      %v10959 = vadd.f32 0.0, %v10958
      %10960 = vmatmul.bf16.gmra.mxu0 %v7954
      %v10961 = vpop.f32.mrf.mxu0
      %v10962 = vadd.f32 0.0, %v10961
      %v10963 = vpop.f32.mrf.mxu0
      %v10964 = vadd.f32 0.0, %v10963
      %10965 = vmatmul.bf16.gmra.mxu0 %v7955
      %v10966 = vpop.f32.mrf.mxu0
      %v10967 = vadd.f32 0.0, %v10966
      %v10968 = vpop.f32.mrf.mxu0
      %v10969 = vadd.f32 0.0, %v10968
      %10970 = vmatmul.bf16.gmra.mxu0 %v7956
      %v10971 = vpop.f32.mrf.mxu0
      %v10972 = vadd.f32 0.0, %v10971
      %v10973 = vpop.f32.mrf.mxu0
      %v10974 = vadd.f32 0.0, %v10973
      %10975 = vmatmul.bf16.gmra.mxu0 %v7957
      %v10976 = vpop.f32.mrf.mxu0
      %v10977 = vadd.f32 0.0, %v10976
      %v10978 = vpop.f32.mrf.mxu0
      %v10979 = vadd.f32 0.0, %v10978
      %10980 = vmatmul.bf16.gmra.mxu0 %v10763
      %v10981 = vpop.f32.mrf.mxu0
      %v10982 = vadd.f32 0.0, %v10981
      %v10983 = vpop.f32.mrf.mxu0
      %v10984 = vadd.f32 0.0, %v10983
      %10985 = vmatmul.bf16.gmra.mxu0 %v10764
      %v10986 = vpop.f32.mrf.mxu0
      %v10987 = vadd.f32 0.0, %v10986
      %v10988 = vpop.f32.mrf.mxu0
      %v10989 = vadd.f32 0.0, %v10988
      %10990 = vmatmul.bf16.gmra.mxu0 %v10765
      %v10991 = vpop.f32.mrf.mxu0
      %v10992 = vadd.f32 0.0, %v10991
      %v10993 = vpop.f32.mrf.mxu0
      %v10994 = vadd.f32 0.0, %v10993
      %10995 = vmatmul.bf16.gmra.mxu0 %v10766
      %v10996 = vpop.f32.mrf.mxu0
      %v10997 = vadd.f32 0.0, %v10996
      %v10998 = vpop.f32.mrf.mxu0
      %v10999 = vadd.f32 0.0, %v10998
      %11000 = vdwg.mxu0
      %v11001 = vadd.f32 %v10695, %v10842
      %v11002 = vadd.f32 %v10696, %v10844
      %v11003 = vadd.f32 %v10697, %v10847
      %v11004 = vadd.f32 %v10698, %v10849
      %v11005 = vadd.f32 %v10699, %v10852
      %v11006 = vadd.f32 %v10700, %v10854
      %v11007 = vadd.f32 %v10701, %v10857
      %v11008 = vadd.f32 %v10702, %v10859
      %v11009 = vadd.f32 %v10703, %v10862
      %v11010 = vadd.f32 %v10704, %v10864
      %v11011 = vadd.f32 %v10705, %v10867
      %v11012 = vadd.f32 %v10706, %v10869
      %v11013 = vadd.f32 %v10707, %v10872
      %v11014 = vadd.f32 %v10708, %v10874
      %v11015 = vadd.f32 %v10709, %v10877
      %v11016 = vadd.f32 %v10710, %v10879
      %v11017 = vadd.f32 %v10711, %v10882
      %v11018 = vadd.f32 %v10712, %v10884
      %v11019 = vadd.f32 %v10713, %v10887
      %v11020 = vadd.f32 %v10714, %v10889
      %v11021 = vadd.f32 %v10715, %v10892
      %v11022 = vadd.f32 %v10716, %v10894
      %v11023 = vadd.f32 %v10717, %v10897
      %v11024 = vadd.f32 %v10718, %v10899
      %v11025 = vadd.f32 %v10719, %v10902
      %v11026 = vadd.f32 %v10720, %v10904
      %v11027 = vadd.f32 %v10721, %v10907
      %v11028 = vadd.f32 %v10722, %v10909
      %v11029 = vadd.f32 %v10723, %v10912
      %v11030 = vadd.f32 %v10724, %v10914
      %v11031 = vadd.f32 %v10725, %v10917
      %v11032 = vadd.f32 %v10726, %v10919
      %v11033 = vadd.f32 %v10727, %v10922
      %v11034 = vadd.f32 %v10728, %v10924
      %v11035 = vadd.f32 %v10729, %v10927
      %v11036 = vadd.f32 %v10730, %v10929
      %v11037 = vadd.f32 %v10731, %v10932
      %v11038 = vadd.f32 %v10732, %v10934
      %v11039 = vadd.f32 %v10733, %v10937
      %v11040 = vadd.f32 %v10734, %v10939
      %v11041 = vadd.f32 %v10735, %v10942
      %v11042 = vadd.f32 %v10736, %v10944
      %v11043 = vadd.f32 %v10737, %v10947
      %v11044 = vadd.f32 %v10738, %v10949
      %v11045 = vadd.f32 %v10739, %v10952
      %v11046 = vadd.f32 %v10740, %v10954
      %v11047 = vadd.f32 %v10741, %v10957
      %v11048 = vadd.f32 %v10742, %v10959
      %v11049 = vadd.f32 %v10743, %v10962
      %v11050 = vadd.f32 %v10744, %v10964
      %v11051 = vadd.f32 %v10745, %v10967
      %v11052 = vadd.f32 %v10746, %v10969
      %v11053 = vadd.f32 %v10747, %v10972
      %v11054 = vadd.f32 %v10748, %v10974
      %v11055 = vadd.f32 %v10749, %v10977
      %v11056 = vadd.f32 %v10750, %v10979
      %v11057 = vadd.f32 %v10751, %v10982
      %v11058 = vadd.f32 %v10752, %v10984
      %v11059 = vadd.f32 %v10753, %v10987
      %v11060 = vadd.f32 %v10754, %v10989
      %v11061 = vadd.f32 %v10755, %v10992
      %v11062 = vadd.f32 %v10756, %v10994
      %v11063 = vadd.f32 %v10757, %v10997
      %v11064 = vadd.f32 %v10758, %v10999
      %v11065 = vpack.c.bf16 %v2781, %v2779
      %s11066 = scalar_lea.vmem %s4, 1536
      %v11067 = vld [vmem:[%s11066] sm:$0xf]
      %v11068 = vld [vmem:[%s11066 + $0x4] sm:$0xf]
      %v11069 = vld [vmem:[%s11066 + $0x8] sm:$0xf]
      %v11070 = vld [vmem:[%s11066 + $0xc] sm:$0xf]
      %v11071 = vld [vmem:[%s11066 + $0x10] sm:$0xf]
      %v11072 = vld [vmem:[%s11066 + $0x14] sm:$0xf]
      %v11073 = vld [vmem:[%s11066 + $0x18] sm:$0xf]
      %v11074 = vld [vmem:[%s11066 + $0x1c] sm:$0xf]
      %v11075 = vld [vmem:[%s11066 + $0x20] sm:$0xf]
      %v11076 = vld [vmem:[%s11066 + $0x24] sm:$0xf]
      %v11077 = vld [vmem:[%s11066 + $0x28] sm:$0xf]
      %v11078 = vld [vmem:[%s11066 + $0x2c] sm:$0xf]
      %v11079 = vld [vmem:[%s11066 + $0x30] sm:$0xf]
      %v11080 = vld [vmem:[%s11066 + $0x34] sm:$0xf]
      %v11081 = vld [vmem:[%s11066 + $0x38] sm:$0xf]
      %v11082 = vld [vmem:[%s11066 + $0x3c] sm:$0xf]
      %v11099 = vunpack.c.l.b16 %v11067
      %v11100 = vunpack.c.l.b16 %v11068
      %v11101 = vunpack.c.l.b16 %v11069
      %v11102 = vunpack.c.l.b16 %v11070
      %v11103 = vunpack.c.l.b16 %v11071
      %v11104 = vunpack.c.l.b16 %v11072
      %v11105 = vunpack.c.l.b16 %v11073
      %v11106 = vunpack.c.l.b16 %v11074
      %v11107 = vunpack.c.l.b16 %v11075
      %v11108 = vunpack.c.l.b16 %v11076
      %v11109 = vunpack.c.l.b16 %v11077
      %v11110 = vunpack.c.l.b16 %v11078
      %v11111 = vunpack.c.l.b16 %v11079
      %v11112 = vunpack.c.l.b16 %v11080
      %v11113 = vunpack.c.l.b16 %v11081
      %v11114 = vunpack.c.l.b16 %v11082
      %v11115 = vpack.c.b16 %v11100, %v11099
      %v11116 = vpack.c.b16 %v11102, %v11101
      %v11117 = vpack.c.b16 %v11104, %v11103
      %v11118 = vpack.c.b16 %v11106, %v11105
      %v11119 = vpack.c.b16 %v11108, %v11107
      %v11120 = vpack.c.b16 %v11110, %v11109
      %v11121 = vpack.c.b16 %v11112, %v11111
      %v11122 = vpack.c.b16 %v11114, %v11113
      %11131 = vmatpush.bf16.msra.mxu0 %v11122
      %11132 = vmatpush.bf16.msra.mxu0 %v11121
      %11133 = vmatpush.bf16.msra.mxu0 %v11120
      %11134 = vmatpush.bf16.msra.mxu0 %v11119
      %11135 = vmatpush.bf16.msra.mxu0 %v11118
      %11136 = vmatpush.bf16.msra.mxu0 %v11117
      %11137 = vmatpush.bf16.msra.mxu0 %v11116
      %11138 = vmatpush.bf16.msra.mxu0 %v11115
      %11139 = vmatmul.bf16.gmra.mxu0 %v2792
      %v11140 = vpop.f32.mrf.mxu0
      %v11141 = vadd.f32 0.0, %v11140
      %v11142 = vpop.f32.mrf.mxu0
      %v11143 = vadd.f32 0.0, %v11142
      %11144 = vmatmul.bf16.gmra.mxu0 %v2793
      %v11145 = vpop.f32.mrf.mxu0
      %v11146 = vadd.f32 0.0, %v11145
      %v11147 = vpop.f32.mrf.mxu0
      %v11148 = vadd.f32 0.0, %v11147
      %11149 = vmatmul.bf16.gmra.mxu0 %v2794
      %v11150 = vpop.f32.mrf.mxu0
      %v11151 = vadd.f32 0.0, %v11150
      %v11152 = vpop.f32.mrf.mxu0
      %v11153 = vadd.f32 0.0, %v11152
      %11154 = vmatmul.bf16.gmra.mxu0 %v5358
      %v11155 = vpop.f32.mrf.mxu0
      %v11156 = vadd.f32 0.0, %v11155
      %v11157 = vpop.f32.mrf.mxu0
      %v11158 = vadd.f32 0.0, %v11157
      %11159 = vmatmul.bf16.gmra.mxu0 %v2796
      %v11160 = vpop.f32.mrf.mxu0
      %v11161 = vadd.f32 0.0, %v11160
      %v11162 = vpop.f32.mrf.mxu0
      %v11163 = vadd.f32 0.0, %v11162
      %11164 = vmatmul.bf16.gmra.mxu0 %v2797
      %v11165 = vpop.f32.mrf.mxu0
      %v11166 = vadd.f32 0.0, %v11165
      %v11167 = vpop.f32.mrf.mxu0
      %v11168 = vadd.f32 0.0, %v11167
      %11169 = vmatmul.bf16.gmra.mxu0 %v2798
      %v11170 = vpop.f32.mrf.mxu0
      %v11171 = vadd.f32 0.0, %v11170
      %v11172 = vpop.f32.mrf.mxu0
      %v11173 = vadd.f32 0.0, %v11172
      %11174 = vmatmul.bf16.gmra.mxu0 %v5359
      %v11175 = vpop.f32.mrf.mxu0
      %v11176 = vadd.f32 0.0, %v11175
      %v11177 = vpop.f32.mrf.mxu0
      %v11178 = vadd.f32 0.0, %v11177
      %11179 = vmatmul.bf16.gmra.mxu0 %v2800
      %v11180 = vpop.f32.mrf.mxu0
      %v11181 = vadd.f32 0.0, %v11180
      %v11182 = vpop.f32.mrf.mxu0
      %v11183 = vadd.f32 0.0, %v11182
      %11184 = vmatmul.bf16.gmra.mxu0 %v2801
      %v11185 = vpop.f32.mrf.mxu0
      %v11186 = vadd.f32 0.0, %v11185
      %v11187 = vpop.f32.mrf.mxu0
      %v11188 = vadd.f32 0.0, %v11187
      %11189 = vmatmul.bf16.gmra.mxu0 %v2802
      %v11190 = vpop.f32.mrf.mxu0
      %v11191 = vadd.f32 0.0, %v11190
      %v11192 = vpop.f32.mrf.mxu0
      %v11193 = vadd.f32 0.0, %v11192
      %11194 = vmatmul.bf16.gmra.mxu0 %v5360
      %v11195 = vpop.f32.mrf.mxu0
      %v11196 = vadd.f32 0.0, %v11195
      %v11197 = vpop.f32.mrf.mxu0
      %v11198 = vadd.f32 0.0, %v11197
      %11199 = vmatmul.bf16.gmra.mxu0 %v2804
      %v11200 = vpop.f32.mrf.mxu0
      %v11201 = vadd.f32 0.0, %v11200
      %v11202 = vpop.f32.mrf.mxu0
      %v11203 = vadd.f32 0.0, %v11202
      %11204 = vmatmul.bf16.gmra.mxu0 %v2805
      %v11205 = vpop.f32.mrf.mxu0
      %v11206 = vadd.f32 0.0, %v11205
      %v11207 = vpop.f32.mrf.mxu0
      %v11208 = vadd.f32 0.0, %v11207
      %11209 = vmatmul.bf16.gmra.mxu0 %v2806
      %v11210 = vpop.f32.mrf.mxu0
      %v11211 = vadd.f32 0.0, %v11210
      %v11212 = vpop.f32.mrf.mxu0
      %v11213 = vadd.f32 0.0, %v11212
      %11214 = vmatmul.bf16.gmra.mxu0 %v5361
      %v11215 = vpop.f32.mrf.mxu0
      %v11216 = vadd.f32 0.0, %v11215
      %v11217 = vpop.f32.mrf.mxu0
      %v11218 = vadd.f32 0.0, %v11217
      %11219 = vmatmul.bf16.gmra.mxu0 %v2808
      %v11220 = vpop.f32.mrf.mxu0
      %v11221 = vadd.f32 0.0, %v11220
      %v11222 = vpop.f32.mrf.mxu0
      %v11223 = vadd.f32 0.0, %v11222
      %11224 = vmatmul.bf16.gmra.mxu0 %v2809
      %v11225 = vpop.f32.mrf.mxu0
      %v11226 = vadd.f32 0.0, %v11225
      %v11227 = vpop.f32.mrf.mxu0
      %v11228 = vadd.f32 0.0, %v11227
      %11229 = vmatmul.bf16.gmra.mxu0 %v2810
      %v11230 = vpop.f32.mrf.mxu0
      %v11231 = vadd.f32 0.0, %v11230
      %v11232 = vpop.f32.mrf.mxu0
      %v11233 = vadd.f32 0.0, %v11232
      %11234 = vmatmul.bf16.gmra.mxu0 %v5362
      %v11235 = vpop.f32.mrf.mxu0
      %v11236 = vadd.f32 0.0, %v11235
      %v11237 = vpop.f32.mrf.mxu0
      %v11238 = vadd.f32 0.0, %v11237
      %11239 = vmatmul.bf16.gmra.mxu0 %v2812
      %v11240 = vpop.f32.mrf.mxu0
      %v11241 = vadd.f32 0.0, %v11240
      %v11242 = vpop.f32.mrf.mxu0
      %v11243 = vadd.f32 0.0, %v11242
      %11244 = vmatmul.bf16.gmra.mxu0 %v2813
      %v11245 = vpop.f32.mrf.mxu0
      %v11246 = vadd.f32 0.0, %v11245
      %v11247 = vpop.f32.mrf.mxu0
      %v11248 = vadd.f32 0.0, %v11247
      %11249 = vmatmul.bf16.gmra.mxu0 %v2814
      %v11250 = vpop.f32.mrf.mxu0
      %v11251 = vadd.f32 0.0, %v11250
      %v11252 = vpop.f32.mrf.mxu0
      %v11253 = vadd.f32 0.0, %v11252
      %11254 = vmatmul.bf16.gmra.mxu0 %v5363
      %v11255 = vpop.f32.mrf.mxu0
      %v11256 = vadd.f32 0.0, %v11255
      %v11257 = vpop.f32.mrf.mxu0
      %v11258 = vadd.f32 0.0, %v11257
      %11259 = vmatmul.bf16.gmra.mxu0 %v6355
      %v11260 = vpop.f32.mrf.mxu0
      %v11261 = vadd.f32 0.0, %v11260
      %v11262 = vpop.f32.mrf.mxu0
      %v11263 = vadd.f32 0.0, %v11262
      %11264 = vmatmul.bf16.gmra.mxu0 %v6356
      %v11265 = vpop.f32.mrf.mxu0
      %v11266 = vadd.f32 0.0, %v11265
      %v11267 = vpop.f32.mrf.mxu0
      %v11268 = vadd.f32 0.0, %v11267
      %11269 = vmatmul.bf16.gmra.mxu0 %v6357
      %v11270 = vpop.f32.mrf.mxu0
      %v11271 = vadd.f32 0.0, %v11270
      %v11272 = vpop.f32.mrf.mxu0
      %v11273 = vadd.f32 0.0, %v11272
      %11274 = vmatmul.bf16.gmra.mxu0 %v8256
      %v11275 = vpop.f32.mrf.mxu0
      %v11276 = vadd.f32 0.0, %v11275
      %v11277 = vpop.f32.mrf.mxu0
      %v11278 = vadd.f32 0.0, %v11277
      %11279 = vmatmul.bf16.gmra.mxu0 %v9164
      %v11280 = vpop.f32.mrf.mxu0
      %v11281 = vadd.f32 0.0, %v11280
      %v11282 = vpop.f32.mrf.mxu0
      %v11283 = vadd.f32 0.0, %v11282
      %11284 = vmatmul.bf16.gmra.mxu0 %v9165
      %v11285 = vpop.f32.mrf.mxu0
      %v11286 = vadd.f32 0.0, %v11285
      %v11287 = vpop.f32.mrf.mxu0
      %v11288 = vadd.f32 0.0, %v11287
      %11289 = vmatmul.bf16.gmra.mxu0 %v9166
      %v11290 = vpop.f32.mrf.mxu0
      %v11291 = vadd.f32 0.0, %v11290
      %v11292 = vpop.f32.mrf.mxu0
      %v11293 = vadd.f32 0.0, %v11292
      %11294 = vmatmul.bf16.gmra.mxu0 %v11065
      %v11295 = vpop.f32.mrf.mxu0
      %v11296 = vadd.f32 0.0, %v11295
      %v11297 = vpop.f32.mrf.mxu0
      %v11298 = vadd.f32 0.0, %v11297
      %11299 = vdwg.mxu0
      %v11300 = vadd.f32 %v11001, %v11141
      %v11301 = vadd.f32 %v11002, %v11143
      %v11302 = vadd.f32 %v11003, %v11146
      %v11303 = vadd.f32 %v11004, %v11148
      %v11304 = vadd.f32 %v11005, %v11151
      %v11305 = vadd.f32 %v11006, %v11153
      %v11306 = vadd.f32 %v11007, %v11156
      %v11307 = vadd.f32 %v11008, %v11158
      %v11308 = vadd.f32 %v11009, %v11161
      %v11309 = vadd.f32 %v11010, %v11163
      %v11310 = vadd.f32 %v11011, %v11166
      %v11311 = vadd.f32 %v11012, %v11168
      %v11312 = vadd.f32 %v11013, %v11171
      %v11313 = vadd.f32 %v11014, %v11173
      %v11314 = vadd.f32 %v11015, %v11176
      %v11315 = vadd.f32 %v11016, %v11178
      %v11316 = vadd.f32 %v11017, %v11181
      %v11317 = vadd.f32 %v11018, %v11183
      %v11318 = vadd.f32 %v11019, %v11186
      %v11319 = vadd.f32 %v11020, %v11188
      %v11320 = vadd.f32 %v11021, %v11191
      %v11321 = vadd.f32 %v11022, %v11193
      %v11322 = vadd.f32 %v11023, %v11196
      %v11323 = vadd.f32 %v11024, %v11198
      %v11324 = vadd.f32 %v11025, %v11201
      %v11325 = vadd.f32 %v11026, %v11203
      %v11326 = vadd.f32 %v11027, %v11206
      %v11327 = vadd.f32 %v11028, %v11208
      %v11328 = vadd.f32 %v11029, %v11211
      %v11329 = vadd.f32 %v11030, %v11213
      %v11330 = vadd.f32 %v11031, %v11216
      %v11331 = vadd.f32 %v11032, %v11218
      %v11332 = vadd.f32 %v11033, %v11221
      %v11333 = vadd.f32 %v11034, %v11223
      %v11334 = vadd.f32 %v11035, %v11226
      %v11335 = vadd.f32 %v11036, %v11228
      %v11336 = vadd.f32 %v11037, %v11231
      %v11337 = vadd.f32 %v11038, %v11233
      %v11338 = vadd.f32 %v11039, %v11236
      %v11339 = vadd.f32 %v11040, %v11238
      %v11340 = vadd.f32 %v11041, %v11241
      %v11341 = vadd.f32 %v11042, %v11243
      %v11342 = vadd.f32 %v11043, %v11246
      %v11343 = vadd.f32 %v11044, %v11248
      %v11344 = vadd.f32 %v11045, %v11251
      %v11345 = vadd.f32 %v11046, %v11253
      %v11346 = vadd.f32 %v11047, %v11256
      %v11347 = vadd.f32 %v11048, %v11258
      %v11348 = vadd.f32 %v11049, %v11261
      %v11349 = vadd.f32 %v11050, %v11263
      %v11350 = vadd.f32 %v11051, %v11266
      %v11351 = vadd.f32 %v11052, %v11268
      %v11352 = vadd.f32 %v11053, %v11271
      %v11353 = vadd.f32 %v11054, %v11273
      %v11354 = vadd.f32 %v11055, %v11276
      %v11355 = vadd.f32 %v11056, %v11278
      %v11356 = vadd.f32 %v11057, %v11281
      %v11357 = vadd.f32 %v11058, %v11283
      %v11358 = vadd.f32 %v11059, %v11286
      %v11359 = vadd.f32 %v11060, %v11288
      %v11360 = vadd.f32 %v11061, %v11291
      %v11361 = vadd.f32 %v11062, %v11293
      %v11362 = vadd.f32 %v11063, %v11296
      %v11363 = vadd.f32 %v11064, %v11298
      %v11366 = vrot.slane %v2781, 1
      %v11367 = vrot.slane %v2782, 1
      %v11368 = vsel %vm2959, %v11366, %v11367
      %v11370 = vpack.c.bf16 %v11368, %v10455
      %s11371 = scalar_lea.vmem %s4, 1600
      %v11372 = vld [vmem:[%s11371] sm:$0xf]
      %v11373 = vld [vmem:[%s11371 + $0x4] sm:$0xf]
      %v11374 = vld [vmem:[%s11371 + $0x8] sm:$0xf]
      %v11375 = vld [vmem:[%s11371 + $0xc] sm:$0xf]
      %v11376 = vld [vmem:[%s11371 + $0x10] sm:$0xf]
      %v11377 = vld [vmem:[%s11371 + $0x14] sm:$0xf]
      %v11378 = vld [vmem:[%s11371 + $0x18] sm:$0xf]
      %v11379 = vld [vmem:[%s11371 + $0x1c] sm:$0xf]
      %v11380 = vld [vmem:[%s11371 + $0x20] sm:$0xf]
      %v11381 = vld [vmem:[%s11371 + $0x24] sm:$0xf]
      %v11382 = vld [vmem:[%s11371 + $0x28] sm:$0xf]
      %v11383 = vld [vmem:[%s11371 + $0x2c] sm:$0xf]
      %v11384 = vld [vmem:[%s11371 + $0x30] sm:$0xf]
      %v11385 = vld [vmem:[%s11371 + $0x34] sm:$0xf]
      %v11386 = vld [vmem:[%s11371 + $0x38] sm:$0xf]
      %v11387 = vld [vmem:[%s11371 + $0x3c] sm:$0xf]
      %v11404 = vunpack.c.l.b16 %v11372
      %v11405 = vunpack.c.l.b16 %v11373
      %v11406 = vunpack.c.l.b16 %v11374
      %v11407 = vunpack.c.l.b16 %v11375
      %v11408 = vunpack.c.l.b16 %v11376
      %v11409 = vunpack.c.l.b16 %v11377
      %v11410 = vunpack.c.l.b16 %v11378
      %v11411 = vunpack.c.l.b16 %v11379
      %v11412 = vunpack.c.l.b16 %v11380
      %v11413 = vunpack.c.l.b16 %v11381
      %v11414 = vunpack.c.l.b16 %v11382
      %v11415 = vunpack.c.l.b16 %v11383
      %v11416 = vunpack.c.l.b16 %v11384
      %v11417 = vunpack.c.l.b16 %v11385
      %v11418 = vunpack.c.l.b16 %v11386
      %v11419 = vunpack.c.l.b16 %v11387
      %v11420 = vpack.c.b16 %v11405, %v11404
      %v11421 = vpack.c.b16 %v11407, %v11406
      %v11422 = vpack.c.b16 %v11409, %v11408
      %v11423 = vpack.c.b16 %v11411, %v11410
      %v11424 = vpack.c.b16 %v11413, %v11412
      %v11425 = vpack.c.b16 %v11415, %v11414
      %v11426 = vpack.c.b16 %v11417, %v11416
      %v11427 = vpack.c.b16 %v11419, %v11418
      %11436 = vmatpush.bf16.msra.mxu0 %v11427
      %11437 = vmatpush.bf16.msra.mxu0 %v11426
      %11438 = vmatpush.bf16.msra.mxu0 %v11425
      %11439 = vmatpush.bf16.msra.mxu0 %v11424
      %11440 = vmatpush.bf16.msra.mxu0 %v11423
      %11441 = vmatpush.bf16.msra.mxu0 %v11422
      %11442 = vmatpush.bf16.msra.mxu0 %v11421
      %11443 = vmatpush.bf16.msra.mxu0 %v11420
      %11444 = vmatmul.bf16.gmra.mxu0 %v3225
      %v11445 = vpop.f32.mrf.mxu0
      %v11446 = vadd.f32 0.0, %v11445
      %v11447 = vpop.f32.mrf.mxu0
      %v11448 = vadd.f32 0.0, %v11447
      %11449 = vmatmul.bf16.gmra.mxu0 %v3226
      %v11450 = vpop.f32.mrf.mxu0
      %v11451 = vadd.f32 0.0, %v11450
      %v11452 = vpop.f32.mrf.mxu0
      %v11453 = vadd.f32 0.0, %v11452
      %11454 = vmatmul.bf16.gmra.mxu0 %v3227
      %v11455 = vpop.f32.mrf.mxu0
      %v11456 = vadd.f32 0.0, %v11455
      %v11457 = vpop.f32.mrf.mxu0
      %v11458 = vadd.f32 0.0, %v11457
      %11459 = vmatmul.bf16.gmra.mxu0 %v5712
      %v11460 = vpop.f32.mrf.mxu0
      %v11461 = vadd.f32 0.0, %v11460
      %v11462 = vpop.f32.mrf.mxu0
      %v11463 = vadd.f32 0.0, %v11462
      %11464 = vmatmul.bf16.gmra.mxu0 %v3229
      %v11465 = vpop.f32.mrf.mxu0
      %v11466 = vadd.f32 0.0, %v11465
      %v11467 = vpop.f32.mrf.mxu0
      %v11468 = vadd.f32 0.0, %v11467
      %11469 = vmatmul.bf16.gmra.mxu0 %v3230
      %v11470 = vpop.f32.mrf.mxu0
      %v11471 = vadd.f32 0.0, %v11470
      %v11472 = vpop.f32.mrf.mxu0
      %v11473 = vadd.f32 0.0, %v11472
      %11474 = vmatmul.bf16.gmra.mxu0 %v3231
      %v11475 = vpop.f32.mrf.mxu0
      %v11476 = vadd.f32 0.0, %v11475
      %v11477 = vpop.f32.mrf.mxu0
      %v11478 = vadd.f32 0.0, %v11477
      %11479 = vmatmul.bf16.gmra.mxu0 %v5713
      %v11480 = vpop.f32.mrf.mxu0
      %v11481 = vadd.f32 0.0, %v11480
      %v11482 = vpop.f32.mrf.mxu0
      %v11483 = vadd.f32 0.0, %v11482
      %11484 = vmatmul.bf16.gmra.mxu0 %v3233
      %v11485 = vpop.f32.mrf.mxu0
      %v11486 = vadd.f32 0.0, %v11485
      %v11487 = vpop.f32.mrf.mxu0
      %v11488 = vadd.f32 0.0, %v11487
      %11489 = vmatmul.bf16.gmra.mxu0 %v3234
      %v11490 = vpop.f32.mrf.mxu0
      %v11491 = vadd.f32 0.0, %v11490
      %v11492 = vpop.f32.mrf.mxu0
      %v11493 = vadd.f32 0.0, %v11492
      %11494 = vmatmul.bf16.gmra.mxu0 %v3235
      %v11495 = vpop.f32.mrf.mxu0
      %v11496 = vadd.f32 0.0, %v11495
      %v11497 = vpop.f32.mrf.mxu0
      %v11498 = vadd.f32 0.0, %v11497
      %11499 = vmatmul.bf16.gmra.mxu0 %v5714
      %v11500 = vpop.f32.mrf.mxu0
      %v11501 = vadd.f32 0.0, %v11500
      %v11502 = vpop.f32.mrf.mxu0
      %v11503 = vadd.f32 0.0, %v11502
      %11504 = vmatmul.bf16.gmra.mxu0 %v3237
      %v11505 = vpop.f32.mrf.mxu0
      %v11506 = vadd.f32 0.0, %v11505
      %v11507 = vpop.f32.mrf.mxu0
      %v11508 = vadd.f32 0.0, %v11507
      %11509 = vmatmul.bf16.gmra.mxu0 %v3238
      %v11510 = vpop.f32.mrf.mxu0
      %v11511 = vadd.f32 0.0, %v11510
      %v11512 = vpop.f32.mrf.mxu0
      %v11513 = vadd.f32 0.0, %v11512
      %11514 = vmatmul.bf16.gmra.mxu0 %v3239
      %v11515 = vpop.f32.mrf.mxu0
      %v11516 = vadd.f32 0.0, %v11515
      %v11517 = vpop.f32.mrf.mxu0
      %v11518 = vadd.f32 0.0, %v11517
      %11519 = vmatmul.bf16.gmra.mxu0 %v5715
      %v11520 = vpop.f32.mrf.mxu0
      %v11521 = vadd.f32 0.0, %v11520
      %v11522 = vpop.f32.mrf.mxu0
      %v11523 = vadd.f32 0.0, %v11522
      %11524 = vmatmul.bf16.gmra.mxu0 %v3241
      %v11525 = vpop.f32.mrf.mxu0
      %v11526 = vadd.f32 0.0, %v11525
      %v11527 = vpop.f32.mrf.mxu0
      %v11528 = vadd.f32 0.0, %v11527
      %11529 = vmatmul.bf16.gmra.mxu0 %v3242
      %v11530 = vpop.f32.mrf.mxu0
      %v11531 = vadd.f32 0.0, %v11530
      %v11532 = vpop.f32.mrf.mxu0
      %v11533 = vadd.f32 0.0, %v11532
      %11534 = vmatmul.bf16.gmra.mxu0 %v3243
      %v11535 = vpop.f32.mrf.mxu0
      %v11536 = vadd.f32 0.0, %v11535
      %v11537 = vpop.f32.mrf.mxu0
      %v11538 = vadd.f32 0.0, %v11537
      %11539 = vmatmul.bf16.gmra.mxu0 %v5716
      %v11540 = vpop.f32.mrf.mxu0
      %v11541 = vadd.f32 0.0, %v11540
      %v11542 = vpop.f32.mrf.mxu0
      %v11543 = vadd.f32 0.0, %v11542
      %11544 = vmatmul.bf16.gmra.mxu0 %v3245
      %v11545 = vpop.f32.mrf.mxu0
      %v11546 = vadd.f32 0.0, %v11545
      %v11547 = vpop.f32.mrf.mxu0
      %v11548 = vadd.f32 0.0, %v11547
      %11549 = vmatmul.bf16.gmra.mxu0 %v3246
      %v11550 = vpop.f32.mrf.mxu0
      %v11551 = vadd.f32 0.0, %v11550
      %v11552 = vpop.f32.mrf.mxu0
      %v11553 = vadd.f32 0.0, %v11552
      %11554 = vmatmul.bf16.gmra.mxu0 %v3247
      %v11555 = vpop.f32.mrf.mxu0
      %v11556 = vadd.f32 0.0, %v11555
      %v11557 = vpop.f32.mrf.mxu0
      %v11558 = vadd.f32 0.0, %v11557
      %11559 = vmatmul.bf16.gmra.mxu0 %v5717
      %v11560 = vpop.f32.mrf.mxu0
      %v11561 = vadd.f32 0.0, %v11560
      %v11562 = vpop.f32.mrf.mxu0
      %v11563 = vadd.f32 0.0, %v11562
      %11564 = vmatmul.bf16.gmra.mxu0 %v6705
      %v11565 = vpop.f32.mrf.mxu0
      %v11566 = vadd.f32 0.0, %v11565
      %v11567 = vpop.f32.mrf.mxu0
      %v11568 = vadd.f32 0.0, %v11567
      %11569 = vmatmul.bf16.gmra.mxu0 %v6706
      %v11570 = vpop.f32.mrf.mxu0
      %v11571 = vadd.f32 0.0, %v11570
      %v11572 = vpop.f32.mrf.mxu0
      %v11573 = vadd.f32 0.0, %v11572
      %11574 = vmatmul.bf16.gmra.mxu0 %v6707
      %v11575 = vpop.f32.mrf.mxu0
      %v11576 = vadd.f32 0.0, %v11575
      %v11577 = vpop.f32.mrf.mxu0
      %v11578 = vadd.f32 0.0, %v11577
      %11579 = vmatmul.bf16.gmra.mxu0 %v8561
      %v11580 = vpop.f32.mrf.mxu0
      %v11581 = vadd.f32 0.0, %v11580
      %v11582 = vpop.f32.mrf.mxu0
      %v11583 = vadd.f32 0.0, %v11582
      %11584 = vmatmul.bf16.gmra.mxu0 %v9514
      %v11585 = vpop.f32.mrf.mxu0
      %v11586 = vadd.f32 0.0, %v11585
      %v11587 = vpop.f32.mrf.mxu0
      %v11588 = vadd.f32 0.0, %v11587
      %11589 = vmatmul.bf16.gmra.mxu0 %v9515
      %v11590 = vpop.f32.mrf.mxu0
      %v11591 = vadd.f32 0.0, %v11590
      %v11592 = vpop.f32.mrf.mxu0
      %v11593 = vadd.f32 0.0, %v11592
      %11594 = vmatmul.bf16.gmra.mxu0 %v9516
      %v11595 = vpop.f32.mrf.mxu0
      %v11596 = vadd.f32 0.0, %v11595
      %v11597 = vpop.f32.mrf.mxu0
      %v11598 = vadd.f32 0.0, %v11597
      %11599 = vmatmul.bf16.gmra.mxu0 %v11370
      %v11600 = vpop.f32.mrf.mxu0
      %v11601 = vadd.f32 0.0, %v11600
      %v11602 = vpop.f32.mrf.mxu0
      %v11603 = vadd.f32 0.0, %v11602
      %11604 = vdwg.mxu0
      %v11605 = vadd.f32 %v11300, %v11446
      %v11606 = vadd.f32 %v11301, %v11448
      %v11607 = vadd.f32 %v11302, %v11451
      %v11608 = vadd.f32 %v11303, %v11453
      %v11609 = vadd.f32 %v11304, %v11456
      %v11610 = vadd.f32 %v11305, %v11458
      %v11611 = vadd.f32 %v11306, %v11461
      %v11612 = vadd.f32 %v11307, %v11463
      %v11613 = vadd.f32 %v11308, %v11466
      %v11614 = vadd.f32 %v11309, %v11468
      %v11615 = vadd.f32 %v11310, %v11471
      %v11616 = vadd.f32 %v11311, %v11473
      %v11617 = vadd.f32 %v11312, %v11476
      %v11618 = vadd.f32 %v11313, %v11478
      %v11619 = vadd.f32 %v11314, %v11481
      %v11620 = vadd.f32 %v11315, %v11483
      %v11621 = vadd.f32 %v11316, %v11486
      %v11622 = vadd.f32 %v11317, %v11488
      %v11623 = vadd.f32 %v11318, %v11491
      %v11624 = vadd.f32 %v11319, %v11493
      %v11625 = vadd.f32 %v11320, %v11496
      %v11626 = vadd.f32 %v11321, %v11498
      %v11627 = vadd.f32 %v11322, %v11501
      %v11628 = vadd.f32 %v11323, %v11503
      %v11629 = vadd.f32 %v11324, %v11506
      %v11630 = vadd.f32 %v11325, %v11508
      %v11631 = vadd.f32 %v11326, %v11511
      %v11632 = vadd.f32 %v11327, %v11513
      %v11633 = vadd.f32 %v11328, %v11516
      %v11634 = vadd.f32 %v11329, %v11518
      %v11635 = vadd.f32 %v11330, %v11521
      %v11636 = vadd.f32 %v11331, %v11523
      %v11637 = vadd.f32 %v11332, %v11526
      %v11638 = vadd.f32 %v11333, %v11528
      %v11639 = vadd.f32 %v11334, %v11531
      %v11640 = vadd.f32 %v11335, %v11533
      %v11641 = vadd.f32 %v11336, %v11536
      %v11642 = vadd.f32 %v11337, %v11538
      %v11643 = vadd.f32 %v11338, %v11541
      %v11644 = vadd.f32 %v11339, %v11543
      %v11645 = vadd.f32 %v11340, %v11546
      %v11646 = vadd.f32 %v11341, %v11548
      %v11647 = vadd.f32 %v11342, %v11551
      %v11648 = vadd.f32 %v11343, %v11553
      %v11649 = vadd.f32 %v11344, %v11556
      %v11650 = vadd.f32 %v11345, %v11558
      %v11651 = vadd.f32 %v11346, %v11561
      %v11652 = vadd.f32 %v11347, %v11563
      %v11653 = vadd.f32 %v11348, %v11566
      %v11654 = vadd.f32 %v11349, %v11568
      %v11655 = vadd.f32 %v11350, %v11571
      %v11656 = vadd.f32 %v11351, %v11573
      %v11657 = vadd.f32 %v11352, %v11576
      %v11658 = vadd.f32 %v11353, %v11578
      %v11659 = vadd.f32 %v11354, %v11581
      %v11660 = vadd.f32 %v11355, %v11583
      %v11661 = vadd.f32 %v11356, %v11586
      %v11662 = vadd.f32 %v11357, %v11588
      %v11663 = vadd.f32 %v11358, %v11591
      %v11664 = vadd.f32 %v11359, %v11593
      %v11665 = vadd.f32 %v11360, %v11596
      %v11666 = vadd.f32 %v11361, %v11598
      %v11667 = vadd.f32 %v11362, %v11601
      %v11668 = vadd.f32 %v11363, %v11603
      %v11669 = vrot.slane %v2781, 2
      %v11670 = vrot.slane %v2782, 2
      %v11671 = vsel %vm3699, %v11669, %v11670
      %v11673 = vpack.c.bf16 %v11671, %v10761
      %s11674 = scalar_lea.vmem %s4, 1664
      %v11675 = vld [vmem:[%s11674] sm:$0xf]
      %v11676 = vld [vmem:[%s11674 + $0x4] sm:$0xf]
      %v11677 = vld [vmem:[%s11674 + $0x8] sm:$0xf]
      %v11678 = vld [vmem:[%s11674 + $0xc] sm:$0xf]
      %v11679 = vld [vmem:[%s11674 + $0x10] sm:$0xf]
      %v11680 = vld [vmem:[%s11674 + $0x14] sm:$0xf]
      %v11681 = vld [vmem:[%s11674 + $0x18] sm:$0xf]
      %v11682 = vld [vmem:[%s11674 + $0x1c] sm:$0xf]
      %v11683 = vld [vmem:[%s11674 + $0x20] sm:$0xf]
      %v11684 = vld [vmem:[%s11674 + $0x24] sm:$0xf]
      %v11685 = vld [vmem:[%s11674 + $0x28] sm:$0xf]
      %v11686 = vld [vmem:[%s11674 + $0x2c] sm:$0xf]
      %v11687 = vld [vmem:[%s11674 + $0x30] sm:$0xf]
      %v11688 = vld [vmem:[%s11674 + $0x34] sm:$0xf]
      %v11689 = vld [vmem:[%s11674 + $0x38] sm:$0xf]
      %v11690 = vld [vmem:[%s11674 + $0x3c] sm:$0xf]
      %v11707 = vunpack.c.l.b16 %v11675
      %v11708 = vunpack.c.l.b16 %v11676
      %v11709 = vunpack.c.l.b16 %v11677
      %v11710 = vunpack.c.l.b16 %v11678
      %v11711 = vunpack.c.l.b16 %v11679
      %v11712 = vunpack.c.l.b16 %v11680
      %v11713 = vunpack.c.l.b16 %v11681
      %v11714 = vunpack.c.l.b16 %v11682
      %v11715 = vunpack.c.l.b16 %v11683
      %v11716 = vunpack.c.l.b16 %v11684
      %v11717 = vunpack.c.l.b16 %v11685
      %v11718 = vunpack.c.l.b16 %v11686
      %v11719 = vunpack.c.l.b16 %v11687
      %v11720 = vunpack.c.l.b16 %v11688
      %v11721 = vunpack.c.l.b16 %v11689
      %v11722 = vunpack.c.l.b16 %v11690
      %v11723 = vpack.c.b16 %v11708, %v11707
      %v11724 = vpack.c.b16 %v11710, %v11709
      %v11725 = vpack.c.b16 %v11712, %v11711
      %v11726 = vpack.c.b16 %v11714, %v11713
      %v11727 = vpack.c.b16 %v11716, %v11715
      %v11728 = vpack.c.b16 %v11718, %v11717
      %v11729 = vpack.c.b16 %v11720, %v11719
      %v11730 = vpack.c.b16 %v11722, %v11721
      %11739 = vmatpush.bf16.msra.mxu0 %v11730
      %11740 = vmatpush.bf16.msra.mxu0 %v11729
      %11741 = vmatpush.bf16.msra.mxu0 %v11728
      %11742 = vmatpush.bf16.msra.mxu0 %v11727
      %11743 = vmatpush.bf16.msra.mxu0 %v11726
      %11744 = vmatpush.bf16.msra.mxu0 %v11725
      %11745 = vmatpush.bf16.msra.mxu0 %v11724
      %11746 = vmatpush.bf16.msra.mxu0 %v11723
      %11747 = vmatmul.bf16.gmra.mxu0 %v3965
      %v11748 = vpop.f32.mrf.mxu0
      %v11749 = vadd.f32 0.0, %v11748
      %v11750 = vpop.f32.mrf.mxu0
      %v11751 = vadd.f32 0.0, %v11750
      %11752 = vmatmul.bf16.gmra.mxu0 %v3966
      %v11753 = vpop.f32.mrf.mxu0
      %v11754 = vadd.f32 0.0, %v11753
      %v11755 = vpop.f32.mrf.mxu0
      %v11756 = vadd.f32 0.0, %v11755
      %11757 = vmatmul.bf16.gmra.mxu0 %v3967
      %v11758 = vpop.f32.mrf.mxu0
      %v11759 = vadd.f32 0.0, %v11758
      %v11760 = vpop.f32.mrf.mxu0
      %v11761 = vadd.f32 0.0, %v11760
      %11762 = vmatmul.bf16.gmra.mxu0 %v6050
      %v11763 = vpop.f32.mrf.mxu0
      %v11764 = vadd.f32 0.0, %v11763
      %v11765 = vpop.f32.mrf.mxu0
      %v11766 = vadd.f32 0.0, %v11765
      %11767 = vmatmul.bf16.gmra.mxu0 %v3969
      %v11768 = vpop.f32.mrf.mxu0
      %v11769 = vadd.f32 0.0, %v11768
      %v11770 = vpop.f32.mrf.mxu0
      %v11771 = vadd.f32 0.0, %v11770
      %11772 = vmatmul.bf16.gmra.mxu0 %v3970
      %v11773 = vpop.f32.mrf.mxu0
      %v11774 = vadd.f32 0.0, %v11773
      %v11775 = vpop.f32.mrf.mxu0
      %v11776 = vadd.f32 0.0, %v11775
      %11777 = vmatmul.bf16.gmra.mxu0 %v3971
      %v11778 = vpop.f32.mrf.mxu0
      %v11779 = vadd.f32 0.0, %v11778
      %v11780 = vpop.f32.mrf.mxu0
      %v11781 = vadd.f32 0.0, %v11780
      %11782 = vmatmul.bf16.gmra.mxu0 %v6051
      %v11783 = vpop.f32.mrf.mxu0
      %v11784 = vadd.f32 0.0, %v11783
      %v11785 = vpop.f32.mrf.mxu0
      %v11786 = vadd.f32 0.0, %v11785
      %11787 = vmatmul.bf16.gmra.mxu0 %v3973
      %v11788 = vpop.f32.mrf.mxu0
      %v11789 = vadd.f32 0.0, %v11788
      %v11790 = vpop.f32.mrf.mxu0
      %v11791 = vadd.f32 0.0, %v11790
      %11792 = vmatmul.bf16.gmra.mxu0 %v3974
      %v11793 = vpop.f32.mrf.mxu0
      %v11794 = vadd.f32 0.0, %v11793
      %v11795 = vpop.f32.mrf.mxu0
      %v11796 = vadd.f32 0.0, %v11795
      %11797 = vmatmul.bf16.gmra.mxu0 %v3975
      %v11798 = vpop.f32.mrf.mxu0
      %v11799 = vadd.f32 0.0, %v11798
      %v11800 = vpop.f32.mrf.mxu0
      %v11801 = vadd.f32 0.0, %v11800
      %11802 = vmatmul.bf16.gmra.mxu0 %v6052
      %v11803 = vpop.f32.mrf.mxu0
      %v11804 = vadd.f32 0.0, %v11803
      %v11805 = vpop.f32.mrf.mxu0
      %v11806 = vadd.f32 0.0, %v11805
      %11807 = vmatmul.bf16.gmra.mxu0 %v3977
      %v11808 = vpop.f32.mrf.mxu0
      %v11809 = vadd.f32 0.0, %v11808
      %v11810 = vpop.f32.mrf.mxu0
      %v11811 = vadd.f32 0.0, %v11810
      %11812 = vmatmul.bf16.gmra.mxu0 %v3978
      %v11813 = vpop.f32.mrf.mxu0
      %v11814 = vadd.f32 0.0, %v11813
      %v11815 = vpop.f32.mrf.mxu0
      %v11816 = vadd.f32 0.0, %v11815
      %11817 = vmatmul.bf16.gmra.mxu0 %v3979
      %v11818 = vpop.f32.mrf.mxu0
      %v11819 = vadd.f32 0.0, %v11818
      %v11820 = vpop.f32.mrf.mxu0
      %v11821 = vadd.f32 0.0, %v11820
      %11822 = vmatmul.bf16.gmra.mxu0 %v6053
      %v11823 = vpop.f32.mrf.mxu0
      %v11824 = vadd.f32 0.0, %v11823
      %v11825 = vpop.f32.mrf.mxu0
      %v11826 = vadd.f32 0.0, %v11825
      %11827 = vmatmul.bf16.gmra.mxu0 %v3981
      %v11828 = vpop.f32.mrf.mxu0
      %v11829 = vadd.f32 0.0, %v11828
      %v11830 = vpop.f32.mrf.mxu0
      %v11831 = vadd.f32 0.0, %v11830
      %11832 = vmatmul.bf16.gmra.mxu0 %v3982
      %v11833 = vpop.f32.mrf.mxu0
      %v11834 = vadd.f32 0.0, %v11833
      %v11835 = vpop.f32.mrf.mxu0
      %v11836 = vadd.f32 0.0, %v11835
      %11837 = vmatmul.bf16.gmra.mxu0 %v3983
      %v11838 = vpop.f32.mrf.mxu0
      %v11839 = vadd.f32 0.0, %v11838
      %v11840 = vpop.f32.mrf.mxu0
      %v11841 = vadd.f32 0.0, %v11840
      %11842 = vmatmul.bf16.gmra.mxu0 %v6054
      %v11843 = vpop.f32.mrf.mxu0
      %v11844 = vadd.f32 0.0, %v11843
      %v11845 = vpop.f32.mrf.mxu0
      %v11846 = vadd.f32 0.0, %v11845
      %11847 = vmatmul.bf16.gmra.mxu0 %v3985
      %v11848 = vpop.f32.mrf.mxu0
      %v11849 = vadd.f32 0.0, %v11848
      %v11850 = vpop.f32.mrf.mxu0
      %v11851 = vadd.f32 0.0, %v11850
      %11852 = vmatmul.bf16.gmra.mxu0 %v3986
      %v11853 = vpop.f32.mrf.mxu0
      %v11854 = vadd.f32 0.0, %v11853
      %v11855 = vpop.f32.mrf.mxu0
      %v11856 = vadd.f32 0.0, %v11855
      %11857 = vmatmul.bf16.gmra.mxu0 %v3987
      %v11858 = vpop.f32.mrf.mxu0
      %v11859 = vadd.f32 0.0, %v11858
      %v11860 = vpop.f32.mrf.mxu0
      %v11861 = vadd.f32 0.0, %v11860
      %11862 = vmatmul.bf16.gmra.mxu0 %v6055
      %v11863 = vpop.f32.mrf.mxu0
      %v11864 = vadd.f32 0.0, %v11863
      %v11865 = vpop.f32.mrf.mxu0
      %v11866 = vadd.f32 0.0, %v11865
      %11867 = vmatmul.bf16.gmra.mxu0 %v7039
      %v11868 = vpop.f32.mrf.mxu0
      %v11869 = vadd.f32 0.0, %v11868
      %v11870 = vpop.f32.mrf.mxu0
      %v11871 = vadd.f32 0.0, %v11870
      %11872 = vmatmul.bf16.gmra.mxu0 %v7040
      %v11873 = vpop.f32.mrf.mxu0
      %v11874 = vadd.f32 0.0, %v11873
      %v11875 = vpop.f32.mrf.mxu0
      %v11876 = vadd.f32 0.0, %v11875
      %11877 = vmatmul.bf16.gmra.mxu0 %v7041
      %v11878 = vpop.f32.mrf.mxu0
      %v11879 = vadd.f32 0.0, %v11878
      %v11880 = vpop.f32.mrf.mxu0
      %v11881 = vadd.f32 0.0, %v11880
      %11882 = vmatmul.bf16.gmra.mxu0 %v8864
      %v11883 = vpop.f32.mrf.mxu0
      %v11884 = vadd.f32 0.0, %v11883
      %v11885 = vpop.f32.mrf.mxu0
      %v11886 = vadd.f32 0.0, %v11885
      %11887 = vmatmul.bf16.gmra.mxu0 %v9848
      %v11888 = vpop.f32.mrf.mxu0
      %v11889 = vadd.f32 0.0, %v11888
      %v11890 = vpop.f32.mrf.mxu0
      %v11891 = vadd.f32 0.0, %v11890
      %11892 = vmatmul.bf16.gmra.mxu0 %v9849
      %v11893 = vpop.f32.mrf.mxu0
      %v11894 = vadd.f32 0.0, %v11893
      %v11895 = vpop.f32.mrf.mxu0
      %v11896 = vadd.f32 0.0, %v11895
      %11897 = vmatmul.bf16.gmra.mxu0 %v9850
      %v11898 = vpop.f32.mrf.mxu0
      %v11899 = vadd.f32 0.0, %v11898
      %v11900 = vpop.f32.mrf.mxu0
      %v11901 = vadd.f32 0.0, %v11900
      %11902 = vmatmul.bf16.gmra.mxu0 %v11673
      %v11903 = vpop.f32.mrf.mxu0
      %v11904 = vadd.f32 0.0, %v11903
      %v11905 = vpop.f32.mrf.mxu0
      %v11906 = vadd.f32 0.0, %v11905
      %11907 = vdwg.mxu0
      %v11908 = vadd.f32 %v11605, %v11749
      %v11909 = vadd.f32 %v11606, %v11751
      %v11910 = vadd.f32 %v11607, %v11754
      %v11911 = vadd.f32 %v11608, %v11756
      %v11912 = vadd.f32 %v11609, %v11759
      %v11913 = vadd.f32 %v11610, %v11761
      %v11914 = vadd.f32 %v11611, %v11764
      %v11915 = vadd.f32 %v11612, %v11766
      %v11916 = vadd.f32 %v11613, %v11769
      %v11917 = vadd.f32 %v11614, %v11771
      %v11918 = vadd.f32 %v11615, %v11774
      %v11919 = vadd.f32 %v11616, %v11776
      %v11920 = vadd.f32 %v11617, %v11779
      %v11921 = vadd.f32 %v11618, %v11781
      %v11922 = vadd.f32 %v11619, %v11784
      %v11923 = vadd.f32 %v11620, %v11786
      %v11924 = vadd.f32 %v11621, %v11789
      %v11925 = vadd.f32 %v11622, %v11791
      %v11926 = vadd.f32 %v11623, %v11794
      %v11927 = vadd.f32 %v11624, %v11796
      %v11928 = vadd.f32 %v11625, %v11799
      %v11929 = vadd.f32 %v11626, %v11801
      %v11930 = vadd.f32 %v11627, %v11804
      %v11931 = vadd.f32 %v11628, %v11806
      %v11932 = vadd.f32 %v11629, %v11809
      %v11933 = vadd.f32 %v11630, %v11811
      %v11934 = vadd.f32 %v11631, %v11814
      %v11935 = vadd.f32 %v11632, %v11816
      %v11936 = vadd.f32 %v11633, %v11819
      %v11937 = vadd.f32 %v11634, %v11821
      %v11938 = vadd.f32 %v11635, %v11824
      %v11939 = vadd.f32 %v11636, %v11826
      %v11940 = vadd.f32 %v11637, %v11829
      %v11941 = vadd.f32 %v11638, %v11831
      %v11942 = vadd.f32 %v11639, %v11834
      %v11943 = vadd.f32 %v11640, %v11836
      %v11944 = vadd.f32 %v11641, %v11839
      %v11945 = vadd.f32 %v11642, %v11841
      %v11946 = vadd.f32 %v11643, %v11844
      %v11947 = vadd.f32 %v11644, %v11846
      %v11948 = vadd.f32 %v11645, %v11849
      %v11949 = vadd.f32 %v11646, %v11851
      %v11950 = vadd.f32 %v11647, %v11854
      %v11951 = vadd.f32 %v11648, %v11856
      %v11952 = vadd.f32 %v11649, %v11859
      %v11953 = vadd.f32 %v11650, %v11861
      %v11954 = vadd.f32 %v11651, %v11864
      %v11955 = vadd.f32 %v11652, %v11866
      %v11956 = vadd.f32 %v11653, %v11869
      %v11957 = vadd.f32 %v11654, %v11871
      %v11958 = vadd.f32 %v11655, %v11874
      %v11959 = vadd.f32 %v11656, %v11876
      %v11960 = vadd.f32 %v11657, %v11879
      %v11961 = vadd.f32 %v11658, %v11881
      %v11962 = vadd.f32 %v11659, %v11884
      %v11963 = vadd.f32 %v11660, %v11886
      %v11964 = vadd.f32 %v11661, %v11889
      %v11965 = vadd.f32 %v11662, %v11891
      %v11966 = vadd.f32 %v11663, %v11894
      %v11967 = vadd.f32 %v11664, %v11896
      %v11968 = vadd.f32 %v11665, %v11899
      %v11969 = vadd.f32 %v11666, %v11901
      %v11970 = vadd.f32 %v11667, %v11904
      %v11971 = vadd.f32 %v11668, %v11906
      %v11972 = vld [vmem:[%s5] sm:$0x1]
      %v11974 = vperm.slane %v11972, 0
      %v11976 = vadd.f32 %v11908, %v11974
      %v11977 = vadd.f32 %v11909, %v11974
      %v11978 = vadd.f32 %v11910, %v11974
      %v11979 = vadd.f32 %v11911, %v11974
      %v11980 = vadd.f32 %v11912, %v11974
      %v11981 = vadd.f32 %v11913, %v11974
      %v11982 = vadd.f32 %v11914, %v11974
      %v11983 = vadd.f32 %v11915, %v11974
      %v11984 = vadd.f32 %v11916, %v11974
      %v11985 = vadd.f32 %v11917, %v11974
      %v11986 = vadd.f32 %v11918, %v11974
      %v11987 = vadd.f32 %v11919, %v11974
      %v11988 = vadd.f32 %v11920, %v11974
      %v11989 = vadd.f32 %v11921, %v11974
      %v11990 = vadd.f32 %v11922, %v11974
      %v11991 = vadd.f32 %v11923, %v11974
      %v11992 = vadd.f32 %v11924, %v11974
      %v11993 = vadd.f32 %v11925, %v11974
      %v11994 = vadd.f32 %v11926, %v11974
      %v11995 = vadd.f32 %v11927, %v11974
      %v11996 = vadd.f32 %v11928, %v11974
      %v11997 = vadd.f32 %v11929, %v11974
      %v11998 = vadd.f32 %v11930, %v11974
      %v11999 = vadd.f32 %v11931, %v11974
      %v12000 = vadd.f32 %v11932, %v11974
      %v12001 = vadd.f32 %v11933, %v11974
      %v12002 = vadd.f32 %v11934, %v11974
      %v12003 = vadd.f32 %v11935, %v11974
      %v12004 = vadd.f32 %v11936, %v11974
      %v12005 = vadd.f32 %v11937, %v11974
      %v12006 = vadd.f32 %v11938, %v11974
      %v12007 = vadd.f32 %v11939, %v11974
      %v12008 = vadd.f32 %v11940, %v11974
      %v12009 = vadd.f32 %v11941, %v11974
      %v12010 = vadd.f32 %v11942, %v11974
      %v12011 = vadd.f32 %v11943, %v11974
      %v12012 = vadd.f32 %v11944, %v11974
      %v12013 = vadd.f32 %v11945, %v11974
      %v12014 = vadd.f32 %v11946, %v11974
      %v12015 = vadd.f32 %v11947, %v11974
      %v12016 = vadd.f32 %v11948, %v11974
      %v12017 = vadd.f32 %v11949, %v11974
      %v12018 = vadd.f32 %v11950, %v11974
      %v12019 = vadd.f32 %v11951, %v11974
      %v12020 = vadd.f32 %v11952, %v11974
      %v12021 = vadd.f32 %v11953, %v11974
      %v12022 = vadd.f32 %v11954, %v11974
      %v12023 = vadd.f32 %v11955, %v11974
      %v12024 = vadd.f32 %v11956, %v11974
      %v12025 = vadd.f32 %v11957, %v11974
      %v12026 = vadd.f32 %v11958, %v11974
      %v12027 = vadd.f32 %v11959, %v11974
      %v12028 = vadd.f32 %v11960, %v11974
      %v12029 = vadd.f32 %v11961, %v11974
      %v12030 = vadd.f32 %v11962, %v11974
      %v12031 = vadd.f32 %v11963, %v11974
      %v12032 = vadd.f32 %v11964, %v11974
      %v12033 = vadd.f32 %v11965, %v11974
      %v12034 = vadd.f32 %v11966, %v11974
      %v12035 = vadd.f32 %v11967, %v11974
      %v12036 = vadd.f32 %v11968, %v11974
      %v12037 = vadd.f32 %v11969, %v11974
      %v12038 = vadd.f32 %v11970, %v11974
      %v12039 = vadd.f32 %v11971, %v11974
      %v12040 = vmax.f32 %v11976, 0.0
      %v12041 = vmax.f32 %v11977, 0.0
      %v12042 = vmax.f32 %v11978, 0.0
      %v12043 = vmax.f32 %v11979, 0.0
      %v12044 = vmax.f32 %v11980, 0.0
      %v12045 = vmax.f32 %v11981, 0.0
      %v12046 = vmax.f32 %v11982, 0.0
      %v12047 = vmax.f32 %v11983, 0.0
      %v12048 = vmax.f32 %v11984, 0.0
      %v12049 = vmax.f32 %v11985, 0.0
      %v12050 = vmax.f32 %v11986, 0.0
      %v12051 = vmax.f32 %v11987, 0.0
      %v12052 = vmax.f32 %v11988, 0.0
      %v12053 = vmax.f32 %v11989, 0.0
      %v12054 = vmax.f32 %v11990, 0.0
      %v12055 = vmax.f32 %v11991, 0.0
      %v12056 = vmax.f32 %v11992, 0.0
      %v12057 = vmax.f32 %v11993, 0.0
      %v12058 = vmax.f32 %v11994, 0.0
      %v12059 = vmax.f32 %v11995, 0.0
      %v12060 = vmax.f32 %v11996, 0.0
      %v12061 = vmax.f32 %v11997, 0.0
      %v12062 = vmax.f32 %v11998, 0.0
      %v12063 = vmax.f32 %v11999, 0.0
      %v12064 = vmax.f32 %v12000, 0.0
      %v12065 = vmax.f32 %v12001, 0.0
      %v12066 = vmax.f32 %v12002, 0.0
      %v12067 = vmax.f32 %v12003, 0.0
      %v12068 = vmax.f32 %v12004, 0.0
      %v12069 = vmax.f32 %v12005, 0.0
      %v12070 = vmax.f32 %v12006, 0.0
      %v12071 = vmax.f32 %v12007, 0.0
      %v12072 = vmax.f32 %v12008, 0.0
      %v12073 = vmax.f32 %v12009, 0.0
      %v12074 = vmax.f32 %v12010, 0.0
      %v12075 = vmax.f32 %v12011, 0.0
      %v12076 = vmax.f32 %v12012, 0.0
      %v12077 = vmax.f32 %v12013, 0.0
      %v12078 = vmax.f32 %v12014, 0.0
      %v12079 = vmax.f32 %v12015, 0.0
      %v12080 = vmax.f32 %v12016, 0.0
      %v12081 = vmax.f32 %v12017, 0.0
      %v12082 = vmax.f32 %v12018, 0.0
      %v12083 = vmax.f32 %v12019, 0.0
      %v12084 = vmax.f32 %v12020, 0.0
      %v12085 = vmax.f32 %v12021, 0.0
      %v12086 = vmax.f32 %v12022, 0.0
      %v12087 = vmax.f32 %v12023, 0.0
      %v12088 = vmax.f32 %v12024, 0.0
      %v12089 = vmax.f32 %v12025, 0.0
      %v12090 = vmax.f32 %v12026, 0.0
      %v12091 = vmax.f32 %v12027, 0.0
      %v12092 = vmax.f32 %v12028, 0.0
      %v12093 = vmax.f32 %v12029, 0.0
      %v12094 = vmax.f32 %v12030, 0.0
      %v12095 = vmax.f32 %v12031, 0.0
      %v12096 = vmax.f32 %v12032, 0.0
      %v12097 = vmax.f32 %v12033, 0.0
      %v12098 = vmax.f32 %v12034, 0.0
      %v12099 = vmax.f32 %v12035, 0.0
      %v12100 = vmax.f32 %v12036, 0.0
      %v12101 = vmax.f32 %v12037, 0.0
      %v12102 = vmax.f32 %v12038, 0.0
      %v12103 = vmax.f32 %v12039, 0.0
      %v12104 = vpack.c.bf16 %v12041, %v12040
      %v12105 = vpack.c.bf16 %v12043, %v12042
      %v12106 = vpack.c.bf16 %v12045, %v12044
      %v12107 = vpack.c.bf16 %v12047, %v12046
      %v12108 = vpack.c.bf16 %v12049, %v12048
      %v12109 = vpack.c.bf16 %v12051, %v12050
      %v12110 = vpack.c.bf16 %v12053, %v12052
      %v12111 = vpack.c.bf16 %v12055, %v12054
      %v12112 = vpack.c.bf16 %v12057, %v12056
      %v12113 = vpack.c.bf16 %v12059, %v12058
      %v12114 = vpack.c.bf16 %v12061, %v12060
      %v12115 = vpack.c.bf16 %v12063, %v12062
      %v12116 = vpack.c.bf16 %v12065, %v12064
      %v12117 = vpack.c.bf16 %v12067, %v12066
      %v12118 = vpack.c.bf16 %v12069, %v12068
      %v12119 = vpack.c.bf16 %v12071, %v12070
      %v12120 = vpack.c.bf16 %v12073, %v12072
      %v12121 = vpack.c.bf16 %v12075, %v12074
      %v12122 = vpack.c.bf16 %v12077, %v12076
      %v12123 = vpack.c.bf16 %v12079, %v12078
      %v12124 = vpack.c.bf16 %v12081, %v12080
      %v12125 = vpack.c.bf16 %v12083, %v12082
      %v12126 = vpack.c.bf16 %v12085, %v12084
      %v12127 = vpack.c.bf16 %v12087, %v12086
      %v12128 = vpack.c.bf16 %v12089, %v12088
      %v12129 = vpack.c.bf16 %v12091, %v12090
      %v12130 = vpack.c.bf16 %v12093, %v12092
      %v12131 = vpack.c.bf16 %v12095, %v12094
      %v12132 = vpack.c.bf16 %v12097, %v12096
      %v12133 = vpack.c.bf16 %v12099, %v12098
      %v12134 = vpack.c.bf16 %v12101, %v12100
      %v12135 = vpack.c.bf16 %v12103, %v12102
      %v12136 = vld [vmem:[%s6] sm:$0xf]
      %v12137 = vld [vmem:[%s6 + $0x4] sm:$0xf]
      %v12138 = vld [vmem:[%s6 + $0x8] sm:$0xf]
      %v12139 = vld [vmem:[%s6 + $0xc] sm:$0xf]
      %v12140 = vld [vmem:[%s6 + $0x10] sm:$0xf]
      %v12141 = vld [vmem:[%s6 + $0x14] sm:$0xf]
      %v12142 = vld [vmem:[%s6 + $0x18] sm:$0xf]
      %v12143 = vld [vmem:[%s6 + $0x1c] sm:$0xf]
      %v12144 = vld [vmem:[%s6 + $0x20] sm:$0xf]
      %v12145 = vld [vmem:[%s6 + $0x24] sm:$0xf]
      %v12146 = vld [vmem:[%s6 + $0x28] sm:$0xf]
      %v12147 = vld [vmem:[%s6 + $0x2c] sm:$0xf]
      %v12148 = vld [vmem:[%s6 + $0x30] sm:$0xf]
      %v12149 = vld [vmem:[%s6 + $0x34] sm:$0xf]
      %v12150 = vld [vmem:[%s6 + $0x38] sm:$0xf]
      %v12151 = vld [vmem:[%s6 + $0x3c] sm:$0xf]
      %v12152 = vld [vmem:[%s7] sm:$0x1]
      %v12154 = vperm.slane %v12152, 0
      %v12172 = vunpack.c.l.b16 %v12136
      %v12173 = vunpack.c.l.b16 %v12137
      %v12174 = vunpack.c.l.b16 %v12138
      %v12175 = vunpack.c.l.b16 %v12139
      %v12176 = vunpack.c.l.b16 %v12140
      %v12177 = vunpack.c.l.b16 %v12141
      %v12178 = vunpack.c.l.b16 %v12142
      %v12179 = vunpack.c.l.b16 %v12143
      %v12180 = vunpack.c.l.b16 %v12144
      %v12181 = vunpack.c.l.b16 %v12145
      %v12182 = vunpack.c.l.b16 %v12146
      %v12183 = vunpack.c.l.b16 %v12147
      %v12184 = vunpack.c.l.b16 %v12148
      %v12185 = vunpack.c.l.b16 %v12149
      %v12186 = vunpack.c.l.b16 %v12150
      %v12187 = vunpack.c.l.b16 %v12151
      %v12188 = vpack.c.b16 %v12173, %v12172
      %v12189 = vpack.c.b16 %v12175, %v12174
      %v12190 = vpack.c.b16 %v12177, %v12176
      %v12191 = vpack.c.b16 %v12179, %v12178
      %v12192 = vpack.c.b16 %v12181, %v12180
      %v12193 = vpack.c.b16 %v12183, %v12182
      %v12194 = vpack.c.b16 %v12185, %v12184
      %v12195 = vpack.c.b16 %v12187, %v12186
      %12204 = vmatpush.bf16.msra.mxu0 %v12195
      %12205 = vmatpush.bf16.msra.mxu0 %v12194
      %12206 = vmatpush.bf16.msra.mxu0 %v12193
      %12207 = vmatpush.bf16.msra.mxu0 %v12192
      %12208 = vmatpush.bf16.msra.mxu0 %v12191
      %12209 = vmatpush.bf16.msra.mxu0 %v12190
      %12210 = vmatpush.bf16.msra.mxu0 %v12189
      %12211 = vmatpush.bf16.msra.mxu0 %v12188
      %12212 = vmatmul.bf16.gmra.mxu0 %v12104
      %v12213 = vpop.f32.mrf.mxu0
      %v12214 = vadd.f32 %v12154, %v12213
      %v12215 = vpop.f32.mrf.mxu0
      %v12216 = vadd.f32 %v12154, %v12215
      %12217 = vmatmul.bf16.gmra.mxu0 %v12105
      %v12218 = vpop.f32.mrf.mxu0
      %v12219 = vadd.f32 %v12154, %v12218
      %v12220 = vpop.f32.mrf.mxu0
      %v12221 = vadd.f32 %v12154, %v12220
      %12222 = vmatmul.bf16.gmra.mxu0 %v12106
      %v12223 = vpop.f32.mrf.mxu0
      %v12224 = vadd.f32 %v12154, %v12223
      %v12225 = vpop.f32.mrf.mxu0
      %v12226 = vadd.f32 %v12154, %v12225
      %12227 = vmatmul.bf16.gmra.mxu0 %v12107
      %v12228 = vpop.f32.mrf.mxu0
      %v12229 = vadd.f32 %v12154, %v12228
      %v12230 = vpop.f32.mrf.mxu0
      %v12231 = vadd.f32 %v12154, %v12230
      %12232 = vmatmul.bf16.gmra.mxu0 %v12108
      %v12233 = vpop.f32.mrf.mxu0
      %v12234 = vadd.f32 %v12154, %v12233
      %v12235 = vpop.f32.mrf.mxu0
      %v12236 = vadd.f32 %v12154, %v12235
      %12237 = vmatmul.bf16.gmra.mxu0 %v12109
      %v12238 = vpop.f32.mrf.mxu0
      %v12239 = vadd.f32 %v12154, %v12238
      %v12240 = vpop.f32.mrf.mxu0
      %v12241 = vadd.f32 %v12154, %v12240
      %12242 = vmatmul.bf16.gmra.mxu0 %v12110
      %v12243 = vpop.f32.mrf.mxu0
      %v12244 = vadd.f32 %v12154, %v12243
      %v12245 = vpop.f32.mrf.mxu0
      %v12246 = vadd.f32 %v12154, %v12245
      %12247 = vmatmul.bf16.gmra.mxu0 %v12111
      %v12248 = vpop.f32.mrf.mxu0
      %v12249 = vadd.f32 %v12154, %v12248
      %v12250 = vpop.f32.mrf.mxu0
      %v12251 = vadd.f32 %v12154, %v12250
      %12252 = vmatmul.bf16.gmra.mxu0 %v12112
      %v12253 = vpop.f32.mrf.mxu0
      %v12254 = vadd.f32 %v12154, %v12253
      %v12255 = vpop.f32.mrf.mxu0
      %v12256 = vadd.f32 %v12154, %v12255
      %12257 = vmatmul.bf16.gmra.mxu0 %v12113
      %v12258 = vpop.f32.mrf.mxu0
      %v12259 = vadd.f32 %v12154, %v12258
      %v12260 = vpop.f32.mrf.mxu0
      %v12261 = vadd.f32 %v12154, %v12260
      %12262 = vmatmul.bf16.gmra.mxu0 %v12114
      %v12263 = vpop.f32.mrf.mxu0
      %v12264 = vadd.f32 %v12154, %v12263
      %v12265 = vpop.f32.mrf.mxu0
      %v12266 = vadd.f32 %v12154, %v12265
      %12267 = vmatmul.bf16.gmra.mxu0 %v12115
      %v12268 = vpop.f32.mrf.mxu0
      %v12269 = vadd.f32 %v12154, %v12268
      %v12270 = vpop.f32.mrf.mxu0
      %v12271 = vadd.f32 %v12154, %v12270
      %12272 = vmatmul.bf16.gmra.mxu0 %v12116
      %v12273 = vpop.f32.mrf.mxu0
      %v12274 = vadd.f32 %v12154, %v12273
      %v12275 = vpop.f32.mrf.mxu0
      %v12276 = vadd.f32 %v12154, %v12275
      %12277 = vmatmul.bf16.gmra.mxu0 %v12117
      %v12278 = vpop.f32.mrf.mxu0
      %v12279 = vadd.f32 %v12154, %v12278
      %v12280 = vpop.f32.mrf.mxu0
      %v12281 = vadd.f32 %v12154, %v12280
      %12282 = vmatmul.bf16.gmra.mxu0 %v12118
      %v12283 = vpop.f32.mrf.mxu0
      %v12284 = vadd.f32 %v12154, %v12283
      %v12285 = vpop.f32.mrf.mxu0
      %v12286 = vadd.f32 %v12154, %v12285
      %12287 = vmatmul.bf16.gmra.mxu0 %v12119
      %v12288 = vpop.f32.mrf.mxu0
      %v12289 = vadd.f32 %v12154, %v12288
      %v12290 = vpop.f32.mrf.mxu0
      %v12291 = vadd.f32 %v12154, %v12290
      %12292 = vmatmul.bf16.gmra.mxu0 %v12120
      %v12293 = vpop.f32.mrf.mxu0
      %v12294 = vadd.f32 %v12154, %v12293
      %v12295 = vpop.f32.mrf.mxu0
      %v12296 = vadd.f32 %v12154, %v12295
      %12297 = vmatmul.bf16.gmra.mxu0 %v12121
      %v12298 = vpop.f32.mrf.mxu0
      %v12299 = vadd.f32 %v12154, %v12298
      %v12300 = vpop.f32.mrf.mxu0
      %v12301 = vadd.f32 %v12154, %v12300
      %12302 = vmatmul.bf16.gmra.mxu0 %v12122
      %v12303 = vpop.f32.mrf.mxu0
      %v12304 = vadd.f32 %v12154, %v12303
      %v12305 = vpop.f32.mrf.mxu0
      %v12306 = vadd.f32 %v12154, %v12305
      %12307 = vmatmul.bf16.gmra.mxu0 %v12123
      %v12308 = vpop.f32.mrf.mxu0
      %v12309 = vadd.f32 %v12154, %v12308
      %v12310 = vpop.f32.mrf.mxu0
      %v12311 = vadd.f32 %v12154, %v12310
      %12312 = vmatmul.bf16.gmra.mxu0 %v12124
      %v12313 = vpop.f32.mrf.mxu0
      %v12314 = vadd.f32 %v12154, %v12313
      %v12315 = vpop.f32.mrf.mxu0
      %v12316 = vadd.f32 %v12154, %v12315
      %12317 = vmatmul.bf16.gmra.mxu0 %v12125
      %v12318 = vpop.f32.mrf.mxu0
      %v12319 = vadd.f32 %v12154, %v12318
      %v12320 = vpop.f32.mrf.mxu0
      %v12321 = vadd.f32 %v12154, %v12320
      %12322 = vmatmul.bf16.gmra.mxu0 %v12126
      %v12323 = vpop.f32.mrf.mxu0
      %v12324 = vadd.f32 %v12154, %v12323
      %v12325 = vpop.f32.mrf.mxu0
      %v12326 = vadd.f32 %v12154, %v12325
      %12327 = vmatmul.bf16.gmra.mxu0 %v12127
      %v12328 = vpop.f32.mrf.mxu0
      %v12329 = vadd.f32 %v12154, %v12328
      %v12330 = vpop.f32.mrf.mxu0
      %v12331 = vadd.f32 %v12154, %v12330
      %12332 = vmatmul.bf16.gmra.mxu0 %v12128
      %v12333 = vpop.f32.mrf.mxu0
      %v12334 = vadd.f32 %v12154, %v12333
      %v12335 = vpop.f32.mrf.mxu0
      %v12336 = vadd.f32 %v12154, %v12335
      %12337 = vmatmul.bf16.gmra.mxu0 %v12129
      %v12338 = vpop.f32.mrf.mxu0
      %v12339 = vadd.f32 %v12154, %v12338
      %v12340 = vpop.f32.mrf.mxu0
      %v12341 = vadd.f32 %v12154, %v12340
      %12342 = vmatmul.bf16.gmra.mxu0 %v12130
      %v12343 = vpop.f32.mrf.mxu0
      %v12344 = vadd.f32 %v12154, %v12343
      %v12345 = vpop.f32.mrf.mxu0
      %v12346 = vadd.f32 %v12154, %v12345
      %12347 = vmatmul.bf16.gmra.mxu0 %v12131
      %v12348 = vpop.f32.mrf.mxu0
      %v12349 = vadd.f32 %v12154, %v12348
      %v12350 = vpop.f32.mrf.mxu0
      %v12351 = vadd.f32 %v12154, %v12350
      %12352 = vmatmul.bf16.gmra.mxu0 %v12132
      %v12353 = vpop.f32.mrf.mxu0
      %v12354 = vadd.f32 %v12154, %v12353
      %v12355 = vpop.f32.mrf.mxu0
      %v12356 = vadd.f32 %v12154, %v12355
      %12357 = vmatmul.bf16.gmra.mxu0 %v12133
      %v12358 = vpop.f32.mrf.mxu0
      %v12359 = vadd.f32 %v12154, %v12358
      %v12360 = vpop.f32.mrf.mxu0
      %v12361 = vadd.f32 %v12154, %v12360
      %12362 = vmatmul.bf16.gmra.mxu0 %v12134
      %v12363 = vpop.f32.mrf.mxu0
      %v12364 = vadd.f32 %v12154, %v12363
      %v12365 = vpop.f32.mrf.mxu0
      %v12366 = vadd.f32 %v12154, %v12365
      %12367 = vmatmul.bf16.gmra.mxu0 %v12135
      %v12368 = vpop.f32.mrf.mxu0
      %v12369 = vadd.f32 %v12154, %v12368
      %v12370 = vpop.f32.mrf.mxu0
      %v12371 = vadd.f32 %v12154, %v12370
      %12372 = vdwg.mxu0
      %v12501 = vrot.slane %v328, 1
      %v12502 = vrot.slane %v329, 1
      %v12503 = vsel %vm2959, %v12501, %v12502
      %v12504 = vrot.slane %v330, 1
      %v12505 = vrot.slane %v331, 1
      %v12506 = vsel %vm2959, %v12504, %v12505
      %v12507 = vrot.slane %v332, 1
      %v12508 = vrot.slane %v333, 1
      %v12509 = vsel %vm2959, %v12507, %v12508
      %v12510 = vrot.slane %v334, 1
      %v12511 = vrot.slane %v335, 1
      %v12512 = vsel %vm2959, %v12510, %v12511
      %v12513 = vrot.slane %v336, 1
      %v12514 = vrot.slane %v337, 1
      %v12515 = vsel %vm2959, %v12513, %v12514
      %v12516 = vrot.slane %v338, 1
      %v12517 = vrot.slane %v339, 1
      %v12518 = vsel %vm2959, %v12516, %v12517
      %v12519 = vrot.slane %v340, 1
      %v12520 = vrot.slane %v341, 1
      %v12521 = vsel %vm2959, %v12519, %v12520
      %v12522 = vrot.slane %v342, 1
      %v12523 = vrot.slane %v343, 1
      %v12524 = vsel %vm2959, %v12522, %v12523
      %v12525 = vrot.slane %v348, 1
      %v12526 = vrot.slane %v349, 1
      %v12527 = vsel %vm2959, %v12525, %v12526
      %v12528 = vrot.slane %v350, 1
      %v12529 = vrot.slane %v351, 1
      %v12530 = vsel %vm2959, %v12528, %v12529
      %v12531 = vrot.slane %v352, 1
      %v12532 = vrot.slane %v353, 1
      %v12533 = vsel %vm2959, %v12531, %v12532
      %v12534 = vrot.slane %v354, 1
      %v12535 = vrot.slane %v355, 1
      %v12536 = vsel %vm2959, %v12534, %v12535
      %v12537 = vrot.slane %v356, 1
      %v12538 = vrot.slane %v357, 1
      %v12539 = vsel %vm2959, %v12537, %v12538
      %v12540 = vrot.slane %v358, 1
      %v12541 = vrot.slane %v359, 1
      %v12542 = vsel %vm2959, %v12540, %v12541
      %v12543 = vrot.slane %v360, 1
      %v12544 = vrot.slane %v361, 1
      %v12545 = vsel %vm2959, %v12543, %v12544
      %v12546 = vrot.slane %v362, 1
      %v12547 = vrot.slane %v363, 1
      %v12548 = vsel %vm2959, %v12546, %v12547
      %v12549 = vrot.slane %v368, 1
      %v12550 = vrot.slane %v369, 1
      %v12551 = vsel %vm2959, %v12549, %v12550
      %v12552 = vrot.slane %v370, 1
      %v12553 = vrot.slane %v371, 1
      %v12554 = vsel %vm2959, %v12552, %v12553
      %v12555 = vrot.slane %v372, 1
      %v12556 = vrot.slane %v373, 1
      %v12557 = vsel %vm2959, %v12555, %v12556
      %v12558 = vrot.slane %v374, 1
      %v12559 = vrot.slane %v375, 1
      %v12560 = vsel %vm2959, %v12558, %v12559
      %v12561 = vrot.slane %v376, 1
      %v12562 = vrot.slane %v377, 1
      %v12563 = vsel %vm2959, %v12561, %v12562
      %v12564 = vrot.slane %v378, 1
      %v12565 = vrot.slane %v379, 1
      %v12566 = vsel %vm2959, %v12564, %v12565
      %v12567 = vrot.slane %v380, 1
      %v12568 = vrot.slane %v381, 1
      %v12569 = vsel %vm2959, %v12567, %v12568
      %v12570 = vrot.slane %v382, 1
      %v12571 = vrot.slane %v383, 1
      %v12572 = vsel %vm2959, %v12570, %v12571
      %v12573 = vrot.slane %v388, 1
      %v12574 = vrot.slane %v389, 1
      %v12575 = vsel %vm2959, %v12573, %v12574
      %v12576 = vrot.slane %v390, 1
      %v12577 = vrot.slane %v391, 1
      %v12578 = vsel %vm2959, %v12576, %v12577
      %v12579 = vrot.slane %v392, 1
      %v12580 = vrot.slane %v393, 1
      %v12581 = vsel %vm2959, %v12579, %v12580
      %v12582 = vrot.slane %v394, 1
      %v12583 = vrot.slane %v395, 1
      %v12584 = vsel %vm2959, %v12582, %v12583
      %v12585 = vrot.slane %v396, 1
      %v12586 = vrot.slane %v397, 1
      %v12587 = vsel %vm2959, %v12585, %v12586
      %v12588 = vrot.slane %v398, 1
      %v12589 = vrot.slane %v399, 1
      %v12590 = vsel %vm2959, %v12588, %v12589
      %v12591 = vrot.slane %v400, 1
      %v12592 = vrot.slane %v401, 1
      %v12593 = vsel %vm2959, %v12591, %v12592
      %v12594 = vrot.slane %v402, 1
      %v12595 = vrot.slane %v403, 1
      %v12596 = vsel %vm2959, %v12594, %v12595
      %v12597 = vrot.slane %v408, 1
      %v12598 = vrot.slane %v409, 1
      %v12599 = vsel %vm2959, %v12597, %v12598
      %v12600 = vrot.slane %v410, 1
      %v12601 = vrot.slane %v411, 1
      %v12602 = vsel %vm2959, %v12600, %v12601
      %v12603 = vrot.slane %v412, 1
      %v12604 = vrot.slane %v413, 1
      %v12605 = vsel %vm2959, %v12603, %v12604
      %v12606 = vrot.slane %v414, 1
      %v12607 = vrot.slane %v415, 1
      %v12608 = vsel %vm2959, %v12606, %v12607
      %v12609 = vrot.slane %v416, 1
      %v12610 = vrot.slane %v417, 1
      %v12611 = vsel %vm2959, %v12609, %v12610
      %v12612 = vrot.slane %v418, 1
      %v12613 = vrot.slane %v419, 1
      %v12614 = vsel %vm2959, %v12612, %v12613
      %v12615 = vrot.slane %v420, 1
      %v12616 = vrot.slane %v421, 1
      %v12617 = vsel %vm2959, %v12615, %v12616
      %v12618 = vrot.slane %v422, 1
      %v12619 = vrot.slane %v423, 1
      %v12620 = vsel %vm2959, %v12618, %v12619
      %v12621 = vrot.slane %v428, 1
      %v12622 = vrot.slane %v429, 1
      %v12623 = vsel %vm2959, %v12621, %v12622
      %v12624 = vrot.slane %v430, 1
      %v12625 = vrot.slane %v431, 1
      %v12626 = vsel %vm2959, %v12624, %v12625
      %v12627 = vrot.slane %v432, 1
      %v12628 = vrot.slane %v433, 1
      %v12629 = vsel %vm2959, %v12627, %v12628
      %v12630 = vrot.slane %v434, 1
      %v12631 = vrot.slane %v435, 1
      %v12632 = vsel %vm2959, %v12630, %v12631
      %v12633 = vrot.slane %v436, 1
      %v12634 = vrot.slane %v437, 1
      %v12635 = vsel %vm2959, %v12633, %v12634
      %v12636 = vrot.slane %v438, 1
      %v12637 = vrot.slane %v439, 1
      %v12638 = vsel %vm2959, %v12636, %v12637
      %v12639 = vrot.slane %v440, 1
      %v12640 = vrot.slane %v441, 1
      %v12641 = vsel %vm2959, %v12639, %v12640
      %v12642 = vrot.slane %v442, 1
      %v12643 = vrot.slane %v443, 1
      %v12644 = vsel %vm2959, %v12642, %v12643
      %v12645 = vrot.slane %v448, 1
      %v12646 = vrot.slane %v449, 1
      %v12647 = vsel %vm2959, %v12645, %v12646
      %v12648 = vrot.slane %v450, 1
      %v12649 = vrot.slane %v451, 1
      %v12650 = vsel %vm2959, %v12648, %v12649
      %v12651 = vrot.slane %v452, 1
      %v12652 = vrot.slane %v453, 1
      %v12653 = vsel %vm2959, %v12651, %v12652
      %v12654 = vrot.slane %v454, 1
      %v12655 = vrot.slane %v455, 1
      %v12656 = vsel %vm2959, %v12654, %v12655
      %v12657 = vrot.slane %v456, 1
      %v12658 = vrot.slane %v457, 1
      %v12659 = vsel %vm2959, %v12657, %v12658
      %v12660 = vrot.slane %v458, 1
      %v12661 = vrot.slane %v459, 1
      %v12662 = vsel %vm2959, %v12660, %v12661
      %v12663 = vrot.slane %v460, 1
      %v12664 = vrot.slane %v461, 1
      %v12665 = vsel %vm2959, %v12663, %v12664
      %v12666 = vrot.slane %v462, 1
      %v12667 = vrot.slane %v463, 1
      %v12668 = vsel %vm2959, %v12666, %v12667
      %v12669 = vrot.slane %v468, 1
      %v12670 = vrot.slane %v469, 1
      %v12671 = vsel %vm2959, %v12669, %v12670
      %v12672 = vrot.slane %v470, 1
      %v12673 = vrot.slane %v471, 1
      %v12674 = vsel %vm2959, %v12672, %v12673
      %v12675 = vrot.slane %v472, 1
      %v12676 = vrot.slane %v473, 1
      %v12677 = vsel %vm2959, %v12675, %v12676
      %v12678 = vrot.slane %v474, 1
      %v12679 = vrot.slane %v475, 1
      %v12680 = vsel %vm2959, %v12678, %v12679
      %v12681 = vrot.slane %v476, 1
      %v12682 = vrot.slane %v477, 1
      %v12683 = vsel %vm2959, %v12681, %v12682
      %v12684 = vrot.slane %v478, 1
      %v12685 = vrot.slane %v479, 1
      %v12686 = vsel %vm2959, %v12684, %v12685
      %v12687 = vrot.slane %v480, 1
      %v12688 = vrot.slane %v481, 1
      %v12689 = vsel %vm2959, %v12687, %v12688
      %v12690 = vrot.slane %v482, 1
      %v12691 = vrot.slane %v483, 1
      %v12692 = vsel %vm2959, %v12690, %v12691
      %v12757 = vadd.f32 %v12214, %v12503
      %v12758 = vadd.f32 %v12216, %v12506
      %v12759 = vadd.f32 %v12219, %v12509
      %v12760 = vadd.f32 %v12221, %v12512
      %v12761 = vadd.f32 %v12224, %v12515
      %v12762 = vadd.f32 %v12226, %v12518
      %v12763 = vadd.f32 %v12229, %v12521
      %v12764 = vadd.f32 %v12231, %v12524
      %v12765 = vadd.f32 %v12234, %v12527
      %v12766 = vadd.f32 %v12236, %v12530
      %v12767 = vadd.f32 %v12239, %v12533
      %v12768 = vadd.f32 %v12241, %v12536
      %v12769 = vadd.f32 %v12244, %v12539
      %v12770 = vadd.f32 %v12246, %v12542
      %v12771 = vadd.f32 %v12249, %v12545
      %v12772 = vadd.f32 %v12251, %v12548
      %v12773 = vadd.f32 %v12254, %v12551
      %v12774 = vadd.f32 %v12256, %v12554
      %v12775 = vadd.f32 %v12259, %v12557
      %v12776 = vadd.f32 %v12261, %v12560
      %v12777 = vadd.f32 %v12264, %v12563
      %v12778 = vadd.f32 %v12266, %v12566
      %v12779 = vadd.f32 %v12269, %v12569
      %v12780 = vadd.f32 %v12271, %v12572
      %v12781 = vadd.f32 %v12274, %v12575
      %v12782 = vadd.f32 %v12276, %v12578
      %v12783 = vadd.f32 %v12279, %v12581
      %v12784 = vadd.f32 %v12281, %v12584
      %v12785 = vadd.f32 %v12284, %v12587
      %v12786 = vadd.f32 %v12286, %v12590
      %v12787 = vadd.f32 %v12289, %v12593
      %v12788 = vadd.f32 %v12291, %v12596
      %v12789 = vadd.f32 %v12294, %v12599
      %v12790 = vadd.f32 %v12296, %v12602
      %v12791 = vadd.f32 %v12299, %v12605
      %v12792 = vadd.f32 %v12301, %v12608
      %v12793 = vadd.f32 %v12304, %v12611
      %v12794 = vadd.f32 %v12306, %v12614
      %v12795 = vadd.f32 %v12309, %v12617
      %v12796 = vadd.f32 %v12311, %v12620
      %v12797 = vadd.f32 %v12314, %v12623
      %v12798 = vadd.f32 %v12316, %v12626
      %v12799 = vadd.f32 %v12319, %v12629
      %v12800 = vadd.f32 %v12321, %v12632
      %v12801 = vadd.f32 %v12324, %v12635
      %v12802 = vadd.f32 %v12326, %v12638
      %v12803 = vadd.f32 %v12329, %v12641
      %v12804 = vadd.f32 %v12331, %v12644
      %v12805 = vadd.f32 %v12334, %v12647
      %v12806 = vadd.f32 %v12336, %v12650
      %v12807 = vadd.f32 %v12339, %v12653
      %v12808 = vadd.f32 %v12341, %v12656
      %v12809 = vadd.f32 %v12344, %v12659
      %v12810 = vadd.f32 %v12346, %v12662
      %v12811 = vadd.f32 %v12349, %v12665
      %v12812 = vadd.f32 %v12351, %v12668
      %v12813 = vadd.f32 %v12354, %v12671
      %v12814 = vadd.f32 %v12356, %v12674
      %v12815 = vadd.f32 %v12359, %v12677
      %v12816 = vadd.f32 %v12361, %v12680
      %v12817 = vadd.f32 %v12364, %v12683
      %v12818 = vadd.f32 %v12366, %v12686
      %v12819 = vadd.f32 %v12369, %v12689
      %v12820 = vadd.f32 %v12371, %v12692
      %v12821 = vmax.f32 %v12757, 0.0
      %v12822 = vmax.f32 %v12758, 0.0
      %v12823 = vmax.f32 %v12759, 0.0
      %v12824 = vmax.f32 %v12760, 0.0
      %v12825 = vmax.f32 %v12761, 0.0
      %v12826 = vmax.f32 %v12762, 0.0
      %v12827 = vmax.f32 %v12763, 0.0
      %v12828 = vmax.f32 %v12764, 0.0
      %v12829 = vmax.f32 %v12765, 0.0
      %v12830 = vmax.f32 %v12766, 0.0
      %v12831 = vmax.f32 %v12767, 0.0
      %v12832 = vmax.f32 %v12768, 0.0
      %v12833 = vmax.f32 %v12769, 0.0
      %v12834 = vmax.f32 %v12770, 0.0
      %v12835 = vmax.f32 %v12771, 0.0
      %v12836 = vmax.f32 %v12772, 0.0
      %v12837 = vmax.f32 %v12773, 0.0
      %v12838 = vmax.f32 %v12774, 0.0
      %v12839 = vmax.f32 %v12775, 0.0
      %v12840 = vmax.f32 %v12776, 0.0
      %v12841 = vmax.f32 %v12777, 0.0
      %v12842 = vmax.f32 %v12778, 0.0
      %v12843 = vmax.f32 %v12779, 0.0
      %v12844 = vmax.f32 %v12780, 0.0
      %v12845 = vmax.f32 %v12781, 0.0
      %v12846 = vmax.f32 %v12782, 0.0
      %v12847 = vmax.f32 %v12783, 0.0
      %v12848 = vmax.f32 %v12784, 0.0
      %v12849 = vmax.f32 %v12785, 0.0
      %v12850 = vmax.f32 %v12786, 0.0
      %v12851 = vmax.f32 %v12787, 0.0
      %v12852 = vmax.f32 %v12788, 0.0
      %v12853 = vmax.f32 %v12789, 0.0
      %v12854 = vmax.f32 %v12790, 0.0
      %v12855 = vmax.f32 %v12791, 0.0
      %v12856 = vmax.f32 %v12792, 0.0
      %v12857 = vmax.f32 %v12793, 0.0
      %v12858 = vmax.f32 %v12794, 0.0
      %v12859 = vmax.f32 %v12795, 0.0
      %v12860 = vmax.f32 %v12796, 0.0
      %v12861 = vmax.f32 %v12797, 0.0
      %v12862 = vmax.f32 %v12798, 0.0
      %v12863 = vmax.f32 %v12799, 0.0
      %v12864 = vmax.f32 %v12800, 0.0
      %v12865 = vmax.f32 %v12801, 0.0
      %v12866 = vmax.f32 %v12802, 0.0
      %v12867 = vmax.f32 %v12803, 0.0
      %v12868 = vmax.f32 %v12804, 0.0
      %v12869 = vmax.f32 %v12805, 0.0
      %v12870 = vmax.f32 %v12806, 0.0
      %v12871 = vmax.f32 %v12807, 0.0
      %v12872 = vmax.f32 %v12808, 0.0
      %v12873 = vmax.f32 %v12809, 0.0
      %v12874 = vmax.f32 %v12810, 0.0
      %v12875 = vmax.f32 %v12811, 0.0
      %v12876 = vmax.f32 %v12812, 0.0
      %v12877 = vmax.f32 %v12813, 0.0
      %v12878 = vmax.f32 %v12814, 0.0
      %v12879 = vmax.f32 %v12815, 0.0
      %v12880 = vmax.f32 %v12816, 0.0
      %v12881 = vmax.f32 %v12817, 0.0
      %v12882 = vmax.f32 %v12818, 0.0
      %v12883 = vmax.f32 %v12819, 0.0
      %v12884 = vmax.f32 %v12820, 0.0
      %12885 = vst [vmem:[%s305] sm:$0xff] %v12821
      %12886 = vst [vmem:[%s305 + $0x8] sm:$0xff] %v12822
      %12887 = vst [vmem:[%s305 + $0x10] sm:$0xff] %v12823
      %12888 = vst [vmem:[%s305 + $0x18] sm:$0xff] %v12824
      %12889 = vst [vmem:[%s305 + $0x20] sm:$0xff] %v12825
      %12890 = vst [vmem:[%s305 + $0x28] sm:$0xff] %v12826
      %12891 = vst [vmem:[%s305 + $0x30] sm:$0xff] %v12827
      %12892 = vst [vmem:[%s305 + $0x38] sm:$0xff] %v12828
      %12893 = vst [vmem:[%s305 + $0x40] sm:$0xff] %v12829
      %12894 = vst [vmem:[%s305 + $0x48] sm:$0xff] %v12830
      %12895 = vst [vmem:[%s305 + $0x50] sm:$0xff] %v12831
      %12896 = vst [vmem:[%s305 + $0x58] sm:$0xff] %v12832
      %12897 = vst [vmem:[%s305 + $0x60] sm:$0xff] %v12833
      %12898 = vst [vmem:[%s305 + $0x68] sm:$0xff] %v12834
      %12899 = vst [vmem:[%s305 + $0x70] sm:$0xff] %v12835
      %12900 = vst [vmem:[%s305 + $0x78] sm:$0xff] %v12836
      %12901 = vst [vmem:[%s305 + $0x80] sm:$0xff] %v12837
      %12902 = vst [vmem:[%s305 + $0x88] sm:$0xff] %v12838
      %12903 = vst [vmem:[%s305 + $0x90] sm:$0xff] %v12839
      %12904 = vst [vmem:[%s305 + $0x98] sm:$0xff] %v12840
      %12905 = vst [vmem:[%s305 + $0xa0] sm:$0xff] %v12841
      %12906 = vst [vmem:[%s305 + $0xa8] sm:$0xff] %v12842
      %12907 = vst [vmem:[%s305 + $0xb0] sm:$0xff] %v12843
      %12908 = vst [vmem:[%s305 + $0xb8] sm:$0xff] %v12844
      %12909 = vst [vmem:[%s305 + $0xc0] sm:$0xff] %v12845
      %12910 = vst [vmem:[%s305 + $0xc8] sm:$0xff] %v12846
      %12911 = vst [vmem:[%s305 + $0xd0] sm:$0xff] %v12847
      %12912 = vst [vmem:[%s305 + $0xd8] sm:$0xff] %v12848
      %12913 = vst [vmem:[%s305 + $0xe0] sm:$0xff] %v12849
      %12914 = vst [vmem:[%s305 + $0xe8] sm:$0xff] %v12850
      %12915 = vst [vmem:[%s305 + $0xf0] sm:$0xff] %v12851
      %12916 = vst [vmem:[%s305 + $0xf8] sm:$0xff] %v12852
      %12917 = vst [vmem:[%s305 + $0x100] sm:$0xff] %v12853
      %12918 = vst [vmem:[%s305 + $0x108] sm:$0xff] %v12854
      %12919 = vst [vmem:[%s305 + $0x110] sm:$0xff] %v12855
      %12920 = vst [vmem:[%s305 + $0x118] sm:$0xff] %v12856
      %12921 = vst [vmem:[%s305 + $0x120] sm:$0xff] %v12857
      %12922 = vst [vmem:[%s305 + $0x128] sm:$0xff] %v12858
      %12923 = vst [vmem:[%s305 + $0x130] sm:$0xff] %v12859
      %12924 = vst [vmem:[%s305 + $0x138] sm:$0xff] %v12860
      %12925 = vst [vmem:[%s305 + $0x140] sm:$0xff] %v12861
      %12926 = vst [vmem:[%s305 + $0x148] sm:$0xff] %v12862
      %12927 = vst [vmem:[%s305 + $0x150] sm:$0xff] %v12863
      %12928 = vst [vmem:[%s305 + $0x158] sm:$0xff] %v12864
      %12929 = vst [vmem:[%s305 + $0x160] sm:$0xff] %v12865
      %12930 = vst [vmem:[%s305 + $0x168] sm:$0xff] %v12866
      %12931 = vst [vmem:[%s305 + $0x170] sm:$0xff] %v12867
      %12932 = vst [vmem:[%s305 + $0x178] sm:$0xff] %v12868
      %12933 = vst [vmem:[%s305 + $0x180] sm:$0xff] %v12869
      %12934 = vst [vmem:[%s305 + $0x188] sm:$0xff] %v12870
      %12935 = vst [vmem:[%s305 + $0x190] sm:$0xff] %v12871
      %12936 = vst [vmem:[%s305 + $0x198] sm:$0xff] %v12872
      %12937 = vst [vmem:[%s305 + $0x1a0] sm:$0xff] %v12873
      %12938 = vst [vmem:[%s305 + $0x1a8] sm:$0xff] %v12874
      %12939 = vst [vmem:[%s305 + $0x1b0] sm:$0xff] %v12875
      %12940 = vst [vmem:[%s305 + $0x1b8] sm:$0xff] %v12876
      %12941 = vst [vmem:[%s305 + $0x1c0] sm:$0xff] %v12877
      %12942 = vst [vmem:[%s305 + $0x1c8] sm:$0xff] %v12878
      %12943 = vst [vmem:[%s305 + $0x1d0] sm:$0xff] %v12879
      %12944 = vst [vmem:[%s305 + $0x1d8] sm:$0xff] %v12880
      %12945 = vst [vmem:[%s305 + $0x1e0] sm:$0xff] %v12881
      %12946 = vst [vmem:[%s305 + $0x1e8] sm:$0xff] %v12882
      %12947 = vst [vmem:[%s305 + $0x1f0] sm:$0xff] %v12883
      %12948 = vst [vmem:[%s305 + $0x1f8] sm:$0xff] %v12884
      %p12949 = scmp.lt.s32.totalorder %s19, 1
      %s12950 = scalar_select %p12949, %s19, 1
      %s12951 = smul.addr %s12950, 64
      %s12952 = smul.addr %s12951, 8
      %s12953 = scalar_lea.vmem %s8, %s12952
      // Predicated region
      $region53: #{bottleneck_forward.1} parent=51 // pred_check
        %p12954 = pneg %p210
      $region54: #{bottleneck_forward.1} parent=51 // pred_check_branch
        %12956 = sbr.rel (%p12954) target = $region56
      $region55: #{bottleneck_forward.1} parent=51 // pred_region
        _
      $region56: #{bottleneck_forward.1} parent=51 // pred_fallthru
        _
    $region52: #{bottleneck_forward.1} parent=5 // pred_fallthru
      _
    %p12957 = scmp.le.s32.totalorder 2, %s14
    // Predicated region
    $region57: #{bottleneck_forward.1} parent=5 // pred_check
      %p12958 = pneg %p12957
    $region58: #{bottleneck_forward.1} parent=5 // pred_check_branch
      %12960 = sbr.rel (%p12958) target = $region60
    $region59: #{bottleneck_forward.1} parent=5 // pred_region
      %s12961 = ssub.s32 %s14, 2
      // Predicated region
      $region61: #{bottleneck_forward.1} parent=59 // pred_check
        %p12962 = pneg %p216
      $region62: #{bottleneck_forward.1} parent=59 // pred_check_branch
        %12964 = sbr.rel (%p12962) target = $region64
      $region63: #{bottleneck_forward.1} parent=59 // pred_region
        %p12965 = scmp.lt.s32.totalorder %s20, 1
        %s12966 = scalar_select %p12965, %s20, 1
        %s12967 = smul.addr %s12966, 64
        %s12968 = smul.addr %s12967, 8
        %s12969 = scalar_lea.vmem %s8, %s12968
      $region64: #{bottleneck_forward.1} parent=59 // pred_fallthru
        _
    $region60: #{bottleneck_forward.1} parent=5 // pred_fallthru
      _
  $region6: #{bottleneck_forward.1} parent=0 // loop_footer
    %s18 = sadd.s32 1, %s14
  $region7: #{bottleneck_forward.1} parent=0 // loop_footer_branch
    %13 = sbr.rel target = $region3
  $region8: #{bottleneck_forward.1} parent=0 // loop_exit
    _

</llo_original>
